<compile_context>
chip_gen: v7x
topology: tpu7x:2x2x1
jax: 0.10.0
libtpu: 0.0.40
codegen_flags: <defaults>
</compile_context>

<pallas_src>
import functools

import jax
import jax.numpy as jnp
from jax.experimental import pallas as pl
from jax.experimental.pallas import tpu as pltpu


def _convgru_kernel(x_ref, h_ref, wx_ref, wh_ref, who_ref, b_ref,
                    o_ref, hr_pad, *, H, W, K, P, Ch):
    """One batch element per grid step. x_ref/h_ref are spatially zero-padded."""
    HW = H * W
    Hp, Wp = H + 2 * P, W + 2 * P

    def conv_fused(padded, w_ref):
        # padded: [Hp, Wp, C] value; w_ref: [K, K, C, Cout] (HWIO) ref.
        # The costly sublane (W) shift is done once per dx and reused for all
        # dy taps; the dy shift is a cheap major-dim slice.
        cout = w_ref.shape[-1]
        acc = jnp.zeros((HW, cout), jnp.float32)
        for dx in range(K):
            col = padded[:, dx:dx + W, :]                      # [Hp, W, C]
            for dy in range(K):
                patch = col[dy:dy + H].reshape(HW, -1)
                acc = acc + jnp.dot(patch.astype(w_ref.dtype), w_ref[dy, dx],
                                    preferred_element_type=jnp.float32)
        return acc                                             # [HW, Cout] f32

    xp = x_ref[0]                                              # [Hp, Wp, Ci]
    hp = h_ref[0]                                              # [Hp, Wp, Ch]

    # One fused conv over x for all three gates (reset | update | out) and one
    # fused conv over h for (reset | update). Per-gate biases are pre-fused.
    gx = conv_fused(xp, wx_ref) + b_ref[...]                   # [HW, 3*Ch]
    gh = conv_fused(hp, wh_ref)                                # [HW, 2*Ch]

    ru = jax.nn.sigmoid(gx[:, :2 * Ch] + gh)                   # [HW, 2*Ch]
    reset = ru[:, :Ch]
    update = ru[:, Ch:]

    h_center = hp[P:P + H, P:P + W, :].reshape(HW, Ch).astype(jnp.float32)

    # Out-gate h-path: conv over zero-padded (h * reset). Zero only the border
    # of the scratch each step (the interior is fully overwritten below).
    if P > 0:
        hr_pad[0:P, :, :] = jnp.zeros((P, Wp, Ch), hr_pad.dtype)
        hr_pad[P + H:Hp, :, :] = jnp.zeros((P, Wp, Ch), hr_pad.dtype)
        hr_pad[P:P + H, 0:P, :] = jnp.zeros((H, P, Ch), hr_pad.dtype)
        hr_pad[P:P + H, P + W:Wp, :] = jnp.zeros((H, P, Ch), hr_pad.dtype)
    hr_pad[P:P + H, P:P + W, :] = (h_center * reset).reshape(H, W, Ch)

    out_inputs = jnp.tanh(gx[:, 2 * Ch:] + conv_fused(hr_pad[...], who_ref))

    new_state = h_center + update * (out_inputs - h_center)
    o_ref[0] = new_state.reshape(H, W, Ch).astype(o_ref.dtype)


def init_convgru_params(key, input_size, hidden_size, kernel_size):
    """Matches the PyTorch init: orthogonal conv weights, zero biases."""
    cin = input_size + hidden_size
    ortho = jax.nn.initializers.orthogonal()
    keys = jax.random.split(key, 3)
    params = {}
    for name, k in zip(("r", "u", "o"), keys):
        w = ortho(k, (hidden_size, cin * kernel_size * kernel_size),
                  jnp.float32)
        w = w.reshape(hidden_size, cin, kernel_size, kernel_size)  # OIHW
        w = jnp.transpose(w, (2, 3, 1, 0))                         # HWIO
        params[f"w_{name}_x"] = w[:, :, :input_size, :]
        params[f"w_{name}_h"] = w[:, :, input_size:, :]
        params[f"b_{name}"] = jnp.zeros((hidden_size,), jnp.float32)
    return params


def _fuse_params(params, operand_dtype):
    """Fuse per-gate weights along Cout so the kernel does 1 x-conv + 1 h-conv."""
    w_x = jnp.concatenate(
        [params["w_r_x"], params["w_u_x"], params["w_o_x"]], axis=-1)  # [K,K,Ci,3Ch]
    w_h = jnp.concatenate(
        [params["w_r_h"], params["w_u_h"]], axis=-1)                   # [K,K,Ch,2Ch]
    w_ho = params["w_o_h"]                                             # [K,K,Ch,Ch]
    b = jnp.concatenate(
        [params["b_r"], params["b_u"], params["b_o"]])[None, :]        # [1,3Ch]
    return (w_x.astype(operand_dtype), w_h.astype(operand_dtype),
            w_ho.astype(operand_dtype), b.astype(jnp.float32))


def conv_gru_forward(x, prev_state, params, kernel_size,
                     operand_dtype=jnp.float32):
    """x: [B,H,W,Ci]; prev_state: [B,H,W,Ch] or None -> new state [B,H,W,Ch].

    operand_dtype=jnp.bfloat16 casts inputs/weights for the matmuls (halves
    DMA bytes, ~2x MXU rate); accumulation and gate math stay float32.
    """
    B, H, W, Ci = x.shape
    Ch = params["b_r"].shape[0]
    K = kernel_size
    P = K // 2
    if prev_state is None:
        prev_state = jnp.zeros((B, H, W, Ch), x.dtype)

    pad = ((0, 0), (P, P), (P, P), (0, 0))
    xp = jnp.pad(x, pad).astype(operand_dtype)
    hp = jnp.pad(prev_state, pad).astype(operand_dtype)
    Hp, Wp = H + 2 * P, W + 2 * P

    w_x, w_h, w_ho, b = _fuse_params(params, operand_dtype)

    kernel = functools.partial(_convgru_kernel, H=H, W=W, K=K, P=P, Ch=Ch)

    def full(shape):
        return pl.BlockSpec(shape, lambda b_: (0,) * len(shape))

    in_specs = [
        pl.BlockSpec((1, Hp, Wp, Ci), lambda b_: (b_, 0, 0, 0)),
        pl.BlockSpec((1, Hp, Wp, Ch), lambda b_: (b_, 0, 0, 0)),
        full((K, K, Ci, 3 * Ch)),      # fused x weights (reset|update|out)
        full((K, K, Ch, 2 * Ch)),      # fused h weights (reset|update)
        full((K, K, Ch, Ch)),          # out-gate h weights
        full((1, 3 * Ch)),             # fused biases
    ]
    out_spec = pl.BlockSpec((1, H, W, Ch), lambda b_: (b_, 0, 0, 0))

    # TODO(synk): for production BDE2VID resolutions, add an H-tile grid axis
    # with a P-row halo and single-buffer the constant-index weight blocks so
    # the working set fits v7x's 64 MiB VMEM; at these test shapes the
    # full-frame-per-batch blocks fit comfortably on all generations.
    return pl.pallas_call(
        kernel,
        out_shape=jax.ShapeDtypeStruct((B, H, W, Ch), x.dtype),
        grid_spec=pltpu.PrefetchScalarGridSpec(
            num_scalar_prefetch=0,
            grid=(B,),                 # batch kept "parallel" -> both v7x cores busy
            in_specs=in_specs,
            out_specs=out_spec,
            scratch_shapes=[pltpu.VMEM((Hp, Wp, Ch), jnp.float32)],
        ),
        compiler_params=pltpu.CompilerParams(
            dimension_semantics=("parallel",)),
    )(xp, hp, w_x, w_h, w_ho, b)


def conv_gru_reference(x, prev_state, params, kernel_size):
    """Pure-JAX reference mirroring the PyTorch forward (NHWC)."""
    if prev_state is None:
        prev_state = jnp.zeros(x.shape[:3] + (params["b_r"].shape[0],), x.dtype)

    def conv(inp, wx, wh, b):
        w = jnp.concatenate([wx, wh], axis=2)
        return jax.lax.conv_general_dilated(
            inp, w, (1, 1), "SAME",
            dimension_numbers=("NHWC", "HWIO", "NHWC")) + b

    stacked = jnp.concatenate([x, prev_state], axis=-1)
    update = jax.nn.sigmoid(
        conv(stacked, params["w_u_x"], params["w_u_h"], params["b_u"]))
    reset = jax.nn.sigmoid(
        conv(stacked, params["w_r_x"], params["w_r_h"], params["b_r"]))
    out_inputs = jnp.tanh(
        conv(jnp.concatenate([x, prev_state * reset], axis=-1),
             params["w_o_x"], params["w_o_h"], params["b_o"]))
    return prev_state * (1.0 - update) + out_inputs * update


if __name__ == "__main__":
    B, Ci, H, W = 2, 4, 16, 16
    hidden, ksize = 32, 3

    key = jax.random.PRNGKey(0)
    k_w, k_x, k_h = jax.random.split(key, 3)
    params = init_convgru_params(k_w, Ci, hidden, ksize)

    x_nhwc = jax.random.normal(k_x, (B, H, W, Ci), jnp.float32)
    h_nhwc = jax.random.normal(k_h, (B, H, W, hidden), jnp.float32)

    ref = conv_gru_reference(x_nhwc, h_nhwc, params, ksize)

    # float32 operand path: tight tolerance against the pure-JAX reference.
    out = jax.block_until_ready(
        conv_gru_forward(x_nhwc, h_nhwc, params, ksize,
                         operand_dtype=jnp.float32))
    assert out.shape == (B, H, W, hidden)
    assert jnp.allclose(out, ref, rtol=1e-4, atol=1e-4), (
        float(jnp.max(jnp.abs(out - ref))))

    # bfloat16 matmul-operand path (f32 accumulation/blend): looser tolerance.
    out_bf16 = jax.block_until_ready(
        conv_gru_forward(x_nhwc, h_nhwc, params, ksize,
                         operand_dtype=jnp.bfloat16))
    assert jnp.allclose(out_bf16, ref, rtol=1e-1, atol=1e-1), (
        float(jnp.max(jnp.abs(out_bf16 - ref))))

    # Also exercise the prev_state=None path (zeros init), as in the module.
    out0 = jax.block_until_ready(
        conv_gru_forward(x_nhwc, None, params, ksize,
                         operand_dtype=jnp.float32))
    ref0 = conv_gru_reference(x_nhwc, None, params, ksize)
    assert jnp.allclose(out0, ref0, rtol=1e-4, atol=1e-4)

    print("KERNEL_OK")
</pallas_src>

<mosaic_0001>
module attributes {stable_mosaic.version = 11 : i64} {
  func.func @_convgru_kernel(%arg0: i32, %arg1: memref<1x18x18x4xf32, #tpu.memory_space<vmem>>, %arg2: memref<1x18x18x32xf32, #tpu.memory_space<vmem>>, %arg3: memref<3x3x4x96xf32, #tpu.memory_space<vmem>>, %arg4: memref<3x3x32x64xf32, #tpu.memory_space<vmem>>, %arg5: memref<3x3x32x32xf32, #tpu.memory_space<vmem>>, %arg6: memref<1x96xf32, #tpu.memory_space<vmem>>, %arg7: memref<1x16x16x32xf32, #tpu.memory_space<vmem>>, %arg8: memref<18x18x32xf32, #tpu.memory_space<vmem>>) attributes {dimension_semantics = [#tpu.dimension_semantics<parallel>], iteration_bounds = array<i64: 2>, scalar_prefetch = 0 : i64, scratch_operands = 1 : i64, tpu.core_type = #tpu.core_type<tc>, window_params = [{transform_indices = @transform_0, window_bounds = array<i64: 1, 18, 18, 4>}, {transform_indices = @transform_1, window_bounds = array<i64: 1, 18, 18, 32>}, {pipeline_mode = #tpu.pipeline_mode<synchronous>, transform_indices = @transform_2, window_bounds = array<i64: 3, 3, 4, 96>}, {pipeline_mode = #tpu.pipeline_mode<synchronous>, transform_indices = @transform_3, window_bounds = array<i64: 3, 3, 32, 64>}, {pipeline_mode = #tpu.pipeline_mode<synchronous>, transform_indices = @transform_4, window_bounds = array<i64: 3, 3, 32, 32>}, {pipeline_mode = #tpu.pipeline_mode<synchronous>, transform_indices = @transform_5, window_bounds = array<i64: 1, 96>}, {transform_indices = @transform_6, window_bounds = array<i64: 1, 16, 16, 32>}]} {
    %c0 = arith.constant 0 : index
    %c0_0 = arith.constant 0 : index
    %c0_1 = arith.constant 0 : index
    %c0_2 = arith.constant 0 : index
    %0 = vector.load %arg1[%c0, %c0_0, %c0_1, %c0_2] : memref<1x18x18x4xf32, #tpu.memory_space<vmem>>, vector<1x18x18x4xf32>
    %1 = vector.shape_cast %0 : vector<1x18x18x4xf32> to vector<18x18x4xf32>
    %c0_3 = arith.constant 0 : index
    %c0_4 = arith.constant 0 : index
    %c0_5 = arith.constant 0 : index
    %c0_6 = arith.constant 0 : index
    %2 = vector.load %arg2[%c0_3, %c0_4, %c0_5, %c0_6] : memref<1x18x18x32xf32, #tpu.memory_space<vmem>>, vector<1x18x18x32xf32>
    %3 = vector.shape_cast %2 : vector<1x18x18x32xf32> to vector<18x18x32xf32>
    %cst = arith.constant 0.000000e+00 : f32
    %4 = vector.broadcast %cst : f32 to vector<256x96xf32>
    %5 = vector.extract_strided_slice %1 {offsets = [0, 0, 0], sizes = [18, 16, 4], strides = [1, 1, 1]} : vector<18x18x4xf32> to vector<18x16x4xf32>
    %6 = vector.extract_strided_slice %5 {offsets = [0, 0, 0], sizes = [16, 16, 4], strides = [1, 1, 1]} : vector<18x16x4xf32> to vector<16x16x4xf32>
    %7 = vector.shape_cast %6 : vector<16x16x4xf32> to vector<256x4xf32>
    %c0_7 = arith.constant 0 : index
    %c0_8 = arith.constant 0 : index
    %c0_9 = arith.constant 0 : index
    %c0_10 = arith.constant 0 : index
    %8 = vector.load %arg3[%c0_7, %c0_8, %c0_9, %c0_10] : memref<3x3x4x96xf32, #tpu.memory_space<vmem>>, vector<1x1x4x96xf32>
    %9 = vector.shape_cast %8 : vector<1x1x4x96xf32> to vector<4x96xf32>
    %cst_11 = arith.constant dense<0.000000e+00> : vector<256x96xf32>
    %10 = tpu.matmul %7, %9, %cst_11 {dimension_numbers = #tpu.dot_dimension_numbers<[1], [0], [0], [1], [0, 0, 1, 1], [], []>} : vector<256x4xf32>, vector<4x96xf32>, vector<256x96xf32> -> vector<256x96xf32>
    %11 = arith.addf %4, %10 : vector<256x96xf32>
    %12 = vector.extract_strided_slice %5 {offsets = [1, 0, 0], sizes = [16, 16, 4], strides = [1, 1, 1]} : vector<18x16x4xf32> to vector<16x16x4xf32>
    %13 = vector.shape_cast %12 : vector<16x16x4xf32> to vector<256x4xf32>
    %c1 = arith.constant 1 : index
    %c0_12 = arith.constant 0 : index
    %c0_13 = arith.constant 0 : index
    %c0_14 = arith.constant 0 : index
    %14 = vector.load %arg3[%c1, %c0_12, %c0_13, %c0_14] : memref<3x3x4x96xf32, #tpu.memory_space<vmem>>, vector<1x1x4x96xf32>
    %15 = vector.shape_cast %14 : vector<1x1x4x96xf32> to vector<4x96xf32>
    %cst_15 = arith.constant dense<0.000000e+00> : vector<256x96xf32>
    %16 = tpu.matmul %13, %15, %cst_15 {dimension_numbers = #tpu.dot_dimension_numbers<[1], [0], [0], [1], [0, 0, 1, 1], [], []>} : vector<256x4xf32>, vector<4x96xf32>, vector<256x96xf32> -> vector<256x96xf32>
    %17 = arith.addf %11, %16 : vector<256x96xf32>
    %18 = vector.extract_strided_slice %5 {offsets = [2, 0, 0], sizes = [16, 16, 4], strides = [1, 1, 1]} : vector<18x16x4xf32> to vector<16x16x4xf32>
    %19 = vector.shape_cast %18 : vector<16x16x4xf32> to vector<256x4xf32>
    %c2 = arith.constant 2 : index
    %c0_16 = arith.constant 0 : index
    %c0_17 = arith.constant 0 : index
    %c0_18 = arith.constant 0 : index
    %20 = vector.load %arg3[%c2, %c0_16, %c0_17, %c0_18] : memref<3x3x4x96xf32, #tpu.memory_space<vmem>>, vector<1x1x4x96xf32>
    %21 = vector.shape_cast %20 : vector<1x1x4x96xf32> to vector<4x96xf32>
    %cst_19 = arith.constant dense<0.000000e+00> : vector<256x96xf32>
    %22 = tpu.matmul %19, %21, %cst_19 {dimension_numbers = #tpu.dot_dimension_numbers<[1], [0], [0], [1], [0, 0, 1, 1], [], []>} : vector<256x4xf32>, vector<4x96xf32>, vector<256x96xf32> -> vector<256x96xf32>
    %23 = arith.addf %17, %22 : vector<256x96xf32>
    %24 = vector.extract_strided_slice %1 {offsets = [0, 1, 0], sizes = [18, 16, 4], strides = [1, 1, 1]} : vector<18x18x4xf32> to vector<18x16x4xf32>
    %25 = vector.extract_strided_slice %24 {offsets = [0, 0, 0], sizes = [16, 16, 4], strides = [1, 1, 1]} : vector<18x16x4xf32> to vector<16x16x4xf32>
    %26 = vector.shape_cast %25 : vector<16x16x4xf32> to vector<256x4xf32>
    %c0_20 = arith.constant 0 : index
    %c1_21 = arith.constant 1 : index
    %c0_22 = arith.constant 0 : index
    %c0_23 = arith.constant 0 : index
    %27 = vector.load %arg3[%c0_20, %c1_21, %c0_22, %c0_23] : memref<3x3x4x96xf32, #tpu.memory_space<vmem>>, vector<1x1x4x96xf32>
    %28 = vector.shape_cast %27 : vector<1x1x4x96xf32> to vector<4x96xf32>
    %cst_24 = arith.constant dense<0.000000e+00> : vector<256x96xf32>
    %29 = tpu.matmul %26, %28, %cst_24 {dimension_numbers = #tpu.dot_dimension_numbers<[1], [0], [0], [1], [0, 0, 1, 1], [], []>} : vector<256x4xf32>, vector<4x96xf32>, vector<256x96xf32> -> vector<256x96xf32>
    %30 = arith.addf %23, %29 : vector<256x96xf32>
    %31 = vector.extract_strided_slice %24 {offsets = [1, 0, 0], sizes = [16, 16, 4], strides = [1, 1, 1]} : vector<18x16x4xf32> to vector<16x16x4xf32>
    %32 = vector.shape_cast %31 : vector<16x16x4xf32> to vector<256x4xf32>
    %c1_25 = arith.constant 1 : index
    %c1_26 = arith.constant 1 : index
    %c0_27 = arith.constant 0 : index
    %c0_28 = arith.constant 0 : index
    %33 = vector.load %arg3[%c1_25, %c1_26, %c0_27, %c0_28] : memref<3x3x4x96xf32, #tpu.memory_space<vmem>>, vector<1x1x4x96xf32>
    %34 = vector.shape_cast %33 : vector<1x1x4x96xf32> to vector<4x96xf32>
    %cst_29 = arith.constant dense<0.000000e+00> : vector<256x96xf32>
    %35 = tpu.matmul %32, %34, %cst_29 {dimension_numbers = #tpu.dot_dimension_numbers<[1], [0], [0], [1], [0, 0, 1, 1], [], []>} : vector<256x4xf32>, vector<4x96xf32>, vector<256x96xf32> -> vector<256x96xf32>
    %36 = arith.addf %30, %35 : vector<256x96xf32>
    %37 = vector.extract_strided_slice %24 {offsets = [2, 0, 0], sizes = [16, 16, 4], strides = [1, 1, 1]} : vector<18x16x4xf32> to vector<16x16x4xf32>
    %38 = vector.shape_cast %37 : vector<16x16x4xf32> to vector<256x4xf32>
    %c2_30 = arith.constant 2 : index
    %c1_31 = arith.constant 1 : index
    %c0_32 = arith.constant 0 : index
    %c0_33 = arith.constant 0 : index
    %39 = vector.load %arg3[%c2_30, %c1_31, %c0_32, %c0_33] : memref<3x3x4x96xf32, #tpu.memory_space<vmem>>, vector<1x1x4x96xf32>
    %40 = vector.shape_cast %39 : vector<1x1x4x96xf32> to vector<4x96xf32>
    %cst_34 = arith.constant dense<0.000000e+00> : vector<256x96xf32>
    %41 = tpu.matmul %38, %40, %cst_34 {dimension_numbers = #tpu.dot_dimension_numbers<[1], [0], [0], [1], [0, 0, 1, 1], [], []>} : vector<256x4xf32>, vector<4x96xf32>, vector<256x96xf32> -> vector<256x96xf32>
    %42 = arith.addf %36, %41 : vector<256x96xf32>
    %43 = vector.extract_strided_slice %1 {offsets = [0, 2, 0], sizes = [18, 16, 4], strides = [1, 1, 1]} : vector<18x18x4xf32> to vector<18x16x4xf32>
    %44 = vector.extract_strided_slice %43 {offsets = [0, 0, 0], sizes = [16, 16, 4], strides = [1, 1, 1]} : vector<18x16x4xf32> to vector<16x16x4xf32>
    %45 = vector.shape_cast %44 : vector<16x16x4xf32> to vector<256x4xf32>
    %c0_35 = arith.constant 0 : index
    %c2_36 = arith.constant 2 : index
    %c0_37 = arith.constant 0 : index
    %c0_38 = arith.constant 0 : index
    %46 = vector.load %arg3[%c0_35, %c2_36, %c0_37, %c0_38] : memref<3x3x4x96xf32, #tpu.memory_space<vmem>>, vector<1x1x4x96xf32>
    %47 = vector.shape_cast %46 : vector<1x1x4x96xf32> to vector<4x96xf32>
    %cst_39 = arith.constant dense<0.000000e+00> : vector<256x96xf32>
    %48 = tpu.matmul %45, %47, %cst_39 {dimension_numbers = #tpu.dot_dimension_numbers<[1], [0], [0], [1], [0, 0, 1, 1], [], []>} : vector<256x4xf32>, vector<4x96xf32>, vector<256x96xf32> -> vector<256x96xf32>
    %49 = arith.addf %42, %48 : vector<256x96xf32>
    %50 = vector.extract_strided_slice %43 {offsets = [1, 0, 0], sizes = [16, 16, 4], strides = [1, 1, 1]} : vector<18x16x4xf32> to vector<16x16x4xf32>
    %51 = vector.shape_cast %50 : vector<16x16x4xf32> to vector<256x4xf32>
    %c1_40 = arith.constant 1 : index
    %c2_41 = arith.constant 2 : index
    %c0_42 = arith.constant 0 : index
    %c0_43 = arith.constant 0 : index
    %52 = vector.load %arg3[%c1_40, %c2_41, %c0_42, %c0_43] : memref<3x3x4x96xf32, #tpu.memory_space<vmem>>, vector<1x1x4x96xf32>
    %53 = vector.shape_cast %52 : vector<1x1x4x96xf32> to vector<4x96xf32>
    %cst_44 = arith.constant dense<0.000000e+00> : vector<256x96xf32>
    %54 = tpu.matmul %51, %53, %cst_44 {dimension_numbers = #tpu.dot_dimension_numbers<[1], [0], [0], [1], [0, 0, 1, 1], [], []>} : vector<256x4xf32>, vector<4x96xf32>, vector<256x96xf32> -> vector<256x96xf32>
    %55 = arith.addf %49, %54 : vector<256x96xf32>
    %56 = vector.extract_strided_slice %43 {offsets = [2, 0, 0], sizes = [16, 16, 4], strides = [1, 1, 1]} : vector<18x16x4xf32> to vector<16x16x4xf32>
    %57 = vector.shape_cast %56 : vector<16x16x4xf32> to vector<256x4xf32>
    %c2_45 = arith.constant 2 : index
    %c2_46 = arith.constant 2 : index
    %c0_47 = arith.constant 0 : index
    %c0_48 = arith.constant 0 : index
    %58 = vector.load %arg3[%c2_45, %c2_46, %c0_47, %c0_48] : memref<3x3x4x96xf32, #tpu.memory_space<vmem>>, vector<1x1x4x96xf32>
    %59 = vector.shape_cast %58 : vector<1x1x4x96xf32> to vector<4x96xf32>
    %cst_49 = arith.constant dense<0.000000e+00> : vector<256x96xf32>
    %60 = tpu.matmul %57, %59, %cst_49 {dimension_numbers = #tpu.dot_dimension_numbers<[1], [0], [0], [1], [0, 0, 1, 1], [], []>} : vector<256x4xf32>, vector<4x96xf32>, vector<256x96xf32> -> vector<256x96xf32>
    %61 = arith.addf %55, %60 : vector<256x96xf32>
    %c0_50 = arith.constant 0 : index
    %c0_51 = arith.constant 0 : index
    %62 = vector.load %arg6[%c0_50, %c0_51] : memref<1x96xf32, #tpu.memory_space<vmem>>, vector<1x96xf32>
    %63 = vector.broadcast %62 : vector<1x96xf32> to vector<256x96xf32>
    %64 = arith.addf %61, %63 : vector<256x96xf32>
    %cst_52 = arith.constant 0.000000e+00 : f32
    %65 = vector.broadcast %cst_52 : f32 to vector<256x64xf32>
    %66 = vector.extract_strided_slice %3 {offsets = [0, 0, 0], sizes = [18, 16, 32], strides = [1, 1, 1]} : vector<18x18x32xf32> to vector<18x16x32xf32>
    %67 = vector.extract_strided_slice %66 {offsets = [0, 0, 0], sizes = [16, 16, 32], strides = [1, 1, 1]} : vector<18x16x32xf32> to vector<16x16x32xf32>
    %68 = vector.shape_cast %67 : vector<16x16x32xf32> to vector<256x32xf32>
    %c0_53 = arith.constant 0 : index
    %c0_54 = arith.constant 0 : index
    %c0_55 = arith.constant 0 : index
    %c0_56 = arith.constant 0 : index
    %69 = vector.load %arg4[%c0_53, %c0_54, %c0_55, %c0_56] : memref<3x3x32x64xf32, #tpu.memory_space<vmem>>, vector<1x1x32x64xf32>
    %70 = vector.shape_cast %69 : vector<1x1x32x64xf32> to vector<32x64xf32>
    %cst_57 = arith.constant dense<0.000000e+00> : vector<256x64xf32>
    %71 = tpu.matmul %68, %70, %cst_57 {dimension_numbers = #tpu.dot_dimension_numbers<[1], [0], [0], [1], [0, 0, 1, 1], [], []>} : vector<256x32xf32>, vector<32x64xf32>, vector<256x64xf32> -> vector<256x64xf32>
    %72 = arith.addf %65, %71 : vector<256x64xf32>
    %73 = vector.extract_strided_slice %66 {offsets = [1, 0, 0], sizes = [16, 16, 32], strides = [1, 1, 1]} : vector<18x16x32xf32> to vector<16x16x32xf32>
    %74 = vector.shape_cast %73 : vector<16x16x32xf32> to vector<256x32xf32>
    %c1_58 = arith.constant 1 : index
    %c0_59 = arith.constant 0 : index
    %c0_60 = arith.constant 0 : index
    %c0_61 = arith.constant 0 : index
    %75 = vector.load %arg4[%c1_58, %c0_59, %c0_60, %c0_61] : memref<3x3x32x64xf32, #tpu.memory_space<vmem>>, vector<1x1x32x64xf32>
    %76 = vector.shape_cast %75 : vector<1x1x32x64xf32> to vector<32x64xf32>
    %cst_62 = arith.constant dense<0.000000e+00> : vector<256x64xf32>
    %77 = tpu.matmul %74, %76, %cst_62 {dimension_numbers = #tpu.dot_dimension_numbers<[1], [0], [0], [1], [0, 0, 1, 1], [], []>} : vector<256x32xf32>, vector<32x64xf32>, vector<256x64xf32> -> vector<256x64xf32>
    %78 = arith.addf %72, %77 : vector<256x64xf32>
    %79 = vector.extract_strided_slice %66 {offsets = [2, 0, 0], sizes = [16, 16, 32], strides = [1, 1, 1]} : vector<18x16x32xf32> to vector<16x16x32xf32>
    %80 = vector.shape_cast %79 : vector<16x16x32xf32> to vector<256x32xf32>
    %c2_63 = arith.constant 2 : index
    %c0_64 = arith.constant 0 : index
    %c0_65 = arith.constant 0 : index
    %c0_66 = arith.constant 0 : index
    %81 = vector.load %arg4[%c2_63, %c0_64, %c0_65, %c0_66] : memref<3x3x32x64xf32, #tpu.memory_space<vmem>>, vector<1x1x32x64xf32>
    %82 = vector.shape_cast %81 : vector<1x1x32x64xf32> to vector<32x64xf32>
    %cst_67 = arith.constant dense<0.000000e+00> : vector<256x64xf32>
    %83 = tpu.matmul %80, %82, %cst_67 {dimension_numbers = #tpu.dot_dimension_numbers<[1], [0], [0], [1], [0, 0, 1, 1], [], []>} : vector<256x32xf32>, vector<32x64xf32>, vector<256x64xf32> -> vector<256x64xf32>
    %84 = arith.addf %78, %83 : vector<256x64xf32>
    %85 = vector.extract_strided_slice %3 {offsets = [0, 1, 0], sizes = [18, 16, 32], strides = [1, 1, 1]} : vector<18x18x32xf32> to vector<18x16x32xf32>
    %86 = vector.extract_strided_slice %85 {offsets = [0, 0, 0], sizes = [16, 16, 32], strides = [1, 1, 1]} : vector<18x16x32xf32> to vector<16x16x32xf32>
    %87 = vector.shape_cast %86 : vector<16x16x32xf32> to vector<256x32xf32>
    %c0_68 = arith.constant 0 : index
    %c1_69 = arith.constant 1 : index
    %c0_70 = arith.constant 0 : index
    %c0_71 = arith.constant 0 : index
    %88 = vector.load %arg4[%c0_68, %c1_69, %c0_70, %c0_71] : memref<3x3x32x64xf32, #tpu.memory_space<vmem>>, vector<1x1x32x64xf32>
    %89 = vector.shape_cast %88 : vector<1x1x32x64xf32> to vector<32x64xf32>
    %cst_72 = arith.constant dense<0.000000e+00> : vector<256x64xf32>
    %90 = tpu.matmul %87, %89, %cst_72 {dimension_numbers = #tpu.dot_dimension_numbers<[1], [0], [0], [1], [0, 0, 1, 1], [], []>} : vector<256x32xf32>, vector<32x64xf32>, vector<256x64xf32> -> vector<256x64xf32>
    %91 = arith.addf %84, %90 : vector<256x64xf32>
    %92 = vector.extract_strided_slice %85 {offsets = [1, 0, 0], sizes = [16, 16, 32], strides = [1, 1, 1]} : vector<18x16x32xf32> to vector<16x16x32xf32>
    %93 = vector.shape_cast %92 : vector<16x16x32xf32> to vector<256x32xf32>
    %c1_73 = arith.constant 1 : index
    %c1_74 = arith.constant 1 : index
    %c0_75 = arith.constant 0 : index
    %c0_76 = arith.constant 0 : index
    %94 = vector.load %arg4[%c1_73, %c1_74, %c0_75, %c0_76] : memref<3x3x32x64xf32, #tpu.memory_space<vmem>>, vector<1x1x32x64xf32>
    %95 = vector.shape_cast %94 : vector<1x1x32x64xf32> to vector<32x64xf32>
    %cst_77 = arith.constant dense<0.000000e+00> : vector<256x64xf32>
    %96 = tpu.matmul %93, %95, %cst_77 {dimension_numbers = #tpu.dot_dimension_numbers<[1], [0], [0], [1], [0, 0, 1, 1], [], []>} : vector<256x32xf32>, vector<32x64xf32>, vector<256x64xf32> -> vector<256x64xf32>
    %97 = arith.addf %91, %96 : vector<256x64xf32>
    %98 = vector.extract_strided_slice %85 {offsets = [2, 0, 0], sizes = [16, 16, 32], strides = [1, 1, 1]} : vector<18x16x32xf32> to vector<16x16x32xf32>
    %99 = vector.shape_cast %98 : vector<16x16x32xf32> to vector<256x32xf32>
    %c2_78 = arith.constant 2 : index
    %c1_79 = arith.constant 1 : index
    %c0_80 = arith.constant 0 : index
    %c0_81 = arith.constant 0 : index
    %100 = vector.load %arg4[%c2_78, %c1_79, %c0_80, %c0_81] : memref<3x3x32x64xf32, #tpu.memory_space<vmem>>, vector<1x1x32x64xf32>
    %101 = vector.shape_cast %100 : vector<1x1x32x64xf32> to vector<32x64xf32>
    %cst_82 = arith.constant dense<0.000000e+00> : vector<256x64xf32>
    %102 = tpu.matmul %99, %101, %cst_82 {dimension_numbers = #tpu.dot_dimension_numbers<[1], [0], [0], [1], [0, 0, 1, 1], [], []>} : vector<256x32xf32>, vector<32x64xf32>, vector<256x64xf32> -> vector<256x64xf32>
    %103 = arith.addf %97, %102 : vector<256x64xf32>
    %104 = vector.extract_strided_slice %3 {offsets = [0, 2, 0], sizes = [18, 16, 32], strides = [1, 1, 1]} : vector<18x18x32xf32> to vector<18x16x32xf32>
    %105 = vector.extract_strided_slice %104 {offsets = [0, 0, 0], sizes = [16, 16, 32], strides = [1, 1, 1]} : vector<18x16x32xf32> to vector<16x16x32xf32>
    %106 = vector.shape_cast %105 : vector<16x16x32xf32> to vector<256x32xf32>
    %c0_83 = arith.constant 0 : index
    %c2_84 = arith.constant 2 : index
    %c0_85 = arith.constant 0 : index
    %c0_86 = arith.constant 0 : index
    %107 = vector.load %arg4[%c0_83, %c2_84, %c0_85, %c0_86] : memref<3x3x32x64xf32, #tpu.memory_space<vmem>>, vector<1x1x32x64xf32>
    %108 = vector.shape_cast %107 : vector<1x1x32x64xf32> to vector<32x64xf32>
    %cst_87 = arith.constant dense<0.000000e+00> : vector<256x64xf32>
    %109 = tpu.matmul %106, %108, %cst_87 {dimension_numbers = #tpu.dot_dimension_numbers<[1], [0], [0], [1], [0, 0, 1, 1], [], []>} : vector<256x32xf32>, vector<32x64xf32>, vector<256x64xf32> -> vector<256x64xf32>
    %110 = arith.addf %103, %109 : vector<256x64xf32>
    %111 = vector.extract_strided_slice %104 {offsets = [1, 0, 0], sizes = [16, 16, 32], strides = [1, 1, 1]} : vector<18x16x32xf32> to vector<16x16x32xf32>
    %112 = vector.shape_cast %111 : vector<16x16x32xf32> to vector<256x32xf32>
    %c1_88 = arith.constant 1 : index
    %c2_89 = arith.constant 2 : index
    %c0_90 = arith.constant 0 : index
    %c0_91 = arith.constant 0 : index
    %113 = vector.load %arg4[%c1_88, %c2_89, %c0_90, %c0_91] : memref<3x3x32x64xf32, #tpu.memory_space<vmem>>, vector<1x1x32x64xf32>
    %114 = vector.shape_cast %113 : vector<1x1x32x64xf32> to vector<32x64xf32>
    %cst_92 = arith.constant dense<0.000000e+00> : vector<256x64xf32>
    %115 = tpu.matmul %112, %114, %cst_92 {dimension_numbers = #tpu.dot_dimension_numbers<[1], [0], [0], [1], [0, 0, 1, 1], [], []>} : vector<256x32xf32>, vector<32x64xf32>, vector<256x64xf32> -> vector<256x64xf32>
    %116 = arith.addf %110, %115 : vector<256x64xf32>
    %117 = vector.extract_strided_slice %104 {offsets = [2, 0, 0], sizes = [16, 16, 32], strides = [1, 1, 1]} : vector<18x16x32xf32> to vector<16x16x32xf32>
    %118 = vector.shape_cast %117 : vector<16x16x32xf32> to vector<256x32xf32>
    %c2_93 = arith.constant 2 : index
    %c2_94 = arith.constant 2 : index
    %c0_95 = arith.constant 0 : index
    %c0_96 = arith.constant 0 : index
    %119 = vector.load %arg4[%c2_93, %c2_94, %c0_95, %c0_96] : memref<3x3x32x64xf32, #tpu.memory_space<vmem>>, vector<1x1x32x64xf32>
    %120 = vector.shape_cast %119 : vector<1x1x32x64xf32> to vector<32x64xf32>
    %cst_97 = arith.constant dense<0.000000e+00> : vector<256x64xf32>
    %121 = tpu.matmul %118, %120, %cst_97 {dimension_numbers = #tpu.dot_dimension_numbers<[1], [0], [0], [1], [0, 0, 1, 1], [], []>} : vector<256x32xf32>, vector<32x64xf32>, vector<256x64xf32> -> vector<256x64xf32>
    %122 = arith.addf %116, %121 : vector<256x64xf32>
    %123 = vector.extract_strided_slice %64 {offsets = [0, 0], sizes = [256, 64], strides = [1, 1]} : vector<256x96xf32> to vector<256x64xf32>
    %124 = arith.addf %123, %122 : vector<256x64xf32>
    %125 = arith.negf %124 : vector<256x64xf32>
    %126 = math.exp %125 : vector<256x64xf32>
    %cst_98 = arith.constant 1.000000e+00 : f32
    %127 = vector.broadcast %cst_98 : f32 to vector<256x64xf32>
    %128 = arith.addf %127, %126 : vector<256x64xf32>
    %129 = arith.divf %127, %128 : vector<256x64xf32>
    %130 = vector.extract_strided_slice %129 {offsets = [0, 0], sizes = [256, 32], strides = [1, 1]} : vector<256x64xf32> to vector<256x32xf32>
    %131 = vector.extract_strided_slice %129 {offsets = [0, 32], sizes = [256, 32], strides = [1, 1]} : vector<256x64xf32> to vector<256x32xf32>
    %132 = vector.extract_strided_slice %3 {offsets = [1, 1, 0], sizes = [16, 16, 32], strides = [1, 1, 1]} : vector<18x18x32xf32> to vector<16x16x32xf32>
    %133 = vector.shape_cast %132 : vector<16x16x32xf32> to vector<256x32xf32>
    %cst_99 = arith.constant 0.000000e+00 : f32
    %134 = vector.broadcast %cst_99 : f32 to vector<1x18x32xf32>
    %c0_100 = arith.constant 0 : index
    %c0_101 = arith.constant 0 : index
    %c0_102 = arith.constant 0 : index
    %135 = vector.load %arg8[%c0_100, %c0_101, %c0_102] : memref<18x18x32xf32, #tpu.memory_space<vmem>>, vector<1x18x32xf32>
    tpu.vector_store %arg8[%c0_100, %c0_101, %c0_102], %134 {strides = array<i32>} : memref<18x18x32xf32, #tpu.memory_space<vmem>>, vector<1x18x32xf32>,
    %cst_103 = arith.constant 0.000000e+00 : f32
    %136 = vector.broadcast %cst_103 : f32 to vector<1x18x32xf32>
    %c17 = arith.constant 17 : index
    %c0_104 = arith.constant 0 : index
    %c0_105 = arith.constant 0 : index
    %137 = vector.load %arg8[%c17, %c0_104, %c0_105] : memref<18x18x32xf32, #tpu.memory_space<vmem>>, vector<1x18x32xf32>
    tpu.vector_store %arg8[%c17, %c0_104, %c0_105], %136 {strides = array<i32>} : memref<18x18x32xf32, #tpu.memory_space<vmem>>, vector<1x18x32xf32>,
    %cst_106 = arith.constant 0.000000e+00 : f32
    %138 = vector.broadcast %cst_106 : f32 to vector<16x1x32xf32>
    %c1_107 = arith.constant 1 : index
    %c0_108 = arith.constant 0 : index
    %c0_109 = arith.constant 0 : index
    %139 = vector.load %arg8[%c1_107, %c0_108, %c0_109] : memref<18x18x32xf32, #tpu.memory_space<vmem>>, vector<16x1x32xf32>
    tpu.vector_store %arg8[%c1_107, %c0_108, %c0_109], %138 {strides = array<i32>} : memref<18x18x32xf32, #tpu.memory_space<vmem>>, vector<16x1x32xf32>,
    %cst_110 = arith.constant 0.000000e+00 : f32
    %140 = vector.broadcast %cst_110 : f32 to vector<16x1x32xf32>
    %c1_111 = arith.constant 1 : index
    %c17_112 = arith.constant 17 : index
    %c0_113 = arith.constant 0 : index
    %141 = vector.load %arg8[%c1_111, %c17_112, %c0_113] : memref<18x18x32xf32, #tpu.memory_space<vmem>>, vector<16x1x32xf32>
    tpu.vector_store %arg8[%c1_111, %c17_112, %c0_113], %140 {strides = array<i32>} : memref<18x18x32xf32, #tpu.memory_space<vmem>>, vector<16x1x32xf32>,
    %142 = arith.mulf %133, %130 : vector<256x32xf32>
    %143 = vector.shape_cast %142 : vector<256x32xf32> to vector<16x16x32xf32>
    %c1_114 = arith.constant 1 : index
    %c1_115 = arith.constant 1 : index
    %c0_116 = arith.constant 0 : index
    %144 = vector.load %arg8[%c1_114, %c1_115, %c0_116] : memref<18x18x32xf32, #tpu.memory_space<vmem>>, vector<16x16x32xf32>
    tpu.vector_store %arg8[%c1_114, %c1_115, %c0_116], %143 {strides = array<i32>} : memref<18x18x32xf32, #tpu.memory_space<vmem>>, vector<16x16x32xf32>,
    %145 = vector.extract_strided_slice %64 {offsets = [0, 64], sizes = [256, 32], strides = [1, 1]} : vector<256x96xf32> to vector<256x32xf32>
    %c0_117 = arith.constant 0 : index
    %c0_118 = arith.constant 0 : index
    %c0_119 = arith.constant 0 : index
    %146 = vector.load %arg8[%c0_117, %c0_118, %c0_119] : memref<18x18x32xf32, #tpu.memory_space<vmem>>, vector<18x18x32xf32>
    %cst_120 = arith.constant 0.000000e+00 : f32
    %147 = vector.broadcast %cst_120 : f32 to vector<256x32xf32>
    %148 = vector.extract_strided_slice %146 {offsets = [0, 0, 0], sizes = [18, 16, 32], strides = [1, 1, 1]} : vector<18x18x32xf32> to vector<18x16x32xf32>
    %149 = vector.extract_strided_slice %148 {offsets = [0, 0, 0], sizes = [16, 16, 32], strides = [1, 1, 1]} : vector<18x16x32xf32> to vector<16x16x32xf32>
    %150 = vector.shape_cast %149 : vector<16x16x32xf32> to vector<256x32xf32>
    %c0_121 = arith.constant 0 : index
    %c0_122 = arith.constant 0 : index
    %c0_123 = arith.constant 0 : index
    %c0_124 = arith.constant 0 : index
    %151 = vector.load %arg5[%c0_121, %c0_122, %c0_123, %c0_124] : memref<3x3x32x32xf32, #tpu.memory_space<vmem>>, vector<1x1x32x32xf32>
    %152 = vector.shape_cast %151 : vector<1x1x32x32xf32> to vector<32x32xf32>
    %cst_125 = arith.constant dense<0.000000e+00> : vector<256x32xf32>
    %153 = tpu.matmul %150, %152, %cst_125 {dimension_numbers = #tpu.dot_dimension_numbers<[1], [0], [0], [1], [0, 0, 1, 1], [], []>} : vector<256x32xf32>, vector<32x32xf32>, vector<256x32xf32> -> vector<256x32xf32>
    %154 = arith.addf %147, %153 : vector<256x32xf32>
    %155 = vector.extract_strided_slice %148 {offsets = [1, 0, 0], sizes = [16, 16, 32], strides = [1, 1, 1]} : vector<18x16x32xf32> to vector<16x16x32xf32>
    %156 = vector.shape_cast %155 : vector<16x16x32xf32> to vector<256x32xf32>
    %c1_126 = arith.constant 1 : index
    %c0_127 = arith.constant 0 : index
    %c0_128 = arith.constant 0 : index
    %c0_129 = arith.constant 0 : index
    %157 = vector.load %arg5[%c1_126, %c0_127, %c0_128, %c0_129] : memref<3x3x32x32xf32, #tpu.memory_space<vmem>>, vector<1x1x32x32xf32>
    %158 = vector.shape_cast %157 : vector<1x1x32x32xf32> to vector<32x32xf32>
    %cst_130 = arith.constant dense<0.000000e+00> : vector<256x32xf32>
    %159 = tpu.matmul %156, %158, %cst_130 {dimension_numbers = #tpu.dot_dimension_numbers<[1], [0], [0], [1], [0, 0, 1, 1], [], []>} : vector<256x32xf32>, vector<32x32xf32>, vector<256x32xf32> -> vector<256x32xf32>
    %160 = arith.addf %154, %159 : vector<256x32xf32>
    %161 = vector.extract_strided_slice %148 {offsets = [2, 0, 0], sizes = [16, 16, 32], strides = [1, 1, 1]} : vector<18x16x32xf32> to vector<16x16x32xf32>
    %162 = vector.shape_cast %161 : vector<16x16x32xf32> to vector<256x32xf32>
    %c2_131 = arith.constant 2 : index
    %c0_132 = arith.constant 0 : index
    %c0_133 = arith.constant 0 : index
    %c0_134 = arith.constant 0 : index
    %163 = vector.load %arg5[%c2_131, %c0_132, %c0_133, %c0_134] : memref<3x3x32x32xf32, #tpu.memory_space<vmem>>, vector<1x1x32x32xf32>
    %164 = vector.shape_cast %163 : vector<1x1x32x32xf32> to vector<32x32xf32>
    %cst_135 = arith.constant dense<0.000000e+00> : vector<256x32xf32>
    %165 = tpu.matmul %162, %164, %cst_135 {dimension_numbers = #tpu.dot_dimension_numbers<[1], [0], [0], [1], [0, 0, 1, 1], [], []>} : vector<256x32xf32>, vector<32x32xf32>, vector<256x32xf32> -> vector<256x32xf32>
    %166 = arith.addf %160, %165 : vector<256x32xf32>
    %167 = vector.extract_strided_slice %146 {offsets = [0, 1, 0], sizes = [18, 16, 32], strides = [1, 1, 1]} : vector<18x18x32xf32> to vector<18x16x32xf32>
    %168 = vector.extract_strided_slice %167 {offsets = [0, 0, 0], sizes = [16, 16, 32], strides = [1, 1, 1]} : vector<18x16x32xf32> to vector<16x16x32xf32>
    %169 = vector.shape_cast %168 : vector<16x16x32xf32> to vector<256x32xf32>
    %c0_136 = arith.constant 0 : index
    %c1_137 = arith.constant 1 : index
    %c0_138 = arith.constant 0 : index
    %c0_139 = arith.constant 0 : index
    %170 = vector.load %arg5[%c0_136, %c1_137, %c0_138, %c0_139] : memref<3x3x32x32xf32, #tpu.memory_space<vmem>>, vector<1x1x32x32xf32>
    %171 = vector.shape_cast %170 : vector<1x1x32x32xf32> to vector<32x32xf32>
    %cst_140 = arith.constant dense<0.000000e+00> : vector<256x32xf32>
    %172 = tpu.matmul %169, %171, %cst_140 {dimension_numbers = #tpu.dot_dimension_numbers<[1], [0], [0], [1], [0, 0, 1, 1], [], []>} : vector<256x32xf32>, vector<32x32xf32>, vector<256x32xf32> -> vector<256x32xf32>
    %173 = arith.addf %166, %172 : vector<256x32xf32>
    %174 = vector.extract_strided_slice %167 {offsets = [1, 0, 0], sizes = [16, 16, 32], strides = [1, 1, 1]} : vector<18x16x32xf32> to vector<16x16x32xf32>
    %175 = vector.shape_cast %174 : vector<16x16x32xf32> to vector<256x32xf32>
    %c1_141 = arith.constant 1 : index
    %c1_142 = arith.constant 1 : index
    %c0_143 = arith.constant 0 : index
    %c0_144 = arith.constant 0 : index
    %176 = vector.load %arg5[%c1_141, %c1_142, %c0_143, %c0_144] : memref<3x3x32x32xf32, #tpu.memory_space<vmem>>, vector<1x1x32x32xf32>
    %177 = vector.shape_cast %176 : vector<1x1x32x32xf32> to vector<32x32xf32>
    %cst_145 = arith.constant dense<0.000000e+00> : vector<256x32xf32>
    %178 = tpu.matmul %175, %177, %cst_145 {dimension_numbers = #tpu.dot_dimension_numbers<[1], [0], [0], [1], [0, 0, 1, 1], [], []>} : vector<256x32xf32>, vector<32x32xf32>, vector<256x32xf32> -> vector<256x32xf32>
    %179 = arith.addf %173, %178 : vector<256x32xf32>
    %180 = vector.extract_strided_slice %167 {offsets = [2, 0, 0], sizes = [16, 16, 32], strides = [1, 1, 1]} : vector<18x16x32xf32> to vector<16x16x32xf32>
    %181 = vector.shape_cast %180 : vector<16x16x32xf32> to vector<256x32xf32>
    %c2_146 = arith.constant 2 : index
    %c1_147 = arith.constant 1 : index
    %c0_148 = arith.constant 0 : index
    %c0_149 = arith.constant 0 : index
    %182 = vector.load %arg5[%c2_146, %c1_147, %c0_148, %c0_149] : memref<3x3x32x32xf32, #tpu.memory_space<vmem>>, vector<1x1x32x32xf32>
    %183 = vector.shape_cast %182 : vector<1x1x32x32xf32> to vector<32x32xf32>
    %cst_150 = arith.constant dense<0.000000e+00> : vector<256x32xf32>
    %184 = tpu.matmul %181, %183, %cst_150 {dimension_numbers = #tpu.dot_dimension_numbers<[1], [0], [0], [1], [0, 0, 1, 1], [], []>} : vector<256x32xf32>, vector<32x32xf32>, vector<256x32xf32> -> vector<256x32xf32>
    %185 = arith.addf %179, %184 : vector<256x32xf32>
    %186 = vector.extract_strided_slice %146 {offsets = [0, 2, 0], sizes = [18, 16, 32], strides = [1, 1, 1]} : vector<18x18x32xf32> to vector<18x16x32xf32>
    %187 = vector.extract_strided_slice %186 {offsets = [0, 0, 0], sizes = [16, 16, 32], strides = [1, 1, 1]} : vector<18x16x32xf32> to vector<16x16x32xf32>
    %188 = vector.shape_cast %187 : vector<16x16x32xf32> to vector<256x32xf32>
    %c0_151 = arith.constant 0 : index
    %c2_152 = arith.constant 2 : index
    %c0_153 = arith.constant 0 : index
    %c0_154 = arith.constant 0 : index
    %189 = vector.load %arg5[%c0_151, %c2_152, %c0_153, %c0_154] : memref<3x3x32x32xf32, #tpu.memory_space<vmem>>, vector<1x1x32x32xf32>
    %190 = vector.shape_cast %189 : vector<1x1x32x32xf32> to vector<32x32xf32>
    %cst_155 = arith.constant dense<0.000000e+00> : vector<256x32xf32>
    %191 = tpu.matmul %188, %190, %cst_155 {dimension_numbers = #tpu.dot_dimension_numbers<[1], [0], [0], [1], [0, 0, 1, 1], [], []>} : vector<256x32xf32>, vector<32x32xf32>, vector<256x32xf32> -> vector<256x32xf32>
    %192 = arith.addf %185, %191 : vector<256x32xf32>
    %193 = vector.extract_strided_slice %186 {offsets = [1, 0, 0], sizes = [16, 16, 32], strides = [1, 1, 1]} : vector<18x16x32xf32> to vector<16x16x32xf32>
    %194 = vector.shape_cast %193 : vector<16x16x32xf32> to vector<256x32xf32>
    %c1_156 = arith.constant 1 : index
    %c2_157 = arith.constant 2 : index
    %c0_158 = arith.constant 0 : index
    %c0_159 = arith.constant 0 : index
    %195 = vector.load %arg5[%c1_156, %c2_157, %c0_158, %c0_159] : memref<3x3x32x32xf32, #tpu.memory_space<vmem>>, vector<1x1x32x32xf32>
    %196 = vector.shape_cast %195 : vector<1x1x32x32xf32> to vector<32x32xf32>
    %cst_160 = arith.constant dense<0.000000e+00> : vector<256x32xf32>
    %197 = tpu.matmul %194, %196, %cst_160 {dimension_numbers = #tpu.dot_dimension_numbers<[1], [0], [0], [1], [0, 0, 1, 1], [], []>} : vector<256x32xf32>, vector<32x32xf32>, vector<256x32xf32> -> vector<256x32xf32>
    %198 = arith.addf %192, %197 : vector<256x32xf32>
    %199 = vector.extract_strided_slice %186 {offsets = [2, 0, 0], sizes = [16, 16, 32], strides = [1, 1, 1]} : vector<18x16x32xf32> to vector<16x16x32xf32>
    %200 = vector.shape_cast %199 : vector<16x16x32xf32> to vector<256x32xf32>
    %c2_161 = arith.constant 2 : index
    %c2_162 = arith.constant 2 : index
    %c0_163 = arith.constant 0 : index
    %c0_164 = arith.constant 0 : index
    %201 = vector.load %arg5[%c2_161, %c2_162, %c0_163, %c0_164] : memref<3x3x32x32xf32, #tpu.memory_space<vmem>>, vector<1x1x32x32xf32>
    %202 = vector.shape_cast %201 : vector<1x1x32x32xf32> to vector<32x32xf32>
    %cst_165 = arith.constant dense<0.000000e+00> : vector<256x32xf32>
    %203 = tpu.matmul %200, %202, %cst_165 {dimension_numbers = #tpu.dot_dimension_numbers<[1], [0], [0], [1], [0, 0, 1, 1], [], []>} : vector<256x32xf32>, vector<32x32xf32>, vector<256x32xf32> -> vector<256x32xf32>
    %204 = arith.addf %198, %203 : vector<256x32xf32>
    %205 = arith.addf %145, %204 : vector<256x32xf32>
    %206 = math.tanh %205 : vector<256x32xf32>
    %207 = arith.subf %206, %133 : vector<256x32xf32>
    %208 = arith.mulf %131, %207 : vector<256x32xf32>
    %209 = arith.addf %133, %208 : vector<256x32xf32>
    %210 = vector.shape_cast %209 : vector<256x32xf32> to vector<16x16x32xf32>
    %c0_166 = arith.constant 0 : index
    %c0_167 = arith.constant 0 : index
    %c0_168 = arith.constant 0 : index
    %c0_169 = arith.constant 0 : index
    %211 = vector.load %arg7[%c0_166, %c0_167, %c0_168, %c0_169] : memref<1x16x16x32xf32, #tpu.memory_space<vmem>>, vector<1x16x16x32xf32>
    %212 = vector.shape_cast %211 : vector<1x16x16x32xf32> to vector<16x16x32xf32>
    %213 = vector.shape_cast %210 : vector<16x16x32xf32> to vector<1x16x16x32xf32>
    tpu.vector_store %arg7[%c0_166, %c0_167, %c0_168, %c0_169], %213 {strides = array<i32>} : memref<1x16x16x32xf32, #tpu.memory_space<vmem>>, vector<1x16x16x32xf32>,
    return
  }
  func.func @transform_0(%arg0: i32) -> (i32, i32, i32, i32) {
    %c0_i32 = arith.constant 0 : i32
    %c0_i32_0 = arith.constant 0 : i32
    %c0_i32_1 = arith.constant 0 : i32
    %c0_i32_2 = arith.constant 0 : i32
    return %arg0, %c0_i32, %c0_i32_0, %c0_i32_1 : i32, i32, i32, i32
  }
  func.func @transform_1(%arg0: i32) -> (i32, i32, i32, i32) {
    %c0_i32 = arith.constant 0 : i32
    %c0_i32_0 = arith.constant 0 : i32
    %c0_i32_1 = arith.constant 0 : i32
    %c0_i32_2 = arith.constant 0 : i32
    return %arg0, %c0_i32, %c0_i32_0, %c0_i32_1 : i32, i32, i32, i32
  }
  func.func @transform_2(%arg0: i32) -> (i32, i32, i32, i32) {
    %c0_i32 = arith.constant 0 : i32
    %c0_i32_0 = arith.constant 0 : i32
    %c0_i32_1 = arith.constant 0 : i32
    %c0_i32_2 = arith.constant 0 : i32
    %c0_i32_3 = arith.constant 0 : i32
    return %c0_i32, %c0_i32_0, %c0_i32_1, %c0_i32_2 : i32, i32, i32, i32
  }
  func.func @transform_3(%arg0: i32) -> (i32, i32, i32, i32) {
    %c0_i32 = arith.constant 0 : i32
    %c0_i32_0 = arith.constant 0 : i32
    %c0_i32_1 = arith.constant 0 : i32
    %c0_i32_2 = arith.constant 0 : i32
    %c0_i32_3 = arith.constant 0 : i32
    return %c0_i32, %c0_i32_0, %c0_i32_1, %c0_i32_2 : i32, i32, i32, i32
  }
  func.func @transform_4(%arg0: i32) -> (i32, i32, i32, i32) {
    %c0_i32 = arith.constant 0 : i32
    %c0_i32_0 = arith.constant 0 : i32
    %c0_i32_1 = arith.constant 0 : i32
    %c0_i32_2 = arith.constant 0 : i32
    %c0_i32_3 = arith.constant 0 : i32
    return %c0_i32, %c0_i32_0, %c0_i32_1, %c0_i32_2 : i32, i32, i32, i32
  }
  func.func @transform_5(%arg0: i32) -> (i32, i32) {
    %c0_i32 = arith.constant 0 : i32
    %c0_i32_0 = arith.constant 0 : i32
    %c0_i32_1 = arith.constant 0 : i32
    return %c0_i32, %c0_i32_0 : i32, i32
  }
  func.func @transform_6(%arg0: i32) -> (i32, i32, i32, i32) {
    %c0_i32 = arith.constant 0 : i32
    %c0_i32_0 = arith.constant 0 : i32
    %c0_i32_1 = arith.constant 0 : i32
    %c0_i32_2 = arith.constant 0 : i32
    return %arg0, %c0_i32, %c0_i32_0, %c0_i32_1 : i32, i32, i32, i32
  }
}

</mosaic_0001>

<llo_original>
// kernel: tpu_custom_call.1
$region0: #{tpu_custom_call.1}
  #allocation0 [shape = 'u32[]', space=smem, size = 0x4, offset = 0x4, fixed_abs, tag = 'smem constant byte address 0x4 - core index']
  #allocation1 [shape = 'u32[144,128]{1,0:T(1,128)}', space=vmem, size = 0x12000, scoped, tag = 'internal scratch']
  #allocation2 [shape = 'f32[18,18,32]{2,1,0:T(8,128)}', space=vmem, size = 0x36000, scoped, tag = 'scratch operand']
  %s0 = inlined_call_operand.vmem [shape: f32[2,18,18,4], index: 0, kind: input, shape index: {}]
  %s1 = inlined_call_operand.vmem [shape: f32[2,18,18,32], index: 1, kind: input, shape index: {}]
  %s2 = inlined_call_operand.vmem [shape: f32[3,3,4,96], index: 2, kind: input, shape index: {}]
  %s3 = inlined_call_operand.vmem [shape: f32[3,3,32,64], index: 3, kind: input, shape index: {}]
  %s4 = inlined_call_operand.vmem [shape: f32[3,3,32,32], index: 4, kind: input, shape index: {}]
  %s5 = inlined_call_operand.vmem [shape: f32[1,96], index: 5, kind: input, shape index: {}]
  %s6 = inlined_call_operand.hbm [shape: f32[2,16,16,32], index: 6, kind: output, shape index: {}]
  %s7 = sld [smem:[#allocation0]]
  $region57: #{tpu_custom_call.1} parent=0
    _
  %s9 = ssub.s32 1, %s7
  %s10 = scalar_select 0, %s9, %s7
  $region1: #{tpu_custom_call.1} parent=0
    #allocation3 [shape = 'u8[262144]{0}', space=vmem, size = 0x40000, scoped, tag = 'output window, operand 0']
    #allocation4 [shape = 's32[2]{0}', space=sflag, size = 0x8, scoped, tag = 'scoped memory for tpu_custom_call.1']
    %11 = vsyncpa [#allocation4], 0
    %s12 = scalar_lea.sflag [#allocation4], 1
    %13 = vsyncpa %s12, 0
    loop: start=0, step=1, limit=4
    $region2: #{tpu_custom_call.1} parent=1 // loop_pre_header
      _
    $region3: #{tpu_custom_call.1} parent=1 // loop_header
      %s15 = sphi 0, %s19
      %p16 = scmp.ge.s32.totalorder %s15, 4
      %s25 = sphi 0, %s27
      %s28 = sphi 0, %s25
      %s29 = sphi 0, %s28
      %s45 = sphi 0, %s29
      %s51 = sphi 0, %s53
      %s54 = sphi 0, %s51
      %s55 = sphi 0, %s54
      %s71 = sphi 0, %s55
      %s75 = sphi 0, %s75
      %s77 = sphi 0, %s75
      %s78 = sphi 0, %s77
      %s92 = sphi 0, %s78
      %s96 = sphi 0, %s96
      %s98 = sphi 0, %s96
      %s99 = sphi 0, %s98
      %s113 = sphi 0, %s99
      %s117 = sphi 0, %s117
      %s119 = sphi 0, %s117
      %s120 = sphi 0, %s119
      %s134 = sphi 0, %s120
      %s138 = sphi 0, %s138
      %s140 = sphi 0, %s138
      %s141 = sphi 0, %s140
      %s155 = sphi 0, %s141
      %s161 = sphi 0, %s163
      %s164 = sphi 0, %s161
      %s165 = sphi 0, %s164
      %s181 = sphi 0, %s165
    $region4: #{tpu_custom_call.1} parent=1 // loop_header_branch
      %18 = sbr.rel (%p16) target = $region8
    $region5: #{tpu_custom_call.1} parent=1 // loop_body
      %s20 = ssub.s32 %s15, 1
      %s21 = ssub.s32 %s15, 2
      %s22 = sadd.s32 %s15, 1
      %s23 = ssub.s32 %s15, %s22
      %p24 = scmp.eq.s32.totalorder %s23, 0
      %s26 = sadd.s32 %s25, 1
      %s27 = scalar_select %p24, %s25, %s26
      %p30 = pneg %p24
      %p31 = scmp.eq.s32.totalorder %s15, 1
      %p32 = por %p30, %p31
      %p33 = scmp.ne.s32.totalorder %s25, %s28
      %p34 = scmp.eq.s32.totalorder %s15, 0
      %p35 = por %p33, %p34
      %p36 = scmp.ne.s32.totalorder %s25, %s28
      %p37 = scmp.eq.s32.totalorder %s20, 1
      %p38 = por %p36, %p37
      %p39 = scmp.ne.s32.totalorder %s28, %s29
      %p40 = scmp.eq.s32.totalorder %s20, 0
      %p41 = por %p39, %p40
      %p42 = scmp.ne.s32.totalorder %s28, %s29
      %p43 = scmp.eq.s32.totalorder %s21, 1
      %p44 = por %p42, %p43
      %p46 = scmp.ne.s32.totalorder %s29, %s45
      %p47 = scmp.eq.s32.totalorder %s21, 0
      %p48 = por %p46, %p47
      %s49 = ssub.s32 %s15, %s22
      %p50 = scmp.eq.s32.totalorder %s49, 0
      %s52 = sadd.s32 %s51, 1
      %s53 = scalar_select %p50, %s51, %s52
      %p56 = pneg %p50
      %p57 = scmp.eq.s32.totalorder %s15, 1
      %p58 = por %p56, %p57
      %p59 = scmp.ne.s32.totalorder %s51, %s54
      %p60 = scmp.eq.s32.totalorder %s15, 0
      %p61 = por %p59, %p60
      %p62 = scmp.ne.s32.totalorder %s51, %s54
      %p63 = scmp.eq.s32.totalorder %s20, 1
      %p64 = por %p62, %p63
      %p65 = scmp.ne.s32.totalorder %s54, %s55
      %p66 = scmp.eq.s32.totalorder %s20, 0
      %p67 = por %p65, %p66
      %p68 = scmp.ne.s32.totalorder %s54, %s55
      %p69 = scmp.eq.s32.totalorder %s21, 1
      %p70 = por %p68, %p69
      %p72 = scmp.ne.s32.totalorder %s55, %s71
      %p73 = scmp.eq.s32.totalorder %s21, 0
      %p74 = por %p72, %p73
      %s76 = sadd.s32 %s75, 1
      %p79 = scmp.eq.s32.totalorder %s15, 1
      %p80 = scmp.ne.s32.totalorder %s75, %s77
      %p81 = scmp.eq.s32.totalorder %s15, 0
      %p82 = por %p80, %p81
      %p83 = scmp.ne.s32.totalorder %s75, %s77
      %p84 = scmp.eq.s32.totalorder %s20, 1
      %p85 = por %p83, %p84
      %p86 = scmp.ne.s32.totalorder %s77, %s78
      %p87 = scmp.eq.s32.totalorder %s20, 0
      %p88 = por %p86, %p87
      %p89 = scmp.ne.s32.totalorder %s77, %s78
      %p90 = scmp.eq.s32.totalorder %s21, 1
      %p91 = por %p89, %p90
      %p93 = scmp.ne.s32.totalorder %s78, %s92
      %p94 = scmp.eq.s32.totalorder %s21, 0
      %p95 = por %p93, %p94
      %s97 = sadd.s32 %s96, 1
      %p100 = scmp.eq.s32.totalorder %s15, 1
      %p101 = scmp.ne.s32.totalorder %s96, %s98
      %p102 = scmp.eq.s32.totalorder %s15, 0
      %p103 = por %p101, %p102
      %p104 = scmp.ne.s32.totalorder %s96, %s98
      %p105 = scmp.eq.s32.totalorder %s20, 1
      %p106 = por %p104, %p105
      %p107 = scmp.ne.s32.totalorder %s98, %s99
      %p108 = scmp.eq.s32.totalorder %s20, 0
      %p109 = por %p107, %p108
      %p110 = scmp.ne.s32.totalorder %s98, %s99
      %p111 = scmp.eq.s32.totalorder %s21, 1
      %p112 = por %p110, %p111
      %p114 = scmp.ne.s32.totalorder %s99, %s113
      %p115 = scmp.eq.s32.totalorder %s21, 0
      %p116 = por %p114, %p115
      %s118 = sadd.s32 %s117, 1
      %p121 = scmp.eq.s32.totalorder %s15, 1
      %p122 = scmp.ne.s32.totalorder %s117, %s119
      %p123 = scmp.eq.s32.totalorder %s15, 0
      %p124 = por %p122, %p123
      %p125 = scmp.ne.s32.totalorder %s117, %s119
      %p126 = scmp.eq.s32.totalorder %s20, 1
      %p127 = por %p125, %p126
      %p128 = scmp.ne.s32.totalorder %s119, %s120
      %p129 = scmp.eq.s32.totalorder %s20, 0
      %p130 = por %p128, %p129
      %p131 = scmp.ne.s32.totalorder %s119, %s120
      %p132 = scmp.eq.s32.totalorder %s21, 1
      %p133 = por %p131, %p132
      %p135 = scmp.ne.s32.totalorder %s120, %s134
      %p136 = scmp.eq.s32.totalorder %s21, 0
      %p137 = por %p135, %p136
      %s139 = sadd.s32 %s138, 1
      %p142 = scmp.eq.s32.totalorder %s15, 1
      %p143 = scmp.ne.s32.totalorder %s138, %s140
      %p144 = scmp.eq.s32.totalorder %s15, 0
      %p145 = por %p143, %p144
      %p146 = scmp.ne.s32.totalorder %s138, %s140
      %p147 = scmp.eq.s32.totalorder %s20, 1
      %p148 = por %p146, %p147
      %p149 = scmp.ne.s32.totalorder %s140, %s141
      %p150 = scmp.eq.s32.totalorder %s20, 0
      %p151 = por %p149, %p150
      %p152 = scmp.ne.s32.totalorder %s140, %s141
      %p153 = scmp.eq.s32.totalorder %s21, 1
      %p154 = por %p152, %p153
      %p156 = scmp.ne.s32.totalorder %s141, %s155
      %p157 = scmp.eq.s32.totalorder %s21, 0
      %p158 = por %p156, %p157
      %s159 = ssub.s32 %s15, %s22
      %p160 = scmp.eq.s32.totalorder %s159, 0
      %s162 = sadd.s32 %s161, 1
      %s163 = scalar_select %p160, %s161, %s162
      %p166 = pneg %p160
      %p167 = scmp.eq.s32.totalorder %s15, 1
      %p168 = por %p166, %p167
      %p169 = scmp.ne.s32.totalorder %s161, %s164
      %p170 = scmp.eq.s32.totalorder %s15, 0
      %p171 = por %p169, %p170
      %p172 = scmp.ne.s32.totalorder %s161, %s164
      %p173 = scmp.eq.s32.totalorder %s20, 1
      %p174 = por %p172, %p173
      %p175 = scmp.ne.s32.totalorder %s164, %s165
      %p176 = scmp.eq.s32.totalorder %s20, 0
      %p177 = por %p175, %p176
      %p178 = scmp.ne.s32.totalorder %s164, %s165
      %p179 = scmp.eq.s32.totalorder %s21, 1
      %p180 = por %p178, %p179
      %p182 = scmp.ne.s32.totalorder %s165, %s181
      %p183 = scmp.eq.s32.totalorder %s21, 0
      %p184 = por %p182, %p183
      %p185 = scmp.le.s32.totalorder 1, %s15
      %p186 = scmp.lt.s32.totalorder %s15, 3
      %p187 = pnand %p185, %p186
      %p188 = pneg %p187
      // Predicated region
      $region9: #{tpu_custom_call.1} parent=5 // pred_check
        _
      $region10: #{tpu_custom_call.1} parent=5 // pred_check_branch
        %190 = sbr.rel (%p187) target = $region12
      $region11: #{tpu_custom_call.1} parent=5 // pred_region
        %s191 = ssub.s32 %s15, 1
        // Predicated region
        $region13: #{tpu_custom_call.1} parent=11 // pred_check
          %p192 = pneg %p88
        $region14: #{tpu_custom_call.1} parent=11 // pred_check_branch
          %194 = sbr.rel (%p192) target = $region16
        $region15: #{tpu_custom_call.1} parent=11 // pred_region
          _
        $region16: #{tpu_custom_call.1} parent=11 // pred_fallthru
          _
        // Predicated region
        $region17: #{tpu_custom_call.1} parent=11 // pred_check
          %p195 = pneg %p109
        $region18: #{tpu_custom_call.1} parent=11 // pred_check_branch
          %197 = sbr.rel (%p195) target = $region20
        $region19: #{tpu_custom_call.1} parent=11 // pred_region
          _
        $region20: #{tpu_custom_call.1} parent=11 // pred_fallthru
          _
        // Predicated region
        $region21: #{tpu_custom_call.1} parent=11 // pred_check
          %p198 = pneg %p130
        $region22: #{tpu_custom_call.1} parent=11 // pred_check_branch
          %200 = sbr.rel (%p198) target = $region24
        $region23: #{tpu_custom_call.1} parent=11 // pred_region
          _
        $region24: #{tpu_custom_call.1} parent=11 // pred_fallthru
          _
        // Predicated region
        $region25: #{tpu_custom_call.1} parent=11 // pred_check
          %p201 = pneg %p151
        $region26: #{tpu_custom_call.1} parent=11 // pred_check_branch
          %203 = sbr.rel (%p201) target = $region28
        $region27: #{tpu_custom_call.1} parent=11 // pred_region
          _
        $region28: #{tpu_custom_call.1} parent=11 // pred_fallthru
          _
      $region12: #{tpu_custom_call.1} parent=5 // pred_fallthru
        _
      %p204 = scmp.lt.s32.totalorder %s15, 2
      // Predicated region
      $region29: #{tpu_custom_call.1} parent=5 // pred_check
        %p205 = pneg %p204
      $region30: #{tpu_custom_call.1} parent=5 // pred_check_branch
        %207 = sbr.rel (%p205) target = $region32
      $region31: #{tpu_custom_call.1} parent=5 // pred_region
        // Predicated region
        $region33: #{tpu_custom_call.1} parent=31 // pred_check
          %p208 = pneg %p35
        $region34: #{tpu_custom_call.1} parent=31 // pred_check_branch
          %210 = sbr.rel (%p208) target = $region36
        $region35: #{tpu_custom_call.1} parent=31 // pred_region
          %p211 = scmp.lt.s32.totalorder %s15, 1
          %s212 = scalar_select %p211, %s15, 1
          %s213 = smul.addr %s212, 54
          %s214 = smul.addr %s213, 8
          %s215 = scalar_lea.vmem %s0, %s214
        $region36: #{tpu_custom_call.1} parent=31 // pred_fallthru
          _
        // Predicated region
        $region37: #{tpu_custom_call.1} parent=31 // pred_check
          %p216 = pneg %p61
        $region38: #{tpu_custom_call.1} parent=31 // pred_check_branch
          %218 = sbr.rel (%p216) target = $region40
        $region39: #{tpu_custom_call.1} parent=31 // pred_region
          %p219 = scmp.lt.s32.totalorder %s15, 1
          %s220 = scalar_select %p219, %s15, 1
          %s221 = smul.addr %s220, 54
          %s222 = smul.addr %s221, 8
          %s223 = scalar_lea.vmem %s1, %s222
        $region40: #{tpu_custom_call.1} parent=31 // pred_fallthru
          _
      $region32: #{tpu_custom_call.1} parent=5 // pred_fallthru
        _
      %p224 = scmp.le.s32.totalorder 1, %s15
      %p225 = scmp.lt.s32.totalorder %s15, 3
      %p226 = pnand %p224, %p225
      %p227 = pneg %p226
      // Predicated region
      $region41: #{tpu_custom_call.1} parent=5 // pred_check
        _
      $region42: #{tpu_custom_call.1} parent=5 // pred_check_branch
        %229 = sbr.rel (%p226) target = $region44
      $region43: #{tpu_custom_call.1} parent=5 // pred_region
        %s230 = ssub.s32 %s15, 1
        %p231 = scmp.lt.s32.totalorder %s20, 1
        %s232 = scalar_select %p231, %s20, 1
        %s233 = smul.addr %s232, 54
        %s234 = smul.addr %s233, 8
        %s235 = scalar_lea.vmem %s0, %s234
        %p236 = pneg %p41
        %p237 = pneg %p38
        %p238 = scmp.lt.s32.totalorder %s20, 1
        %s239 = scalar_select %p238, %s20, 1
        %s240 = smul.addr %s239, 54
        %s241 = smul.addr %s240, 8
        %s242 = scalar_lea.vmem %s1, %s241
        %p243 = pneg %p67
        %p244 = pneg %p64
        %p245 = pneg %p88
        %p246 = pneg %p85
        %p247 = pneg %p109
        %p248 = pneg %p106
        %p249 = pneg %p130
        %p250 = pneg %p127
        %p251 = pneg %p151
        %p252 = pneg %p148
        %p253 = pneg %p177
        %p254 = pneg %p174
        %s255 = sand.u32 %s164, 1
        %s256 = scalar_lea.sflag [#allocation4], %s255
        %s257 = sand.u32 %s164, 1
        %s258 = smul.addr %s257, 256
        %s259 = scalar_lea.vmem [#allocation3], %s258
        %p260 = scmp.lt.s32.totalorder %s20, 1
        %s261 = scalar_select %p260, %s20, 1
        %s262 = smul.addr %s261, 54
        %s263 = smul.addr %s262, 8
        %s264 = scalar_lea.vmem %s0, %s263
        %p265 = scmp.lt.s32.totalorder %s20, 1
        %s266 = scalar_select %p265, %s20, 1
        %s267 = smul.addr %s266, 54
        %s268 = smul.addr %s267, 8
        %s269 = scalar_lea.vmem %s1, %s268
        %v270 = vld [vmem:[%s264] sm:$0xff]
        %v271 = vld [vmem:[%s264 + $0x8] sm:$0xff]
        %v272 = vld [vmem:[%s264 + $0x10] sm:$0x3]
        %v273 = vld [vmem:[%s264 + $0x18] sm:$0xff]
        %v274 = vld [vmem:[%s264 + $0x20] sm:$0xff]
        %v275 = vld [vmem:[%s264 + $0x28] sm:$0x3]
        %v276 = vld [vmem:[%s264 + $0x30] sm:$0xff]
        %v277 = vld [vmem:[%s264 + $0x38] sm:$0xff]
        %v278 = vld [vmem:[%s264 + $0x40] sm:$0x3]
        %v279 = vld [vmem:[%s264 + $0x48] sm:$0xff]
        %v280 = vld [vmem:[%s264 + $0x50] sm:$0xff]
        %v281 = vld [vmem:[%s264 + $0x58] sm:$0x3]
        %v282 = vld [vmem:[%s264 + $0x60] sm:$0xff]
        %v283 = vld [vmem:[%s264 + $0x68] sm:$0xff]
        %v284 = vld [vmem:[%s264 + $0x70] sm:$0x3]
        %v285 = vld [vmem:[%s264 + $0x78] sm:$0xff]
        %v286 = vld [vmem:[%s264 + $0x80] sm:$0xff]
        %v287 = vld [vmem:[%s264 + $0x88] sm:$0x3]
        %v288 = vld [vmem:[%s264 + $0x90] sm:$0xff]
        %v289 = vld [vmem:[%s264 + $0x98] sm:$0xff]
        %v290 = vld [vmem:[%s264 + $0xa0] sm:$0x3]
        %v291 = vld [vmem:[%s264 + $0xa8] sm:$0xff]
        %v292 = vld [vmem:[%s264 + $0xb0] sm:$0xff]
        %v293 = vld [vmem:[%s264 + $0xb8] sm:$0x3]
        %v294 = vld [vmem:[%s264 + $0xc0] sm:$0xff]
        %v295 = vld [vmem:[%s264 + $0xc8] sm:$0xff]
        %v296 = vld [vmem:[%s264 + $0xd0] sm:$0x3]
        %v297 = vld [vmem:[%s264 + $0xd8] sm:$0xff]
        %v298 = vld [vmem:[%s264 + $0xe0] sm:$0xff]
        %v299 = vld [vmem:[%s264 + $0xe8] sm:$0x3]
        %v300 = vld [vmem:[%s264 + $0xf0] sm:$0xff]
        %v301 = vld [vmem:[%s264 + $0xf8] sm:$0xff]
        %v302 = vld [vmem:[%s264 + $0x100] sm:$0x3]
        %v303 = vld [vmem:[%s264 + $0x108] sm:$0xff]
        %v304 = vld [vmem:[%s264 + $0x110] sm:$0xff]
        %v305 = vld [vmem:[%s264 + $0x118] sm:$0x3]
        %v306 = vld [vmem:[%s264 + $0x120] sm:$0xff]
        %v307 = vld [vmem:[%s264 + $0x128] sm:$0xff]
        %v308 = vld [vmem:[%s264 + $0x130] sm:$0x3]
        %v309 = vld [vmem:[%s264 + $0x138] sm:$0xff]
        %v310 = vld [vmem:[%s264 + $0x140] sm:$0xff]
        %v311 = vld [vmem:[%s264 + $0x148] sm:$0x3]
        %v312 = vld [vmem:[%s264 + $0x150] sm:$0xff]
        %v313 = vld [vmem:[%s264 + $0x158] sm:$0xff]
        %v314 = vld [vmem:[%s264 + $0x160] sm:$0x3]
        %v315 = vld [vmem:[%s264 + $0x168] sm:$0xff]
        %v316 = vld [vmem:[%s264 + $0x170] sm:$0xff]
        %v317 = vld [vmem:[%s264 + $0x178] sm:$0x3]
        %v318 = vld [vmem:[%s264 + $0x180] sm:$0xff]
        %v319 = vld [vmem:[%s264 + $0x188] sm:$0xff]
        %v320 = vld [vmem:[%s264 + $0x190] sm:$0x3]
        %v321 = vld [vmem:[%s264 + $0x198] sm:$0xff]
        %v322 = vld [vmem:[%s264 + $0x1a0] sm:$0xff]
        %v323 = vld [vmem:[%s264 + $0x1a8] sm:$0x3]
        %v324 = vld [vmem:[%s269] sm:$0xff]
        %v325 = vld [vmem:[%s269 + $0x8] sm:$0xff]
        %v326 = vld [vmem:[%s269 + $0x10] sm:$0x3]
        %v327 = vld [vmem:[%s269 + $0x18] sm:$0xff]
        %v328 = vld [vmem:[%s269 + $0x20] sm:$0xff]
        %v329 = vld [vmem:[%s269 + $0x28] sm:$0x3]
        %v330 = vld [vmem:[%s269 + $0x30] sm:$0xff]
        %v331 = vld [vmem:[%s269 + $0x38] sm:$0xff]
        %v332 = vld [vmem:[%s269 + $0x40] sm:$0x3]
        %v333 = vld [vmem:[%s269 + $0x48] sm:$0xff]
        %v334 = vld [vmem:[%s269 + $0x50] sm:$0xff]
        %v335 = vld [vmem:[%s269 + $0x58] sm:$0x3]
        %v336 = vld [vmem:[%s269 + $0x60] sm:$0xff]
        %v337 = vld [vmem:[%s269 + $0x68] sm:$0xff]
        %v338 = vld [vmem:[%s269 + $0x70] sm:$0x3]
        %v339 = vld [vmem:[%s269 + $0x78] sm:$0xff]
        %v340 = vld [vmem:[%s269 + $0x80] sm:$0xff]
        %v341 = vld [vmem:[%s269 + $0x88] sm:$0x3]
        %v342 = vld [vmem:[%s269 + $0x90] sm:$0xff]
        %v343 = vld [vmem:[%s269 + $0x98] sm:$0xff]
        %v344 = vld [vmem:[%s269 + $0xa0] sm:$0x3]
        %v345 = vld [vmem:[%s269 + $0xa8] sm:$0xff]
        %v346 = vld [vmem:[%s269 + $0xb0] sm:$0xff]
        %v347 = vld [vmem:[%s269 + $0xb8] sm:$0x3]
        %v348 = vld [vmem:[%s269 + $0xc0] sm:$0xff]
        %v349 = vld [vmem:[%s269 + $0xc8] sm:$0xff]
        %v350 = vld [vmem:[%s269 + $0xd0] sm:$0x3]
        %v351 = vld [vmem:[%s269 + $0xd8] sm:$0xff]
        %v352 = vld [vmem:[%s269 + $0xe0] sm:$0xff]
        %v353 = vld [vmem:[%s269 + $0xe8] sm:$0x3]
        %v354 = vld [vmem:[%s269 + $0xf0] sm:$0xff]
        %v355 = vld [vmem:[%s269 + $0xf8] sm:$0xff]
        %v356 = vld [vmem:[%s269 + $0x100] sm:$0x3]
        %v357 = vld [vmem:[%s269 + $0x108] sm:$0xff]
        %v358 = vld [vmem:[%s269 + $0x110] sm:$0xff]
        %v359 = vld [vmem:[%s269 + $0x118] sm:$0x3]
        %v360 = vld [vmem:[%s269 + $0x120] sm:$0xff]
        %v361 = vld [vmem:[%s269 + $0x128] sm:$0xff]
        %v362 = vld [vmem:[%s269 + $0x130] sm:$0x3]
        %v363 = vld [vmem:[%s269 + $0x138] sm:$0xff]
        %v364 = vld [vmem:[%s269 + $0x140] sm:$0xff]
        %v365 = vld [vmem:[%s269 + $0x148] sm:$0x3]
        %v366 = vld [vmem:[%s269 + $0x150] sm:$0xff]
        %v367 = vld [vmem:[%s269 + $0x158] sm:$0xff]
        %v368 = vld [vmem:[%s269 + $0x160] sm:$0x3]
        %v369 = vld [vmem:[%s269 + $0x168] sm:$0xff]
        %v370 = vld [vmem:[%s269 + $0x170] sm:$0xff]
        %v371 = vld [vmem:[%s269 + $0x178] sm:$0x3]
        %v372 = vld [vmem:[%s269 + $0x180] sm:$0xff]
        %v373 = vld [vmem:[%s269 + $0x188] sm:$0xff]
        %v374 = vld [vmem:[%s269 + $0x190] sm:$0x3]
        %v375 = vld [vmem:[%s269 + $0x198] sm:$0xff]
        %v376 = vld [vmem:[%s269 + $0x1a0] sm:$0xff]
        %v377 = vld [vmem:[%s269 + $0x1a8] sm:$0x3]
        %v378 = vld [vmem:[%s2] sm:$0xf]
        %s379 = scalar_lea.vmem %s2, 12
        %v380 = vld [vmem:[%s379] sm:$0xf]
        %vm381 = vcmask 31744
        %v383 = vsel %vm381, %v273, 0
        %v386 = vsel %vm381, %v274, 0
        %v389 = vsel %vm381, %v276, 0
        %v392 = vsel %vm381, %v277, 0
        %v395 = vsel %vm381, %v279, 0
        %v398 = vsel %vm381, %v280, 0
        %v401 = vsel %vm381, %v282, 0
        %v404 = vsel %vm381, %v283, 0
        %v407 = vsel %vm381, %v285, 0
        %v410 = vsel %vm381, %v286, 0
        %v413 = vsel %vm381, %v288, 0
        %v416 = vsel %vm381, %v289, 0
        %v419 = vsel %vm381, %v291, 0
        %v422 = vsel %vm381, %v292, 0
        %v425 = vsel %vm381, %v294, 0
        %v428 = vsel %vm381, %v295, 0
        %v431 = vsel %vm381, %v297, 0
        %v434 = vsel %vm381, %v298, 0
        %v437 = vsel %vm381, %v300, 0
        %v440 = vsel %vm381, %v301, 0
        %v443 = vsel %vm381, %v303, 0
        %v446 = vsel %vm381, %v304, 0
        %v449 = vsel %vm381, %v306, 0
        %v452 = vsel %vm381, %v307, 0
        %v455 = vsel %vm381, %v309, 0
        %v458 = vsel %vm381, %v310, 0
        %v461 = vsel %vm381, %v312, 0
        %v464 = vsel %vm381, %v313, 0
        %v467 = vsel %vm381, %v315, 0
        %v470 = vsel %vm381, %v316, 0
        %v473 = vsel %vm381, %v318, 0
        %v476 = vsel %vm381, %v319, 0
        %vm478 = vcmask 1043456
        %v480 = vsel %vm478, %v380, 0
        %482 = vmatprep.subr.mxu0 0.0
        %483 = vmatpush1.msra.mxu0 %v480
        %484 = vmatprep.subr.mxu0 0.0
        %485 = vmatpush1.msra.mxu0 0.0
        %486 = vmatprep.subr.mxu0 0.0
        %487 = vmatpush1.msra.mxu0 0.0
        %488 = vmatprep.subr.mxu0 0.0
        %489 = vmatpush1.msra.mxu0 0.0
        %490 = vmatprep.subr.mxu0 0.0
        %491 = vmatpush1.msra.mxu0 0.0
        %492 = vmatprep.subr.mxu0 0.0
        %493 = vmatpush1.msra.mxu0 0.0
        %494 = vmatprep.subr.mxu0 0.0
        %495 = vmatpush1.msra.mxu0 0.0
        %496 = vmatprep.subr.mxu0 0.0
        %497 = vmatpush1.msra.mxu0 0.0
        %498 = vmatprep.subr.mxu0 0.0
        %499 = vmatpush1.msra.mxu0 0.0
        %500 = vmatprep.subr.mxu0 0.0
        %501 = vmatpush1.msra.mxu0 0.0
        %502 = vmatprep.subr.mxu0 0.0
        %503 = vmatpush1.msra.mxu0 0.0
        %504 = vmatprep.subr.mxu0 0.0
        %505 = vmatpush1.msra.mxu0 0.0
        %506 = vmatprep.subr.mxu0 0.0
        %507 = vmatpush1.msra.mxu0 0.0
        %508 = vmatprep.subr.mxu0 0.0
        %509 = vmatpush1.msra.mxu0 0.0
        %510 = vmatprep.subr.mxu0 0.0
        %511 = vmatpush1.msra.mxu0 0.0
        %512 = vmatprep.subr.mxu0 0.0
        %513 = vmatpush1.msra.mxu0 0.0
        %514 = vmatprep.subr.mxu0 0.0
        %515 = vmatpush1.msra.mxu0 0.0
        %516 = vmatprep.subr.mxu0 0.0
        %517 = vmatpush1.msra.mxu0 0.0
        %518 = vmatprep.subr.mxu0 0.0
        %519 = vmatpush1.msra.mxu0 0.0
        %520 = vmatprep.subr.mxu0 0.0
        %521 = vmatpush1.msra.mxu0 0.0
        %522 = vmatprep.subr.mxu0 0.0
        %523 = vmatpush1.msra.mxu0 0.0
        %524 = vmatprep.subr.mxu0 0.0
        %525 = vmatpush1.msra.mxu0 0.0
        %526 = vmatprep.subr.mxu0 0.0
        %527 = vmatpush1.msra.mxu0 0.0
        %528 = vmatprep.subr.mxu0 0.0
        %529 = vmatpush1.msra.mxu0 0.0
        %530 = vmatprep.subr.mxu0 0.0
        %531 = vmatpush1.msra.mxu0 0.0
        %532 = vmatprep.subr.mxu0 0.0
        %533 = vmatpush1.msra.mxu0 0.0
        %534 = vmatprep.subr.mxu0 0.0
        %535 = vmatpush1.msra.mxu0 0.0
        %536 = vmatprep.subr.mxu0 0.0
        %537 = vmatpush1.msra.mxu0 0.0
        %538 = vmatprep.subr.mxu0 0.0
        %539 = vmatpush1.msra.mxu0 0.0
        %540 = vmatprep.subr.mxu0 0.0
        %541 = vmatpush1.msra.mxu0 0.0
        %542 = vmatprep.subr.mxu0 0.0
        %543 = vmatpush1.msra.mxu0 0.0
        %544 = vmatprep.subr.mxu0 0.0
        %545 = vmatpush1.msra.mxu0 0.0
        %546 = vmatprep.mubr.f32.mxu0 0.0
        %547 = vmatmul.mubr.f32.gmra.mrb[0].mxu0 %v383
        %v548 = vpop.f32.mrb[0].mxu0
        %v549 = vadd.f32 0.0, %v548
        %v550 = vpop.f32.mrb[0].mxu0
        %551 = vmatprep.mubr.f32.mxu0 0.0
        %552 = vmatmul.mubr.f32.gmra.mrb[0].mxu0 %v386
        %v553 = vpop.f32.mrb[0].mxu0
        %v554 = vadd.f32 0.0, %v553
        %v555 = vpop.f32.mrb[0].mxu0
        %556 = vmatprep.mubr.f32.mxu0 0.0
        %557 = vmatmul.mubr.f32.gmra.mrb[0].mxu0 %v389
        %v558 = vpop.f32.mrb[0].mxu0
        %v559 = vadd.f32 0.0, %v558
        %v560 = vpop.f32.mrb[0].mxu0
        %561 = vmatprep.mubr.f32.mxu0 0.0
        %562 = vmatmul.mubr.f32.gmra.mrb[0].mxu0 %v392
        %v563 = vpop.f32.mrb[0].mxu0
        %v564 = vadd.f32 0.0, %v563
        %v565 = vpop.f32.mrb[0].mxu0
        %566 = vmatprep.mubr.f32.mxu0 0.0
        %567 = vmatmul.mubr.f32.gmra.mrb[0].mxu0 %v395
        %v568 = vpop.f32.mrb[0].mxu0
        %v569 = vadd.f32 0.0, %v568
        %v570 = vpop.f32.mrb[0].mxu0
        %571 = vmatprep.mubr.f32.mxu0 0.0
        %572 = vmatmul.mubr.f32.gmra.mrb[0].mxu0 %v398
        %v573 = vpop.f32.mrb[0].mxu0
        %v574 = vadd.f32 0.0, %v573
        %v575 = vpop.f32.mrb[0].mxu0
        %576 = vmatprep.mubr.f32.mxu0 0.0
        %577 = vmatmul.mubr.f32.gmra.mrb[0].mxu0 %v401
        %v578 = vpop.f32.mrb[0].mxu0
        %v579 = vadd.f32 0.0, %v578
        %v580 = vpop.f32.mrb[0].mxu0
        %581 = vmatprep.mubr.f32.mxu0 0.0
        %582 = vmatmul.mubr.f32.gmra.mrb[0].mxu0 %v404
        %v583 = vpop.f32.mrb[0].mxu0
        %v584 = vadd.f32 0.0, %v583
        %v585 = vpop.f32.mrb[0].mxu0
        %586 = vmatprep.mubr.f32.mxu0 0.0
        %587 = vmatmul.mubr.f32.gmra.mrb[0].mxu0 %v407
        %v588 = vpop.f32.mrb[0].mxu0
        %v589 = vadd.f32 0.0, %v588
        %v590 = vpop.f32.mrb[0].mxu0
        %591 = vmatprep.mubr.f32.mxu0 0.0
        %592 = vmatmul.mubr.f32.gmra.mrb[0].mxu0 %v410
        %v593 = vpop.f32.mrb[0].mxu0
        %v594 = vadd.f32 0.0, %v593
        %v595 = vpop.f32.mrb[0].mxu0
        %596 = vmatprep.mubr.f32.mxu0 0.0
        %597 = vmatmul.mubr.f32.gmra.mrb[0].mxu0 %v413
        %v598 = vpop.f32.mrb[0].mxu0
        %v599 = vadd.f32 0.0, %v598
        %v600 = vpop.f32.mrb[0].mxu0
        %601 = vmatprep.mubr.f32.mxu0 0.0
        %602 = vmatmul.mubr.f32.gmra.mrb[0].mxu0 %v416
        %v603 = vpop.f32.mrb[0].mxu0
        %v604 = vadd.f32 0.0, %v603
        %v605 = vpop.f32.mrb[0].mxu0
        %606 = vmatprep.mubr.f32.mxu0 0.0
        %607 = vmatmul.mubr.f32.gmra.mrb[0].mxu0 %v419
        %v608 = vpop.f32.mrb[0].mxu0
        %v609 = vadd.f32 0.0, %v608
        %v610 = vpop.f32.mrb[0].mxu0
        %611 = vmatprep.mubr.f32.mxu0 0.0
        %612 = vmatmul.mubr.f32.gmra.mrb[0].mxu0 %v422
        %v613 = vpop.f32.mrb[0].mxu0
        %v614 = vadd.f32 0.0, %v613
        %v615 = vpop.f32.mrb[0].mxu0
        %616 = vmatprep.mubr.f32.mxu0 0.0
        %617 = vmatmul.mubr.f32.gmra.mrb[0].mxu0 %v425
        %v618 = vpop.f32.mrb[0].mxu0
        %v619 = vadd.f32 0.0, %v618
        %v620 = vpop.f32.mrb[0].mxu0
        %621 = vmatprep.mubr.f32.mxu0 0.0
        %622 = vmatmul.mubr.f32.gmra.mrb[0].mxu0 %v428
        %v623 = vpop.f32.mrb[0].mxu0
        %v624 = vadd.f32 0.0, %v623
        %v625 = vpop.f32.mrb[0].mxu0
        %626 = vmatprep.mubr.f32.mxu0 0.0
        %627 = vmatmul.mubr.f32.gmra.mrb[0].mxu0 %v431
        %v628 = vpop.f32.mrb[0].mxu0
        %v629 = vadd.f32 0.0, %v628
        %v630 = vpop.f32.mrb[0].mxu0
        %631 = vmatprep.mubr.f32.mxu0 0.0
        %632 = vmatmul.mubr.f32.gmra.mrb[0].mxu0 %v434
        %v633 = vpop.f32.mrb[0].mxu0
        %v634 = vadd.f32 0.0, %v633
        %v635 = vpop.f32.mrb[0].mxu0
        %636 = vmatprep.mubr.f32.mxu0 0.0
        %637 = vmatmul.mubr.f32.gmra.mrb[0].mxu0 %v437
        %v638 = vpop.f32.mrb[0].mxu0
        %v639 = vadd.f32 0.0, %v638
        %v640 = vpop.f32.mrb[0].mxu0
        %641 = vmatprep.mubr.f32.mxu0 0.0
        %642 = vmatmul.mubr.f32.gmra.mrb[0].mxu0 %v440
        %v643 = vpop.f32.mrb[0].mxu0
        %v644 = vadd.f32 0.0, %v643
        %v645 = vpop.f32.mrb[0].mxu0
        %646 = vmatprep.mubr.f32.mxu0 0.0
        %647 = vmatmul.mubr.f32.gmra.mrb[0].mxu0 %v443
        %v648 = vpop.f32.mrb[0].mxu0
        %v649 = vadd.f32 0.0, %v648
        %v650 = vpop.f32.mrb[0].mxu0
        %651 = vmatprep.mubr.f32.mxu0 0.0
        %652 = vmatmul.mubr.f32.gmra.mrb[0].mxu0 %v446
        %v653 = vpop.f32.mrb[0].mxu0
        %v654 = vadd.f32 0.0, %v653
        %v655 = vpop.f32.mrb[0].mxu0
        %656 = vmatprep.mubr.f32.mxu0 0.0
        %657 = vmatmul.mubr.f32.gmra.mrb[0].mxu0 %v449
        %v658 = vpop.f32.mrb[0].mxu0
        %v659 = vadd.f32 0.0, %v658
        %v660 = vpop.f32.mrb[0].mxu0
        %661 = vmatprep.mubr.f32.mxu0 0.0
        %662 = vmatmul.mubr.f32.gmra.mrb[0].mxu0 %v452
        %v663 = vpop.f32.mrb[0].mxu0
        %v664 = vadd.f32 0.0, %v663
        %v665 = vpop.f32.mrb[0].mxu0
        %666 = vmatprep.mubr.f32.mxu0 0.0
        %667 = vmatmul.mubr.f32.gmra.mrb[0].mxu0 %v455
        %v668 = vpop.f32.mrb[0].mxu0
        %v669 = vadd.f32 0.0, %v668
        %v670 = vpop.f32.mrb[0].mxu0
        %671 = vmatprep.mubr.f32.mxu0 0.0
        %672 = vmatmul.mubr.f32.gmra.mrb[0].mxu0 %v458
        %v673 = vpop.f32.mrb[0].mxu0
        %v674 = vadd.f32 0.0, %v673
        %v675 = vpop.f32.mrb[0].mxu0
        %676 = vmatprep.mubr.f32.mxu0 0.0
        %677 = vmatmul.mubr.f32.gmra.mrb[0].mxu0 %v461
        %v678 = vpop.f32.mrb[0].mxu0
        %v679 = vadd.f32 0.0, %v678
        %v680 = vpop.f32.mrb[0].mxu0
        %681 = vmatprep.mubr.f32.mxu0 0.0
        %682 = vmatmul.mubr.f32.gmra.mrb[0].mxu0 %v464
        %v683 = vpop.f32.mrb[0].mxu0
        %v684 = vadd.f32 0.0, %v683
        %v685 = vpop.f32.mrb[0].mxu0
        %686 = vmatprep.mubr.f32.mxu0 0.0
        %687 = vmatmul.mubr.f32.gmra.mrb[0].mxu0 %v467
        %v688 = vpop.f32.mrb[0].mxu0
        %v689 = vadd.f32 0.0, %v688
        %v690 = vpop.f32.mrb[0].mxu0
        %691 = vmatprep.mubr.f32.mxu0 0.0
        %692 = vmatmul.mubr.f32.gmra.mrb[0].mxu0 %v470
        %v693 = vpop.f32.mrb[0].mxu0
        %v694 = vadd.f32 0.0, %v693
        %v695 = vpop.f32.mrb[0].mxu0
        %696 = vmatprep.mubr.f32.mxu0 0.0
        %697 = vmatmul.mubr.f32.gmra.mrb[0].mxu0 %v473
        %v698 = vpop.f32.mrb[0].mxu0
        %v699 = vadd.f32 0.0, %v698
        %v700 = vpop.f32.mrb[0].mxu0
        %701 = vmatprep.mubr.f32.mxu0 0.0
        %702 = vmatmul.mubr.f32.gmra.mrb[0].mxu0 %v476
        %v703 = vpop.f32.mrb[0].mxu0
        %v704 = vadd.f32 0.0, %v703
        %v705 = vpop.f32.mrb[0].mxu0
        %706 = vdwg.mxu0
        %v708 = vsel %vm381, %v270, 0
        %v711 = vsel %vm381, %v271, 0
        %v714 = vsel %vm478, %v378, 0
        %716 = vmatprep.subr.mxu0 0.0
        %717 = vmatpush1.msra.mxu0 %v714
        %718 = vmatprep.subr.mxu0 0.0
        %719 = vmatpush1.msra.mxu0 0.0
        %720 = vmatprep.subr.mxu0 0.0
        %721 = vmatpush1.msra.mxu0 0.0
        %722 = vmatprep.subr.mxu0 0.0
        %723 = vmatpush1.msra.mxu0 0.0
        %724 = vmatprep.subr.mxu0 0.0
        %725 = vmatpush1.msra.mxu0 0.0
        %726 = vmatprep.subr.mxu0 0.0
        %727 = vmatpush1.msra.mxu0 0.0
        %728 = vmatprep.subr.mxu0 0.0
        %729 = vmatpush1.msra.mxu0 0.0
        %730 = vmatprep.subr.mxu0 0.0
        %731 = vmatpush1.msra.mxu0 0.0
        %732 = vmatprep.subr.mxu0 0.0
        %733 = vmatpush1.msra.mxu0 0.0
        %734 = vmatprep.subr.mxu0 0.0
        %735 = vmatpush1.msra.mxu0 0.0
        %736 = vmatprep.subr.mxu0 0.0
        %737 = vmatpush1.msra.mxu0 0.0
        %738 = vmatprep.subr.mxu0 0.0
        %739 = vmatpush1.msra.mxu0 0.0
        %740 = vmatprep.subr.mxu0 0.0
        %741 = vmatpush1.msra.mxu0 0.0
        %742 = vmatprep.subr.mxu0 0.0
        %743 = vmatpush1.msra.mxu0 0.0
        %744 = vmatprep.subr.mxu0 0.0
        %745 = vmatpush1.msra.mxu0 0.0
        %746 = vmatprep.subr.mxu0 0.0
        %747 = vmatpush1.msra.mxu0 0.0
        %748 = vmatprep.subr.mxu0 0.0
        %749 = vmatpush1.msra.mxu0 0.0
        %750 = vmatprep.subr.mxu0 0.0
        %751 = vmatpush1.msra.mxu0 0.0
        %752 = vmatprep.subr.mxu0 0.0
        %753 = vmatpush1.msra.mxu0 0.0
        %754 = vmatprep.subr.mxu0 0.0
        %755 = vmatpush1.msra.mxu0 0.0
        %756 = vmatprep.subr.mxu0 0.0
        %757 = vmatpush1.msra.mxu0 0.0
        %758 = vmatprep.subr.mxu0 0.0
        %759 = vmatpush1.msra.mxu0 0.0
        %760 = vmatprep.subr.mxu0 0.0
        %761 = vmatpush1.msra.mxu0 0.0
        %762 = vmatprep.subr.mxu0 0.0
        %763 = vmatpush1.msra.mxu0 0.0
        %764 = vmatprep.subr.mxu0 0.0
        %765 = vmatpush1.msra.mxu0 0.0
        %766 = vmatprep.subr.mxu0 0.0
        %767 = vmatpush1.msra.mxu0 0.0
        %768 = vmatprep.subr.mxu0 0.0
        %769 = vmatpush1.msra.mxu0 0.0
        %770 = vmatprep.subr.mxu0 0.0
        %771 = vmatpush1.msra.mxu0 0.0
        %772 = vmatprep.subr.mxu0 0.0
        %773 = vmatpush1.msra.mxu0 0.0
        %774 = vmatprep.subr.mxu0 0.0
        %775 = vmatpush1.msra.mxu0 0.0
        %776 = vmatprep.subr.mxu0 0.0
        %777 = vmatpush1.msra.mxu0 0.0
        %778 = vmatprep.subr.mxu0 0.0
        %779 = vmatpush1.msra.mxu0 0.0
        %780 = vmatprep.mubr.f32.mxu0 0.0
        %781 = vmatmul.mubr.f32.gmra.mrb[0].mxu0 %v708
        %v782 = vpop.f32.mrb[0].mxu0
        %v783 = vadd.f32 %v549, %v782
        %v784 = vpop.f32.mrb[0].mxu0
        %785 = vmatprep.mubr.f32.mxu0 0.0
        %786 = vmatmul.mubr.f32.gmra.mrb[0].mxu0 %v711
        %v787 = vpop.f32.mrb[0].mxu0
        %v788 = vadd.f32 %v554, %v787
        %v789 = vpop.f32.mrb[0].mxu0
        %790 = vmatprep.mubr.f32.mxu0 0.0
        %791 = vmatmul.mubr.f32.gmra.mrb[0].mxu0 %v383
        %v792 = vpop.f32.mrb[0].mxu0
        %v793 = vadd.f32 %v559, %v792
        %v794 = vpop.f32.mrb[0].mxu0
        %795 = vmatprep.mubr.f32.mxu0 0.0
        %796 = vmatmul.mubr.f32.gmra.mrb[0].mxu0 %v386
        %v797 = vpop.f32.mrb[0].mxu0
        %v798 = vadd.f32 %v564, %v797
        %v799 = vpop.f32.mrb[0].mxu0
        %800 = vmatprep.mubr.f32.mxu0 0.0
        %801 = vmatmul.mubr.f32.gmra.mrb[0].mxu0 %v389
        %v802 = vpop.f32.mrb[0].mxu0
        %v803 = vadd.f32 %v569, %v802
        %v804 = vpop.f32.mrb[0].mxu0
        %805 = vmatprep.mubr.f32.mxu0 0.0
        %806 = vmatmul.mubr.f32.gmra.mrb[0].mxu0 %v392
        %v807 = vpop.f32.mrb[0].mxu0
        %v808 = vadd.f32 %v574, %v807
        %v809 = vpop.f32.mrb[0].mxu0
        %810 = vmatprep.mubr.f32.mxu0 0.0
        %811 = vmatmul.mubr.f32.gmra.mrb[0].mxu0 %v395
        %v812 = vpop.f32.mrb[0].mxu0
        %v813 = vadd.f32 %v579, %v812
        %v814 = vpop.f32.mrb[0].mxu0
        %815 = vmatprep.mubr.f32.mxu0 0.0
        %816 = vmatmul.mubr.f32.gmra.mrb[0].mxu0 %v398
        %v817 = vpop.f32.mrb[0].mxu0
        %v818 = vadd.f32 %v584, %v817
        %v819 = vpop.f32.mrb[0].mxu0
        %820 = vmatprep.mubr.f32.mxu0 0.0
        %821 = vmatmul.mubr.f32.gmra.mrb[0].mxu0 %v401
        %v822 = vpop.f32.mrb[0].mxu0
        %v823 = vadd.f32 %v589, %v822
        %v824 = vpop.f32.mrb[0].mxu0
        %825 = vmatprep.mubr.f32.mxu0 0.0
        %826 = vmatmul.mubr.f32.gmra.mrb[0].mxu0 %v404
        %v827 = vpop.f32.mrb[0].mxu0
        %v828 = vadd.f32 %v594, %v827
        %v829 = vpop.f32.mrb[0].mxu0
        %830 = vmatprep.mubr.f32.mxu0 0.0
        %831 = vmatmul.mubr.f32.gmra.mrb[0].mxu0 %v407
        %v832 = vpop.f32.mrb[0].mxu0
        %v833 = vadd.f32 %v599, %v832
        %v834 = vpop.f32.mrb[0].mxu0
        %835 = vmatprep.mubr.f32.mxu0 0.0
        %836 = vmatmul.mubr.f32.gmra.mrb[0].mxu0 %v410
        %v837 = vpop.f32.mrb[0].mxu0
        %v838 = vadd.f32 %v604, %v837
        %v839 = vpop.f32.mrb[0].mxu0
        %840 = vmatprep.mubr.f32.mxu0 0.0
        %841 = vmatmul.mubr.f32.gmra.mrb[0].mxu0 %v413
        %v842 = vpop.f32.mrb[0].mxu0
        %v843 = vadd.f32 %v609, %v842
        %v844 = vpop.f32.mrb[0].mxu0
        %845 = vmatprep.mubr.f32.mxu0 0.0
        %846 = vmatmul.mubr.f32.gmra.mrb[0].mxu0 %v416
        %v847 = vpop.f32.mrb[0].mxu0
        %v848 = vadd.f32 %v614, %v847
        %v849 = vpop.f32.mrb[0].mxu0
        %850 = vmatprep.mubr.f32.mxu0 0.0
        %851 = vmatmul.mubr.f32.gmra.mrb[0].mxu0 %v419
        %v852 = vpop.f32.mrb[0].mxu0
        %v853 = vadd.f32 %v619, %v852
        %v854 = vpop.f32.mrb[0].mxu0
        %855 = vmatprep.mubr.f32.mxu0 0.0
        %856 = vmatmul.mubr.f32.gmra.mrb[0].mxu0 %v422
        %v857 = vpop.f32.mrb[0].mxu0
        %v858 = vadd.f32 %v624, %v857
        %v859 = vpop.f32.mrb[0].mxu0
        %860 = vmatprep.mubr.f32.mxu0 0.0
        %861 = vmatmul.mubr.f32.gmra.mrb[0].mxu0 %v425
        %v862 = vpop.f32.mrb[0].mxu0
        %v863 = vadd.f32 %v629, %v862
        %v864 = vpop.f32.mrb[0].mxu0
        %865 = vmatprep.mubr.f32.mxu0 0.0
        %866 = vmatmul.mubr.f32.gmra.mrb[0].mxu0 %v428
        %v867 = vpop.f32.mrb[0].mxu0
        %v868 = vadd.f32 %v634, %v867
        %v869 = vpop.f32.mrb[0].mxu0
        %870 = vmatprep.mubr.f32.mxu0 0.0
        %871 = vmatmul.mubr.f32.gmra.mrb[0].mxu0 %v431
        %v872 = vpop.f32.mrb[0].mxu0
        %v873 = vadd.f32 %v639, %v872
        %v874 = vpop.f32.mrb[0].mxu0
        %875 = vmatprep.mubr.f32.mxu0 0.0
        %876 = vmatmul.mubr.f32.gmra.mrb[0].mxu0 %v434
        %v877 = vpop.f32.mrb[0].mxu0
        %v878 = vadd.f32 %v644, %v877
        %v879 = vpop.f32.mrb[0].mxu0
        %880 = vmatprep.mubr.f32.mxu0 0.0
        %881 = vmatmul.mubr.f32.gmra.mrb[0].mxu0 %v437
        %v882 = vpop.f32.mrb[0].mxu0
        %v883 = vadd.f32 %v649, %v882
        %v884 = vpop.f32.mrb[0].mxu0
        %885 = vmatprep.mubr.f32.mxu0 0.0
        %886 = vmatmul.mubr.f32.gmra.mrb[0].mxu0 %v440
        %v887 = vpop.f32.mrb[0].mxu0
        %v888 = vadd.f32 %v654, %v887
        %v889 = vpop.f32.mrb[0].mxu0
        %890 = vmatprep.mubr.f32.mxu0 0.0
        %891 = vmatmul.mubr.f32.gmra.mrb[0].mxu0 %v443
        %v892 = vpop.f32.mrb[0].mxu0
        %v893 = vadd.f32 %v659, %v892
        %v894 = vpop.f32.mrb[0].mxu0
        %895 = vmatprep.mubr.f32.mxu0 0.0
        %896 = vmatmul.mubr.f32.gmra.mrb[0].mxu0 %v446
        %v897 = vpop.f32.mrb[0].mxu0
        %v898 = vadd.f32 %v664, %v897
        %v899 = vpop.f32.mrb[0].mxu0
        %900 = vmatprep.mubr.f32.mxu0 0.0
        %901 = vmatmul.mubr.f32.gmra.mrb[0].mxu0 %v449
        %v902 = vpop.f32.mrb[0].mxu0
        %v903 = vadd.f32 %v669, %v902
        %v904 = vpop.f32.mrb[0].mxu0
        %905 = vmatprep.mubr.f32.mxu0 0.0
        %906 = vmatmul.mubr.f32.gmra.mrb[0].mxu0 %v452
        %v907 = vpop.f32.mrb[0].mxu0
        %v908 = vadd.f32 %v674, %v907
        %v909 = vpop.f32.mrb[0].mxu0
        %910 = vmatprep.mubr.f32.mxu0 0.0
        %911 = vmatmul.mubr.f32.gmra.mrb[0].mxu0 %v455
        %v912 = vpop.f32.mrb[0].mxu0
        %v913 = vadd.f32 %v679, %v912
        %v914 = vpop.f32.mrb[0].mxu0
        %915 = vmatprep.mubr.f32.mxu0 0.0
        %916 = vmatmul.mubr.f32.gmra.mrb[0].mxu0 %v458
        %v917 = vpop.f32.mrb[0].mxu0
        %v918 = vadd.f32 %v684, %v917
        %v919 = vpop.f32.mrb[0].mxu0
        %920 = vmatprep.mubr.f32.mxu0 0.0
        %921 = vmatmul.mubr.f32.gmra.mrb[0].mxu0 %v461
        %v922 = vpop.f32.mrb[0].mxu0
        %v923 = vadd.f32 %v689, %v922
        %v924 = vpop.f32.mrb[0].mxu0
        %925 = vmatprep.mubr.f32.mxu0 0.0
        %926 = vmatmul.mubr.f32.gmra.mrb[0].mxu0 %v464
        %v927 = vpop.f32.mrb[0].mxu0
        %v928 = vadd.f32 %v694, %v927
        %v929 = vpop.f32.mrb[0].mxu0
        %930 = vmatprep.mubr.f32.mxu0 0.0
        %931 = vmatmul.mubr.f32.gmra.mrb[0].mxu0 %v467
        %v932 = vpop.f32.mrb[0].mxu0
        %v933 = vadd.f32 %v699, %v932
        %v934 = vpop.f32.mrb[0].mxu0
        %935 = vmatprep.mubr.f32.mxu0 0.0
        %936 = vmatmul.mubr.f32.gmra.mrb[0].mxu0 %v470
        %v937 = vpop.f32.mrb[0].mxu0
        %v938 = vadd.f32 %v704, %v937
        %v939 = vpop.f32.mrb[0].mxu0
        %940 = vdwg.mxu0
        %s941 = scalar_lea.vmem %s2, 24
        %v942 = vld [vmem:[%s941] sm:$0xf]
        %v944 = vsel %vm381, %v321, 0
        %v947 = vsel %vm381, %v322, 0
        %v950 = vsel %vm478, %v942, 0
        %952 = vmatprep.subr.mxu0 0.0
        %953 = vmatpush1.msra.mxu0 %v950
        %954 = vmatprep.subr.mxu0 0.0
        %955 = vmatpush1.msra.mxu0 0.0
        %956 = vmatprep.subr.mxu0 0.0
        %957 = vmatpush1.msra.mxu0 0.0
        %958 = vmatprep.subr.mxu0 0.0
        %959 = vmatpush1.msra.mxu0 0.0
        %960 = vmatprep.subr.mxu0 0.0
        %961 = vmatpush1.msra.mxu0 0.0
        %962 = vmatprep.subr.mxu0 0.0
        %963 = vmatpush1.msra.mxu0 0.0
        %964 = vmatprep.subr.mxu0 0.0
        %965 = vmatpush1.msra.mxu0 0.0
        %966 = vmatprep.subr.mxu0 0.0
        %967 = vmatpush1.msra.mxu0 0.0
        %968 = vmatprep.subr.mxu0 0.0
        %969 = vmatpush1.msra.mxu0 0.0
        %970 = vmatprep.subr.mxu0 0.0
        %971 = vmatpush1.msra.mxu0 0.0
        %972 = vmatprep.subr.mxu0 0.0
        %973 = vmatpush1.msra.mxu0 0.0
        %974 = vmatprep.subr.mxu0 0.0
        %975 = vmatpush1.msra.mxu0 0.0
        %976 = vmatprep.subr.mxu0 0.0
        %977 = vmatpush1.msra.mxu0 0.0
        %978 = vmatprep.subr.mxu0 0.0
        %979 = vmatpush1.msra.mxu0 0.0
        %980 = vmatprep.subr.mxu0 0.0
        %981 = vmatpush1.msra.mxu0 0.0
        %982 = vmatprep.subr.mxu0 0.0
        %983 = vmatpush1.msra.mxu0 0.0
        %984 = vmatprep.subr.mxu0 0.0
        %985 = vmatpush1.msra.mxu0 0.0
        %986 = vmatprep.subr.mxu0 0.0
        %987 = vmatpush1.msra.mxu0 0.0
        %988 = vmatprep.subr.mxu0 0.0
        %989 = vmatpush1.msra.mxu0 0.0
        %990 = vmatprep.subr.mxu0 0.0
        %991 = vmatpush1.msra.mxu0 0.0
        %992 = vmatprep.subr.mxu0 0.0
        %993 = vmatpush1.msra.mxu0 0.0
        %994 = vmatprep.subr.mxu0 0.0
        %995 = vmatpush1.msra.mxu0 0.0
        %996 = vmatprep.subr.mxu0 0.0
        %997 = vmatpush1.msra.mxu0 0.0
        %998 = vmatprep.subr.mxu0 0.0
        %999 = vmatpush1.msra.mxu0 0.0
        %1000 = vmatprep.subr.mxu0 0.0
        %1001 = vmatpush1.msra.mxu0 0.0
        %1002 = vmatprep.subr.mxu0 0.0
        %1003 = vmatpush1.msra.mxu0 0.0
        %1004 = vmatprep.subr.mxu0 0.0
        %1005 = vmatpush1.msra.mxu0 0.0
        %1006 = vmatprep.subr.mxu0 0.0
        %1007 = vmatpush1.msra.mxu0 0.0
        %1008 = vmatprep.subr.mxu0 0.0
        %1009 = vmatpush1.msra.mxu0 0.0
        %1010 = vmatprep.subr.mxu0 0.0
        %1011 = vmatpush1.msra.mxu0 0.0
        %1012 = vmatprep.subr.mxu0 0.0
        %1013 = vmatpush1.msra.mxu0 0.0
        %1014 = vmatprep.subr.mxu0 0.0
        %1015 = vmatpush1.msra.mxu0 0.0
        %1016 = vmatprep.mubr.f32.mxu0 0.0
        %1017 = vmatmul.mubr.f32.gmra.mrb[0].mxu0 %v389
        %v1018 = vpop.f32.mrb[0].mxu0
        %v1019 = vadd.f32 0.0, %v1018
        %v1020 = vpop.f32.mrb[0].mxu0
        %1021 = vmatprep.mubr.f32.mxu0 0.0
        %1022 = vmatmul.mubr.f32.gmra.mrb[0].mxu0 %v392
        %v1023 = vpop.f32.mrb[0].mxu0
        %v1024 = vadd.f32 0.0, %v1023
        %v1025 = vpop.f32.mrb[0].mxu0
        %1026 = vmatprep.mubr.f32.mxu0 0.0
        %1027 = vmatmul.mubr.f32.gmra.mrb[0].mxu0 %v395
        %v1028 = vpop.f32.mrb[0].mxu0
        %v1029 = vadd.f32 0.0, %v1028
        %v1030 = vpop.f32.mrb[0].mxu0
        %1031 = vmatprep.mubr.f32.mxu0 0.0
        %1032 = vmatmul.mubr.f32.gmra.mrb[0].mxu0 %v398
        %v1033 = vpop.f32.mrb[0].mxu0
        %v1034 = vadd.f32 0.0, %v1033
        %v1035 = vpop.f32.mrb[0].mxu0
        %1036 = vmatprep.mubr.f32.mxu0 0.0
        %1037 = vmatmul.mubr.f32.gmra.mrb[0].mxu0 %v401
        %v1038 = vpop.f32.mrb[0].mxu0
        %v1039 = vadd.f32 0.0, %v1038
        %v1040 = vpop.f32.mrb[0].mxu0
        %1041 = vmatprep.mubr.f32.mxu0 0.0
        %1042 = vmatmul.mubr.f32.gmra.mrb[0].mxu0 %v404
        %v1043 = vpop.f32.mrb[0].mxu0
        %v1044 = vadd.f32 0.0, %v1043
        %v1045 = vpop.f32.mrb[0].mxu0
        %1046 = vmatprep.mubr.f32.mxu0 0.0
        %1047 = vmatmul.mubr.f32.gmra.mrb[0].mxu0 %v407
        %v1048 = vpop.f32.mrb[0].mxu0
        %v1049 = vadd.f32 0.0, %v1048
        %v1050 = vpop.f32.mrb[0].mxu0
        %1051 = vmatprep.mubr.f32.mxu0 0.0
        %1052 = vmatmul.mubr.f32.gmra.mrb[0].mxu0 %v410
        %v1053 = vpop.f32.mrb[0].mxu0
        %v1054 = vadd.f32 0.0, %v1053
        %v1055 = vpop.f32.mrb[0].mxu0
        %1056 = vmatprep.mubr.f32.mxu0 0.0
        %1057 = vmatmul.mubr.f32.gmra.mrb[0].mxu0 %v413
        %v1058 = vpop.f32.mrb[0].mxu0
        %v1059 = vadd.f32 0.0, %v1058
        %v1060 = vpop.f32.mrb[0].mxu0
        %1061 = vmatprep.mubr.f32.mxu0 0.0
        %1062 = vmatmul.mubr.f32.gmra.mrb[0].mxu0 %v416
        %v1063 = vpop.f32.mrb[0].mxu0
        %v1064 = vadd.f32 0.0, %v1063
        %v1065 = vpop.f32.mrb[0].mxu0
        %1066 = vmatprep.mubr.f32.mxu0 0.0
        %1067 = vmatmul.mubr.f32.gmra.mrb[0].mxu0 %v419
        %v1068 = vpop.f32.mrb[0].mxu0
        %v1069 = vadd.f32 0.0, %v1068
        %v1070 = vpop.f32.mrb[0].mxu0
        %1071 = vmatprep.mubr.f32.mxu0 0.0
        %1072 = vmatmul.mubr.f32.gmra.mrb[0].mxu0 %v422
        %v1073 = vpop.f32.mrb[0].mxu0
        %v1074 = vadd.f32 0.0, %v1073
        %v1075 = vpop.f32.mrb[0].mxu0
        %1076 = vmatprep.mubr.f32.mxu0 0.0
        %1077 = vmatmul.mubr.f32.gmra.mrb[0].mxu0 %v425
        %v1078 = vpop.f32.mrb[0].mxu0
        %v1079 = vadd.f32 0.0, %v1078
        %v1080 = vpop.f32.mrb[0].mxu0
        %1081 = vmatprep.mubr.f32.mxu0 0.0
        %1082 = vmatmul.mubr.f32.gmra.mrb[0].mxu0 %v428
        %v1083 = vpop.f32.mrb[0].mxu0
        %v1084 = vadd.f32 0.0, %v1083
        %v1085 = vpop.f32.mrb[0].mxu0
        %1086 = vmatprep.mubr.f32.mxu0 0.0
        %1087 = vmatmul.mubr.f32.gmra.mrb[0].mxu0 %v431
        %v1088 = vpop.f32.mrb[0].mxu0
        %v1089 = vadd.f32 0.0, %v1088
        %v1090 = vpop.f32.mrb[0].mxu0
        %1091 = vmatprep.mubr.f32.mxu0 0.0
        %1092 = vmatmul.mubr.f32.gmra.mrb[0].mxu0 %v434
        %v1093 = vpop.f32.mrb[0].mxu0
        %v1094 = vadd.f32 0.0, %v1093
        %v1095 = vpop.f32.mrb[0].mxu0
        %1096 = vmatprep.mubr.f32.mxu0 0.0
        %1097 = vmatmul.mubr.f32.gmra.mrb[0].mxu0 %v437
        %v1098 = vpop.f32.mrb[0].mxu0
        %v1099 = vadd.f32 0.0, %v1098
        %v1100 = vpop.f32.mrb[0].mxu0
        %1101 = vmatprep.mubr.f32.mxu0 0.0
        %1102 = vmatmul.mubr.f32.gmra.mrb[0].mxu0 %v440
        %v1103 = vpop.f32.mrb[0].mxu0
        %v1104 = vadd.f32 0.0, %v1103
        %v1105 = vpop.f32.mrb[0].mxu0
        %1106 = vmatprep.mubr.f32.mxu0 0.0
        %1107 = vmatmul.mubr.f32.gmra.mrb[0].mxu0 %v443
        %v1108 = vpop.f32.mrb[0].mxu0
        %v1109 = vadd.f32 0.0, %v1108
        %v1110 = vpop.f32.mrb[0].mxu0
        %1111 = vmatprep.mubr.f32.mxu0 0.0
        %1112 = vmatmul.mubr.f32.gmra.mrb[0].mxu0 %v446
        %v1113 = vpop.f32.mrb[0].mxu0
        %v1114 = vadd.f32 0.0, %v1113
        %v1115 = vpop.f32.mrb[0].mxu0
        %1116 = vmatprep.mubr.f32.mxu0 0.0
        %1117 = vmatmul.mubr.f32.gmra.mrb[0].mxu0 %v449
        %v1118 = vpop.f32.mrb[0].mxu0
        %v1119 = vadd.f32 0.0, %v1118
        %v1120 = vpop.f32.mrb[0].mxu0
        %1121 = vmatprep.mubr.f32.mxu0 0.0
        %1122 = vmatmul.mubr.f32.gmra.mrb[0].mxu0 %v452
        %v1123 = vpop.f32.mrb[0].mxu0
        %v1124 = vadd.f32 0.0, %v1123
        %v1125 = vpop.f32.mrb[0].mxu0
        %1126 = vmatprep.mubr.f32.mxu0 0.0
        %1127 = vmatmul.mubr.f32.gmra.mrb[0].mxu0 %v455
        %v1128 = vpop.f32.mrb[0].mxu0
        %v1129 = vadd.f32 0.0, %v1128
        %v1130 = vpop.f32.mrb[0].mxu0
        %1131 = vmatprep.mubr.f32.mxu0 0.0
        %1132 = vmatmul.mubr.f32.gmra.mrb[0].mxu0 %v458
        %v1133 = vpop.f32.mrb[0].mxu0
        %v1134 = vadd.f32 0.0, %v1133
        %v1135 = vpop.f32.mrb[0].mxu0
        %1136 = vmatprep.mubr.f32.mxu0 0.0
        %1137 = vmatmul.mubr.f32.gmra.mrb[0].mxu0 %v461
        %v1138 = vpop.f32.mrb[0].mxu0
        %v1139 = vadd.f32 0.0, %v1138
        %v1140 = vpop.f32.mrb[0].mxu0
        %1141 = vmatprep.mubr.f32.mxu0 0.0
        %1142 = vmatmul.mubr.f32.gmra.mrb[0].mxu0 %v464
        %v1143 = vpop.f32.mrb[0].mxu0
        %v1144 = vadd.f32 0.0, %v1143
        %v1145 = vpop.f32.mrb[0].mxu0
        %1146 = vmatprep.mubr.f32.mxu0 0.0
        %1147 = vmatmul.mubr.f32.gmra.mrb[0].mxu0 %v467
        %v1148 = vpop.f32.mrb[0].mxu0
        %v1149 = vadd.f32 0.0, %v1148
        %v1150 = vpop.f32.mrb[0].mxu0
        %1151 = vmatprep.mubr.f32.mxu0 0.0
        %1152 = vmatmul.mubr.f32.gmra.mrb[0].mxu0 %v470
        %v1153 = vpop.f32.mrb[0].mxu0
        %v1154 = vadd.f32 0.0, %v1153
        %v1155 = vpop.f32.mrb[0].mxu0
        %1156 = vmatprep.mubr.f32.mxu0 0.0
        %1157 = vmatmul.mubr.f32.gmra.mrb[0].mxu0 %v473
        %v1158 = vpop.f32.mrb[0].mxu0
        %v1159 = vadd.f32 0.0, %v1158
        %v1160 = vpop.f32.mrb[0].mxu0
        %1161 = vmatprep.mubr.f32.mxu0 0.0
        %1162 = vmatmul.mubr.f32.gmra.mrb[0].mxu0 %v476
        %v1163 = vpop.f32.mrb[0].mxu0
        %v1164 = vadd.f32 0.0, %v1163
        %v1165 = vpop.f32.mrb[0].mxu0
        %1166 = vmatprep.mubr.f32.mxu0 0.0
        %1167 = vmatmul.mubr.f32.gmra.mrb[0].mxu0 %v944
        %v1168 = vpop.f32.mrb[0].mxu0
        %v1169 = vadd.f32 0.0, %v1168
        %v1170 = vpop.f32.mrb[0].mxu0
        %1171 = vmatprep.mubr.f32.mxu0 0.0
        %1172 = vmatmul.mubr.f32.gmra.mrb[0].mxu0 %v947
        %v1173 = vpop.f32.mrb[0].mxu0
        %v1174 = vadd.f32 0.0, %v1173
        %v1175 = vpop.f32.mrb[0].mxu0
        %1176 = vdwg.mxu0
        %v1177 = vadd.f32 %v783, %v1019
        %v1178 = vadd.f32 %v788, %v1024
        %v1179 = vadd.f32 %v793, %v1029
        %v1180 = vadd.f32 %v798, %v1034
        %v1181 = vadd.f32 %v803, %v1039
        %v1182 = vadd.f32 %v808, %v1044
        %v1183 = vadd.f32 %v813, %v1049
        %v1184 = vadd.f32 %v818, %v1054
        %v1185 = vadd.f32 %v823, %v1059
        %v1186 = vadd.f32 %v828, %v1064
        %v1187 = vadd.f32 %v833, %v1069
        %v1188 = vadd.f32 %v838, %v1074
        %v1189 = vadd.f32 %v843, %v1079
        %v1190 = vadd.f32 %v848, %v1084
        %v1191 = vadd.f32 %v853, %v1089
        %v1192 = vadd.f32 %v858, %v1094
        %v1193 = vadd.f32 %v863, %v1099
        %v1194 = vadd.f32 %v868, %v1104
        %v1195 = vadd.f32 %v873, %v1109
        %v1196 = vadd.f32 %v878, %v1114
        %v1197 = vadd.f32 %v883, %v1119
        %v1198 = vadd.f32 %v888, %v1124
        %v1199 = vadd.f32 %v893, %v1129
        %v1200 = vadd.f32 %v898, %v1134
        %v1201 = vadd.f32 %v903, %v1139
        %v1202 = vadd.f32 %v908, %v1144
        %v1203 = vadd.f32 %v913, %v1149
        %v1204 = vadd.f32 %v918, %v1154
        %v1205 = vadd.f32 %v923, %v1159
        %v1206 = vadd.f32 %v928, %v1164
        %v1207 = vadd.f32 %v933, %v1169
        %v1208 = vadd.f32 %v938, %v1174
        %vm1225 = vcmask 1046528
        %v1226 = vrot.slane %v270, 1
        %v1227 = vrot.slane %v271, 1
        %v1228 = vsel %vm1225, %v1226, %v1227
        %v1229 = vrot.slane %v272, 1
        %v1230 = vsel %vm1225, %v1227, %v1229
        %v1231 = vrot.slane %v273, 1
        %v1232 = vrot.slane %v274, 1
        %v1233 = vsel %vm1225, %v1231, %v1232
        %v1234 = vrot.slane %v275, 1
        %v1235 = vsel %vm1225, %v1232, %v1234
        %v1236 = vrot.slane %v276, 1
        %v1237 = vrot.slane %v277, 1
        %v1238 = vsel %vm1225, %v1236, %v1237
        %v1239 = vrot.slane %v278, 1
        %v1240 = vsel %vm1225, %v1237, %v1239
        %v1241 = vrot.slane %v279, 1
        %v1242 = vrot.slane %v280, 1
        %v1243 = vsel %vm1225, %v1241, %v1242
        %v1244 = vrot.slane %v281, 1
        %v1245 = vsel %vm1225, %v1242, %v1244
        %v1246 = vrot.slane %v282, 1
        %v1247 = vrot.slane %v283, 1
        %v1248 = vsel %vm1225, %v1246, %v1247
        %v1249 = vrot.slane %v284, 1
        %v1250 = vsel %vm1225, %v1247, %v1249
        %v1251 = vrot.slane %v285, 1
        %v1252 = vrot.slane %v286, 1
        %v1253 = vsel %vm1225, %v1251, %v1252
        %v1254 = vrot.slane %v287, 1
        %v1255 = vsel %vm1225, %v1252, %v1254
        %v1256 = vrot.slane %v288, 1
        %v1257 = vrot.slane %v289, 1
        %v1258 = vsel %vm1225, %v1256, %v1257
        %v1259 = vrot.slane %v290, 1
        %v1260 = vsel %vm1225, %v1257, %v1259
        %v1261 = vrot.slane %v291, 1
        %v1262 = vrot.slane %v292, 1
        %v1263 = vsel %vm1225, %v1261, %v1262
        %v1264 = vrot.slane %v293, 1
        %v1265 = vsel %vm1225, %v1262, %v1264
        %v1266 = vrot.slane %v294, 1
        %v1267 = vrot.slane %v295, 1
        %v1268 = vsel %vm1225, %v1266, %v1267
        %v1269 = vrot.slane %v296, 1
        %v1270 = vsel %vm1225, %v1267, %v1269
        %v1271 = vrot.slane %v297, 1
        %v1272 = vrot.slane %v298, 1
        %v1273 = vsel %vm1225, %v1271, %v1272
        %v1274 = vrot.slane %v299, 1
        %v1275 = vsel %vm1225, %v1272, %v1274
        %v1276 = vrot.slane %v300, 1
        %v1277 = vrot.slane %v301, 1
        %v1278 = vsel %vm1225, %v1276, %v1277
        %v1279 = vrot.slane %v302, 1
        %v1280 = vsel %vm1225, %v1277, %v1279
        %v1281 = vrot.slane %v303, 1
        %v1282 = vrot.slane %v304, 1
        %v1283 = vsel %vm1225, %v1281, %v1282
        %v1284 = vrot.slane %v305, 1
        %v1285 = vsel %vm1225, %v1282, %v1284
        %v1286 = vrot.slane %v306, 1
        %v1287 = vrot.slane %v307, 1
        %v1288 = vsel %vm1225, %v1286, %v1287
        %v1289 = vrot.slane %v308, 1
        %v1290 = vsel %vm1225, %v1287, %v1289
        %v1291 = vrot.slane %v309, 1
        %v1292 = vrot.slane %v310, 1
        %v1293 = vsel %vm1225, %v1291, %v1292
        %v1294 = vrot.slane %v311, 1
        %v1295 = vsel %vm1225, %v1292, %v1294
        %v1296 = vrot.slane %v312, 1
        %v1297 = vrot.slane %v313, 1
        %v1298 = vsel %vm1225, %v1296, %v1297
        %v1299 = vrot.slane %v314, 1
        %v1300 = vsel %vm1225, %v1297, %v1299
        %v1301 = vrot.slane %v315, 1
        %v1302 = vrot.slane %v316, 1
        %v1303 = vsel %vm1225, %v1301, %v1302
        %v1304 = vrot.slane %v317, 1
        %v1305 = vsel %vm1225, %v1302, %v1304
        %s1306 = scalar_lea.vmem %s2, 4
        %v1307 = vld [vmem:[%s1306] sm:$0xf]
        %v1308 = vsel %vm381, %v1228, 0
        %v1310 = vsel %vm381, %v1230, 0
        %v1312 = vsel %vm381, %v1233, 0
        %v1314 = vsel %vm381, %v1235, 0
        %v1316 = vsel %vm381, %v1238, 0
        %v1318 = vsel %vm381, %v1240, 0
        %v1320 = vsel %vm381, %v1243, 0
        %v1322 = vsel %vm381, %v1245, 0
        %v1324 = vsel %vm381, %v1248, 0
        %v1326 = vsel %vm381, %v1250, 0
        %v1328 = vsel %vm381, %v1253, 0
        %v1330 = vsel %vm381, %v1255, 0
        %v1332 = vsel %vm381, %v1258, 0
        %v1334 = vsel %vm381, %v1260, 0
        %v1336 = vsel %vm381, %v1263, 0
        %v1338 = vsel %vm381, %v1265, 0
        %v1340 = vsel %vm381, %v1268, 0
        %v1342 = vsel %vm381, %v1270, 0
        %v1344 = vsel %vm381, %v1273, 0
        %v1346 = vsel %vm381, %v1275, 0
        %v1348 = vsel %vm381, %v1278, 0
        %v1350 = vsel %vm381, %v1280, 0
        %v1352 = vsel %vm381, %v1283, 0
        %v1354 = vsel %vm381, %v1285, 0
        %v1356 = vsel %vm381, %v1288, 0
        %v1358 = vsel %vm381, %v1290, 0
        %v1360 = vsel %vm381, %v1293, 0
        %v1362 = vsel %vm381, %v1295, 0
        %v1364 = vsel %vm381, %v1298, 0
        %v1366 = vsel %vm381, %v1300, 0
        %v1368 = vsel %vm381, %v1303, 0
        %v1370 = vsel %vm381, %v1305, 0
        %v1373 = vsel %vm478, %v1307, 0
        %1375 = vmatprep.subr.mxu0 0.0
        %1376 = vmatpush1.msra.mxu0 %v1373
        %1377 = vmatprep.subr.mxu0 0.0
        %1378 = vmatpush1.msra.mxu0 0.0
        %1379 = vmatprep.subr.mxu0 0.0
        %1380 = vmatpush1.msra.mxu0 0.0
        %1381 = vmatprep.subr.mxu0 0.0
        %1382 = vmatpush1.msra.mxu0 0.0
        %1383 = vmatprep.subr.mxu0 0.0
        %1384 = vmatpush1.msra.mxu0 0.0
        %1385 = vmatprep.subr.mxu0 0.0
        %1386 = vmatpush1.msra.mxu0 0.0
        %1387 = vmatprep.subr.mxu0 0.0
        %1388 = vmatpush1.msra.mxu0 0.0
        %1389 = vmatprep.subr.mxu0 0.0
        %1390 = vmatpush1.msra.mxu0 0.0
        %1391 = vmatprep.subr.mxu0 0.0
        %1392 = vmatpush1.msra.mxu0 0.0
        %1393 = vmatprep.subr.mxu0 0.0
        %1394 = vmatpush1.msra.mxu0 0.0
        %1395 = vmatprep.subr.mxu0 0.0
        %1396 = vmatpush1.msra.mxu0 0.0
        %1397 = vmatprep.subr.mxu0 0.0
        %1398 = vmatpush1.msra.mxu0 0.0
        %1399 = vmatprep.subr.mxu0 0.0
        %1400 = vmatpush1.msra.mxu0 0.0
        %1401 = vmatprep.subr.mxu0 0.0
        %1402 = vmatpush1.msra.mxu0 0.0
        %1403 = vmatprep.subr.mxu0 0.0
        %1404 = vmatpush1.msra.mxu0 0.0
        %1405 = vmatprep.subr.mxu0 0.0
        %1406 = vmatpush1.msra.mxu0 0.0
        %1407 = vmatprep.subr.mxu0 0.0
        %1408 = vmatpush1.msra.mxu0 0.0
        %1409 = vmatprep.subr.mxu0 0.0
        %1410 = vmatpush1.msra.mxu0 0.0
        %1411 = vmatprep.subr.mxu0 0.0
        %1412 = vmatpush1.msra.mxu0 0.0
        %1413 = vmatprep.subr.mxu0 0.0
        %1414 = vmatpush1.msra.mxu0 0.0
        %1415 = vmatprep.subr.mxu0 0.0
        %1416 = vmatpush1.msra.mxu0 0.0
        %1417 = vmatprep.subr.mxu0 0.0
        %1418 = vmatpush1.msra.mxu0 0.0
        %1419 = vmatprep.subr.mxu0 0.0
        %1420 = vmatpush1.msra.mxu0 0.0
        %1421 = vmatprep.subr.mxu0 0.0
        %1422 = vmatpush1.msra.mxu0 0.0
        %1423 = vmatprep.subr.mxu0 0.0
        %1424 = vmatpush1.msra.mxu0 0.0
        %1425 = vmatprep.subr.mxu0 0.0
        %1426 = vmatpush1.msra.mxu0 0.0
        %1427 = vmatprep.subr.mxu0 0.0
        %1428 = vmatpush1.msra.mxu0 0.0
        %1429 = vmatprep.subr.mxu0 0.0
        %1430 = vmatpush1.msra.mxu0 0.0
        %1431 = vmatprep.subr.mxu0 0.0
        %1432 = vmatpush1.msra.mxu0 0.0
        %1433 = vmatprep.subr.mxu0 0.0
        %1434 = vmatpush1.msra.mxu0 0.0
        %1435 = vmatprep.subr.mxu0 0.0
        %1436 = vmatpush1.msra.mxu0 0.0
        %1437 = vmatprep.subr.mxu0 0.0
        %1438 = vmatpush1.msra.mxu0 0.0
        %1439 = vmatprep.mubr.f32.mxu0 0.0
        %1440 = vmatmul.mubr.f32.gmra.mrb[0].mxu0 %v1308
        %v1441 = vpop.f32.mrb[0].mxu0
        %v1442 = vadd.f32 0.0, %v1441
        %v1443 = vpop.f32.mrb[0].mxu0
        %1444 = vmatprep.mubr.f32.mxu0 0.0
        %1445 = vmatmul.mubr.f32.gmra.mrb[0].mxu0 %v1310
        %v1446 = vpop.f32.mrb[0].mxu0
        %v1447 = vadd.f32 0.0, %v1446
        %v1448 = vpop.f32.mrb[0].mxu0
        %1449 = vmatprep.mubr.f32.mxu0 0.0
        %1450 = vmatmul.mubr.f32.gmra.mrb[0].mxu0 %v1312
        %v1451 = vpop.f32.mrb[0].mxu0
        %v1452 = vadd.f32 0.0, %v1451
        %v1453 = vpop.f32.mrb[0].mxu0
        %1454 = vmatprep.mubr.f32.mxu0 0.0
        %1455 = vmatmul.mubr.f32.gmra.mrb[0].mxu0 %v1314
        %v1456 = vpop.f32.mrb[0].mxu0
        %v1457 = vadd.f32 0.0, %v1456
        %v1458 = vpop.f32.mrb[0].mxu0
        %1459 = vmatprep.mubr.f32.mxu0 0.0
        %1460 = vmatmul.mubr.f32.gmra.mrb[0].mxu0 %v1316
        %v1461 = vpop.f32.mrb[0].mxu0
        %v1462 = vadd.f32 0.0, %v1461
        %v1463 = vpop.f32.mrb[0].mxu0
        %1464 = vmatprep.mubr.f32.mxu0 0.0
        %1465 = vmatmul.mubr.f32.gmra.mrb[0].mxu0 %v1318
        %v1466 = vpop.f32.mrb[0].mxu0
        %v1467 = vadd.f32 0.0, %v1466
        %v1468 = vpop.f32.mrb[0].mxu0
        %1469 = vmatprep.mubr.f32.mxu0 0.0
        %1470 = vmatmul.mubr.f32.gmra.mrb[0].mxu0 %v1320
        %v1471 = vpop.f32.mrb[0].mxu0
        %v1472 = vadd.f32 0.0, %v1471
        %v1473 = vpop.f32.mrb[0].mxu0
        %1474 = vmatprep.mubr.f32.mxu0 0.0
        %1475 = vmatmul.mubr.f32.gmra.mrb[0].mxu0 %v1322
        %v1476 = vpop.f32.mrb[0].mxu0
        %v1477 = vadd.f32 0.0, %v1476
        %v1478 = vpop.f32.mrb[0].mxu0
        %1479 = vmatprep.mubr.f32.mxu0 0.0
        %1480 = vmatmul.mubr.f32.gmra.mrb[0].mxu0 %v1324
        %v1481 = vpop.f32.mrb[0].mxu0
        %v1482 = vadd.f32 0.0, %v1481
        %v1483 = vpop.f32.mrb[0].mxu0
        %1484 = vmatprep.mubr.f32.mxu0 0.0
        %1485 = vmatmul.mubr.f32.gmra.mrb[0].mxu0 %v1326
        %v1486 = vpop.f32.mrb[0].mxu0
        %v1487 = vadd.f32 0.0, %v1486
        %v1488 = vpop.f32.mrb[0].mxu0
        %1489 = vmatprep.mubr.f32.mxu0 0.0
        %1490 = vmatmul.mubr.f32.gmra.mrb[0].mxu0 %v1328
        %v1491 = vpop.f32.mrb[0].mxu0
        %v1492 = vadd.f32 0.0, %v1491
        %v1493 = vpop.f32.mrb[0].mxu0
        %1494 = vmatprep.mubr.f32.mxu0 0.0
        %1495 = vmatmul.mubr.f32.gmra.mrb[0].mxu0 %v1330
        %v1496 = vpop.f32.mrb[0].mxu0
        %v1497 = vadd.f32 0.0, %v1496
        %v1498 = vpop.f32.mrb[0].mxu0
        %1499 = vmatprep.mubr.f32.mxu0 0.0
        %1500 = vmatmul.mubr.f32.gmra.mrb[0].mxu0 %v1332
        %v1501 = vpop.f32.mrb[0].mxu0
        %v1502 = vadd.f32 0.0, %v1501
        %v1503 = vpop.f32.mrb[0].mxu0
        %1504 = vmatprep.mubr.f32.mxu0 0.0
        %1505 = vmatmul.mubr.f32.gmra.mrb[0].mxu0 %v1334
        %v1506 = vpop.f32.mrb[0].mxu0
        %v1507 = vadd.f32 0.0, %v1506
        %v1508 = vpop.f32.mrb[0].mxu0
        %1509 = vmatprep.mubr.f32.mxu0 0.0
        %1510 = vmatmul.mubr.f32.gmra.mrb[0].mxu0 %v1336
        %v1511 = vpop.f32.mrb[0].mxu0
        %v1512 = vadd.f32 0.0, %v1511
        %v1513 = vpop.f32.mrb[0].mxu0
        %1514 = vmatprep.mubr.f32.mxu0 0.0
        %1515 = vmatmul.mubr.f32.gmra.mrb[0].mxu0 %v1338
        %v1516 = vpop.f32.mrb[0].mxu0
        %v1517 = vadd.f32 0.0, %v1516
        %v1518 = vpop.f32.mrb[0].mxu0
        %1519 = vmatprep.mubr.f32.mxu0 0.0
        %1520 = vmatmul.mubr.f32.gmra.mrb[0].mxu0 %v1340
        %v1521 = vpop.f32.mrb[0].mxu0
        %v1522 = vadd.f32 0.0, %v1521
        %v1523 = vpop.f32.mrb[0].mxu0
        %1524 = vmatprep.mubr.f32.mxu0 0.0
        %1525 = vmatmul.mubr.f32.gmra.mrb[0].mxu0 %v1342
        %v1526 = vpop.f32.mrb[0].mxu0
        %v1527 = vadd.f32 0.0, %v1526
        %v1528 = vpop.f32.mrb[0].mxu0
        %1529 = vmatprep.mubr.f32.mxu0 0.0
        %1530 = vmatmul.mubr.f32.gmra.mrb[0].mxu0 %v1344
        %v1531 = vpop.f32.mrb[0].mxu0
        %v1532 = vadd.f32 0.0, %v1531
        %v1533 = vpop.f32.mrb[0].mxu0
        %1534 = vmatprep.mubr.f32.mxu0 0.0
        %1535 = vmatmul.mubr.f32.gmra.mrb[0].mxu0 %v1346
        %v1536 = vpop.f32.mrb[0].mxu0
        %v1537 = vadd.f32 0.0, %v1536
        %v1538 = vpop.f32.mrb[0].mxu0
        %1539 = vmatprep.mubr.f32.mxu0 0.0
        %1540 = vmatmul.mubr.f32.gmra.mrb[0].mxu0 %v1348
        %v1541 = vpop.f32.mrb[0].mxu0
        %v1542 = vadd.f32 0.0, %v1541
        %v1543 = vpop.f32.mrb[0].mxu0
        %1544 = vmatprep.mubr.f32.mxu0 0.0
        %1545 = vmatmul.mubr.f32.gmra.mrb[0].mxu0 %v1350
        %v1546 = vpop.f32.mrb[0].mxu0
        %v1547 = vadd.f32 0.0, %v1546
        %v1548 = vpop.f32.mrb[0].mxu0
        %1549 = vmatprep.mubr.f32.mxu0 0.0
        %1550 = vmatmul.mubr.f32.gmra.mrb[0].mxu0 %v1352
        %v1551 = vpop.f32.mrb[0].mxu0
        %v1552 = vadd.f32 0.0, %v1551
        %v1553 = vpop.f32.mrb[0].mxu0
        %1554 = vmatprep.mubr.f32.mxu0 0.0
        %1555 = vmatmul.mubr.f32.gmra.mrb[0].mxu0 %v1354
        %v1556 = vpop.f32.mrb[0].mxu0
        %v1557 = vadd.f32 0.0, %v1556
        %v1558 = vpop.f32.mrb[0].mxu0
        %1559 = vmatprep.mubr.f32.mxu0 0.0
        %1560 = vmatmul.mubr.f32.gmra.mrb[0].mxu0 %v1356
        %v1561 = vpop.f32.mrb[0].mxu0
        %v1562 = vadd.f32 0.0, %v1561
        %v1563 = vpop.f32.mrb[0].mxu0
        %1564 = vmatprep.mubr.f32.mxu0 0.0
        %1565 = vmatmul.mubr.f32.gmra.mrb[0].mxu0 %v1358
        %v1566 = vpop.f32.mrb[0].mxu0
        %v1567 = vadd.f32 0.0, %v1566
        %v1568 = vpop.f32.mrb[0].mxu0
        %1569 = vmatprep.mubr.f32.mxu0 0.0
        %1570 = vmatmul.mubr.f32.gmra.mrb[0].mxu0 %v1360
        %v1571 = vpop.f32.mrb[0].mxu0
        %v1572 = vadd.f32 0.0, %v1571
        %v1573 = vpop.f32.mrb[0].mxu0
        %1574 = vmatprep.mubr.f32.mxu0 0.0
        %1575 = vmatmul.mubr.f32.gmra.mrb[0].mxu0 %v1362
        %v1576 = vpop.f32.mrb[0].mxu0
        %v1577 = vadd.f32 0.0, %v1576
        %v1578 = vpop.f32.mrb[0].mxu0
        %1579 = vmatprep.mubr.f32.mxu0 0.0
        %1580 = vmatmul.mubr.f32.gmra.mrb[0].mxu0 %v1364
        %v1581 = vpop.f32.mrb[0].mxu0
        %v1582 = vadd.f32 0.0, %v1581
        %v1583 = vpop.f32.mrb[0].mxu0
        %1584 = vmatprep.mubr.f32.mxu0 0.0
        %1585 = vmatmul.mubr.f32.gmra.mrb[0].mxu0 %v1366
        %v1586 = vpop.f32.mrb[0].mxu0
        %v1587 = vadd.f32 0.0, %v1586
        %v1588 = vpop.f32.mrb[0].mxu0
        %1589 = vmatprep.mubr.f32.mxu0 0.0
        %1590 = vmatmul.mubr.f32.gmra.mrb[0].mxu0 %v1368
        %v1591 = vpop.f32.mrb[0].mxu0
        %v1592 = vadd.f32 0.0, %v1591
        %v1593 = vpop.f32.mrb[0].mxu0
        %1594 = vmatprep.mubr.f32.mxu0 0.0
        %1595 = vmatmul.mubr.f32.gmra.mrb[0].mxu0 %v1370
        %v1596 = vpop.f32.mrb[0].mxu0
        %v1597 = vadd.f32 0.0, %v1596
        %v1598 = vpop.f32.mrb[0].mxu0
        %1599 = vdwg.mxu0
        %v1600 = vadd.f32 %v1177, %v1442
        %v1601 = vadd.f32 %v1178, %v1447
        %v1602 = vadd.f32 %v1179, %v1452
        %v1603 = vadd.f32 %v1180, %v1457
        %v1604 = vadd.f32 %v1181, %v1462
        %v1605 = vadd.f32 %v1182, %v1467
        %v1606 = vadd.f32 %v1183, %v1472
        %v1607 = vadd.f32 %v1184, %v1477
        %v1608 = vadd.f32 %v1185, %v1482
        %v1609 = vadd.f32 %v1186, %v1487
        %v1610 = vadd.f32 %v1187, %v1492
        %v1611 = vadd.f32 %v1188, %v1497
        %v1612 = vadd.f32 %v1189, %v1502
        %v1613 = vadd.f32 %v1190, %v1507
        %v1614 = vadd.f32 %v1191, %v1512
        %v1615 = vadd.f32 %v1192, %v1517
        %v1616 = vadd.f32 %v1193, %v1522
        %v1617 = vadd.f32 %v1194, %v1527
        %v1618 = vadd.f32 %v1195, %v1532
        %v1619 = vadd.f32 %v1196, %v1537
        %v1620 = vadd.f32 %v1197, %v1542
        %v1621 = vadd.f32 %v1198, %v1547
        %v1622 = vadd.f32 %v1199, %v1552
        %v1623 = vadd.f32 %v1200, %v1557
        %v1624 = vadd.f32 %v1201, %v1562
        %v1625 = vadd.f32 %v1202, %v1567
        %v1626 = vadd.f32 %v1203, %v1572
        %v1627 = vadd.f32 %v1204, %v1577
        %v1628 = vadd.f32 %v1205, %v1582
        %v1629 = vadd.f32 %v1206, %v1587
        %v1630 = vadd.f32 %v1207, %v1592
        %v1631 = vadd.f32 %v1208, %v1597
        %v1633 = vrot.slane %v318, 1
        %v1634 = vrot.slane %v319, 1
        %v1635 = vsel %vm1225, %v1633, %v1634
        %v1636 = vrot.slane %v320, 1
        %v1637 = vsel %vm1225, %v1634, %v1636
        %s1638 = scalar_lea.vmem %s2, 16
        %v1639 = vld [vmem:[%s1638] sm:$0xf]
        %v1640 = vsel %vm381, %v1635, 0
        %v1642 = vsel %vm381, %v1637, 0
        %v1645 = vsel %vm478, %v1639, 0
        %1647 = vmatprep.subr.mxu0 0.0
        %1648 = vmatpush1.msra.mxu0 %v1645
        %1649 = vmatprep.subr.mxu0 0.0
        %1650 = vmatpush1.msra.mxu0 0.0
        %1651 = vmatprep.subr.mxu0 0.0
        %1652 = vmatpush1.msra.mxu0 0.0
        %1653 = vmatprep.subr.mxu0 0.0
        %1654 = vmatpush1.msra.mxu0 0.0
        %1655 = vmatprep.subr.mxu0 0.0
        %1656 = vmatpush1.msra.mxu0 0.0
        %1657 = vmatprep.subr.mxu0 0.0
        %1658 = vmatpush1.msra.mxu0 0.0
        %1659 = vmatprep.subr.mxu0 0.0
        %1660 = vmatpush1.msra.mxu0 0.0
        %1661 = vmatprep.subr.mxu0 0.0
        %1662 = vmatpush1.msra.mxu0 0.0
        %1663 = vmatprep.subr.mxu0 0.0
        %1664 = vmatpush1.msra.mxu0 0.0
        %1665 = vmatprep.subr.mxu0 0.0
        %1666 = vmatpush1.msra.mxu0 0.0
        %1667 = vmatprep.subr.mxu0 0.0
        %1668 = vmatpush1.msra.mxu0 0.0
        %1669 = vmatprep.subr.mxu0 0.0
        %1670 = vmatpush1.msra.mxu0 0.0
        %1671 = vmatprep.subr.mxu0 0.0
        %1672 = vmatpush1.msra.mxu0 0.0
        %1673 = vmatprep.subr.mxu0 0.0
        %1674 = vmatpush1.msra.mxu0 0.0
        %1675 = vmatprep.subr.mxu0 0.0
        %1676 = vmatpush1.msra.mxu0 0.0
        %1677 = vmatprep.subr.mxu0 0.0
        %1678 = vmatpush1.msra.mxu0 0.0
        %1679 = vmatprep.subr.mxu0 0.0
        %1680 = vmatpush1.msra.mxu0 0.0
        %1681 = vmatprep.subr.mxu0 0.0
        %1682 = vmatpush1.msra.mxu0 0.0
        %1683 = vmatprep.subr.mxu0 0.0
        %1684 = vmatpush1.msra.mxu0 0.0
        %1685 = vmatprep.subr.mxu0 0.0
        %1686 = vmatpush1.msra.mxu0 0.0
        %1687 = vmatprep.subr.mxu0 0.0
        %1688 = vmatpush1.msra.mxu0 0.0
        %1689 = vmatprep.subr.mxu0 0.0
        %1690 = vmatpush1.msra.mxu0 0.0
        %1691 = vmatprep.subr.mxu0 0.0
        %1692 = vmatpush1.msra.mxu0 0.0
        %1693 = vmatprep.subr.mxu0 0.0
        %1694 = vmatpush1.msra.mxu0 0.0
        %1695 = vmatprep.subr.mxu0 0.0
        %1696 = vmatpush1.msra.mxu0 0.0
        %1697 = vmatprep.subr.mxu0 0.0
        %1698 = vmatpush1.msra.mxu0 0.0
        %1699 = vmatprep.subr.mxu0 0.0
        %1700 = vmatpush1.msra.mxu0 0.0
        %1701 = vmatprep.subr.mxu0 0.0
        %1702 = vmatpush1.msra.mxu0 0.0
        %1703 = vmatprep.subr.mxu0 0.0
        %1704 = vmatpush1.msra.mxu0 0.0
        %1705 = vmatprep.subr.mxu0 0.0
        %1706 = vmatpush1.msra.mxu0 0.0
        %1707 = vmatprep.subr.mxu0 0.0
        %1708 = vmatpush1.msra.mxu0 0.0
        %1709 = vmatprep.subr.mxu0 0.0
        %1710 = vmatpush1.msra.mxu0 0.0
        %1711 = vmatprep.mubr.f32.mxu0 0.0
        %1712 = vmatmul.mubr.f32.gmra.mrb[0].mxu0 %v1312
        %v1713 = vpop.f32.mrb[0].mxu0
        %v1714 = vadd.f32 0.0, %v1713
        %v1715 = vpop.f32.mrb[0].mxu0
        %1716 = vmatprep.mubr.f32.mxu0 0.0
        %1717 = vmatmul.mubr.f32.gmra.mrb[0].mxu0 %v1314
        %v1718 = vpop.f32.mrb[0].mxu0
        %v1719 = vadd.f32 0.0, %v1718
        %v1720 = vpop.f32.mrb[0].mxu0
        %1721 = vmatprep.mubr.f32.mxu0 0.0
        %1722 = vmatmul.mubr.f32.gmra.mrb[0].mxu0 %v1316
        %v1723 = vpop.f32.mrb[0].mxu0
        %v1724 = vadd.f32 0.0, %v1723
        %v1725 = vpop.f32.mrb[0].mxu0
        %1726 = vmatprep.mubr.f32.mxu0 0.0
        %1727 = vmatmul.mubr.f32.gmra.mrb[0].mxu0 %v1318
        %v1728 = vpop.f32.mrb[0].mxu0
        %v1729 = vadd.f32 0.0, %v1728
        %v1730 = vpop.f32.mrb[0].mxu0
        %1731 = vmatprep.mubr.f32.mxu0 0.0
        %1732 = vmatmul.mubr.f32.gmra.mrb[0].mxu0 %v1320
        %v1733 = vpop.f32.mrb[0].mxu0
        %v1734 = vadd.f32 0.0, %v1733
        %v1735 = vpop.f32.mrb[0].mxu0
        %1736 = vmatprep.mubr.f32.mxu0 0.0
        %1737 = vmatmul.mubr.f32.gmra.mrb[0].mxu0 %v1322
        %v1738 = vpop.f32.mrb[0].mxu0
        %v1739 = vadd.f32 0.0, %v1738
        %v1740 = vpop.f32.mrb[0].mxu0
        %1741 = vmatprep.mubr.f32.mxu0 0.0
        %1742 = vmatmul.mubr.f32.gmra.mrb[0].mxu0 %v1324
        %v1743 = vpop.f32.mrb[0].mxu0
        %v1744 = vadd.f32 0.0, %v1743
        %v1745 = vpop.f32.mrb[0].mxu0
        %1746 = vmatprep.mubr.f32.mxu0 0.0
        %1747 = vmatmul.mubr.f32.gmra.mrb[0].mxu0 %v1326
        %v1748 = vpop.f32.mrb[0].mxu0
        %v1749 = vadd.f32 0.0, %v1748
        %v1750 = vpop.f32.mrb[0].mxu0
        %1751 = vmatprep.mubr.f32.mxu0 0.0
        %1752 = vmatmul.mubr.f32.gmra.mrb[0].mxu0 %v1328
        %v1753 = vpop.f32.mrb[0].mxu0
        %v1754 = vadd.f32 0.0, %v1753
        %v1755 = vpop.f32.mrb[0].mxu0
        %1756 = vmatprep.mubr.f32.mxu0 0.0
        %1757 = vmatmul.mubr.f32.gmra.mrb[0].mxu0 %v1330
        %v1758 = vpop.f32.mrb[0].mxu0
        %v1759 = vadd.f32 0.0, %v1758
        %v1760 = vpop.f32.mrb[0].mxu0
        %1761 = vmatprep.mubr.f32.mxu0 0.0
        %1762 = vmatmul.mubr.f32.gmra.mrb[0].mxu0 %v1332
        %v1763 = vpop.f32.mrb[0].mxu0
        %v1764 = vadd.f32 0.0, %v1763
        %v1765 = vpop.f32.mrb[0].mxu0
        %1766 = vmatprep.mubr.f32.mxu0 0.0
        %1767 = vmatmul.mubr.f32.gmra.mrb[0].mxu0 %v1334
        %v1768 = vpop.f32.mrb[0].mxu0
        %v1769 = vadd.f32 0.0, %v1768
        %v1770 = vpop.f32.mrb[0].mxu0
        %1771 = vmatprep.mubr.f32.mxu0 0.0
        %1772 = vmatmul.mubr.f32.gmra.mrb[0].mxu0 %v1336
        %v1773 = vpop.f32.mrb[0].mxu0
        %v1774 = vadd.f32 0.0, %v1773
        %v1775 = vpop.f32.mrb[0].mxu0
        %1776 = vmatprep.mubr.f32.mxu0 0.0
        %1777 = vmatmul.mubr.f32.gmra.mrb[0].mxu0 %v1338
        %v1778 = vpop.f32.mrb[0].mxu0
        %v1779 = vadd.f32 0.0, %v1778
        %v1780 = vpop.f32.mrb[0].mxu0
        %1781 = vmatprep.mubr.f32.mxu0 0.0
        %1782 = vmatmul.mubr.f32.gmra.mrb[0].mxu0 %v1340
        %v1783 = vpop.f32.mrb[0].mxu0
        %v1784 = vadd.f32 0.0, %v1783
        %v1785 = vpop.f32.mrb[0].mxu0
        %1786 = vmatprep.mubr.f32.mxu0 0.0
        %1787 = vmatmul.mubr.f32.gmra.mrb[0].mxu0 %v1342
        %v1788 = vpop.f32.mrb[0].mxu0
        %v1789 = vadd.f32 0.0, %v1788
        %v1790 = vpop.f32.mrb[0].mxu0
        %1791 = vmatprep.mubr.f32.mxu0 0.0
        %1792 = vmatmul.mubr.f32.gmra.mrb[0].mxu0 %v1344
        %v1793 = vpop.f32.mrb[0].mxu0
        %v1794 = vadd.f32 0.0, %v1793
        %v1795 = vpop.f32.mrb[0].mxu0
        %1796 = vmatprep.mubr.f32.mxu0 0.0
        %1797 = vmatmul.mubr.f32.gmra.mrb[0].mxu0 %v1346
        %v1798 = vpop.f32.mrb[0].mxu0
        %v1799 = vadd.f32 0.0, %v1798
        %v1800 = vpop.f32.mrb[0].mxu0
        %1801 = vmatprep.mubr.f32.mxu0 0.0
        %1802 = vmatmul.mubr.f32.gmra.mrb[0].mxu0 %v1348
        %v1803 = vpop.f32.mrb[0].mxu0
        %v1804 = vadd.f32 0.0, %v1803
        %v1805 = vpop.f32.mrb[0].mxu0
        %1806 = vmatprep.mubr.f32.mxu0 0.0
        %1807 = vmatmul.mubr.f32.gmra.mrb[0].mxu0 %v1350
        %v1808 = vpop.f32.mrb[0].mxu0
        %v1809 = vadd.f32 0.0, %v1808
        %v1810 = vpop.f32.mrb[0].mxu0
        %1811 = vmatprep.mubr.f32.mxu0 0.0
        %1812 = vmatmul.mubr.f32.gmra.mrb[0].mxu0 %v1352
        %v1813 = vpop.f32.mrb[0].mxu0
        %v1814 = vadd.f32 0.0, %v1813
        %v1815 = vpop.f32.mrb[0].mxu0
        %1816 = vmatprep.mubr.f32.mxu0 0.0
        %1817 = vmatmul.mubr.f32.gmra.mrb[0].mxu0 %v1354
        %v1818 = vpop.f32.mrb[0].mxu0
        %v1819 = vadd.f32 0.0, %v1818
        %v1820 = vpop.f32.mrb[0].mxu0
        %1821 = vmatprep.mubr.f32.mxu0 0.0
        %1822 = vmatmul.mubr.f32.gmra.mrb[0].mxu0 %v1356
        %v1823 = vpop.f32.mrb[0].mxu0
        %v1824 = vadd.f32 0.0, %v1823
        %v1825 = vpop.f32.mrb[0].mxu0
        %1826 = vmatprep.mubr.f32.mxu0 0.0
        %1827 = vmatmul.mubr.f32.gmra.mrb[0].mxu0 %v1358
        %v1828 = vpop.f32.mrb[0].mxu0
        %v1829 = vadd.f32 0.0, %v1828
        %v1830 = vpop.f32.mrb[0].mxu0
        %1831 = vmatprep.mubr.f32.mxu0 0.0
        %1832 = vmatmul.mubr.f32.gmra.mrb[0].mxu0 %v1360
        %v1833 = vpop.f32.mrb[0].mxu0
        %v1834 = vadd.f32 0.0, %v1833
        %v1835 = vpop.f32.mrb[0].mxu0
        %1836 = vmatprep.mubr.f32.mxu0 0.0
        %1837 = vmatmul.mubr.f32.gmra.mrb[0].mxu0 %v1362
        %v1838 = vpop.f32.mrb[0].mxu0
        %v1839 = vadd.f32 0.0, %v1838
        %v1840 = vpop.f32.mrb[0].mxu0
        %1841 = vmatprep.mubr.f32.mxu0 0.0
        %1842 = vmatmul.mubr.f32.gmra.mrb[0].mxu0 %v1364
        %v1843 = vpop.f32.mrb[0].mxu0
        %v1844 = vadd.f32 0.0, %v1843
        %v1845 = vpop.f32.mrb[0].mxu0
        %1846 = vmatprep.mubr.f32.mxu0 0.0
        %1847 = vmatmul.mubr.f32.gmra.mrb[0].mxu0 %v1366
        %v1848 = vpop.f32.mrb[0].mxu0
        %v1849 = vadd.f32 0.0, %v1848
        %v1850 = vpop.f32.mrb[0].mxu0
        %1851 = vmatprep.mubr.f32.mxu0 0.0
        %1852 = vmatmul.mubr.f32.gmra.mrb[0].mxu0 %v1368
        %v1853 = vpop.f32.mrb[0].mxu0
        %v1854 = vadd.f32 0.0, %v1853
        %v1855 = vpop.f32.mrb[0].mxu0
        %1856 = vmatprep.mubr.f32.mxu0 0.0
        %1857 = vmatmul.mubr.f32.gmra.mrb[0].mxu0 %v1370
        %v1858 = vpop.f32.mrb[0].mxu0
        %v1859 = vadd.f32 0.0, %v1858
        %v1860 = vpop.f32.mrb[0].mxu0
        %1861 = vmatprep.mubr.f32.mxu0 0.0
        %1862 = vmatmul.mubr.f32.gmra.mrb[0].mxu0 %v1640
        %v1863 = vpop.f32.mrb[0].mxu0
        %v1864 = vadd.f32 0.0, %v1863
        %v1865 = vpop.f32.mrb[0].mxu0
        %1866 = vmatprep.mubr.f32.mxu0 0.0
        %1867 = vmatmul.mubr.f32.gmra.mrb[0].mxu0 %v1642
        %v1868 = vpop.f32.mrb[0].mxu0
        %v1869 = vadd.f32 0.0, %v1868
        %v1870 = vpop.f32.mrb[0].mxu0
        %1871 = vdwg.mxu0
        %v1872 = vadd.f32 %v1600, %v1714
        %v1873 = vadd.f32 %v1601, %v1719
        %v1874 = vadd.f32 %v1602, %v1724
        %v1875 = vadd.f32 %v1603, %v1729
        %v1876 = vadd.f32 %v1604, %v1734
        %v1877 = vadd.f32 %v1605, %v1739
        %v1878 = vadd.f32 %v1606, %v1744
        %v1879 = vadd.f32 %v1607, %v1749
        %v1880 = vadd.f32 %v1608, %v1754
        %v1881 = vadd.f32 %v1609, %v1759
        %v1882 = vadd.f32 %v1610, %v1764
        %v1883 = vadd.f32 %v1611, %v1769
        %v1884 = vadd.f32 %v1612, %v1774
        %v1885 = vadd.f32 %v1613, %v1779
        %v1886 = vadd.f32 %v1614, %v1784
        %v1887 = vadd.f32 %v1615, %v1789
        %v1888 = vadd.f32 %v1616, %v1794
        %v1889 = vadd.f32 %v1617, %v1799
        %v1890 = vadd.f32 %v1618, %v1804
        %v1891 = vadd.f32 %v1619, %v1809
        %v1892 = vadd.f32 %v1620, %v1814
        %v1893 = vadd.f32 %v1621, %v1819
        %v1894 = vadd.f32 %v1622, %v1824
        %v1895 = vadd.f32 %v1623, %v1829
        %v1896 = vadd.f32 %v1624, %v1834
        %v1897 = vadd.f32 %v1625, %v1839
        %v1898 = vadd.f32 %v1626, %v1844
        %v1899 = vadd.f32 %v1627, %v1849
        %v1900 = vadd.f32 %v1628, %v1854
        %v1901 = vadd.f32 %v1629, %v1859
        %v1902 = vadd.f32 %v1630, %v1864
        %v1903 = vadd.f32 %v1631, %v1869
        %v1905 = vrot.slane %v321, 1
        %v1906 = vrot.slane %v322, 1
        %v1907 = vsel %vm1225, %v1905, %v1906
        %v1908 = vrot.slane %v323, 1
        %v1909 = vsel %vm1225, %v1906, %v1908
        %s1910 = scalar_lea.vmem %s2, 28
        %v1911 = vld [vmem:[%s1910] sm:$0xf]
        %v1912 = vsel %vm381, %v1907, 0
        %v1914 = vsel %vm381, %v1909, 0
        %v1917 = vsel %vm478, %v1911, 0
        %1919 = vmatprep.subr.mxu0 0.0
        %1920 = vmatpush1.msra.mxu0 %v1917
        %1921 = vmatprep.subr.mxu0 0.0
        %1922 = vmatpush1.msra.mxu0 0.0
        %1923 = vmatprep.subr.mxu0 0.0
        %1924 = vmatpush1.msra.mxu0 0.0
        %1925 = vmatprep.subr.mxu0 0.0
        %1926 = vmatpush1.msra.mxu0 0.0
        %1927 = vmatprep.subr.mxu0 0.0
        %1928 = vmatpush1.msra.mxu0 0.0
        %1929 = vmatprep.subr.mxu0 0.0
        %1930 = vmatpush1.msra.mxu0 0.0
        %1931 = vmatprep.subr.mxu0 0.0
        %1932 = vmatpush1.msra.mxu0 0.0
        %1933 = vmatprep.subr.mxu0 0.0
        %1934 = vmatpush1.msra.mxu0 0.0
        %1935 = vmatprep.subr.mxu0 0.0
        %1936 = vmatpush1.msra.mxu0 0.0
        %1937 = vmatprep.subr.mxu0 0.0
        %1938 = vmatpush1.msra.mxu0 0.0
        %1939 = vmatprep.subr.mxu0 0.0
        %1940 = vmatpush1.msra.mxu0 0.0
        %1941 = vmatprep.subr.mxu0 0.0
        %1942 = vmatpush1.msra.mxu0 0.0
        %1943 = vmatprep.subr.mxu0 0.0
        %1944 = vmatpush1.msra.mxu0 0.0
        %1945 = vmatprep.subr.mxu0 0.0
        %1946 = vmatpush1.msra.mxu0 0.0
        %1947 = vmatprep.subr.mxu0 0.0
        %1948 = vmatpush1.msra.mxu0 0.0
        %1949 = vmatprep.subr.mxu0 0.0
        %1950 = vmatpush1.msra.mxu0 0.0
        %1951 = vmatprep.subr.mxu0 0.0
        %1952 = vmatpush1.msra.mxu0 0.0
        %1953 = vmatprep.subr.mxu0 0.0
        %1954 = vmatpush1.msra.mxu0 0.0
        %1955 = vmatprep.subr.mxu0 0.0
        %1956 = vmatpush1.msra.mxu0 0.0
        %1957 = vmatprep.subr.mxu0 0.0
        %1958 = vmatpush1.msra.mxu0 0.0
        %1959 = vmatprep.subr.mxu0 0.0
        %1960 = vmatpush1.msra.mxu0 0.0
        %1961 = vmatprep.subr.mxu0 0.0
        %1962 = vmatpush1.msra.mxu0 0.0
        %1963 = vmatprep.subr.mxu0 0.0
        %1964 = vmatpush1.msra.mxu0 0.0
        %1965 = vmatprep.subr.mxu0 0.0
        %1966 = vmatpush1.msra.mxu0 0.0
        %1967 = vmatprep.subr.mxu0 0.0
        %1968 = vmatpush1.msra.mxu0 0.0
        %1969 = vmatprep.subr.mxu0 0.0
        %1970 = vmatpush1.msra.mxu0 0.0
        %1971 = vmatprep.subr.mxu0 0.0
        %1972 = vmatpush1.msra.mxu0 0.0
        %1973 = vmatprep.subr.mxu0 0.0
        %1974 = vmatpush1.msra.mxu0 0.0
        %1975 = vmatprep.subr.mxu0 0.0
        %1976 = vmatpush1.msra.mxu0 0.0
        %1977 = vmatprep.subr.mxu0 0.0
        %1978 = vmatpush1.msra.mxu0 0.0
        %1979 = vmatprep.subr.mxu0 0.0
        %1980 = vmatpush1.msra.mxu0 0.0
        %1981 = vmatprep.subr.mxu0 0.0
        %1982 = vmatpush1.msra.mxu0 0.0
        %1983 = vmatprep.mubr.f32.mxu0 0.0
        %1984 = vmatmul.mubr.f32.gmra.mrb[0].mxu0 %v1316
        %v1985 = vpop.f32.mrb[0].mxu0
        %v1986 = vadd.f32 0.0, %v1985
        %v1987 = vpop.f32.mrb[0].mxu0
        %1988 = vmatprep.mubr.f32.mxu0 0.0
        %1989 = vmatmul.mubr.f32.gmra.mrb[0].mxu0 %v1318
        %v1990 = vpop.f32.mrb[0].mxu0
        %v1991 = vadd.f32 0.0, %v1990
        %v1992 = vpop.f32.mrb[0].mxu0
        %1993 = vmatprep.mubr.f32.mxu0 0.0
        %1994 = vmatmul.mubr.f32.gmra.mrb[0].mxu0 %v1320
        %v1995 = vpop.f32.mrb[0].mxu0
        %v1996 = vadd.f32 0.0, %v1995
        %v1997 = vpop.f32.mrb[0].mxu0
        %1998 = vmatprep.mubr.f32.mxu0 0.0
        %1999 = vmatmul.mubr.f32.gmra.mrb[0].mxu0 %v1322
        %v2000 = vpop.f32.mrb[0].mxu0
        %v2001 = vadd.f32 0.0, %v2000
        %v2002 = vpop.f32.mrb[0].mxu0
        %2003 = vmatprep.mubr.f32.mxu0 0.0
        %2004 = vmatmul.mubr.f32.gmra.mrb[0].mxu0 %v1324
        %v2005 = vpop.f32.mrb[0].mxu0
        %v2006 = vadd.f32 0.0, %v2005
        %v2007 = vpop.f32.mrb[0].mxu0
        %2008 = vmatprep.mubr.f32.mxu0 0.0
        %2009 = vmatmul.mubr.f32.gmra.mrb[0].mxu0 %v1326
        %v2010 = vpop.f32.mrb[0].mxu0
        %v2011 = vadd.f32 0.0, %v2010
        %v2012 = vpop.f32.mrb[0].mxu0
        %2013 = vmatprep.mubr.f32.mxu0 0.0
        %2014 = vmatmul.mubr.f32.gmra.mrb[0].mxu0 %v1328
        %v2015 = vpop.f32.mrb[0].mxu0
        %v2016 = vadd.f32 0.0, %v2015
        %v2017 = vpop.f32.mrb[0].mxu0
        %2018 = vmatprep.mubr.f32.mxu0 0.0
        %2019 = vmatmul.mubr.f32.gmra.mrb[0].mxu0 %v1330
        %v2020 = vpop.f32.mrb[0].mxu0
        %v2021 = vadd.f32 0.0, %v2020
        %v2022 = vpop.f32.mrb[0].mxu0
        %2023 = vmatprep.mubr.f32.mxu0 0.0
        %2024 = vmatmul.mubr.f32.gmra.mrb[0].mxu0 %v1332
        %v2025 = vpop.f32.mrb[0].mxu0
        %v2026 = vadd.f32 0.0, %v2025
        %v2027 = vpop.f32.mrb[0].mxu0
        %2028 = vmatprep.mubr.f32.mxu0 0.0
        %2029 = vmatmul.mubr.f32.gmra.mrb[0].mxu0 %v1334
        %v2030 = vpop.f32.mrb[0].mxu0
        %v2031 = vadd.f32 0.0, %v2030
        %v2032 = vpop.f32.mrb[0].mxu0
        %2033 = vmatprep.mubr.f32.mxu0 0.0
        %2034 = vmatmul.mubr.f32.gmra.mrb[0].mxu0 %v1336
        %v2035 = vpop.f32.mrb[0].mxu0
        %v2036 = vadd.f32 0.0, %v2035
        %v2037 = vpop.f32.mrb[0].mxu0
        %2038 = vmatprep.mubr.f32.mxu0 0.0
        %2039 = vmatmul.mubr.f32.gmra.mrb[0].mxu0 %v1338
        %v2040 = vpop.f32.mrb[0].mxu0
        %v2041 = vadd.f32 0.0, %v2040
        %v2042 = vpop.f32.mrb[0].mxu0
        %2043 = vmatprep.mubr.f32.mxu0 0.0
        %2044 = vmatmul.mubr.f32.gmra.mrb[0].mxu0 %v1340
        %v2045 = vpop.f32.mrb[0].mxu0
        %v2046 = vadd.f32 0.0, %v2045
        %v2047 = vpop.f32.mrb[0].mxu0
        %2048 = vmatprep.mubr.f32.mxu0 0.0
        %2049 = vmatmul.mubr.f32.gmra.mrb[0].mxu0 %v1342
        %v2050 = vpop.f32.mrb[0].mxu0
        %v2051 = vadd.f32 0.0, %v2050
        %v2052 = vpop.f32.mrb[0].mxu0
        %2053 = vmatprep.mubr.f32.mxu0 0.0
        %2054 = vmatmul.mubr.f32.gmra.mrb[0].mxu0 %v1344
        %v2055 = vpop.f32.mrb[0].mxu0
        %v2056 = vadd.f32 0.0, %v2055
        %v2057 = vpop.f32.mrb[0].mxu0
        %2058 = vmatprep.mubr.f32.mxu0 0.0
        %2059 = vmatmul.mubr.f32.gmra.mrb[0].mxu0 %v1346
        %v2060 = vpop.f32.mrb[0].mxu0
        %v2061 = vadd.f32 0.0, %v2060
        %v2062 = vpop.f32.mrb[0].mxu0
        %2063 = vmatprep.mubr.f32.mxu0 0.0
        %2064 = vmatmul.mubr.f32.gmra.mrb[0].mxu0 %v1348
        %v2065 = vpop.f32.mrb[0].mxu0
        %v2066 = vadd.f32 0.0, %v2065
        %v2067 = vpop.f32.mrb[0].mxu0
        %2068 = vmatprep.mubr.f32.mxu0 0.0
        %2069 = vmatmul.mubr.f32.gmra.mrb[0].mxu0 %v1350
        %v2070 = vpop.f32.mrb[0].mxu0
        %v2071 = vadd.f32 0.0, %v2070
        %v2072 = vpop.f32.mrb[0].mxu0
        %2073 = vmatprep.mubr.f32.mxu0 0.0
        %2074 = vmatmul.mubr.f32.gmra.mrb[0].mxu0 %v1352
        %v2075 = vpop.f32.mrb[0].mxu0
        %v2076 = vadd.f32 0.0, %v2075
        %v2077 = vpop.f32.mrb[0].mxu0
        %2078 = vmatprep.mubr.f32.mxu0 0.0
        %2079 = vmatmul.mubr.f32.gmra.mrb[0].mxu0 %v1354
        %v2080 = vpop.f32.mrb[0].mxu0
        %v2081 = vadd.f32 0.0, %v2080
        %v2082 = vpop.f32.mrb[0].mxu0
        %2083 = vmatprep.mubr.f32.mxu0 0.0
        %2084 = vmatmul.mubr.f32.gmra.mrb[0].mxu0 %v1356
        %v2085 = vpop.f32.mrb[0].mxu0
        %v2086 = vadd.f32 0.0, %v2085
        %v2087 = vpop.f32.mrb[0].mxu0
        %2088 = vmatprep.mubr.f32.mxu0 0.0
        %2089 = vmatmul.mubr.f32.gmra.mrb[0].mxu0 %v1358
        %v2090 = vpop.f32.mrb[0].mxu0
        %v2091 = vadd.f32 0.0, %v2090
        %v2092 = vpop.f32.mrb[0].mxu0
        %2093 = vmatprep.mubr.f32.mxu0 0.0
        %2094 = vmatmul.mubr.f32.gmra.mrb[0].mxu0 %v1360
        %v2095 = vpop.f32.mrb[0].mxu0
        %v2096 = vadd.f32 0.0, %v2095
        %v2097 = vpop.f32.mrb[0].mxu0
        %2098 = vmatprep.mubr.f32.mxu0 0.0
        %2099 = vmatmul.mubr.f32.gmra.mrb[0].mxu0 %v1362
        %v2100 = vpop.f32.mrb[0].mxu0
        %v2101 = vadd.f32 0.0, %v2100
        %v2102 = vpop.f32.mrb[0].mxu0
        %2103 = vmatprep.mubr.f32.mxu0 0.0
        %2104 = vmatmul.mubr.f32.gmra.mrb[0].mxu0 %v1364
        %v2105 = vpop.f32.mrb[0].mxu0
        %v2106 = vadd.f32 0.0, %v2105
        %v2107 = vpop.f32.mrb[0].mxu0
        %2108 = vmatprep.mubr.f32.mxu0 0.0
        %2109 = vmatmul.mubr.f32.gmra.mrb[0].mxu0 %v1366
        %v2110 = vpop.f32.mrb[0].mxu0
        %v2111 = vadd.f32 0.0, %v2110
        %v2112 = vpop.f32.mrb[0].mxu0
        %2113 = vmatprep.mubr.f32.mxu0 0.0
        %2114 = vmatmul.mubr.f32.gmra.mrb[0].mxu0 %v1368
        %v2115 = vpop.f32.mrb[0].mxu0
        %v2116 = vadd.f32 0.0, %v2115
        %v2117 = vpop.f32.mrb[0].mxu0
        %2118 = vmatprep.mubr.f32.mxu0 0.0
        %2119 = vmatmul.mubr.f32.gmra.mrb[0].mxu0 %v1370
        %v2120 = vpop.f32.mrb[0].mxu0
        %v2121 = vadd.f32 0.0, %v2120
        %v2122 = vpop.f32.mrb[0].mxu0
        %2123 = vmatprep.mubr.f32.mxu0 0.0
        %2124 = vmatmul.mubr.f32.gmra.mrb[0].mxu0 %v1640
        %v2125 = vpop.f32.mrb[0].mxu0
        %v2126 = vadd.f32 0.0, %v2125
        %v2127 = vpop.f32.mrb[0].mxu0
        %2128 = vmatprep.mubr.f32.mxu0 0.0
        %2129 = vmatmul.mubr.f32.gmra.mrb[0].mxu0 %v1642
        %v2130 = vpop.f32.mrb[0].mxu0
        %v2131 = vadd.f32 0.0, %v2130
        %v2132 = vpop.f32.mrb[0].mxu0
        %2133 = vmatprep.mubr.f32.mxu0 0.0
        %2134 = vmatmul.mubr.f32.gmra.mrb[0].mxu0 %v1912
        %v2135 = vpop.f32.mrb[0].mxu0
        %v2136 = vadd.f32 0.0, %v2135
        %v2137 = vpop.f32.mrb[0].mxu0
        %2138 = vmatprep.mubr.f32.mxu0 0.0
        %2139 = vmatmul.mubr.f32.gmra.mrb[0].mxu0 %v1914
        %v2140 = vpop.f32.mrb[0].mxu0
        %v2141 = vadd.f32 0.0, %v2140
        %v2142 = vpop.f32.mrb[0].mxu0
        %2143 = vdwg.mxu0
        %v2144 = vadd.f32 %v1872, %v1986
        %v2145 = vadd.f32 %v1873, %v1991
        %v2146 = vadd.f32 %v1874, %v1996
        %v2147 = vadd.f32 %v1875, %v2001
        %v2148 = vadd.f32 %v1876, %v2006
        %v2149 = vadd.f32 %v1877, %v2011
        %v2150 = vadd.f32 %v1878, %v2016
        %v2151 = vadd.f32 %v1879, %v2021
        %v2152 = vadd.f32 %v1880, %v2026
        %v2153 = vadd.f32 %v1881, %v2031
        %v2154 = vadd.f32 %v1882, %v2036
        %v2155 = vadd.f32 %v1883, %v2041
        %v2156 = vadd.f32 %v1884, %v2046
        %v2157 = vadd.f32 %v1885, %v2051
        %v2158 = vadd.f32 %v1886, %v2056
        %v2159 = vadd.f32 %v1887, %v2061
        %v2160 = vadd.f32 %v1888, %v2066
        %v2161 = vadd.f32 %v1889, %v2071
        %v2162 = vadd.f32 %v1890, %v2076
        %v2163 = vadd.f32 %v1891, %v2081
        %v2164 = vadd.f32 %v1892, %v2086
        %v2165 = vadd.f32 %v1893, %v2091
        %v2166 = vadd.f32 %v1894, %v2096
        %v2167 = vadd.f32 %v1895, %v2101
        %v2168 = vadd.f32 %v1896, %v2106
        %v2169 = vadd.f32 %v1897, %v2111
        %v2170 = vadd.f32 %v1898, %v2116
        %v2171 = vadd.f32 %v1899, %v2121
        %v2172 = vadd.f32 %v1900, %v2126
        %v2173 = vadd.f32 %v1901, %v2131
        %v2174 = vadd.f32 %v1902, %v2136
        %v2175 = vadd.f32 %v1903, %v2141
        %vm2176 = vcmask 1045504
        %v2177 = vrot.slane %v270, 2
        %v2178 = vrot.slane %v271, 2
        %v2179 = vsel %vm2176, %v2177, %v2178
        %v2180 = vrot.slane %v272, 2
        %v2181 = vsel %vm2176, %v2178, %v2180
        %v2182 = vrot.slane %v273, 2
        %v2183 = vrot.slane %v274, 2
        %v2184 = vsel %vm2176, %v2182, %v2183
        %v2185 = vrot.slane %v275, 2
        %v2186 = vsel %vm2176, %v2183, %v2185
        %v2187 = vrot.slane %v276, 2
        %v2188 = vrot.slane %v277, 2
        %v2189 = vsel %vm2176, %v2187, %v2188
        %v2190 = vrot.slane %v278, 2
        %v2191 = vsel %vm2176, %v2188, %v2190
        %v2192 = vrot.slane %v279, 2
        %v2193 = vrot.slane %v280, 2
        %v2194 = vsel %vm2176, %v2192, %v2193
        %v2195 = vrot.slane %v281, 2
        %v2196 = vsel %vm2176, %v2193, %v2195
        %v2197 = vrot.slane %v282, 2
        %v2198 = vrot.slane %v283, 2
        %v2199 = vsel %vm2176, %v2197, %v2198
        %v2200 = vrot.slane %v284, 2
        %v2201 = vsel %vm2176, %v2198, %v2200
        %v2202 = vrot.slane %v285, 2
        %v2203 = vrot.slane %v286, 2
        %v2204 = vsel %vm2176, %v2202, %v2203
        %v2205 = vrot.slane %v287, 2
        %v2206 = vsel %vm2176, %v2203, %v2205
        %v2207 = vrot.slane %v288, 2
        %v2208 = vrot.slane %v289, 2
        %v2209 = vsel %vm2176, %v2207, %v2208
        %v2210 = vrot.slane %v290, 2
        %v2211 = vsel %vm2176, %v2208, %v2210
        %v2212 = vrot.slane %v291, 2
        %v2213 = vrot.slane %v292, 2
        %v2214 = vsel %vm2176, %v2212, %v2213
        %v2215 = vrot.slane %v293, 2
        %v2216 = vsel %vm2176, %v2213, %v2215
        %v2217 = vrot.slane %v294, 2
        %v2218 = vrot.slane %v295, 2
        %v2219 = vsel %vm2176, %v2217, %v2218
        %v2220 = vrot.slane %v296, 2
        %v2221 = vsel %vm2176, %v2218, %v2220
        %v2222 = vrot.slane %v297, 2
        %v2223 = vrot.slane %v298, 2
        %v2224 = vsel %vm2176, %v2222, %v2223
        %v2225 = vrot.slane %v299, 2
        %v2226 = vsel %vm2176, %v2223, %v2225
        %v2227 = vrot.slane %v300, 2
        %v2228 = vrot.slane %v301, 2
        %v2229 = vsel %vm2176, %v2227, %v2228
        %v2230 = vrot.slane %v302, 2
        %v2231 = vsel %vm2176, %v2228, %v2230
        %v2232 = vrot.slane %v303, 2
        %v2233 = vrot.slane %v304, 2
        %v2234 = vsel %vm2176, %v2232, %v2233
        %v2235 = vrot.slane %v305, 2
        %v2236 = vsel %vm2176, %v2233, %v2235
        %v2237 = vrot.slane %v306, 2
        %v2238 = vrot.slane %v307, 2
        %v2239 = vsel %vm2176, %v2237, %v2238
        %v2240 = vrot.slane %v308, 2
        %v2241 = vsel %vm2176, %v2238, %v2240
        %v2242 = vrot.slane %v309, 2
        %v2243 = vrot.slane %v310, 2
        %v2244 = vsel %vm2176, %v2242, %v2243
        %v2245 = vrot.slane %v311, 2
        %v2246 = vsel %vm2176, %v2243, %v2245
        %v2247 = vrot.slane %v312, 2
        %v2248 = vrot.slane %v313, 2
        %v2249 = vsel %vm2176, %v2247, %v2248
        %v2250 = vrot.slane %v314, 2
        %v2251 = vsel %vm2176, %v2248, %v2250
        %v2252 = vrot.slane %v315, 2
        %v2253 = vrot.slane %v316, 2
        %v2254 = vsel %vm2176, %v2252, %v2253
        %v2255 = vrot.slane %v317, 2
        %v2256 = vsel %vm2176, %v2253, %v2255
        %s2257 = scalar_lea.vmem %s2, 8
        %v2258 = vld [vmem:[%s2257] sm:$0xf]
        %v2259 = vsel %vm381, %v2179, 0
        %v2261 = vsel %vm381, %v2181, 0
        %v2263 = vsel %vm381, %v2184, 0
        %v2265 = vsel %vm381, %v2186, 0
        %v2267 = vsel %vm381, %v2189, 0
        %v2269 = vsel %vm381, %v2191, 0
        %v2271 = vsel %vm381, %v2194, 0
        %v2273 = vsel %vm381, %v2196, 0
        %v2275 = vsel %vm381, %v2199, 0
        %v2277 = vsel %vm381, %v2201, 0
        %v2279 = vsel %vm381, %v2204, 0
        %v2281 = vsel %vm381, %v2206, 0
        %v2283 = vsel %vm381, %v2209, 0
        %v2285 = vsel %vm381, %v2211, 0
        %v2287 = vsel %vm381, %v2214, 0
        %v2289 = vsel %vm381, %v2216, 0
        %v2291 = vsel %vm381, %v2219, 0
        %v2293 = vsel %vm381, %v2221, 0
        %v2295 = vsel %vm381, %v2224, 0
        %v2297 = vsel %vm381, %v2226, 0
        %v2299 = vsel %vm381, %v2229, 0
        %v2301 = vsel %vm381, %v2231, 0
        %v2303 = vsel %vm381, %v2234, 0
        %v2305 = vsel %vm381, %v2236, 0
        %v2307 = vsel %vm381, %v2239, 0
        %v2309 = vsel %vm381, %v2241, 0
        %v2311 = vsel %vm381, %v2244, 0
        %v2313 = vsel %vm381, %v2246, 0
        %v2315 = vsel %vm381, %v2249, 0
        %v2317 = vsel %vm381, %v2251, 0
        %v2319 = vsel %vm381, %v2254, 0
        %v2321 = vsel %vm381, %v2256, 0
        %v2324 = vsel %vm478, %v2258, 0
        %2326 = vmatprep.subr.mxu0 0.0
        %2327 = vmatpush1.msra.mxu0 %v2324
        %2328 = vmatprep.subr.mxu0 0.0
        %2329 = vmatpush1.msra.mxu0 0.0
        %2330 = vmatprep.subr.mxu0 0.0
        %2331 = vmatpush1.msra.mxu0 0.0
        %2332 = vmatprep.subr.mxu0 0.0
        %2333 = vmatpush1.msra.mxu0 0.0
        %2334 = vmatprep.subr.mxu0 0.0
        %2335 = vmatpush1.msra.mxu0 0.0
        %2336 = vmatprep.subr.mxu0 0.0
        %2337 = vmatpush1.msra.mxu0 0.0
        %2338 = vmatprep.subr.mxu0 0.0
        %2339 = vmatpush1.msra.mxu0 0.0
        %2340 = vmatprep.subr.mxu0 0.0
        %2341 = vmatpush1.msra.mxu0 0.0
        %2342 = vmatprep.subr.mxu0 0.0
        %2343 = vmatpush1.msra.mxu0 0.0
        %2344 = vmatprep.subr.mxu0 0.0
        %2345 = vmatpush1.msra.mxu0 0.0
        %2346 = vmatprep.subr.mxu0 0.0
        %2347 = vmatpush1.msra.mxu0 0.0
        %2348 = vmatprep.subr.mxu0 0.0
        %2349 = vmatpush1.msra.mxu0 0.0
        %2350 = vmatprep.subr.mxu0 0.0
        %2351 = vmatpush1.msra.mxu0 0.0
        %2352 = vmatprep.subr.mxu0 0.0
        %2353 = vmatpush1.msra.mxu0 0.0
        %2354 = vmatprep.subr.mxu0 0.0
        %2355 = vmatpush1.msra.mxu0 0.0
        %2356 = vmatprep.subr.mxu0 0.0
        %2357 = vmatpush1.msra.mxu0 0.0
        %2358 = vmatprep.subr.mxu0 0.0
        %2359 = vmatpush1.msra.mxu0 0.0
        %2360 = vmatprep.subr.mxu0 0.0
        %2361 = vmatpush1.msra.mxu0 0.0
        %2362 = vmatprep.subr.mxu0 0.0
        %2363 = vmatpush1.msra.mxu0 0.0
        %2364 = vmatprep.subr.mxu0 0.0
        %2365 = vmatpush1.msra.mxu0 0.0
        %2366 = vmatprep.subr.mxu0 0.0
        %2367 = vmatpush1.msra.mxu0 0.0
        %2368 = vmatprep.subr.mxu0 0.0
        %2369 = vmatpush1.msra.mxu0 0.0
        %2370 = vmatprep.subr.mxu0 0.0
        %2371 = vmatpush1.msra.mxu0 0.0
        %2372 = vmatprep.subr.mxu0 0.0
        %2373 = vmatpush1.msra.mxu0 0.0
        %2374 = vmatprep.subr.mxu0 0.0
        %2375 = vmatpush1.msra.mxu0 0.0
        %2376 = vmatprep.subr.mxu0 0.0
        %2377 = vmatpush1.msra.mxu0 0.0
        %2378 = vmatprep.subr.mxu0 0.0
        %2379 = vmatpush1.msra.mxu0 0.0
        %2380 = vmatprep.subr.mxu0 0.0
        %2381 = vmatpush1.msra.mxu0 0.0
        %2382 = vmatprep.subr.mxu0 0.0
        %2383 = vmatpush1.msra.mxu0 0.0
        %2384 = vmatprep.subr.mxu0 0.0
        %2385 = vmatpush1.msra.mxu0 0.0
        %2386 = vmatprep.subr.mxu0 0.0
        %2387 = vmatpush1.msra.mxu0 0.0
        %2388 = vmatprep.subr.mxu0 0.0
        %2389 = vmatpush1.msra.mxu0 0.0
        %2390 = vmatprep.mubr.f32.mxu0 0.0
        %2391 = vmatmul.mubr.f32.gmra.mrb[0].mxu0 %v2259
        %v2392 = vpop.f32.mrb[0].mxu0
        %v2393 = vadd.f32 0.0, %v2392
        %v2394 = vpop.f32.mrb[0].mxu0
        %2395 = vmatprep.mubr.f32.mxu0 0.0
        %2396 = vmatmul.mubr.f32.gmra.mrb[0].mxu0 %v2261
        %v2397 = vpop.f32.mrb[0].mxu0
        %v2398 = vadd.f32 0.0, %v2397
        %v2399 = vpop.f32.mrb[0].mxu0
        %2400 = vmatprep.mubr.f32.mxu0 0.0
        %2401 = vmatmul.mubr.f32.gmra.mrb[0].mxu0 %v2263
        %v2402 = vpop.f32.mrb[0].mxu0
        %v2403 = vadd.f32 0.0, %v2402
        %v2404 = vpop.f32.mrb[0].mxu0
        %2405 = vmatprep.mubr.f32.mxu0 0.0
        %2406 = vmatmul.mubr.f32.gmra.mrb[0].mxu0 %v2265
        %v2407 = vpop.f32.mrb[0].mxu0
        %v2408 = vadd.f32 0.0, %v2407
        %v2409 = vpop.f32.mrb[0].mxu0
        %2410 = vmatprep.mubr.f32.mxu0 0.0
        %2411 = vmatmul.mubr.f32.gmra.mrb[0].mxu0 %v2267
        %v2412 = vpop.f32.mrb[0].mxu0
        %v2413 = vadd.f32 0.0, %v2412
        %v2414 = vpop.f32.mrb[0].mxu0
        %2415 = vmatprep.mubr.f32.mxu0 0.0
        %2416 = vmatmul.mubr.f32.gmra.mrb[0].mxu0 %v2269
        %v2417 = vpop.f32.mrb[0].mxu0
        %v2418 = vadd.f32 0.0, %v2417
        %v2419 = vpop.f32.mrb[0].mxu0
        %2420 = vmatprep.mubr.f32.mxu0 0.0
        %2421 = vmatmul.mubr.f32.gmra.mrb[0].mxu0 %v2271
        %v2422 = vpop.f32.mrb[0].mxu0
        %v2423 = vadd.f32 0.0, %v2422
        %v2424 = vpop.f32.mrb[0].mxu0
        %2425 = vmatprep.mubr.f32.mxu0 0.0
        %2426 = vmatmul.mubr.f32.gmra.mrb[0].mxu0 %v2273
        %v2427 = vpop.f32.mrb[0].mxu0
        %v2428 = vadd.f32 0.0, %v2427
        %v2429 = vpop.f32.mrb[0].mxu0
        %2430 = vmatprep.mubr.f32.mxu0 0.0
        %2431 = vmatmul.mubr.f32.gmra.mrb[0].mxu0 %v2275
        %v2432 = vpop.f32.mrb[0].mxu0
        %v2433 = vadd.f32 0.0, %v2432
        %v2434 = vpop.f32.mrb[0].mxu0
        %2435 = vmatprep.mubr.f32.mxu0 0.0
        %2436 = vmatmul.mubr.f32.gmra.mrb[0].mxu0 %v2277
        %v2437 = vpop.f32.mrb[0].mxu0
        %v2438 = vadd.f32 0.0, %v2437
        %v2439 = vpop.f32.mrb[0].mxu0
        %2440 = vmatprep.mubr.f32.mxu0 0.0
        %2441 = vmatmul.mubr.f32.gmra.mrb[0].mxu0 %v2279
        %v2442 = vpop.f32.mrb[0].mxu0
        %v2443 = vadd.f32 0.0, %v2442
        %v2444 = vpop.f32.mrb[0].mxu0
        %2445 = vmatprep.mubr.f32.mxu0 0.0
        %2446 = vmatmul.mubr.f32.gmra.mrb[0].mxu0 %v2281
        %v2447 = vpop.f32.mrb[0].mxu0
        %v2448 = vadd.f32 0.0, %v2447
        %v2449 = vpop.f32.mrb[0].mxu0
        %2450 = vmatprep.mubr.f32.mxu0 0.0
        %2451 = vmatmul.mubr.f32.gmra.mrb[0].mxu0 %v2283
        %v2452 = vpop.f32.mrb[0].mxu0
        %v2453 = vadd.f32 0.0, %v2452
        %v2454 = vpop.f32.mrb[0].mxu0
        %2455 = vmatprep.mubr.f32.mxu0 0.0
        %2456 = vmatmul.mubr.f32.gmra.mrb[0].mxu0 %v2285
        %v2457 = vpop.f32.mrb[0].mxu0
        %v2458 = vadd.f32 0.0, %v2457
        %v2459 = vpop.f32.mrb[0].mxu0
        %2460 = vmatprep.mubr.f32.mxu0 0.0
        %2461 = vmatmul.mubr.f32.gmra.mrb[0].mxu0 %v2287
        %v2462 = vpop.f32.mrb[0].mxu0
        %v2463 = vadd.f32 0.0, %v2462
        %v2464 = vpop.f32.mrb[0].mxu0
        %2465 = vmatprep.mubr.f32.mxu0 0.0
        %2466 = vmatmul.mubr.f32.gmra.mrb[0].mxu0 %v2289
        %v2467 = vpop.f32.mrb[0].mxu0
        %v2468 = vadd.f32 0.0, %v2467
        %v2469 = vpop.f32.mrb[0].mxu0
        %2470 = vmatprep.mubr.f32.mxu0 0.0
        %2471 = vmatmul.mubr.f32.gmra.mrb[0].mxu0 %v2291
        %v2472 = vpop.f32.mrb[0].mxu0
        %v2473 = vadd.f32 0.0, %v2472
        %v2474 = vpop.f32.mrb[0].mxu0
        %2475 = vmatprep.mubr.f32.mxu0 0.0
        %2476 = vmatmul.mubr.f32.gmra.mrb[0].mxu0 %v2293
        %v2477 = vpop.f32.mrb[0].mxu0
        %v2478 = vadd.f32 0.0, %v2477
        %v2479 = vpop.f32.mrb[0].mxu0
        %2480 = vmatprep.mubr.f32.mxu0 0.0
        %2481 = vmatmul.mubr.f32.gmra.mrb[0].mxu0 %v2295
        %v2482 = vpop.f32.mrb[0].mxu0
        %v2483 = vadd.f32 0.0, %v2482
        %v2484 = vpop.f32.mrb[0].mxu0
        %2485 = vmatprep.mubr.f32.mxu0 0.0
        %2486 = vmatmul.mubr.f32.gmra.mrb[0].mxu0 %v2297
        %v2487 = vpop.f32.mrb[0].mxu0
        %v2488 = vadd.f32 0.0, %v2487
        %v2489 = vpop.f32.mrb[0].mxu0
        %2490 = vmatprep.mubr.f32.mxu0 0.0
        %2491 = vmatmul.mubr.f32.gmra.mrb[0].mxu0 %v2299
        %v2492 = vpop.f32.mrb[0].mxu0
        %v2493 = vadd.f32 0.0, %v2492
        %v2494 = vpop.f32.mrb[0].mxu0
        %2495 = vmatprep.mubr.f32.mxu0 0.0
        %2496 = vmatmul.mubr.f32.gmra.mrb[0].mxu0 %v2301
        %v2497 = vpop.f32.mrb[0].mxu0
        %v2498 = vadd.f32 0.0, %v2497
        %v2499 = vpop.f32.mrb[0].mxu0
        %2500 = vmatprep.mubr.f32.mxu0 0.0
        %2501 = vmatmul.mubr.f32.gmra.mrb[0].mxu0 %v2303
        %v2502 = vpop.f32.mrb[0].mxu0
        %v2503 = vadd.f32 0.0, %v2502
        %v2504 = vpop.f32.mrb[0].mxu0
        %2505 = vmatprep.mubr.f32.mxu0 0.0
        %2506 = vmatmul.mubr.f32.gmra.mrb[0].mxu0 %v2305
        %v2507 = vpop.f32.mrb[0].mxu0
        %v2508 = vadd.f32 0.0, %v2507
        %v2509 = vpop.f32.mrb[0].mxu0
        %2510 = vmatprep.mubr.f32.mxu0 0.0
        %2511 = vmatmul.mubr.f32.gmra.mrb[0].mxu0 %v2307
        %v2512 = vpop.f32.mrb[0].mxu0
        %v2513 = vadd.f32 0.0, %v2512
        %v2514 = vpop.f32.mrb[0].mxu0
        %2515 = vmatprep.mubr.f32.mxu0 0.0
        %2516 = vmatmul.mubr.f32.gmra.mrb[0].mxu0 %v2309
        %v2517 = vpop.f32.mrb[0].mxu0
        %v2518 = vadd.f32 0.0, %v2517
        %v2519 = vpop.f32.mrb[0].mxu0
        %2520 = vmatprep.mubr.f32.mxu0 0.0
        %2521 = vmatmul.mubr.f32.gmra.mrb[0].mxu0 %v2311
        %v2522 = vpop.f32.mrb[0].mxu0
        %v2523 = vadd.f32 0.0, %v2522
        %v2524 = vpop.f32.mrb[0].mxu0
        %2525 = vmatprep.mubr.f32.mxu0 0.0
        %2526 = vmatmul.mubr.f32.gmra.mrb[0].mxu0 %v2313
        %v2527 = vpop.f32.mrb[0].mxu0
        %v2528 = vadd.f32 0.0, %v2527
        %v2529 = vpop.f32.mrb[0].mxu0
        %2530 = vmatprep.mubr.f32.mxu0 0.0
        %2531 = vmatmul.mubr.f32.gmra.mrb[0].mxu0 %v2315
        %v2532 = vpop.f32.mrb[0].mxu0
        %v2533 = vadd.f32 0.0, %v2532
        %v2534 = vpop.f32.mrb[0].mxu0
        %2535 = vmatprep.mubr.f32.mxu0 0.0
        %2536 = vmatmul.mubr.f32.gmra.mrb[0].mxu0 %v2317
        %v2537 = vpop.f32.mrb[0].mxu0
        %v2538 = vadd.f32 0.0, %v2537
        %v2539 = vpop.f32.mrb[0].mxu0
        %2540 = vmatprep.mubr.f32.mxu0 0.0
        %2541 = vmatmul.mubr.f32.gmra.mrb[0].mxu0 %v2319
        %v2542 = vpop.f32.mrb[0].mxu0
        %v2543 = vadd.f32 0.0, %v2542
        %v2544 = vpop.f32.mrb[0].mxu0
        %2545 = vmatprep.mubr.f32.mxu0 0.0
        %2546 = vmatmul.mubr.f32.gmra.mrb[0].mxu0 %v2321
        %v2547 = vpop.f32.mrb[0].mxu0
        %v2548 = vadd.f32 0.0, %v2547
        %v2549 = vpop.f32.mrb[0].mxu0
        %2550 = vdwg.mxu0
        %v2551 = vadd.f32 %v2144, %v2393
        %v2552 = vadd.f32 %v2145, %v2398
        %v2553 = vadd.f32 %v2146, %v2403
        %v2554 = vadd.f32 %v2147, %v2408
        %v2555 = vadd.f32 %v2148, %v2413
        %v2556 = vadd.f32 %v2149, %v2418
        %v2557 = vadd.f32 %v2150, %v2423
        %v2558 = vadd.f32 %v2151, %v2428
        %v2559 = vadd.f32 %v2152, %v2433
        %v2560 = vadd.f32 %v2153, %v2438
        %v2561 = vadd.f32 %v2154, %v2443
        %v2562 = vadd.f32 %v2155, %v2448
        %v2563 = vadd.f32 %v2156, %v2453
        %v2564 = vadd.f32 %v2157, %v2458
        %v2565 = vadd.f32 %v2158, %v2463
        %v2566 = vadd.f32 %v2159, %v2468
        %v2567 = vadd.f32 %v2160, %v2473
        %v2568 = vadd.f32 %v2161, %v2478
        %v2569 = vadd.f32 %v2162, %v2483
        %v2570 = vadd.f32 %v2163, %v2488
        %v2571 = vadd.f32 %v2164, %v2493
        %v2572 = vadd.f32 %v2165, %v2498
        %v2573 = vadd.f32 %v2166, %v2503
        %v2574 = vadd.f32 %v2167, %v2508
        %v2575 = vadd.f32 %v2168, %v2513
        %v2576 = vadd.f32 %v2169, %v2518
        %v2577 = vadd.f32 %v2170, %v2523
        %v2578 = vadd.f32 %v2171, %v2528
        %v2579 = vadd.f32 %v2172, %v2533
        %v2580 = vadd.f32 %v2173, %v2538
        %v2581 = vadd.f32 %v2174, %v2543
        %v2582 = vadd.f32 %v2175, %v2548
        %v2583 = vrot.slane %v318, 2
        %v2584 = vrot.slane %v319, 2
        %v2585 = vsel %vm2176, %v2583, %v2584
        %v2586 = vrot.slane %v320, 2
        %v2587 = vsel %vm2176, %v2584, %v2586
        %s2588 = scalar_lea.vmem %s2, 20
        %v2589 = vld [vmem:[%s2588] sm:$0xf]
        %v2590 = vsel %vm381, %v2585, 0
        %v2592 = vsel %vm381, %v2587, 0
        %v2595 = vsel %vm478, %v2589, 0
        %2597 = vmatprep.subr.mxu0 0.0
        %2598 = vmatpush1.msra.mxu0 %v2595
        %2599 = vmatprep.subr.mxu0 0.0
        %2600 = vmatpush1.msra.mxu0 0.0
        %2601 = vmatprep.subr.mxu0 0.0
        %2602 = vmatpush1.msra.mxu0 0.0
        %2603 = vmatprep.subr.mxu0 0.0
        %2604 = vmatpush1.msra.mxu0 0.0
        %2605 = vmatprep.subr.mxu0 0.0
        %2606 = vmatpush1.msra.mxu0 0.0
        %2607 = vmatprep.subr.mxu0 0.0
        %2608 = vmatpush1.msra.mxu0 0.0
        %2609 = vmatprep.subr.mxu0 0.0
        %2610 = vmatpush1.msra.mxu0 0.0
        %2611 = vmatprep.subr.mxu0 0.0
        %2612 = vmatpush1.msra.mxu0 0.0
        %2613 = vmatprep.subr.mxu0 0.0
        %2614 = vmatpush1.msra.mxu0 0.0
        %2615 = vmatprep.subr.mxu0 0.0
        %2616 = vmatpush1.msra.mxu0 0.0
        %2617 = vmatprep.subr.mxu0 0.0
        %2618 = vmatpush1.msra.mxu0 0.0
        %2619 = vmatprep.subr.mxu0 0.0
        %2620 = vmatpush1.msra.mxu0 0.0
        %2621 = vmatprep.subr.mxu0 0.0
        %2622 = vmatpush1.msra.mxu0 0.0
        %2623 = vmatprep.subr.mxu0 0.0
        %2624 = vmatpush1.msra.mxu0 0.0
        %2625 = vmatprep.subr.mxu0 0.0
        %2626 = vmatpush1.msra.mxu0 0.0
        %2627 = vmatprep.subr.mxu0 0.0
        %2628 = vmatpush1.msra.mxu0 0.0
        %2629 = vmatprep.subr.mxu0 0.0
        %2630 = vmatpush1.msra.mxu0 0.0
        %2631 = vmatprep.subr.mxu0 0.0
        %2632 = vmatpush1.msra.mxu0 0.0
        %2633 = vmatprep.subr.mxu0 0.0
        %2634 = vmatpush1.msra.mxu0 0.0
        %2635 = vmatprep.subr.mxu0 0.0
        %2636 = vmatpush1.msra.mxu0 0.0
        %2637 = vmatprep.subr.mxu0 0.0
        %2638 = vmatpush1.msra.mxu0 0.0
        %2639 = vmatprep.subr.mxu0 0.0
        %2640 = vmatpush1.msra.mxu0 0.0
        %2641 = vmatprep.subr.mxu0 0.0
        %2642 = vmatpush1.msra.mxu0 0.0
        %2643 = vmatprep.subr.mxu0 0.0
        %2644 = vmatpush1.msra.mxu0 0.0
        %2645 = vmatprep.subr.mxu0 0.0
        %2646 = vmatpush1.msra.mxu0 0.0
        %2647 = vmatprep.subr.mxu0 0.0
        %2648 = vmatpush1.msra.mxu0 0.0
        %2649 = vmatprep.subr.mxu0 0.0
        %2650 = vmatpush1.msra.mxu0 0.0
        %2651 = vmatprep.subr.mxu0 0.0
        %2652 = vmatpush1.msra.mxu0 0.0
        %2653 = vmatprep.subr.mxu0 0.0
        %2654 = vmatpush1.msra.mxu0 0.0
        %2655 = vmatprep.subr.mxu0 0.0
        %2656 = vmatpush1.msra.mxu0 0.0
        %2657 = vmatprep.subr.mxu0 0.0
        %2658 = vmatpush1.msra.mxu0 0.0
        %2659 = vmatprep.subr.mxu0 0.0
        %2660 = vmatpush1.msra.mxu0 0.0
        %2661 = vmatprep.mubr.f32.mxu0 0.0
        %2662 = vmatmul.mubr.f32.gmra.mrb[0].mxu0 %v2263
        %v2663 = vpop.f32.mrb[0].mxu0
        %v2664 = vadd.f32 0.0, %v2663
        %v2665 = vpop.f32.mrb[0].mxu0
        %2666 = vmatprep.mubr.f32.mxu0 0.0
        %2667 = vmatmul.mubr.f32.gmra.mrb[0].mxu0 %v2265
        %v2668 = vpop.f32.mrb[0].mxu0
        %v2669 = vadd.f32 0.0, %v2668
        %v2670 = vpop.f32.mrb[0].mxu0
        %2671 = vmatprep.mubr.f32.mxu0 0.0
        %2672 = vmatmul.mubr.f32.gmra.mrb[0].mxu0 %v2267
        %v2673 = vpop.f32.mrb[0].mxu0
        %v2674 = vadd.f32 0.0, %v2673
        %v2675 = vpop.f32.mrb[0].mxu0
        %2676 = vmatprep.mubr.f32.mxu0 0.0
        %2677 = vmatmul.mubr.f32.gmra.mrb[0].mxu0 %v2269
        %v2678 = vpop.f32.mrb[0].mxu0
        %v2679 = vadd.f32 0.0, %v2678
        %v2680 = vpop.f32.mrb[0].mxu0
        %2681 = vmatprep.mubr.f32.mxu0 0.0
        %2682 = vmatmul.mubr.f32.gmra.mrb[0].mxu0 %v2271
        %v2683 = vpop.f32.mrb[0].mxu0
        %v2684 = vadd.f32 0.0, %v2683
        %v2685 = vpop.f32.mrb[0].mxu0
        %2686 = vmatprep.mubr.f32.mxu0 0.0
        %2687 = vmatmul.mubr.f32.gmra.mrb[0].mxu0 %v2273
        %v2688 = vpop.f32.mrb[0].mxu0
        %v2689 = vadd.f32 0.0, %v2688
        %v2690 = vpop.f32.mrb[0].mxu0
        %2691 = vmatprep.mubr.f32.mxu0 0.0
        %2692 = vmatmul.mubr.f32.gmra.mrb[0].mxu0 %v2275
        %v2693 = vpop.f32.mrb[0].mxu0
        %v2694 = vadd.f32 0.0, %v2693
        %v2695 = vpop.f32.mrb[0].mxu0
        %2696 = vmatprep.mubr.f32.mxu0 0.0
        %2697 = vmatmul.mubr.f32.gmra.mrb[0].mxu0 %v2277
        %v2698 = vpop.f32.mrb[0].mxu0
        %v2699 = vadd.f32 0.0, %v2698
        %v2700 = vpop.f32.mrb[0].mxu0
        %2701 = vmatprep.mubr.f32.mxu0 0.0
        %2702 = vmatmul.mubr.f32.gmra.mrb[0].mxu0 %v2279
        %v2703 = vpop.f32.mrb[0].mxu0
        %v2704 = vadd.f32 0.0, %v2703
        %v2705 = vpop.f32.mrb[0].mxu0
        %2706 = vmatprep.mubr.f32.mxu0 0.0
        %2707 = vmatmul.mubr.f32.gmra.mrb[0].mxu0 %v2281
        %v2708 = vpop.f32.mrb[0].mxu0
        %v2709 = vadd.f32 0.0, %v2708
        %v2710 = vpop.f32.mrb[0].mxu0
        %2711 = vmatprep.mubr.f32.mxu0 0.0
        %2712 = vmatmul.mubr.f32.gmra.mrb[0].mxu0 %v2283
        %v2713 = vpop.f32.mrb[0].mxu0
        %v2714 = vadd.f32 0.0, %v2713
        %v2715 = vpop.f32.mrb[0].mxu0
        %2716 = vmatprep.mubr.f32.mxu0 0.0
        %2717 = vmatmul.mubr.f32.gmra.mrb[0].mxu0 %v2285
        %v2718 = vpop.f32.mrb[0].mxu0
        %v2719 = vadd.f32 0.0, %v2718
        %v2720 = vpop.f32.mrb[0].mxu0
        %2721 = vmatprep.mubr.f32.mxu0 0.0
        %2722 = vmatmul.mubr.f32.gmra.mrb[0].mxu0 %v2287
        %v2723 = vpop.f32.mrb[0].mxu0
        %v2724 = vadd.f32 0.0, %v2723
        %v2725 = vpop.f32.mrb[0].mxu0
        %2726 = vmatprep.mubr.f32.mxu0 0.0
        %2727 = vmatmul.mubr.f32.gmra.mrb[0].mxu0 %v2289
        %v2728 = vpop.f32.mrb[0].mxu0
        %v2729 = vadd.f32 0.0, %v2728
        %v2730 = vpop.f32.mrb[0].mxu0
        %2731 = vmatprep.mubr.f32.mxu0 0.0
        %2732 = vmatmul.mubr.f32.gmra.mrb[0].mxu0 %v2291
        %v2733 = vpop.f32.mrb[0].mxu0
        %v2734 = vadd.f32 0.0, %v2733
        %v2735 = vpop.f32.mrb[0].mxu0
        %2736 = vmatprep.mubr.f32.mxu0 0.0
        %2737 = vmatmul.mubr.f32.gmra.mrb[0].mxu0 %v2293
        %v2738 = vpop.f32.mrb[0].mxu0
        %v2739 = vadd.f32 0.0, %v2738
        %v2740 = vpop.f32.mrb[0].mxu0
        %2741 = vmatprep.mubr.f32.mxu0 0.0
        %2742 = vmatmul.mubr.f32.gmra.mrb[0].mxu0 %v2295
        %v2743 = vpop.f32.mrb[0].mxu0
        %v2744 = vadd.f32 0.0, %v2743
        %v2745 = vpop.f32.mrb[0].mxu0
        %2746 = vmatprep.mubr.f32.mxu0 0.0
        %2747 = vmatmul.mubr.f32.gmra.mrb[0].mxu0 %v2297
        %v2748 = vpop.f32.mrb[0].mxu0
        %v2749 = vadd.f32 0.0, %v2748
        %v2750 = vpop.f32.mrb[0].mxu0
        %2751 = vmatprep.mubr.f32.mxu0 0.0
        %2752 = vmatmul.mubr.f32.gmra.mrb[0].mxu0 %v2299
        %v2753 = vpop.f32.mrb[0].mxu0
        %v2754 = vadd.f32 0.0, %v2753
        %v2755 = vpop.f32.mrb[0].mxu0
        %2756 = vmatprep.mubr.f32.mxu0 0.0
        %2757 = vmatmul.mubr.f32.gmra.mrb[0].mxu0 %v2301
        %v2758 = vpop.f32.mrb[0].mxu0
        %v2759 = vadd.f32 0.0, %v2758
        %v2760 = vpop.f32.mrb[0].mxu0
        %2761 = vmatprep.mubr.f32.mxu0 0.0
        %2762 = vmatmul.mubr.f32.gmra.mrb[0].mxu0 %v2303
        %v2763 = vpop.f32.mrb[0].mxu0
        %v2764 = vadd.f32 0.0, %v2763
        %v2765 = vpop.f32.mrb[0].mxu0
        %2766 = vmatprep.mubr.f32.mxu0 0.0
        %2767 = vmatmul.mubr.f32.gmra.mrb[0].mxu0 %v2305
        %v2768 = vpop.f32.mrb[0].mxu0
        %v2769 = vadd.f32 0.0, %v2768
        %v2770 = vpop.f32.mrb[0].mxu0
        %2771 = vmatprep.mubr.f32.mxu0 0.0
        %2772 = vmatmul.mubr.f32.gmra.mrb[0].mxu0 %v2307
        %v2773 = vpop.f32.mrb[0].mxu0
        %v2774 = vadd.f32 0.0, %v2773
        %v2775 = vpop.f32.mrb[0].mxu0
        %2776 = vmatprep.mubr.f32.mxu0 0.0
        %2777 = vmatmul.mubr.f32.gmra.mrb[0].mxu0 %v2309
        %v2778 = vpop.f32.mrb[0].mxu0
        %v2779 = vadd.f32 0.0, %v2778
        %v2780 = vpop.f32.mrb[0].mxu0
        %2781 = vmatprep.mubr.f32.mxu0 0.0
        %2782 = vmatmul.mubr.f32.gmra.mrb[0].mxu0 %v2311
        %v2783 = vpop.f32.mrb[0].mxu0
        %v2784 = vadd.f32 0.0, %v2783
        %v2785 = vpop.f32.mrb[0].mxu0
        %2786 = vmatprep.mubr.f32.mxu0 0.0
        %2787 = vmatmul.mubr.f32.gmra.mrb[0].mxu0 %v2313
        %v2788 = vpop.f32.mrb[0].mxu0
        %v2789 = vadd.f32 0.0, %v2788
        %v2790 = vpop.f32.mrb[0].mxu0
        %2791 = vmatprep.mubr.f32.mxu0 0.0
        %2792 = vmatmul.mubr.f32.gmra.mrb[0].mxu0 %v2315
        %v2793 = vpop.f32.mrb[0].mxu0
        %v2794 = vadd.f32 0.0, %v2793
        %v2795 = vpop.f32.mrb[0].mxu0
        %2796 = vmatprep.mubr.f32.mxu0 0.0
        %2797 = vmatmul.mubr.f32.gmra.mrb[0].mxu0 %v2317
        %v2798 = vpop.f32.mrb[0].mxu0
        %v2799 = vadd.f32 0.0, %v2798
        %v2800 = vpop.f32.mrb[0].mxu0
        %2801 = vmatprep.mubr.f32.mxu0 0.0
        %2802 = vmatmul.mubr.f32.gmra.mrb[0].mxu0 %v2319
        %v2803 = vpop.f32.mrb[0].mxu0
        %v2804 = vadd.f32 0.0, %v2803
        %v2805 = vpop.f32.mrb[0].mxu0
        %2806 = vmatprep.mubr.f32.mxu0 0.0
        %2807 = vmatmul.mubr.f32.gmra.mrb[0].mxu0 %v2321
        %v2808 = vpop.f32.mrb[0].mxu0
        %v2809 = vadd.f32 0.0, %v2808
        %v2810 = vpop.f32.mrb[0].mxu0
        %2811 = vmatprep.mubr.f32.mxu0 0.0
        %2812 = vmatmul.mubr.f32.gmra.mrb[0].mxu0 %v2590
        %v2813 = vpop.f32.mrb[0].mxu0
        %v2814 = vadd.f32 0.0, %v2813
        %v2815 = vpop.f32.mrb[0].mxu0
        %2816 = vmatprep.mubr.f32.mxu0 0.0
        %2817 = vmatmul.mubr.f32.gmra.mrb[0].mxu0 %v2592
        %v2818 = vpop.f32.mrb[0].mxu0
        %v2819 = vadd.f32 0.0, %v2818
        %v2820 = vpop.f32.mrb[0].mxu0
        %2821 = vdwg.mxu0
        %v2822 = vadd.f32 %v2551, %v2664
        %v2823 = vadd.f32 %v2552, %v2669
        %v2824 = vadd.f32 %v2553, %v2674
        %v2825 = vadd.f32 %v2554, %v2679
        %v2826 = vadd.f32 %v2555, %v2684
        %v2827 = vadd.f32 %v2556, %v2689
        %v2828 = vadd.f32 %v2557, %v2694
        %v2829 = vadd.f32 %v2558, %v2699
        %v2830 = vadd.f32 %v2559, %v2704
        %v2831 = vadd.f32 %v2560, %v2709
        %v2832 = vadd.f32 %v2561, %v2714
        %v2833 = vadd.f32 %v2562, %v2719
        %v2834 = vadd.f32 %v2563, %v2724
        %v2835 = vadd.f32 %v2564, %v2729
        %v2836 = vadd.f32 %v2565, %v2734
        %v2837 = vadd.f32 %v2566, %v2739
        %v2838 = vadd.f32 %v2567, %v2744
        %v2839 = vadd.f32 %v2568, %v2749
        %v2840 = vadd.f32 %v2569, %v2754
        %v2841 = vadd.f32 %v2570, %v2759
        %v2842 = vadd.f32 %v2571, %v2764
        %v2843 = vadd.f32 %v2572, %v2769
        %v2844 = vadd.f32 %v2573, %v2774
        %v2845 = vadd.f32 %v2574, %v2779
        %v2846 = vadd.f32 %v2575, %v2784
        %v2847 = vadd.f32 %v2576, %v2789
        %v2848 = vadd.f32 %v2577, %v2794
        %v2849 = vadd.f32 %v2578, %v2799
        %v2850 = vadd.f32 %v2579, %v2804
        %v2851 = vadd.f32 %v2580, %v2809
        %v2852 = vadd.f32 %v2581, %v2814
        %v2853 = vadd.f32 %v2582, %v2819
        %v2854 = vrot.slane %v321, 2
        %v2855 = vrot.slane %v322, 2
        %v2856 = vsel %vm2176, %v2854, %v2855
        %v2857 = vrot.slane %v323, 2
        %v2858 = vsel %vm2176, %v2855, %v2857
        %s2859 = scalar_lea.vmem %s2, 32
        %v2860 = vld [vmem:[%s2859] sm:$0xf]
        %v2861 = vsel %vm381, %v2856, 0
        %v2863 = vsel %vm381, %v2858, 0
        %v2866 = vsel %vm478, %v2860, 0
        %2868 = vmatprep.subr.mxu0 0.0
        %2869 = vmatpush1.msra.mxu0 %v2866
        %2870 = vmatprep.subr.mxu0 0.0
        %2871 = vmatpush1.msra.mxu0 0.0
        %2872 = vmatprep.subr.mxu0 0.0
        %2873 = vmatpush1.msra.mxu0 0.0
        %2874 = vmatprep.subr.mxu0 0.0
        %2875 = vmatpush1.msra.mxu0 0.0
        %2876 = vmatprep.subr.mxu0 0.0
        %2877 = vmatpush1.msra.mxu0 0.0
        %2878 = vmatprep.subr.mxu0 0.0
        %2879 = vmatpush1.msra.mxu0 0.0
        %2880 = vmatprep.subr.mxu0 0.0
        %2881 = vmatpush1.msra.mxu0 0.0
        %2882 = vmatprep.subr.mxu0 0.0
        %2883 = vmatpush1.msra.mxu0 0.0
        %2884 = vmatprep.subr.mxu0 0.0
        %2885 = vmatpush1.msra.mxu0 0.0
        %2886 = vmatprep.subr.mxu0 0.0
        %2887 = vmatpush1.msra.mxu0 0.0
        %2888 = vmatprep.subr.mxu0 0.0
        %2889 = vmatpush1.msra.mxu0 0.0
        %2890 = vmatprep.subr.mxu0 0.0
        %2891 = vmatpush1.msra.mxu0 0.0
        %2892 = vmatprep.subr.mxu0 0.0
        %2893 = vmatpush1.msra.mxu0 0.0
        %2894 = vmatprep.subr.mxu0 0.0
        %2895 = vmatpush1.msra.mxu0 0.0
        %2896 = vmatprep.subr.mxu0 0.0
        %2897 = vmatpush1.msra.mxu0 0.0
        %2898 = vmatprep.subr.mxu0 0.0
        %2899 = vmatpush1.msra.mxu0 0.0
        %2900 = vmatprep.subr.mxu0 0.0
        %2901 = vmatpush1.msra.mxu0 0.0
        %2902 = vmatprep.subr.mxu0 0.0
        %2903 = vmatpush1.msra.mxu0 0.0
        %2904 = vmatprep.subr.mxu0 0.0
        %2905 = vmatpush1.msra.mxu0 0.0
        %2906 = vmatprep.subr.mxu0 0.0
        %2907 = vmatpush1.msra.mxu0 0.0
        %2908 = vmatprep.subr.mxu0 0.0
        %2909 = vmatpush1.msra.mxu0 0.0
        %2910 = vmatprep.subr.mxu0 0.0
        %2911 = vmatpush1.msra.mxu0 0.0
        %2912 = vmatprep.subr.mxu0 0.0
        %2913 = vmatpush1.msra.mxu0 0.0
        %2914 = vmatprep.subr.mxu0 0.0
        %2915 = vmatpush1.msra.mxu0 0.0
        %2916 = vmatprep.subr.mxu0 0.0
        %2917 = vmatpush1.msra.mxu0 0.0
        %2918 = vmatprep.subr.mxu0 0.0
        %2919 = vmatpush1.msra.mxu0 0.0
        %2920 = vmatprep.subr.mxu0 0.0
        %2921 = vmatpush1.msra.mxu0 0.0
        %2922 = vmatprep.subr.mxu0 0.0
        %2923 = vmatpush1.msra.mxu0 0.0
        %2924 = vmatprep.subr.mxu0 0.0
        %2925 = vmatpush1.msra.mxu0 0.0
        %2926 = vmatprep.subr.mxu0 0.0
        %2927 = vmatpush1.msra.mxu0 0.0
        %2928 = vmatprep.subr.mxu0 0.0
        %2929 = vmatpush1.msra.mxu0 0.0
        %2930 = vmatprep.subr.mxu0 0.0
        %2931 = vmatpush1.msra.mxu0 0.0
        %2932 = vmatprep.mubr.f32.mxu0 0.0
        %2933 = vmatmul.mubr.f32.gmra.mrb[0].mxu0 %v2267
        %v2934 = vpop.f32.mrb[0].mxu0
        %v2935 = vadd.f32 0.0, %v2934
        %v2936 = vpop.f32.mrb[0].mxu0
        %2937 = vmatprep.mubr.f32.mxu0 0.0
        %2938 = vmatmul.mubr.f32.gmra.mrb[0].mxu0 %v2269
        %v2939 = vpop.f32.mrb[0].mxu0
        %v2940 = vadd.f32 0.0, %v2939
        %v2941 = vpop.f32.mrb[0].mxu0
        %2942 = vmatprep.mubr.f32.mxu0 0.0
        %2943 = vmatmul.mubr.f32.gmra.mrb[0].mxu0 %v2271
        %v2944 = vpop.f32.mrb[0].mxu0
        %v2945 = vadd.f32 0.0, %v2944
        %v2946 = vpop.f32.mrb[0].mxu0
        %2947 = vmatprep.mubr.f32.mxu0 0.0
        %2948 = vmatmul.mubr.f32.gmra.mrb[0].mxu0 %v2273
        %v2949 = vpop.f32.mrb[0].mxu0
        %v2950 = vadd.f32 0.0, %v2949
        %v2951 = vpop.f32.mrb[0].mxu0
        %2952 = vmatprep.mubr.f32.mxu0 0.0
        %2953 = vmatmul.mubr.f32.gmra.mrb[0].mxu0 %v2275
        %v2954 = vpop.f32.mrb[0].mxu0
        %v2955 = vadd.f32 0.0, %v2954
        %v2956 = vpop.f32.mrb[0].mxu0
        %2957 = vmatprep.mubr.f32.mxu0 0.0
        %2958 = vmatmul.mubr.f32.gmra.mrb[0].mxu0 %v2277
        %v2959 = vpop.f32.mrb[0].mxu0
        %v2960 = vadd.f32 0.0, %v2959
        %v2961 = vpop.f32.mrb[0].mxu0
        %2962 = vmatprep.mubr.f32.mxu0 0.0
        %2963 = vmatmul.mubr.f32.gmra.mrb[0].mxu0 %v2279
        %v2964 = vpop.f32.mrb[0].mxu0
        %v2965 = vadd.f32 0.0, %v2964
        %v2966 = vpop.f32.mrb[0].mxu0
        %2967 = vmatprep.mubr.f32.mxu0 0.0
        %2968 = vmatmul.mubr.f32.gmra.mrb[0].mxu0 %v2281
        %v2969 = vpop.f32.mrb[0].mxu0
        %v2970 = vadd.f32 0.0, %v2969
        %v2971 = vpop.f32.mrb[0].mxu0
        %2972 = vmatprep.mubr.f32.mxu0 0.0
        %2973 = vmatmul.mubr.f32.gmra.mrb[0].mxu0 %v2283
        %v2974 = vpop.f32.mrb[0].mxu0
        %v2975 = vadd.f32 0.0, %v2974
        %v2976 = vpop.f32.mrb[0].mxu0
        %2977 = vmatprep.mubr.f32.mxu0 0.0
        %2978 = vmatmul.mubr.f32.gmra.mrb[0].mxu0 %v2285
        %v2979 = vpop.f32.mrb[0].mxu0
        %v2980 = vadd.f32 0.0, %v2979
        %v2981 = vpop.f32.mrb[0].mxu0
        %2982 = vmatprep.mubr.f32.mxu0 0.0
        %2983 = vmatmul.mubr.f32.gmra.mrb[0].mxu0 %v2287
        %v2984 = vpop.f32.mrb[0].mxu0
        %v2985 = vadd.f32 0.0, %v2984
        %v2986 = vpop.f32.mrb[0].mxu0
        %2987 = vmatprep.mubr.f32.mxu0 0.0
        %2988 = vmatmul.mubr.f32.gmra.mrb[0].mxu0 %v2289
        %v2989 = vpop.f32.mrb[0].mxu0
        %v2990 = vadd.f32 0.0, %v2989
        %v2991 = vpop.f32.mrb[0].mxu0
        %2992 = vmatprep.mubr.f32.mxu0 0.0
        %2993 = vmatmul.mubr.f32.gmra.mrb[0].mxu0 %v2291
        %v2994 = vpop.f32.mrb[0].mxu0
        %v2995 = vadd.f32 0.0, %v2994
        %v2996 = vpop.f32.mrb[0].mxu0
        %2997 = vmatprep.mubr.f32.mxu0 0.0
        %2998 = vmatmul.mubr.f32.gmra.mrb[0].mxu0 %v2293
        %v2999 = vpop.f32.mrb[0].mxu0
        %v3000 = vadd.f32 0.0, %v2999
        %v3001 = vpop.f32.mrb[0].mxu0
        %3002 = vmatprep.mubr.f32.mxu0 0.0
        %3003 = vmatmul.mubr.f32.gmra.mrb[0].mxu0 %v2295
        %v3004 = vpop.f32.mrb[0].mxu0
        %v3005 = vadd.f32 0.0, %v3004
        %v3006 = vpop.f32.mrb[0].mxu0
        %3007 = vmatprep.mubr.f32.mxu0 0.0
        %3008 = vmatmul.mubr.f32.gmra.mrb[0].mxu0 %v2297
        %v3009 = vpop.f32.mrb[0].mxu0
        %v3010 = vadd.f32 0.0, %v3009
        %v3011 = vpop.f32.mrb[0].mxu0
        %3012 = vmatprep.mubr.f32.mxu0 0.0
        %3013 = vmatmul.mubr.f32.gmra.mrb[0].mxu0 %v2299
        %v3014 = vpop.f32.mrb[0].mxu0
        %v3015 = vadd.f32 0.0, %v3014
        %v3016 = vpop.f32.mrb[0].mxu0
        %3017 = vmatprep.mubr.f32.mxu0 0.0
        %3018 = vmatmul.mubr.f32.gmra.mrb[0].mxu0 %v2301
        %v3019 = vpop.f32.mrb[0].mxu0
        %v3020 = vadd.f32 0.0, %v3019
        %v3021 = vpop.f32.mrb[0].mxu0
        %3022 = vmatprep.mubr.f32.mxu0 0.0
        %3023 = vmatmul.mubr.f32.gmra.mrb[0].mxu0 %v2303
        %v3024 = vpop.f32.mrb[0].mxu0
        %v3025 = vadd.f32 0.0, %v3024
        %v3026 = vpop.f32.mrb[0].mxu0
        %3027 = vmatprep.mubr.f32.mxu0 0.0
        %3028 = vmatmul.mubr.f32.gmra.mrb[0].mxu0 %v2305
        %v3029 = vpop.f32.mrb[0].mxu0
        %v3030 = vadd.f32 0.0, %v3029
        %v3031 = vpop.f32.mrb[0].mxu0
        %3032 = vmatprep.mubr.f32.mxu0 0.0
        %3033 = vmatmul.mubr.f32.gmra.mrb[0].mxu0 %v2307
        %v3034 = vpop.f32.mrb[0].mxu0
        %v3035 = vadd.f32 0.0, %v3034
        %v3036 = vpop.f32.mrb[0].mxu0
        %3037 = vmatprep.mubr.f32.mxu0 0.0
        %3038 = vmatmul.mubr.f32.gmra.mrb[0].mxu0 %v2309
        %v3039 = vpop.f32.mrb[0].mxu0
        %v3040 = vadd.f32 0.0, %v3039
        %v3041 = vpop.f32.mrb[0].mxu0
        %3042 = vmatprep.mubr.f32.mxu0 0.0
        %3043 = vmatmul.mubr.f32.gmra.mrb[0].mxu0 %v2311
        %v3044 = vpop.f32.mrb[0].mxu0
        %v3045 = vadd.f32 0.0, %v3044
        %v3046 = vpop.f32.mrb[0].mxu0
        %3047 = vmatprep.mubr.f32.mxu0 0.0
        %3048 = vmatmul.mubr.f32.gmra.mrb[0].mxu0 %v2313
        %v3049 = vpop.f32.mrb[0].mxu0
        %v3050 = vadd.f32 0.0, %v3049
        %v3051 = vpop.f32.mrb[0].mxu0
        %3052 = vmatprep.mubr.f32.mxu0 0.0
        %3053 = vmatmul.mubr.f32.gmra.mrb[0].mxu0 %v2315
        %v3054 = vpop.f32.mrb[0].mxu0
        %v3055 = vadd.f32 0.0, %v3054
        %v3056 = vpop.f32.mrb[0].mxu0
        %3057 = vmatprep.mubr.f32.mxu0 0.0
        %3058 = vmatmul.mubr.f32.gmra.mrb[0].mxu0 %v2317
        %v3059 = vpop.f32.mrb[0].mxu0
        %v3060 = vadd.f32 0.0, %v3059
        %v3061 = vpop.f32.mrb[0].mxu0
        %3062 = vmatprep.mubr.f32.mxu0 0.0
        %3063 = vmatmul.mubr.f32.gmra.mrb[0].mxu0 %v2319
        %v3064 = vpop.f32.mrb[0].mxu0
        %v3065 = vadd.f32 0.0, %v3064
        %v3066 = vpop.f32.mrb[0].mxu0
        %3067 = vmatprep.mubr.f32.mxu0 0.0
        %3068 = vmatmul.mubr.f32.gmra.mrb[0].mxu0 %v2321
        %v3069 = vpop.f32.mrb[0].mxu0
        %v3070 = vadd.f32 0.0, %v3069
        %v3071 = vpop.f32.mrb[0].mxu0
        %3072 = vmatprep.mubr.f32.mxu0 0.0
        %3073 = vmatmul.mubr.f32.gmra.mrb[0].mxu0 %v2590
        %v3074 = vpop.f32.mrb[0].mxu0
        %v3075 = vadd.f32 0.0, %v3074
        %v3076 = vpop.f32.mrb[0].mxu0
        %3077 = vmatprep.mubr.f32.mxu0 0.0
        %3078 = vmatmul.mubr.f32.gmra.mrb[0].mxu0 %v2592
        %v3079 = vpop.f32.mrb[0].mxu0
        %v3080 = vadd.f32 0.0, %v3079
        %v3081 = vpop.f32.mrb[0].mxu0
        %3082 = vmatprep.mubr.f32.mxu0 0.0
        %3083 = vmatmul.mubr.f32.gmra.mrb[0].mxu0 %v2861
        %v3084 = vpop.f32.mrb[0].mxu0
        %v3085 = vadd.f32 0.0, %v3084
        %v3086 = vpop.f32.mrb[0].mxu0
        %3087 = vmatprep.mubr.f32.mxu0 0.0
        %3088 = vmatmul.mubr.f32.gmra.mrb[0].mxu0 %v2863
        %v3089 = vpop.f32.mrb[0].mxu0
        %v3090 = vadd.f32 0.0, %v3089
        %v3091 = vpop.f32.mrb[0].mxu0
        %3092 = vdwg.mxu0
        %v3093 = vadd.f32 %v2822, %v2935
        %v3094 = vadd.f32 %v2823, %v2940
        %v3095 = vadd.f32 %v2824, %v2945
        %v3096 = vadd.f32 %v2825, %v2950
        %v3097 = vadd.f32 %v2826, %v2955
        %v3098 = vadd.f32 %v2827, %v2960
        %v3099 = vadd.f32 %v2828, %v2965
        %v3100 = vadd.f32 %v2829, %v2970
        %v3101 = vadd.f32 %v2830, %v2975
        %v3102 = vadd.f32 %v2831, %v2980
        %v3103 = vadd.f32 %v2832, %v2985
        %v3104 = vadd.f32 %v2833, %v2990
        %v3105 = vadd.f32 %v2834, %v2995
        %v3106 = vadd.f32 %v2835, %v3000
        %v3107 = vadd.f32 %v2836, %v3005
        %v3108 = vadd.f32 %v2837, %v3010
        %v3109 = vadd.f32 %v2838, %v3015
        %v3110 = vadd.f32 %v2839, %v3020
        %v3111 = vadd.f32 %v2840, %v3025
        %v3112 = vadd.f32 %v2841, %v3030
        %v3113 = vadd.f32 %v2842, %v3035
        %v3114 = vadd.f32 %v2843, %v3040
        %v3115 = vadd.f32 %v2844, %v3045
        %v3116 = vadd.f32 %v2845, %v3050
        %v3117 = vadd.f32 %v2846, %v3055
        %v3118 = vadd.f32 %v2847, %v3060
        %v3119 = vadd.f32 %v2848, %v3065
        %v3120 = vadd.f32 %v2849, %v3070
        %v3121 = vadd.f32 %v2850, %v3075
        %v3122 = vadd.f32 %v2851, %v3080
        %v3123 = vadd.f32 %v2852, %v3085
        %v3124 = vadd.f32 %v2853, %v3090
        %v3125 = vld [vmem:[%s5] sm:$0x1]
        %v3127 = vlaneseq
        %v3128 = vshrl.u32 %v3127, 7
        %v3129 = vsub.s32 0, %v3128
        %v3130 = vrot.slane %v3125, %v3129
        %v3132 = vadd.f32 %v3093, %v3130
        %v3133 = vadd.f32 %v3094, %v3130
        %v3134 = vadd.f32 %v3095, %v3130
        %v3135 = vadd.f32 %v3096, %v3130
        %v3136 = vadd.f32 %v3097, %v3130
        %v3137 = vadd.f32 %v3098, %v3130
        %v3138 = vadd.f32 %v3099, %v3130
        %v3139 = vadd.f32 %v3100, %v3130
        %v3140 = vadd.f32 %v3101, %v3130
        %v3141 = vadd.f32 %v3102, %v3130
        %v3142 = vadd.f32 %v3103, %v3130
        %v3143 = vadd.f32 %v3104, %v3130
        %v3144 = vadd.f32 %v3105, %v3130
        %v3145 = vadd.f32 %v3106, %v3130
        %v3146 = vadd.f32 %v3107, %v3130
        %v3147 = vadd.f32 %v3108, %v3130
        %v3148 = vadd.f32 %v3109, %v3130
        %v3149 = vadd.f32 %v3110, %v3130
        %v3150 = vadd.f32 %v3111, %v3130
        %v3151 = vadd.f32 %v3112, %v3130
        %v3152 = vadd.f32 %v3113, %v3130
        %v3153 = vadd.f32 %v3114, %v3130
        %v3154 = vadd.f32 %v3115, %v3130
        %v3155 = vadd.f32 %v3116, %v3130
        %v3156 = vadd.f32 %v3117, %v3130
        %v3157 = vadd.f32 %v3118, %v3130
        %v3158 = vadd.f32 %v3119, %v3130
        %v3159 = vadd.f32 %v3120, %v3130
        %v3160 = vadd.f32 %v3121, %v3130
        %v3161 = vadd.f32 %v3122, %v3130
        %v3162 = vadd.f32 %v3123, %v3130
        %v3163 = vadd.f32 %v3124, %v3130
        %v3164 = vld [vmem:[%s3] sm:$0xff]
        %v3165 = vld [vmem:[%s3 + $0x8] sm:$0xff]
        %v3166 = vld [vmem:[%s3 + $0x10] sm:$0xff]
        %v3167 = vld [vmem:[%s3 + $0x18] sm:$0xff]
        %s3168 = scalar_lea.vmem %s3, 96
        %v3169 = vld [vmem:[%s3168] sm:$0xff]
        %v3170 = vld [vmem:[%s3168 + $0x8] sm:$0xff]
        %v3171 = vld [vmem:[%s3168 + $0x10] sm:$0xff]
        %v3172 = vld [vmem:[%s3168 + $0x18] sm:$0xff]
        %vm3173 = vcmask 261120
        %v3175 = vsel %vm3173, %v327, 0
        %v3178 = vsel %vm3173, %v328, 0
        %v3181 = vsel %vm3173, %v330, 0
        %v3184 = vsel %vm3173, %v331, 0
        %v3187 = vsel %vm3173, %v333, 0
        %v3190 = vsel %vm3173, %v334, 0
        %v3193 = vsel %vm3173, %v336, 0
        %v3196 = vsel %vm3173, %v337, 0
        %v3199 = vsel %vm3173, %v339, 0
        %v3202 = vsel %vm3173, %v340, 0
        %v3205 = vsel %vm3173, %v342, 0
        %v3208 = vsel %vm3173, %v343, 0
        %v3211 = vsel %vm3173, %v345, 0
        %v3214 = vsel %vm3173, %v346, 0
        %v3217 = vsel %vm3173, %v348, 0
        %v3220 = vsel %vm3173, %v349, 0
        %v3223 = vsel %vm3173, %v351, 0
        %v3226 = vsel %vm3173, %v352, 0
        %v3229 = vsel %vm3173, %v354, 0
        %v3232 = vsel %vm3173, %v355, 0
        %v3235 = vsel %vm3173, %v357, 0
        %v3238 = vsel %vm3173, %v358, 0
        %v3241 = vsel %vm3173, %v360, 0
        %v3244 = vsel %vm3173, %v361, 0
        %v3247 = vsel %vm3173, %v363, 0
        %v3250 = vsel %vm3173, %v364, 0
        %v3253 = vsel %vm3173, %v366, 0
        %v3256 = vsel %vm3173, %v367, 0
        %v3259 = vsel %vm3173, %v369, 0
        %v3262 = vsel %vm3173, %v370, 0
        %v3265 = vsel %vm3173, %v372, 0
        %v3268 = vsel %vm3173, %v373, 0
        %3270 = vmatprep.subr.mxu0 0.0
        %3271 = vmatpush1.msra.mxu0 %v3169
        %3272 = vmatprep.subr.mxu0 0.0
        %3273 = vmatpush1.msra.mxu0 %v3170
        %3274 = vmatprep.subr.mxu0 0.0
        %3275 = vmatpush1.msra.mxu0 %v3171
        %3276 = vmatprep.subr.mxu0 0.0
        %3277 = vmatpush1.msra.mxu0 %v3172
        %3278 = vmatprep.subr.mxu0 0.0
        %3279 = vmatpush1.msra.mxu0 0.0
        %3280 = vmatprep.subr.mxu0 0.0
        %3281 = vmatpush1.msra.mxu0 0.0
        %3282 = vmatprep.subr.mxu0 0.0
        %3283 = vmatpush1.msra.mxu0 0.0
        %3284 = vmatprep.subr.mxu0 0.0
        %3285 = vmatpush1.msra.mxu0 0.0
        %3286 = vmatprep.subr.mxu0 0.0
        %3287 = vmatpush1.msra.mxu0 0.0
        %3288 = vmatprep.subr.mxu0 0.0
        %3289 = vmatpush1.msra.mxu0 0.0
        %3290 = vmatprep.subr.mxu0 0.0
        %3291 = vmatpush1.msra.mxu0 0.0
        %3292 = vmatprep.subr.mxu0 0.0
        %3293 = vmatpush1.msra.mxu0 0.0
        %3294 = vmatprep.subr.mxu0 0.0
        %3295 = vmatpush1.msra.mxu0 0.0
        %3296 = vmatprep.subr.mxu0 0.0
        %3297 = vmatpush1.msra.mxu0 0.0
        %3298 = vmatprep.subr.mxu0 0.0
        %3299 = vmatpush1.msra.mxu0 0.0
        %3300 = vmatprep.subr.mxu0 0.0
        %3301 = vmatpush1.msra.mxu0 0.0
        %3302 = vmatprep.subr.mxu0 0.0
        %3303 = vmatpush1.msra.mxu0 0.0
        %3304 = vmatprep.subr.mxu0 0.0
        %3305 = vmatpush1.msra.mxu0 0.0
        %3306 = vmatprep.subr.mxu0 0.0
        %3307 = vmatpush1.msra.mxu0 0.0
        %3308 = vmatprep.subr.mxu0 0.0
        %3309 = vmatpush1.msra.mxu0 0.0
        %3310 = vmatprep.subr.mxu0 0.0
        %3311 = vmatpush1.msra.mxu0 0.0
        %3312 = vmatprep.subr.mxu0 0.0
        %3313 = vmatpush1.msra.mxu0 0.0
        %3314 = vmatprep.subr.mxu0 0.0
        %3315 = vmatpush1.msra.mxu0 0.0
        %3316 = vmatprep.subr.mxu0 0.0
        %3317 = vmatpush1.msra.mxu0 0.0
        %3318 = vmatprep.subr.mxu0 0.0
        %3319 = vmatpush1.msra.mxu0 0.0
        %3320 = vmatprep.subr.mxu0 0.0
        %3321 = vmatpush1.msra.mxu0 0.0
        %3322 = vmatprep.subr.mxu0 0.0
        %3323 = vmatpush1.msra.mxu0 0.0
        %3324 = vmatprep.subr.mxu0 0.0
        %3325 = vmatpush1.msra.mxu0 0.0
        %3326 = vmatprep.subr.mxu0 0.0
        %3327 = vmatpush1.msra.mxu0 0.0
        %3328 = vmatprep.subr.mxu0 0.0
        %3329 = vmatpush1.msra.mxu0 0.0
        %3330 = vmatprep.subr.mxu0 0.0
        %3331 = vmatpush1.msra.mxu0 0.0
        %3332 = vmatprep.subr.mxu0 0.0
        %3333 = vmatpush1.msra.mxu0 0.0
        %3334 = vmatprep.mubr.f32.mxu0 0.0
        %3335 = vmatmul.mubr.f32.gmra.mrb[0].mxu0 %v3175
        %v3336 = vpop.f32.mrb[0].mxu0
        %v3337 = vadd.f32 0.0, %v3336
        %v3338 = vpop.f32.mrb[0].mxu0
        %3339 = vmatprep.mubr.f32.mxu0 0.0
        %3340 = vmatmul.mubr.f32.gmra.mrb[0].mxu0 %v3178
        %v3341 = vpop.f32.mrb[0].mxu0
        %v3342 = vadd.f32 0.0, %v3341
        %v3343 = vpop.f32.mrb[0].mxu0
        %3344 = vmatprep.mubr.f32.mxu0 0.0
        %3345 = vmatmul.mubr.f32.gmra.mrb[0].mxu0 %v3181
        %v3346 = vpop.f32.mrb[0].mxu0
        %v3347 = vadd.f32 0.0, %v3346
        %v3348 = vpop.f32.mrb[0].mxu0
        %3349 = vmatprep.mubr.f32.mxu0 0.0
        %3350 = vmatmul.mubr.f32.gmra.mrb[0].mxu0 %v3184
        %v3351 = vpop.f32.mrb[0].mxu0
        %v3352 = vadd.f32 0.0, %v3351
        %v3353 = vpop.f32.mrb[0].mxu0
        %3354 = vmatprep.mubr.f32.mxu0 0.0
        %3355 = vmatmul.mubr.f32.gmra.mrb[0].mxu0 %v3187
        %v3356 = vpop.f32.mrb[0].mxu0
        %v3357 = vadd.f32 0.0, %v3356
        %v3358 = vpop.f32.mrb[0].mxu0
        %3359 = vmatprep.mubr.f32.mxu0 0.0
        %3360 = vmatmul.mubr.f32.gmra.mrb[0].mxu0 %v3190
        %v3361 = vpop.f32.mrb[0].mxu0
        %v3362 = vadd.f32 0.0, %v3361
        %v3363 = vpop.f32.mrb[0].mxu0
        %3364 = vmatprep.mubr.f32.mxu0 0.0
        %3365 = vmatmul.mubr.f32.gmra.mrb[0].mxu0 %v3193
        %v3366 = vpop.f32.mrb[0].mxu0
        %v3367 = vadd.f32 0.0, %v3366
        %v3368 = vpop.f32.mrb[0].mxu0
        %3369 = vmatprep.mubr.f32.mxu0 0.0
        %3370 = vmatmul.mubr.f32.gmra.mrb[0].mxu0 %v3196
        %v3371 = vpop.f32.mrb[0].mxu0
        %v3372 = vadd.f32 0.0, %v3371
        %v3373 = vpop.f32.mrb[0].mxu0
        %3374 = vmatprep.mubr.f32.mxu0 0.0
        %3375 = vmatmul.mubr.f32.gmra.mrb[0].mxu0 %v3199
        %v3376 = vpop.f32.mrb[0].mxu0
        %v3377 = vadd.f32 0.0, %v3376
        %v3378 = vpop.f32.mrb[0].mxu0
        %3379 = vmatprep.mubr.f32.mxu0 0.0
        %3380 = vmatmul.mubr.f32.gmra.mrb[0].mxu0 %v3202
        %v3381 = vpop.f32.mrb[0].mxu0
        %v3382 = vadd.f32 0.0, %v3381
        %v3383 = vpop.f32.mrb[0].mxu0
        %3384 = vmatprep.mubr.f32.mxu0 0.0
        %3385 = vmatmul.mubr.f32.gmra.mrb[0].mxu0 %v3205
        %v3386 = vpop.f32.mrb[0].mxu0
        %v3387 = vadd.f32 0.0, %v3386
        %v3388 = vpop.f32.mrb[0].mxu0
        %3389 = vmatprep.mubr.f32.mxu0 0.0
        %3390 = vmatmul.mubr.f32.gmra.mrb[0].mxu0 %v3208
        %v3391 = vpop.f32.mrb[0].mxu0
        %v3392 = vadd.f32 0.0, %v3391
        %v3393 = vpop.f32.mrb[0].mxu0
        %3394 = vmatprep.mubr.f32.mxu0 0.0
        %3395 = vmatmul.mubr.f32.gmra.mrb[0].mxu0 %v3211
        %v3396 = vpop.f32.mrb[0].mxu0
        %v3397 = vadd.f32 0.0, %v3396
        %v3398 = vpop.f32.mrb[0].mxu0
        %3399 = vmatprep.mubr.f32.mxu0 0.0
        %3400 = vmatmul.mubr.f32.gmra.mrb[0].mxu0 %v3214
        %v3401 = vpop.f32.mrb[0].mxu0
        %v3402 = vadd.f32 0.0, %v3401
        %v3403 = vpop.f32.mrb[0].mxu0
        %3404 = vmatprep.mubr.f32.mxu0 0.0
        %3405 = vmatmul.mubr.f32.gmra.mrb[0].mxu0 %v3217
        %v3406 = vpop.f32.mrb[0].mxu0
        %v3407 = vadd.f32 0.0, %v3406
        %v3408 = vpop.f32.mrb[0].mxu0
        %3409 = vmatprep.mubr.f32.mxu0 0.0
        %3410 = vmatmul.mubr.f32.gmra.mrb[0].mxu0 %v3220
        %v3411 = vpop.f32.mrb[0].mxu0
        %v3412 = vadd.f32 0.0, %v3411
        %v3413 = vpop.f32.mrb[0].mxu0
        %3414 = vmatprep.mubr.f32.mxu0 0.0
        %3415 = vmatmul.mubr.f32.gmra.mrb[0].mxu0 %v3223
        %v3416 = vpop.f32.mrb[0].mxu0
        %v3417 = vadd.f32 0.0, %v3416
        %v3418 = vpop.f32.mrb[0].mxu0
        %3419 = vmatprep.mubr.f32.mxu0 0.0
        %3420 = vmatmul.mubr.f32.gmra.mrb[0].mxu0 %v3226
        %v3421 = vpop.f32.mrb[0].mxu0
        %v3422 = vadd.f32 0.0, %v3421
        %v3423 = vpop.f32.mrb[0].mxu0
        %3424 = vmatprep.mubr.f32.mxu0 0.0
        %3425 = vmatmul.mubr.f32.gmra.mrb[0].mxu0 %v3229
        %v3426 = vpop.f32.mrb[0].mxu0
        %v3427 = vadd.f32 0.0, %v3426
        %v3428 = vpop.f32.mrb[0].mxu0
        %3429 = vmatprep.mubr.f32.mxu0 0.0
        %3430 = vmatmul.mubr.f32.gmra.mrb[0].mxu0 %v3232
        %v3431 = vpop.f32.mrb[0].mxu0
        %v3432 = vadd.f32 0.0, %v3431
        %v3433 = vpop.f32.mrb[0].mxu0
        %3434 = vmatprep.mubr.f32.mxu0 0.0
        %3435 = vmatmul.mubr.f32.gmra.mrb[0].mxu0 %v3235
        %v3436 = vpop.f32.mrb[0].mxu0
        %v3437 = vadd.f32 0.0, %v3436
        %v3438 = vpop.f32.mrb[0].mxu0
        %3439 = vmatprep.mubr.f32.mxu0 0.0
        %3440 = vmatmul.mubr.f32.gmra.mrb[0].mxu0 %v3238
        %v3441 = vpop.f32.mrb[0].mxu0
        %v3442 = vadd.f32 0.0, %v3441
        %v3443 = vpop.f32.mrb[0].mxu0
        %3444 = vmatprep.mubr.f32.mxu0 0.0
        %3445 = vmatmul.mubr.f32.gmra.mrb[0].mxu0 %v3241
        %v3446 = vpop.f32.mrb[0].mxu0
        %v3447 = vadd.f32 0.0, %v3446
        %v3448 = vpop.f32.mrb[0].mxu0
        %3449 = vmatprep.mubr.f32.mxu0 0.0
        %3450 = vmatmul.mubr.f32.gmra.mrb[0].mxu0 %v3244
        %v3451 = vpop.f32.mrb[0].mxu0
        %v3452 = vadd.f32 0.0, %v3451
        %v3453 = vpop.f32.mrb[0].mxu0
        %3454 = vmatprep.mubr.f32.mxu0 0.0
        %3455 = vmatmul.mubr.f32.gmra.mrb[0].mxu0 %v3247
        %v3456 = vpop.f32.mrb[0].mxu0
        %v3457 = vadd.f32 0.0, %v3456
        %v3458 = vpop.f32.mrb[0].mxu0
        %3459 = vmatprep.mubr.f32.mxu0 0.0
        %3460 = vmatmul.mubr.f32.gmra.mrb[0].mxu0 %v3250
        %v3461 = vpop.f32.mrb[0].mxu0
        %v3462 = vadd.f32 0.0, %v3461
        %v3463 = vpop.f32.mrb[0].mxu0
        %3464 = vmatprep.mubr.f32.mxu0 0.0
        %3465 = vmatmul.mubr.f32.gmra.mrb[0].mxu0 %v3253
        %v3466 = vpop.f32.mrb[0].mxu0
        %v3467 = vadd.f32 0.0, %v3466
        %v3468 = vpop.f32.mrb[0].mxu0
        %3469 = vmatprep.mubr.f32.mxu0 0.0
        %3470 = vmatmul.mubr.f32.gmra.mrb[0].mxu0 %v3256
        %v3471 = vpop.f32.mrb[0].mxu0
        %v3472 = vadd.f32 0.0, %v3471
        %v3473 = vpop.f32.mrb[0].mxu0
        %3474 = vmatprep.mubr.f32.mxu0 0.0
        %3475 = vmatmul.mubr.f32.gmra.mrb[0].mxu0 %v3259
        %v3476 = vpop.f32.mrb[0].mxu0
        %v3477 = vadd.f32 0.0, %v3476
        %v3478 = vpop.f32.mrb[0].mxu0
        %3479 = vmatprep.mubr.f32.mxu0 0.0
        %3480 = vmatmul.mubr.f32.gmra.mrb[0].mxu0 %v3262
        %v3481 = vpop.f32.mrb[0].mxu0
        %v3482 = vadd.f32 0.0, %v3481
        %v3483 = vpop.f32.mrb[0].mxu0
        %3484 = vmatprep.mubr.f32.mxu0 0.0
        %3485 = vmatmul.mubr.f32.gmra.mrb[0].mxu0 %v3265
        %v3486 = vpop.f32.mrb[0].mxu0
        %v3487 = vadd.f32 0.0, %v3486
        %v3488 = vpop.f32.mrb[0].mxu0
        %3489 = vmatprep.mubr.f32.mxu0 0.0
        %3490 = vmatmul.mubr.f32.gmra.mrb[0].mxu0 %v3268
        %v3491 = vpop.f32.mrb[0].mxu0
        %v3492 = vadd.f32 0.0, %v3491
        %v3493 = vpop.f32.mrb[0].mxu0
        %3494 = vdwg.mxu0
        %v3496 = vsel %vm3173, %v324, 0
        %v3499 = vsel %vm3173, %v325, 0
        %3501 = vmatprep.subr.mxu0 0.0
        %3502 = vmatpush1.msra.mxu0 %v3164
        %3503 = vmatprep.subr.mxu0 0.0
        %3504 = vmatpush1.msra.mxu0 %v3165
        %3505 = vmatprep.subr.mxu0 0.0
        %3506 = vmatpush1.msra.mxu0 %v3166
        %3507 = vmatprep.subr.mxu0 0.0
        %3508 = vmatpush1.msra.mxu0 %v3167
        %3509 = vmatprep.subr.mxu0 0.0
        %3510 = vmatpush1.msra.mxu0 0.0
        %3511 = vmatprep.subr.mxu0 0.0
        %3512 = vmatpush1.msra.mxu0 0.0
        %3513 = vmatprep.subr.mxu0 0.0
        %3514 = vmatpush1.msra.mxu0 0.0
        %3515 = vmatprep.subr.mxu0 0.0
        %3516 = vmatpush1.msra.mxu0 0.0
        %3517 = vmatprep.subr.mxu0 0.0
        %3518 = vmatpush1.msra.mxu0 0.0
        %3519 = vmatprep.subr.mxu0 0.0
        %3520 = vmatpush1.msra.mxu0 0.0
        %3521 = vmatprep.subr.mxu0 0.0
        %3522 = vmatpush1.msra.mxu0 0.0
        %3523 = vmatprep.subr.mxu0 0.0
        %3524 = vmatpush1.msra.mxu0 0.0
        %3525 = vmatprep.subr.mxu0 0.0
        %3526 = vmatpush1.msra.mxu0 0.0
        %3527 = vmatprep.subr.mxu0 0.0
        %3528 = vmatpush1.msra.mxu0 0.0
        %3529 = vmatprep.subr.mxu0 0.0
        %3530 = vmatpush1.msra.mxu0 0.0
        %3531 = vmatprep.subr.mxu0 0.0
        %3532 = vmatpush1.msra.mxu0 0.0
        %3533 = vmatprep.subr.mxu0 0.0
        %3534 = vmatpush1.msra.mxu0 0.0
        %3535 = vmatprep.subr.mxu0 0.0
        %3536 = vmatpush1.msra.mxu0 0.0
        %3537 = vmatprep.subr.mxu0 0.0
        %3538 = vmatpush1.msra.mxu0 0.0
        %3539 = vmatprep.subr.mxu0 0.0
        %3540 = vmatpush1.msra.mxu0 0.0
        %3541 = vmatprep.subr.mxu0 0.0
        %3542 = vmatpush1.msra.mxu0 0.0
        %3543 = vmatprep.subr.mxu0 0.0
        %3544 = vmatpush1.msra.mxu0 0.0
        %3545 = vmatprep.subr.mxu0 0.0
        %3546 = vmatpush1.msra.mxu0 0.0
        %3547 = vmatprep.subr.mxu0 0.0
        %3548 = vmatpush1.msra.mxu0 0.0
        %3549 = vmatprep.subr.mxu0 0.0
        %3550 = vmatpush1.msra.mxu0 0.0
        %3551 = vmatprep.subr.mxu0 0.0
        %3552 = vmatpush1.msra.mxu0 0.0
        %3553 = vmatprep.subr.mxu0 0.0
        %3554 = vmatpush1.msra.mxu0 0.0
        %3555 = vmatprep.subr.mxu0 0.0
        %3556 = vmatpush1.msra.mxu0 0.0
        %3557 = vmatprep.subr.mxu0 0.0
        %3558 = vmatpush1.msra.mxu0 0.0
        %3559 = vmatprep.subr.mxu0 0.0
        %3560 = vmatpush1.msra.mxu0 0.0
        %3561 = vmatprep.subr.mxu0 0.0
        %3562 = vmatpush1.msra.mxu0 0.0
        %3563 = vmatprep.subr.mxu0 0.0
        %3564 = vmatpush1.msra.mxu0 0.0
        %3565 = vmatprep.mubr.f32.mxu0 0.0
        %3566 = vmatmul.mubr.f32.gmra.mrb[0].mxu0 %v3496
        %v3567 = vpop.f32.mrb[0].mxu0
        %v3568 = vadd.f32 %v3337, %v3567
        %v3569 = vpop.f32.mrb[0].mxu0
        %3570 = vmatprep.mubr.f32.mxu0 0.0
        %3571 = vmatmul.mubr.f32.gmra.mrb[0].mxu0 %v3499
        %v3572 = vpop.f32.mrb[0].mxu0
        %v3573 = vadd.f32 %v3342, %v3572
        %v3574 = vpop.f32.mrb[0].mxu0
        %3575 = vmatprep.mubr.f32.mxu0 0.0
        %3576 = vmatmul.mubr.f32.gmra.mrb[0].mxu0 %v3175
        %v3577 = vpop.f32.mrb[0].mxu0
        %v3578 = vadd.f32 %v3347, %v3577
        %v3579 = vpop.f32.mrb[0].mxu0
        %3580 = vmatprep.mubr.f32.mxu0 0.0
        %3581 = vmatmul.mubr.f32.gmra.mrb[0].mxu0 %v3178
        %v3582 = vpop.f32.mrb[0].mxu0
        %v3583 = vadd.f32 %v3352, %v3582
        %v3584 = vpop.f32.mrb[0].mxu0
        %3585 = vmatprep.mubr.f32.mxu0 0.0
        %3586 = vmatmul.mubr.f32.gmra.mrb[0].mxu0 %v3181
        %v3587 = vpop.f32.mrb[0].mxu0
        %v3588 = vadd.f32 %v3357, %v3587
        %v3589 = vpop.f32.mrb[0].mxu0
        %3590 = vmatprep.mubr.f32.mxu0 0.0
        %3591 = vmatmul.mubr.f32.gmra.mrb[0].mxu0 %v3184
        %v3592 = vpop.f32.mrb[0].mxu0
        %v3593 = vadd.f32 %v3362, %v3592
        %v3594 = vpop.f32.mrb[0].mxu0
        %3595 = vmatprep.mubr.f32.mxu0 0.0
        %3596 = vmatmul.mubr.f32.gmra.mrb[0].mxu0 %v3187
        %v3597 = vpop.f32.mrb[0].mxu0
        %v3598 = vadd.f32 %v3367, %v3597
        %v3599 = vpop.f32.mrb[0].mxu0
        %3600 = vmatprep.mubr.f32.mxu0 0.0
        %3601 = vmatmul.mubr.f32.gmra.mrb[0].mxu0 %v3190
        %v3602 = vpop.f32.mrb[0].mxu0
        %v3603 = vadd.f32 %v3372, %v3602
        %v3604 = vpop.f32.mrb[0].mxu0
        %3605 = vmatprep.mubr.f32.mxu0 0.0
        %3606 = vmatmul.mubr.f32.gmra.mrb[0].mxu0 %v3193
        %v3607 = vpop.f32.mrb[0].mxu0
        %v3608 = vadd.f32 %v3377, %v3607
        %v3609 = vpop.f32.mrb[0].mxu0
        %3610 = vmatprep.mubr.f32.mxu0 0.0
        %3611 = vmatmul.mubr.f32.gmra.mrb[0].mxu0 %v3196
        %v3612 = vpop.f32.mrb[0].mxu0
        %v3613 = vadd.f32 %v3382, %v3612
        %v3614 = vpop.f32.mrb[0].mxu0
        %3615 = vmatprep.mubr.f32.mxu0 0.0
        %3616 = vmatmul.mubr.f32.gmra.mrb[0].mxu0 %v3199
        %v3617 = vpop.f32.mrb[0].mxu0
        %v3618 = vadd.f32 %v3387, %v3617
        %v3619 = vpop.f32.mrb[0].mxu0
        %3620 = vmatprep.mubr.f32.mxu0 0.0
        %3621 = vmatmul.mubr.f32.gmra.mrb[0].mxu0 %v3202
        %v3622 = vpop.f32.mrb[0].mxu0
        %v3623 = vadd.f32 %v3392, %v3622
        %v3624 = vpop.f32.mrb[0].mxu0
        %3625 = vmatprep.mubr.f32.mxu0 0.0
        %3626 = vmatmul.mubr.f32.gmra.mrb[0].mxu0 %v3205
        %v3627 = vpop.f32.mrb[0].mxu0
        %v3628 = vadd.f32 %v3397, %v3627
        %v3629 = vpop.f32.mrb[0].mxu0
        %3630 = vmatprep.mubr.f32.mxu0 0.0
        %3631 = vmatmul.mubr.f32.gmra.mrb[0].mxu0 %v3208
        %v3632 = vpop.f32.mrb[0].mxu0
        %v3633 = vadd.f32 %v3402, %v3632
        %v3634 = vpop.f32.mrb[0].mxu0
        %3635 = vmatprep.mubr.f32.mxu0 0.0
        %3636 = vmatmul.mubr.f32.gmra.mrb[0].mxu0 %v3211
        %v3637 = vpop.f32.mrb[0].mxu0
        %v3638 = vadd.f32 %v3407, %v3637
        %v3639 = vpop.f32.mrb[0].mxu0
        %3640 = vmatprep.mubr.f32.mxu0 0.0
        %3641 = vmatmul.mubr.f32.gmra.mrb[0].mxu0 %v3214
        %v3642 = vpop.f32.mrb[0].mxu0
        %v3643 = vadd.f32 %v3412, %v3642
        %v3644 = vpop.f32.mrb[0].mxu0
        %3645 = vmatprep.mubr.f32.mxu0 0.0
        %3646 = vmatmul.mubr.f32.gmra.mrb[0].mxu0 %v3217
        %v3647 = vpop.f32.mrb[0].mxu0
        %v3648 = vadd.f32 %v3417, %v3647
        %v3649 = vpop.f32.mrb[0].mxu0
        %3650 = vmatprep.mubr.f32.mxu0 0.0
        %3651 = vmatmul.mubr.f32.gmra.mrb[0].mxu0 %v3220
        %v3652 = vpop.f32.mrb[0].mxu0
        %v3653 = vadd.f32 %v3422, %v3652
        %v3654 = vpop.f32.mrb[0].mxu0
        %3655 = vmatprep.mubr.f32.mxu0 0.0
        %3656 = vmatmul.mubr.f32.gmra.mrb[0].mxu0 %v3223
        %v3657 = vpop.f32.mrb[0].mxu0
        %v3658 = vadd.f32 %v3427, %v3657
        %v3659 = vpop.f32.mrb[0].mxu0
        %3660 = vmatprep.mubr.f32.mxu0 0.0
        %3661 = vmatmul.mubr.f32.gmra.mrb[0].mxu0 %v3226
        %v3662 = vpop.f32.mrb[0].mxu0
        %v3663 = vadd.f32 %v3432, %v3662
        %v3664 = vpop.f32.mrb[0].mxu0
        %3665 = vmatprep.mubr.f32.mxu0 0.0
        %3666 = vmatmul.mubr.f32.gmra.mrb[0].mxu0 %v3229
        %v3667 = vpop.f32.mrb[0].mxu0
        %v3668 = vadd.f32 %v3437, %v3667
        %v3669 = vpop.f32.mrb[0].mxu0
        %3670 = vmatprep.mubr.f32.mxu0 0.0
        %3671 = vmatmul.mubr.f32.gmra.mrb[0].mxu0 %v3232
        %v3672 = vpop.f32.mrb[0].mxu0
        %v3673 = vadd.f32 %v3442, %v3672
        %v3674 = vpop.f32.mrb[0].mxu0
        %3675 = vmatprep.mubr.f32.mxu0 0.0
        %3676 = vmatmul.mubr.f32.gmra.mrb[0].mxu0 %v3235
        %v3677 = vpop.f32.mrb[0].mxu0
        %v3678 = vadd.f32 %v3447, %v3677
        %v3679 = vpop.f32.mrb[0].mxu0
        %3680 = vmatprep.mubr.f32.mxu0 0.0
        %3681 = vmatmul.mubr.f32.gmra.mrb[0].mxu0 %v3238
        %v3682 = vpop.f32.mrb[0].mxu0
        %v3683 = vadd.f32 %v3452, %v3682
        %v3684 = vpop.f32.mrb[0].mxu0
        %3685 = vmatprep.mubr.f32.mxu0 0.0
        %3686 = vmatmul.mubr.f32.gmra.mrb[0].mxu0 %v3241
        %v3687 = vpop.f32.mrb[0].mxu0
        %v3688 = vadd.f32 %v3457, %v3687
        %v3689 = vpop.f32.mrb[0].mxu0
        %3690 = vmatprep.mubr.f32.mxu0 0.0
        %3691 = vmatmul.mubr.f32.gmra.mrb[0].mxu0 %v3244
        %v3692 = vpop.f32.mrb[0].mxu0
        %v3693 = vadd.f32 %v3462, %v3692
        %v3694 = vpop.f32.mrb[0].mxu0
        %3695 = vmatprep.mubr.f32.mxu0 0.0
        %3696 = vmatmul.mubr.f32.gmra.mrb[0].mxu0 %v3247
        %v3697 = vpop.f32.mrb[0].mxu0
        %v3698 = vadd.f32 %v3467, %v3697
        %v3699 = vpop.f32.mrb[0].mxu0
        %3700 = vmatprep.mubr.f32.mxu0 0.0
        %3701 = vmatmul.mubr.f32.gmra.mrb[0].mxu0 %v3250
        %v3702 = vpop.f32.mrb[0].mxu0
        %v3703 = vadd.f32 %v3472, %v3702
        %v3704 = vpop.f32.mrb[0].mxu0
        %3705 = vmatprep.mubr.f32.mxu0 0.0
        %3706 = vmatmul.mubr.f32.gmra.mrb[0].mxu0 %v3253
        %v3707 = vpop.f32.mrb[0].mxu0
        %v3708 = vadd.f32 %v3477, %v3707
        %v3709 = vpop.f32.mrb[0].mxu0
        %3710 = vmatprep.mubr.f32.mxu0 0.0
        %3711 = vmatmul.mubr.f32.gmra.mrb[0].mxu0 %v3256
        %v3712 = vpop.f32.mrb[0].mxu0
        %v3713 = vadd.f32 %v3482, %v3712
        %v3714 = vpop.f32.mrb[0].mxu0
        %3715 = vmatprep.mubr.f32.mxu0 0.0
        %3716 = vmatmul.mubr.f32.gmra.mrb[0].mxu0 %v3259
        %v3717 = vpop.f32.mrb[0].mxu0
        %v3718 = vadd.f32 %v3487, %v3717
        %v3719 = vpop.f32.mrb[0].mxu0
        %3720 = vmatprep.mubr.f32.mxu0 0.0
        %3721 = vmatmul.mubr.f32.gmra.mrb[0].mxu0 %v3262
        %v3722 = vpop.f32.mrb[0].mxu0
        %v3723 = vadd.f32 %v3492, %v3722
        %v3724 = vpop.f32.mrb[0].mxu0
        %3725 = vdwg.mxu0
        %s3726 = scalar_lea.vmem %s3, 192
        %v3727 = vld [vmem:[%s3726] sm:$0xff]
        %v3728 = vld [vmem:[%s3726 + $0x8] sm:$0xff]
        %v3729 = vld [vmem:[%s3726 + $0x10] sm:$0xff]
        %v3730 = vld [vmem:[%s3726 + $0x18] sm:$0xff]
        %v3732 = vsel %vm3173, %v375, 0
        %v3735 = vsel %vm3173, %v376, 0
        %3737 = vmatprep.subr.mxu0 0.0
        %3738 = vmatpush1.msra.mxu0 %v3727
        %3739 = vmatprep.subr.mxu0 0.0
        %3740 = vmatpush1.msra.mxu0 %v3728
        %3741 = vmatprep.subr.mxu0 0.0
        %3742 = vmatpush1.msra.mxu0 %v3729
        %3743 = vmatprep.subr.mxu0 0.0
        %3744 = vmatpush1.msra.mxu0 %v3730
        %3745 = vmatprep.subr.mxu0 0.0
        %3746 = vmatpush1.msra.mxu0 0.0
        %3747 = vmatprep.subr.mxu0 0.0
        %3748 = vmatpush1.msra.mxu0 0.0
        %3749 = vmatprep.subr.mxu0 0.0
        %3750 = vmatpush1.msra.mxu0 0.0
        %3751 = vmatprep.subr.mxu0 0.0
        %3752 = vmatpush1.msra.mxu0 0.0
        %3753 = vmatprep.subr.mxu0 0.0
        %3754 = vmatpush1.msra.mxu0 0.0
        %3755 = vmatprep.subr.mxu0 0.0
        %3756 = vmatpush1.msra.mxu0 0.0
        %3757 = vmatprep.subr.mxu0 0.0
        %3758 = vmatpush1.msra.mxu0 0.0
        %3759 = vmatprep.subr.mxu0 0.0
        %3760 = vmatpush1.msra.mxu0 0.0
        %3761 = vmatprep.subr.mxu0 0.0
        %3762 = vmatpush1.msra.mxu0 0.0
        %3763 = vmatprep.subr.mxu0 0.0
        %3764 = vmatpush1.msra.mxu0 0.0
        %3765 = vmatprep.subr.mxu0 0.0
        %3766 = vmatpush1.msra.mxu0 0.0
        %3767 = vmatprep.subr.mxu0 0.0
        %3768 = vmatpush1.msra.mxu0 0.0
        %3769 = vmatprep.subr.mxu0 0.0
        %3770 = vmatpush1.msra.mxu0 0.0
        %3771 = vmatprep.subr.mxu0 0.0
        %3772 = vmatpush1.msra.mxu0 0.0
        %3773 = vmatprep.subr.mxu0 0.0
        %3774 = vmatpush1.msra.mxu0 0.0
        %3775 = vmatprep.subr.mxu0 0.0
        %3776 = vmatpush1.msra.mxu0 0.0
        %3777 = vmatprep.subr.mxu0 0.0
        %3778 = vmatpush1.msra.mxu0 0.0
        %3779 = vmatprep.subr.mxu0 0.0
        %3780 = vmatpush1.msra.mxu0 0.0
        %3781 = vmatprep.subr.mxu0 0.0
        %3782 = vmatpush1.msra.mxu0 0.0
        %3783 = vmatprep.subr.mxu0 0.0
        %3784 = vmatpush1.msra.mxu0 0.0
        %3785 = vmatprep.subr.mxu0 0.0
        %3786 = vmatpush1.msra.mxu0 0.0
        %3787 = vmatprep.subr.mxu0 0.0
        %3788 = vmatpush1.msra.mxu0 0.0
        %3789 = vmatprep.subr.mxu0 0.0
        %3790 = vmatpush1.msra.mxu0 0.0
        %3791 = vmatprep.subr.mxu0 0.0
        %3792 = vmatpush1.msra.mxu0 0.0
        %3793 = vmatprep.subr.mxu0 0.0
        %3794 = vmatpush1.msra.mxu0 0.0
        %3795 = vmatprep.subr.mxu0 0.0
        %3796 = vmatpush1.msra.mxu0 0.0
        %3797 = vmatprep.subr.mxu0 0.0
        %3798 = vmatpush1.msra.mxu0 0.0
        %3799 = vmatprep.subr.mxu0 0.0
        %3800 = vmatpush1.msra.mxu0 0.0
        %3801 = vmatprep.mubr.f32.mxu0 0.0
        %3802 = vmatmul.mubr.f32.gmra.mrb[0].mxu0 %v3181
        %v3803 = vpop.f32.mrb[0].mxu0
        %v3804 = vadd.f32 0.0, %v3803
        %v3805 = vpop.f32.mrb[0].mxu0
        %3806 = vmatprep.mubr.f32.mxu0 0.0
        %3807 = vmatmul.mubr.f32.gmra.mrb[0].mxu0 %v3184
        %v3808 = vpop.f32.mrb[0].mxu0
        %v3809 = vadd.f32 0.0, %v3808
        %v3810 = vpop.f32.mrb[0].mxu0
        %3811 = vmatprep.mubr.f32.mxu0 0.0
        %3812 = vmatmul.mubr.f32.gmra.mrb[0].mxu0 %v3187
        %v3813 = vpop.f32.mrb[0].mxu0
        %v3814 = vadd.f32 0.0, %v3813
        %v3815 = vpop.f32.mrb[0].mxu0
        %3816 = vmatprep.mubr.f32.mxu0 0.0
        %3817 = vmatmul.mubr.f32.gmra.mrb[0].mxu0 %v3190
        %v3818 = vpop.f32.mrb[0].mxu0
        %v3819 = vadd.f32 0.0, %v3818
        %v3820 = vpop.f32.mrb[0].mxu0
        %3821 = vmatprep.mubr.f32.mxu0 0.0
        %3822 = vmatmul.mubr.f32.gmra.mrb[0].mxu0 %v3193
        %v3823 = vpop.f32.mrb[0].mxu0
        %v3824 = vadd.f32 0.0, %v3823
        %v3825 = vpop.f32.mrb[0].mxu0
        %3826 = vmatprep.mubr.f32.mxu0 0.0
        %3827 = vmatmul.mubr.f32.gmra.mrb[0].mxu0 %v3196
        %v3828 = vpop.f32.mrb[0].mxu0
        %v3829 = vadd.f32 0.0, %v3828
        %v3830 = vpop.f32.mrb[0].mxu0
        %3831 = vmatprep.mubr.f32.mxu0 0.0
        %3832 = vmatmul.mubr.f32.gmra.mrb[0].mxu0 %v3199
        %v3833 = vpop.f32.mrb[0].mxu0
        %v3834 = vadd.f32 0.0, %v3833
        %v3835 = vpop.f32.mrb[0].mxu0
        %3836 = vmatprep.mubr.f32.mxu0 0.0
        %3837 = vmatmul.mubr.f32.gmra.mrb[0].mxu0 %v3202
        %v3838 = vpop.f32.mrb[0].mxu0
        %v3839 = vadd.f32 0.0, %v3838
        %v3840 = vpop.f32.mrb[0].mxu0
        %3841 = vmatprep.mubr.f32.mxu0 0.0
        %3842 = vmatmul.mubr.f32.gmra.mrb[0].mxu0 %v3205
        %v3843 = vpop.f32.mrb[0].mxu0
        %v3844 = vadd.f32 0.0, %v3843
        %v3845 = vpop.f32.mrb[0].mxu0
        %3846 = vmatprep.mubr.f32.mxu0 0.0
        %3847 = vmatmul.mubr.f32.gmra.mrb[0].mxu0 %v3208
        %v3848 = vpop.f32.mrb[0].mxu0
        %v3849 = vadd.f32 0.0, %v3848
        %v3850 = vpop.f32.mrb[0].mxu0
        %3851 = vmatprep.mubr.f32.mxu0 0.0
        %3852 = vmatmul.mubr.f32.gmra.mrb[0].mxu0 %v3211
        %v3853 = vpop.f32.mrb[0].mxu0
        %v3854 = vadd.f32 0.0, %v3853
        %v3855 = vpop.f32.mrb[0].mxu0
        %3856 = vmatprep.mubr.f32.mxu0 0.0
        %3857 = vmatmul.mubr.f32.gmra.mrb[0].mxu0 %v3214
        %v3858 = vpop.f32.mrb[0].mxu0
        %v3859 = vadd.f32 0.0, %v3858
        %v3860 = vpop.f32.mrb[0].mxu0
        %3861 = vmatprep.mubr.f32.mxu0 0.0
        %3862 = vmatmul.mubr.f32.gmra.mrb[0].mxu0 %v3217
        %v3863 = vpop.f32.mrb[0].mxu0
        %v3864 = vadd.f32 0.0, %v3863
        %v3865 = vpop.f32.mrb[0].mxu0
        %3866 = vmatprep.mubr.f32.mxu0 0.0
        %3867 = vmatmul.mubr.f32.gmra.mrb[0].mxu0 %v3220
        %v3868 = vpop.f32.mrb[0].mxu0
        %v3869 = vadd.f32 0.0, %v3868
        %v3870 = vpop.f32.mrb[0].mxu0
        %3871 = vmatprep.mubr.f32.mxu0 0.0
        %3872 = vmatmul.mubr.f32.gmra.mrb[0].mxu0 %v3223
        %v3873 = vpop.f32.mrb[0].mxu0
        %v3874 = vadd.f32 0.0, %v3873
        %v3875 = vpop.f32.mrb[0].mxu0
        %3876 = vmatprep.mubr.f32.mxu0 0.0
        %3877 = vmatmul.mubr.f32.gmra.mrb[0].mxu0 %v3226
        %v3878 = vpop.f32.mrb[0].mxu0
        %v3879 = vadd.f32 0.0, %v3878
        %v3880 = vpop.f32.mrb[0].mxu0
        %3881 = vmatprep.mubr.f32.mxu0 0.0
        %3882 = vmatmul.mubr.f32.gmra.mrb[0].mxu0 %v3229
        %v3883 = vpop.f32.mrb[0].mxu0
        %v3884 = vadd.f32 0.0, %v3883
        %v3885 = vpop.f32.mrb[0].mxu0
        %3886 = vmatprep.mubr.f32.mxu0 0.0
        %3887 = vmatmul.mubr.f32.gmra.mrb[0].mxu0 %v3232
        %v3888 = vpop.f32.mrb[0].mxu0
        %v3889 = vadd.f32 0.0, %v3888
        %v3890 = vpop.f32.mrb[0].mxu0
        %3891 = vmatprep.mubr.f32.mxu0 0.0
        %3892 = vmatmul.mubr.f32.gmra.mrb[0].mxu0 %v3235
        %v3893 = vpop.f32.mrb[0].mxu0
        %v3894 = vadd.f32 0.0, %v3893
        %v3895 = vpop.f32.mrb[0].mxu0
        %3896 = vmatprep.mubr.f32.mxu0 0.0
        %3897 = vmatmul.mubr.f32.gmra.mrb[0].mxu0 %v3238
        %v3898 = vpop.f32.mrb[0].mxu0
        %v3899 = vadd.f32 0.0, %v3898
        %v3900 = vpop.f32.mrb[0].mxu0
        %3901 = vmatprep.mubr.f32.mxu0 0.0
        %3902 = vmatmul.mubr.f32.gmra.mrb[0].mxu0 %v3241
        %v3903 = vpop.f32.mrb[0].mxu0
        %v3904 = vadd.f32 0.0, %v3903
        %v3905 = vpop.f32.mrb[0].mxu0
        %3906 = vmatprep.mubr.f32.mxu0 0.0
        %3907 = vmatmul.mubr.f32.gmra.mrb[0].mxu0 %v3244
        %v3908 = vpop.f32.mrb[0].mxu0
        %v3909 = vadd.f32 0.0, %v3908
        %v3910 = vpop.f32.mrb[0].mxu0
        %3911 = vmatprep.mubr.f32.mxu0 0.0
        %3912 = vmatmul.mubr.f32.gmra.mrb[0].mxu0 %v3247
        %v3913 = vpop.f32.mrb[0].mxu0
        %v3914 = vadd.f32 0.0, %v3913
        %v3915 = vpop.f32.mrb[0].mxu0
        %3916 = vmatprep.mubr.f32.mxu0 0.0
        %3917 = vmatmul.mubr.f32.gmra.mrb[0].mxu0 %v3250
        %v3918 = vpop.f32.mrb[0].mxu0
        %v3919 = vadd.f32 0.0, %v3918
        %v3920 = vpop.f32.mrb[0].mxu0
        %3921 = vmatprep.mubr.f32.mxu0 0.0
        %3922 = vmatmul.mubr.f32.gmra.mrb[0].mxu0 %v3253
        %v3923 = vpop.f32.mrb[0].mxu0
        %v3924 = vadd.f32 0.0, %v3923
        %v3925 = vpop.f32.mrb[0].mxu0
        %3926 = vmatprep.mubr.f32.mxu0 0.0
        %3927 = vmatmul.mubr.f32.gmra.mrb[0].mxu0 %v3256
        %v3928 = vpop.f32.mrb[0].mxu0
        %v3929 = vadd.f32 0.0, %v3928
        %v3930 = vpop.f32.mrb[0].mxu0
        %3931 = vmatprep.mubr.f32.mxu0 0.0
        %3932 = vmatmul.mubr.f32.gmra.mrb[0].mxu0 %v3259
        %v3933 = vpop.f32.mrb[0].mxu0
        %v3934 = vadd.f32 0.0, %v3933
        %v3935 = vpop.f32.mrb[0].mxu0
        %3936 = vmatprep.mubr.f32.mxu0 0.0
        %3937 = vmatmul.mubr.f32.gmra.mrb[0].mxu0 %v3262
        %v3938 = vpop.f32.mrb[0].mxu0
        %v3939 = vadd.f32 0.0, %v3938
        %v3940 = vpop.f32.mrb[0].mxu0
        %3941 = vmatprep.mubr.f32.mxu0 0.0
        %3942 = vmatmul.mubr.f32.gmra.mrb[0].mxu0 %v3265
        %v3943 = vpop.f32.mrb[0].mxu0
        %v3944 = vadd.f32 0.0, %v3943
        %v3945 = vpop.f32.mrb[0].mxu0
        %3946 = vmatprep.mubr.f32.mxu0 0.0
        %3947 = vmatmul.mubr.f32.gmra.mrb[0].mxu0 %v3268
        %v3948 = vpop.f32.mrb[0].mxu0
        %v3949 = vadd.f32 0.0, %v3948
        %v3950 = vpop.f32.mrb[0].mxu0
        %3951 = vmatprep.mubr.f32.mxu0 0.0
        %3952 = vmatmul.mubr.f32.gmra.mrb[0].mxu0 %v3732
        %v3953 = vpop.f32.mrb[0].mxu0
        %v3954 = vadd.f32 0.0, %v3953
        %v3955 = vpop.f32.mrb[0].mxu0
        %3956 = vmatprep.mubr.f32.mxu0 0.0
        %3957 = vmatmul.mubr.f32.gmra.mrb[0].mxu0 %v3735
        %v3958 = vpop.f32.mrb[0].mxu0
        %v3959 = vadd.f32 0.0, %v3958
        %v3960 = vpop.f32.mrb[0].mxu0
        %3961 = vdwg.mxu0
        %v3962 = vadd.f32 %v3568, %v3804
        %v3963 = vadd.f32 %v3573, %v3809
        %v3964 = vadd.f32 %v3578, %v3814
        %v3965 = vadd.f32 %v3583, %v3819
        %v3966 = vadd.f32 %v3588, %v3824
        %v3967 = vadd.f32 %v3593, %v3829
        %v3968 = vadd.f32 %v3598, %v3834
        %v3969 = vadd.f32 %v3603, %v3839
        %v3970 = vadd.f32 %v3608, %v3844
        %v3971 = vadd.f32 %v3613, %v3849
        %v3972 = vadd.f32 %v3618, %v3854
        %v3973 = vadd.f32 %v3623, %v3859
        %v3974 = vadd.f32 %v3628, %v3864
        %v3975 = vadd.f32 %v3633, %v3869
        %v3976 = vadd.f32 %v3638, %v3874
        %v3977 = vadd.f32 %v3643, %v3879
        %v3978 = vadd.f32 %v3648, %v3884
        %v3979 = vadd.f32 %v3653, %v3889
        %v3980 = vadd.f32 %v3658, %v3894
        %v3981 = vadd.f32 %v3663, %v3899
        %v3982 = vadd.f32 %v3668, %v3904
        %v3983 = vadd.f32 %v3673, %v3909
        %v3984 = vadd.f32 %v3678, %v3914
        %v3985 = vadd.f32 %v3683, %v3919
        %v3986 = vadd.f32 %v3688, %v3924
        %v3987 = vadd.f32 %v3693, %v3929
        %v3988 = vadd.f32 %v3698, %v3934
        %v3989 = vadd.f32 %v3703, %v3939
        %v3990 = vadd.f32 %v3708, %v3944
        %v3991 = vadd.f32 %v3713, %v3949
        %v3992 = vadd.f32 %v3718, %v3954
        %v3993 = vadd.f32 %v3723, %v3959
        %v4010 = vrot.slane %v324, 1
        %v4011 = vrot.slane %v325, 1
        %v4012 = vsel %vm1225, %v4010, %v4011
        %v4013 = vrot.slane %v326, 1
        %v4014 = vsel %vm1225, %v4011, %v4013
        %v4015 = vrot.slane %v327, 1
        %v4016 = vrot.slane %v328, 1
        %v4017 = vsel %vm1225, %v4015, %v4016
        %v4018 = vrot.slane %v329, 1
        %v4019 = vsel %vm1225, %v4016, %v4018
        %v4020 = vrot.slane %v330, 1
        %v4021 = vrot.slane %v331, 1
        %v4022 = vsel %vm1225, %v4020, %v4021
        %v4023 = vrot.slane %v332, 1
        %v4024 = vsel %vm1225, %v4021, %v4023
        %v4025 = vrot.slane %v333, 1
        %v4026 = vrot.slane %v334, 1
        %v4027 = vsel %vm1225, %v4025, %v4026
        %v4028 = vrot.slane %v335, 1
        %v4029 = vsel %vm1225, %v4026, %v4028
        %v4030 = vrot.slane %v336, 1
        %v4031 = vrot.slane %v337, 1
        %v4032 = vsel %vm1225, %v4030, %v4031
        %v4033 = vrot.slane %v338, 1
        %v4034 = vsel %vm1225, %v4031, %v4033
        %v4035 = vrot.slane %v339, 1
        %v4036 = vrot.slane %v340, 1
        %v4037 = vsel %vm1225, %v4035, %v4036
        %v4038 = vrot.slane %v341, 1
        %v4039 = vsel %vm1225, %v4036, %v4038
        %v4040 = vrot.slane %v342, 1
        %v4041 = vrot.slane %v343, 1
        %v4042 = vsel %vm1225, %v4040, %v4041
        %v4043 = vrot.slane %v344, 1
        %v4044 = vsel %vm1225, %v4041, %v4043
        %v4045 = vrot.slane %v345, 1
        %v4046 = vrot.slane %v346, 1
        %v4047 = vsel %vm1225, %v4045, %v4046
        %v4048 = vrot.slane %v347, 1
        %v4049 = vsel %vm1225, %v4046, %v4048
        %v4050 = vrot.slane %v348, 1
        %v4051 = vrot.slane %v349, 1
        %v4052 = vsel %vm1225, %v4050, %v4051
        %v4053 = vrot.slane %v350, 1
        %v4054 = vsel %vm1225, %v4051, %v4053
        %v4055 = vrot.slane %v351, 1
        %v4056 = vrot.slane %v352, 1
        %v4057 = vsel %vm1225, %v4055, %v4056
        %v4058 = vrot.slane %v353, 1
        %v4059 = vsel %vm1225, %v4056, %v4058
        %v4060 = vrot.slane %v354, 1
        %v4061 = vrot.slane %v355, 1
        %v4062 = vsel %vm1225, %v4060, %v4061
        %v4063 = vrot.slane %v356, 1
        %v4064 = vsel %vm1225, %v4061, %v4063
        %v4065 = vrot.slane %v357, 1
        %v4066 = vrot.slane %v358, 1
        %v4067 = vsel %vm1225, %v4065, %v4066
        %v4068 = vrot.slane %v359, 1
        %v4069 = vsel %vm1225, %v4066, %v4068
        %v4070 = vrot.slane %v360, 1
        %v4071 = vrot.slane %v361, 1
        %v4072 = vsel %vm1225, %v4070, %v4071
        %v4073 = vrot.slane %v362, 1
        %v4074 = vsel %vm1225, %v4071, %v4073
        %v4075 = vrot.slane %v363, 1
        %v4076 = vrot.slane %v364, 1
        %v4077 = vsel %vm1225, %v4075, %v4076
        %v4078 = vrot.slane %v365, 1
        %v4079 = vsel %vm1225, %v4076, %v4078
        %v4080 = vrot.slane %v366, 1
        %v4081 = vrot.slane %v367, 1
        %v4082 = vsel %vm1225, %v4080, %v4081
        %v4083 = vrot.slane %v368, 1
        %v4084 = vsel %vm1225, %v4081, %v4083
        %v4085 = vrot.slane %v369, 1
        %v4086 = vrot.slane %v370, 1
        %v4087 = vsel %vm1225, %v4085, %v4086
        %v4088 = vrot.slane %v371, 1
        %v4089 = vsel %vm1225, %v4086, %v4088
        %s4090 = scalar_lea.vmem %s3, 32
        %v4091 = vld [vmem:[%s4090] sm:$0xff]
        %v4092 = vld [vmem:[%s4090 + $0x8] sm:$0xff]
        %v4093 = vld [vmem:[%s4090 + $0x10] sm:$0xff]
        %v4094 = vld [vmem:[%s4090 + $0x18] sm:$0xff]
        %v4095 = vsel %vm3173, %v4012, 0
        %v4097 = vsel %vm3173, %v4014, 0
        %v4099 = vsel %vm3173, %v4017, 0
        %v4101 = vsel %vm3173, %v4019, 0
        %v4103 = vsel %vm3173, %v4022, 0
        %v4105 = vsel %vm3173, %v4024, 0
        %v4107 = vsel %vm3173, %v4027, 0
        %v4109 = vsel %vm3173, %v4029, 0
        %v4111 = vsel %vm3173, %v4032, 0
        %v4113 = vsel %vm3173, %v4034, 0
        %v4115 = vsel %vm3173, %v4037, 0
        %v4117 = vsel %vm3173, %v4039, 0
        %v4119 = vsel %vm3173, %v4042, 0
        %v4121 = vsel %vm3173, %v4044, 0
        %v4123 = vsel %vm3173, %v4047, 0
        %v4125 = vsel %vm3173, %v4049, 0
        %v4127 = vsel %vm3173, %v4052, 0
        %v4129 = vsel %vm3173, %v4054, 0
        %v4131 = vsel %vm3173, %v4057, 0
        %v4133 = vsel %vm3173, %v4059, 0
        %v4135 = vsel %vm3173, %v4062, 0
        %v4137 = vsel %vm3173, %v4064, 0
        %v4139 = vsel %vm3173, %v4067, 0
        %v4141 = vsel %vm3173, %v4069, 0
        %v4143 = vsel %vm3173, %v4072, 0
        %v4145 = vsel %vm3173, %v4074, 0
        %v4147 = vsel %vm3173, %v4077, 0
        %v4149 = vsel %vm3173, %v4079, 0
        %v4151 = vsel %vm3173, %v4082, 0
        %v4153 = vsel %vm3173, %v4084, 0
        %v4155 = vsel %vm3173, %v4087, 0
        %v4157 = vsel %vm3173, %v4089, 0
        %4159 = vmatprep.subr.mxu0 0.0
        %4160 = vmatpush1.msra.mxu0 %v4091
        %4161 = vmatprep.subr.mxu0 0.0
        %4162 = vmatpush1.msra.mxu0 %v4092
        %4163 = vmatprep.subr.mxu0 0.0
        %4164 = vmatpush1.msra.mxu0 %v4093
        %4165 = vmatprep.subr.mxu0 0.0
        %4166 = vmatpush1.msra.mxu0 %v4094
        %4167 = vmatprep.subr.mxu0 0.0
        %4168 = vmatpush1.msra.mxu0 0.0
        %4169 = vmatprep.subr.mxu0 0.0
        %4170 = vmatpush1.msra.mxu0 0.0
        %4171 = vmatprep.subr.mxu0 0.0
        %4172 = vmatpush1.msra.mxu0 0.0
        %4173 = vmatprep.subr.mxu0 0.0
        %4174 = vmatpush1.msra.mxu0 0.0
        %4175 = vmatprep.subr.mxu0 0.0
        %4176 = vmatpush1.msra.mxu0 0.0
        %4177 = vmatprep.subr.mxu0 0.0
        %4178 = vmatpush1.msra.mxu0 0.0
        %4179 = vmatprep.subr.mxu0 0.0
        %4180 = vmatpush1.msra.mxu0 0.0
        %4181 = vmatprep.subr.mxu0 0.0
        %4182 = vmatpush1.msra.mxu0 0.0
        %4183 = vmatprep.subr.mxu0 0.0
        %4184 = vmatpush1.msra.mxu0 0.0
        %4185 = vmatprep.subr.mxu0 0.0
        %4186 = vmatpush1.msra.mxu0 0.0
        %4187 = vmatprep.subr.mxu0 0.0
        %4188 = vmatpush1.msra.mxu0 0.0
        %4189 = vmatprep.subr.mxu0 0.0
        %4190 = vmatpush1.msra.mxu0 0.0
        %4191 = vmatprep.subr.mxu0 0.0
        %4192 = vmatpush1.msra.mxu0 0.0
        %4193 = vmatprep.subr.mxu0 0.0
        %4194 = vmatpush1.msra.mxu0 0.0
        %4195 = vmatprep.subr.mxu0 0.0
        %4196 = vmatpush1.msra.mxu0 0.0
        %4197 = vmatprep.subr.mxu0 0.0
        %4198 = vmatpush1.msra.mxu0 0.0
        %4199 = vmatprep.subr.mxu0 0.0
        %4200 = vmatpush1.msra.mxu0 0.0
        %4201 = vmatprep.subr.mxu0 0.0
        %4202 = vmatpush1.msra.mxu0 0.0
        %4203 = vmatprep.subr.mxu0 0.0
        %4204 = vmatpush1.msra.mxu0 0.0
        %4205 = vmatprep.subr.mxu0 0.0
        %4206 = vmatpush1.msra.mxu0 0.0
        %4207 = vmatprep.subr.mxu0 0.0
        %4208 = vmatpush1.msra.mxu0 0.0
        %4209 = vmatprep.subr.mxu0 0.0
        %4210 = vmatpush1.msra.mxu0 0.0
        %4211 = vmatprep.subr.mxu0 0.0
        %4212 = vmatpush1.msra.mxu0 0.0
        %4213 = vmatprep.subr.mxu0 0.0
        %4214 = vmatpush1.msra.mxu0 0.0
        %4215 = vmatprep.subr.mxu0 0.0
        %4216 = vmatpush1.msra.mxu0 0.0
        %4217 = vmatprep.subr.mxu0 0.0
        %4218 = vmatpush1.msra.mxu0 0.0
        %4219 = vmatprep.subr.mxu0 0.0
        %4220 = vmatpush1.msra.mxu0 0.0
        %4221 = vmatprep.subr.mxu0 0.0
        %4222 = vmatpush1.msra.mxu0 0.0
        %4223 = vmatprep.mubr.f32.mxu0 0.0
        %4224 = vmatmul.mubr.f32.gmra.mrb[0].mxu0 %v4095
        %v4225 = vpop.f32.mrb[0].mxu0
        %v4226 = vadd.f32 0.0, %v4225
        %v4227 = vpop.f32.mrb[0].mxu0
        %4228 = vmatprep.mubr.f32.mxu0 0.0
        %4229 = vmatmul.mubr.f32.gmra.mrb[0].mxu0 %v4097
        %v4230 = vpop.f32.mrb[0].mxu0
        %v4231 = vadd.f32 0.0, %v4230
        %v4232 = vpop.f32.mrb[0].mxu0
        %4233 = vmatprep.mubr.f32.mxu0 0.0
        %4234 = vmatmul.mubr.f32.gmra.mrb[0].mxu0 %v4099
        %v4235 = vpop.f32.mrb[0].mxu0
        %v4236 = vadd.f32 0.0, %v4235
        %v4237 = vpop.f32.mrb[0].mxu0
        %4238 = vmatprep.mubr.f32.mxu0 0.0
        %4239 = vmatmul.mubr.f32.gmra.mrb[0].mxu0 %v4101
        %v4240 = vpop.f32.mrb[0].mxu0
        %v4241 = vadd.f32 0.0, %v4240
        %v4242 = vpop.f32.mrb[0].mxu0
        %4243 = vmatprep.mubr.f32.mxu0 0.0
        %4244 = vmatmul.mubr.f32.gmra.mrb[0].mxu0 %v4103
        %v4245 = vpop.f32.mrb[0].mxu0
        %v4246 = vadd.f32 0.0, %v4245
        %v4247 = vpop.f32.mrb[0].mxu0
        %4248 = vmatprep.mubr.f32.mxu0 0.0
        %4249 = vmatmul.mubr.f32.gmra.mrb[0].mxu0 %v4105
        %v4250 = vpop.f32.mrb[0].mxu0
        %v4251 = vadd.f32 0.0, %v4250
        %v4252 = vpop.f32.mrb[0].mxu0
        %4253 = vmatprep.mubr.f32.mxu0 0.0
        %4254 = vmatmul.mubr.f32.gmra.mrb[0].mxu0 %v4107
        %v4255 = vpop.f32.mrb[0].mxu0
        %v4256 = vadd.f32 0.0, %v4255
        %v4257 = vpop.f32.mrb[0].mxu0
        %4258 = vmatprep.mubr.f32.mxu0 0.0
        %4259 = vmatmul.mubr.f32.gmra.mrb[0].mxu0 %v4109
        %v4260 = vpop.f32.mrb[0].mxu0
        %v4261 = vadd.f32 0.0, %v4260
        %v4262 = vpop.f32.mrb[0].mxu0
        %4263 = vmatprep.mubr.f32.mxu0 0.0
        %4264 = vmatmul.mubr.f32.gmra.mrb[0].mxu0 %v4111
        %v4265 = vpop.f32.mrb[0].mxu0
        %v4266 = vadd.f32 0.0, %v4265
        %v4267 = vpop.f32.mrb[0].mxu0
        %4268 = vmatprep.mubr.f32.mxu0 0.0
        %4269 = vmatmul.mubr.f32.gmra.mrb[0].mxu0 %v4113
        %v4270 = vpop.f32.mrb[0].mxu0
        %v4271 = vadd.f32 0.0, %v4270
        %v4272 = vpop.f32.mrb[0].mxu0
        %4273 = vmatprep.mubr.f32.mxu0 0.0
        %4274 = vmatmul.mubr.f32.gmra.mrb[0].mxu0 %v4115
        %v4275 = vpop.f32.mrb[0].mxu0
        %v4276 = vadd.f32 0.0, %v4275
        %v4277 = vpop.f32.mrb[0].mxu0
        %4278 = vmatprep.mubr.f32.mxu0 0.0
        %4279 = vmatmul.mubr.f32.gmra.mrb[0].mxu0 %v4117
        %v4280 = vpop.f32.mrb[0].mxu0
        %v4281 = vadd.f32 0.0, %v4280
        %v4282 = vpop.f32.mrb[0].mxu0
        %4283 = vmatprep.mubr.f32.mxu0 0.0
        %4284 = vmatmul.mubr.f32.gmra.mrb[0].mxu0 %v4119
        %v4285 = vpop.f32.mrb[0].mxu0
        %v4286 = vadd.f32 0.0, %v4285
        %v4287 = vpop.f32.mrb[0].mxu0
        %4288 = vmatprep.mubr.f32.mxu0 0.0
        %4289 = vmatmul.mubr.f32.gmra.mrb[0].mxu0 %v4121
        %v4290 = vpop.f32.mrb[0].mxu0
        %v4291 = vadd.f32 0.0, %v4290
        %v4292 = vpop.f32.mrb[0].mxu0
        %4293 = vmatprep.mubr.f32.mxu0 0.0
        %4294 = vmatmul.mubr.f32.gmra.mrb[0].mxu0 %v4123
        %v4295 = vpop.f32.mrb[0].mxu0
        %v4296 = vadd.f32 0.0, %v4295
        %v4297 = vpop.f32.mrb[0].mxu0
        %4298 = vmatprep.mubr.f32.mxu0 0.0
        %4299 = vmatmul.mubr.f32.gmra.mrb[0].mxu0 %v4125
        %v4300 = vpop.f32.mrb[0].mxu0
        %v4301 = vadd.f32 0.0, %v4300
        %v4302 = vpop.f32.mrb[0].mxu0
        %4303 = vmatprep.mubr.f32.mxu0 0.0
        %4304 = vmatmul.mubr.f32.gmra.mrb[0].mxu0 %v4127
        %v4305 = vpop.f32.mrb[0].mxu0
        %v4306 = vadd.f32 0.0, %v4305
        %v4307 = vpop.f32.mrb[0].mxu0
        %4308 = vmatprep.mubr.f32.mxu0 0.0
        %4309 = vmatmul.mubr.f32.gmra.mrb[0].mxu0 %v4129
        %v4310 = vpop.f32.mrb[0].mxu0
        %v4311 = vadd.f32 0.0, %v4310
        %v4312 = vpop.f32.mrb[0].mxu0
        %4313 = vmatprep.mubr.f32.mxu0 0.0
        %4314 = vmatmul.mubr.f32.gmra.mrb[0].mxu0 %v4131
        %v4315 = vpop.f32.mrb[0].mxu0
        %v4316 = vadd.f32 0.0, %v4315
        %v4317 = vpop.f32.mrb[0].mxu0
        %4318 = vmatprep.mubr.f32.mxu0 0.0
        %4319 = vmatmul.mubr.f32.gmra.mrb[0].mxu0 %v4133
        %v4320 = vpop.f32.mrb[0].mxu0
        %v4321 = vadd.f32 0.0, %v4320
        %v4322 = vpop.f32.mrb[0].mxu0
        %4323 = vmatprep.mubr.f32.mxu0 0.0
        %4324 = vmatmul.mubr.f32.gmra.mrb[0].mxu0 %v4135
        %v4325 = vpop.f32.mrb[0].mxu0
        %v4326 = vadd.f32 0.0, %v4325
        %v4327 = vpop.f32.mrb[0].mxu0
        %4328 = vmatprep.mubr.f32.mxu0 0.0
        %4329 = vmatmul.mubr.f32.gmra.mrb[0].mxu0 %v4137
        %v4330 = vpop.f32.mrb[0].mxu0
        %v4331 = vadd.f32 0.0, %v4330
        %v4332 = vpop.f32.mrb[0].mxu0
        %4333 = vmatprep.mubr.f32.mxu0 0.0
        %4334 = vmatmul.mubr.f32.gmra.mrb[0].mxu0 %v4139
        %v4335 = vpop.f32.mrb[0].mxu0
        %v4336 = vadd.f32 0.0, %v4335
        %v4337 = vpop.f32.mrb[0].mxu0
        %4338 = vmatprep.mubr.f32.mxu0 0.0
        %4339 = vmatmul.mubr.f32.gmra.mrb[0].mxu0 %v4141
        %v4340 = vpop.f32.mrb[0].mxu0
        %v4341 = vadd.f32 0.0, %v4340
        %v4342 = vpop.f32.mrb[0].mxu0
        %4343 = vmatprep.mubr.f32.mxu0 0.0
        %4344 = vmatmul.mubr.f32.gmra.mrb[0].mxu0 %v4143
        %v4345 = vpop.f32.mrb[0].mxu0
        %v4346 = vadd.f32 0.0, %v4345
        %v4347 = vpop.f32.mrb[0].mxu0
        %4348 = vmatprep.mubr.f32.mxu0 0.0
        %4349 = vmatmul.mubr.f32.gmra.mrb[0].mxu0 %v4145
        %v4350 = vpop.f32.mrb[0].mxu0
        %v4351 = vadd.f32 0.0, %v4350
        %v4352 = vpop.f32.mrb[0].mxu0
        %4353 = vmatprep.mubr.f32.mxu0 0.0
        %4354 = vmatmul.mubr.f32.gmra.mrb[0].mxu0 %v4147
        %v4355 = vpop.f32.mrb[0].mxu0
        %v4356 = vadd.f32 0.0, %v4355
        %v4357 = vpop.f32.mrb[0].mxu0
        %4358 = vmatprep.mubr.f32.mxu0 0.0
        %4359 = vmatmul.mubr.f32.gmra.mrb[0].mxu0 %v4149
        %v4360 = vpop.f32.mrb[0].mxu0
        %v4361 = vadd.f32 0.0, %v4360
        %v4362 = vpop.f32.mrb[0].mxu0
        %4363 = vmatprep.mubr.f32.mxu0 0.0
        %4364 = vmatmul.mubr.f32.gmra.mrb[0].mxu0 %v4151
        %v4365 = vpop.f32.mrb[0].mxu0
        %v4366 = vadd.f32 0.0, %v4365
        %v4367 = vpop.f32.mrb[0].mxu0
        %4368 = vmatprep.mubr.f32.mxu0 0.0
        %4369 = vmatmul.mubr.f32.gmra.mrb[0].mxu0 %v4153
        %v4370 = vpop.f32.mrb[0].mxu0
        %v4371 = vadd.f32 0.0, %v4370
        %v4372 = vpop.f32.mrb[0].mxu0
        %4373 = vmatprep.mubr.f32.mxu0 0.0
        %4374 = vmatmul.mubr.f32.gmra.mrb[0].mxu0 %v4155
        %v4375 = vpop.f32.mrb[0].mxu0
        %v4376 = vadd.f32 0.0, %v4375
        %v4377 = vpop.f32.mrb[0].mxu0
        %4378 = vmatprep.mubr.f32.mxu0 0.0
        %4379 = vmatmul.mubr.f32.gmra.mrb[0].mxu0 %v4157
        %v4380 = vpop.f32.mrb[0].mxu0
        %v4381 = vadd.f32 0.0, %v4380
        %v4382 = vpop.f32.mrb[0].mxu0
        %4383 = vdwg.mxu0
        %v4384 = vadd.f32 %v3962, %v4226
        %v4385 = vadd.f32 %v3963, %v4231
        %v4386 = vadd.f32 %v3964, %v4236
        %v4387 = vadd.f32 %v3965, %v4241
        %v4388 = vadd.f32 %v3966, %v4246
        %v4389 = vadd.f32 %v3967, %v4251
        %v4390 = vadd.f32 %v3968, %v4256
        %v4391 = vadd.f32 %v3969, %v4261
        %v4392 = vadd.f32 %v3970, %v4266
        %v4393 = vadd.f32 %v3971, %v4271
        %v4394 = vadd.f32 %v3972, %v4276
        %v4395 = vadd.f32 %v3973, %v4281
        %v4396 = vadd.f32 %v3974, %v4286
        %v4397 = vadd.f32 %v3975, %v4291
        %v4398 = vadd.f32 %v3976, %v4296
        %v4399 = vadd.f32 %v3977, %v4301
        %v4400 = vadd.f32 %v3978, %v4306
        %v4401 = vadd.f32 %v3979, %v4311
        %v4402 = vadd.f32 %v3980, %v4316
        %v4403 = vadd.f32 %v3981, %v4321
        %v4404 = vadd.f32 %v3982, %v4326
        %v4405 = vadd.f32 %v3983, %v4331
        %v4406 = vadd.f32 %v3984, %v4336
        %v4407 = vadd.f32 %v3985, %v4341
        %v4408 = vadd.f32 %v3986, %v4346
        %v4409 = vadd.f32 %v3987, %v4351
        %v4410 = vadd.f32 %v3988, %v4356
        %v4411 = vadd.f32 %v3989, %v4361
        %v4412 = vadd.f32 %v3990, %v4366
        %v4413 = vadd.f32 %v3991, %v4371
        %v4414 = vadd.f32 %v3992, %v4376
        %v4415 = vadd.f32 %v3993, %v4381
        %v4417 = vrot.slane %v372, 1
        %v4418 = vrot.slane %v373, 1
        %v4419 = vsel %vm1225, %v4417, %v4418
        %v4420 = vrot.slane %v374, 1
        %v4421 = vsel %vm1225, %v4418, %v4420
        %s4454 = scalar_lea.vmem %s3, 128
        %v4455 = vld [vmem:[%s4454] sm:$0xff]
        %v4456 = vld [vmem:[%s4454 + $0x8] sm:$0xff]
        %v4457 = vld [vmem:[%s4454 + $0x10] sm:$0xff]
        %v4458 = vld [vmem:[%s4454 + $0x18] sm:$0xff]
        %v4459 = vsel %vm3173, %v4419, 0
        %v4461 = vsel %vm3173, %v4421, 0
        %4463 = vmatprep.subr.mxu0 0.0
        %4464 = vmatpush1.msra.mxu0 %v4455
        %4465 = vmatprep.subr.mxu0 0.0
        %4466 = vmatpush1.msra.mxu0 %v4456
        %4467 = vmatprep.subr.mxu0 0.0
        %4468 = vmatpush1.msra.mxu0 %v4457
        %4469 = vmatprep.subr.mxu0 0.0
        %4470 = vmatpush1.msra.mxu0 %v4458
        %4471 = vmatprep.subr.mxu0 0.0
        %4472 = vmatpush1.msra.mxu0 0.0
        %4473 = vmatprep.subr.mxu0 0.0
        %4474 = vmatpush1.msra.mxu0 0.0
        %4475 = vmatprep.subr.mxu0 0.0
        %4476 = vmatpush1.msra.mxu0 0.0
        %4477 = vmatprep.subr.mxu0 0.0
        %4478 = vmatpush1.msra.mxu0 0.0
        %4479 = vmatprep.subr.mxu0 0.0
        %4480 = vmatpush1.msra.mxu0 0.0
        %4481 = vmatprep.subr.mxu0 0.0
        %4482 = vmatpush1.msra.mxu0 0.0
        %4483 = vmatprep.subr.mxu0 0.0
        %4484 = vmatpush1.msra.mxu0 0.0
        %4485 = vmatprep.subr.mxu0 0.0
        %4486 = vmatpush1.msra.mxu0 0.0
        %4487 = vmatprep.subr.mxu0 0.0
        %4488 = vmatpush1.msra.mxu0 0.0
        %4489 = vmatprep.subr.mxu0 0.0
        %4490 = vmatpush1.msra.mxu0 0.0
        %4491 = vmatprep.subr.mxu0 0.0
        %4492 = vmatpush1.msra.mxu0 0.0
        %4493 = vmatprep.subr.mxu0 0.0
        %4494 = vmatpush1.msra.mxu0 0.0
        %4495 = vmatprep.subr.mxu0 0.0
        %4496 = vmatpush1.msra.mxu0 0.0
        %4497 = vmatprep.subr.mxu0 0.0
        %4498 = vmatpush1.msra.mxu0 0.0
        %4499 = vmatprep.subr.mxu0 0.0
        %4500 = vmatpush1.msra.mxu0 0.0
        %4501 = vmatprep.subr.mxu0 0.0
        %4502 = vmatpush1.msra.mxu0 0.0
        %4503 = vmatprep.subr.mxu0 0.0
        %4504 = vmatpush1.msra.mxu0 0.0
        %4505 = vmatprep.subr.mxu0 0.0
        %4506 = vmatpush1.msra.mxu0 0.0
        %4507 = vmatprep.subr.mxu0 0.0
        %4508 = vmatpush1.msra.mxu0 0.0
        %4509 = vmatprep.subr.mxu0 0.0
        %4510 = vmatpush1.msra.mxu0 0.0
        %4511 = vmatprep.subr.mxu0 0.0
        %4512 = vmatpush1.msra.mxu0 0.0
        %4513 = vmatprep.subr.mxu0 0.0
        %4514 = vmatpush1.msra.mxu0 0.0
        %4515 = vmatprep.subr.mxu0 0.0
        %4516 = vmatpush1.msra.mxu0 0.0
        %4517 = vmatprep.subr.mxu0 0.0
        %4518 = vmatpush1.msra.mxu0 0.0
        %4519 = vmatprep.subr.mxu0 0.0
        %4520 = vmatpush1.msra.mxu0 0.0
        %4521 = vmatprep.subr.mxu0 0.0
        %4522 = vmatpush1.msra.mxu0 0.0
        %4523 = vmatprep.subr.mxu0 0.0
        %4524 = vmatpush1.msra.mxu0 0.0
        %4525 = vmatprep.subr.mxu0 0.0
        %4526 = vmatpush1.msra.mxu0 0.0
        %4527 = vmatprep.mubr.f32.mxu0 0.0
        %4528 = vmatmul.mubr.f32.gmra.mrb[0].mxu0 %v4099
        %v4529 = vpop.f32.mrb[0].mxu0
        %v4530 = vadd.f32 0.0, %v4529
        %v4531 = vpop.f32.mrb[0].mxu0
        %4532 = vmatprep.mubr.f32.mxu0 0.0
        %4533 = vmatmul.mubr.f32.gmra.mrb[0].mxu0 %v4101
        %v4534 = vpop.f32.mrb[0].mxu0
        %v4535 = vadd.f32 0.0, %v4534
        %v4536 = vpop.f32.mrb[0].mxu0
        %4537 = vmatprep.mubr.f32.mxu0 0.0
        %4538 = vmatmul.mubr.f32.gmra.mrb[0].mxu0 %v4103
        %v4539 = vpop.f32.mrb[0].mxu0
        %v4540 = vadd.f32 0.0, %v4539
        %v4541 = vpop.f32.mrb[0].mxu0
        %4542 = vmatprep.mubr.f32.mxu0 0.0
        %4543 = vmatmul.mubr.f32.gmra.mrb[0].mxu0 %v4105
        %v4544 = vpop.f32.mrb[0].mxu0
        %v4545 = vadd.f32 0.0, %v4544
        %v4546 = vpop.f32.mrb[0].mxu0
        %4547 = vmatprep.mubr.f32.mxu0 0.0
        %4548 = vmatmul.mubr.f32.gmra.mrb[0].mxu0 %v4107
        %v4549 = vpop.f32.mrb[0].mxu0
        %v4550 = vadd.f32 0.0, %v4549
        %v4551 = vpop.f32.mrb[0].mxu0
        %4552 = vmatprep.mubr.f32.mxu0 0.0
        %4553 = vmatmul.mubr.f32.gmra.mrb[0].mxu0 %v4109
        %v4554 = vpop.f32.mrb[0].mxu0
        %v4555 = vadd.f32 0.0, %v4554
        %v4556 = vpop.f32.mrb[0].mxu0
        %4557 = vmatprep.mubr.f32.mxu0 0.0
        %4558 = vmatmul.mubr.f32.gmra.mrb[0].mxu0 %v4111
        %v4559 = vpop.f32.mrb[0].mxu0
        %v4560 = vadd.f32 0.0, %v4559
        %v4561 = vpop.f32.mrb[0].mxu0
        %4562 = vmatprep.mubr.f32.mxu0 0.0
        %4563 = vmatmul.mubr.f32.gmra.mrb[0].mxu0 %v4113
        %v4564 = vpop.f32.mrb[0].mxu0
        %v4565 = vadd.f32 0.0, %v4564
        %v4566 = vpop.f32.mrb[0].mxu0
        %4567 = vmatprep.mubr.f32.mxu0 0.0
        %4568 = vmatmul.mubr.f32.gmra.mrb[0].mxu0 %v4115
        %v4569 = vpop.f32.mrb[0].mxu0
        %v4570 = vadd.f32 0.0, %v4569
        %v4571 = vpop.f32.mrb[0].mxu0
        %4572 = vmatprep.mubr.f32.mxu0 0.0
        %4573 = vmatmul.mubr.f32.gmra.mrb[0].mxu0 %v4117
        %v4574 = vpop.f32.mrb[0].mxu0
        %v4575 = vadd.f32 0.0, %v4574
        %v4576 = vpop.f32.mrb[0].mxu0
        %4577 = vmatprep.mubr.f32.mxu0 0.0
        %4578 = vmatmul.mubr.f32.gmra.mrb[0].mxu0 %v4119
        %v4579 = vpop.f32.mrb[0].mxu0
        %v4580 = vadd.f32 0.0, %v4579
        %v4581 = vpop.f32.mrb[0].mxu0
        %4582 = vmatprep.mubr.f32.mxu0 0.0
        %4583 = vmatmul.mubr.f32.gmra.mrb[0].mxu0 %v4121
        %v4584 = vpop.f32.mrb[0].mxu0
        %v4585 = vadd.f32 0.0, %v4584
        %v4586 = vpop.f32.mrb[0].mxu0
        %4587 = vmatprep.mubr.f32.mxu0 0.0
        %4588 = vmatmul.mubr.f32.gmra.mrb[0].mxu0 %v4123
        %v4589 = vpop.f32.mrb[0].mxu0
        %v4590 = vadd.f32 0.0, %v4589
        %v4591 = vpop.f32.mrb[0].mxu0
        %4592 = vmatprep.mubr.f32.mxu0 0.0
        %4593 = vmatmul.mubr.f32.gmra.mrb[0].mxu0 %v4125
        %v4594 = vpop.f32.mrb[0].mxu0
        %v4595 = vadd.f32 0.0, %v4594
        %v4596 = vpop.f32.mrb[0].mxu0
        %4597 = vmatprep.mubr.f32.mxu0 0.0
        %4598 = vmatmul.mubr.f32.gmra.mrb[0].mxu0 %v4127
        %v4599 = vpop.f32.mrb[0].mxu0
        %v4600 = vadd.f32 0.0, %v4599
        %v4601 = vpop.f32.mrb[0].mxu0
        %4602 = vmatprep.mubr.f32.mxu0 0.0
        %4603 = vmatmul.mubr.f32.gmra.mrb[0].mxu0 %v4129
        %v4604 = vpop.f32.mrb[0].mxu0
        %v4605 = vadd.f32 0.0, %v4604
        %v4606 = vpop.f32.mrb[0].mxu0
        %4607 = vmatprep.mubr.f32.mxu0 0.0
        %4608 = vmatmul.mubr.f32.gmra.mrb[0].mxu0 %v4131
        %v4609 = vpop.f32.mrb[0].mxu0
        %v4610 = vadd.f32 0.0, %v4609
        %v4611 = vpop.f32.mrb[0].mxu0
        %4612 = vmatprep.mubr.f32.mxu0 0.0
        %4613 = vmatmul.mubr.f32.gmra.mrb[0].mxu0 %v4133
        %v4614 = vpop.f32.mrb[0].mxu0
        %v4615 = vadd.f32 0.0, %v4614
        %v4616 = vpop.f32.mrb[0].mxu0
        %4617 = vmatprep.mubr.f32.mxu0 0.0
        %4618 = vmatmul.mubr.f32.gmra.mrb[0].mxu0 %v4135
        %v4619 = vpop.f32.mrb[0].mxu0
        %v4620 = vadd.f32 0.0, %v4619
        %v4621 = vpop.f32.mrb[0].mxu0
        %4622 = vmatprep.mubr.f32.mxu0 0.0
        %4623 = vmatmul.mubr.f32.gmra.mrb[0].mxu0 %v4137
        %v4624 = vpop.f32.mrb[0].mxu0
        %v4625 = vadd.f32 0.0, %v4624
        %v4626 = vpop.f32.mrb[0].mxu0
        %4627 = vmatprep.mubr.f32.mxu0 0.0
        %4628 = vmatmul.mubr.f32.gmra.mrb[0].mxu0 %v4139
        %v4629 = vpop.f32.mrb[0].mxu0
        %v4630 = vadd.f32 0.0, %v4629
        %v4631 = vpop.f32.mrb[0].mxu0
        %4632 = vmatprep.mubr.f32.mxu0 0.0
        %4633 = vmatmul.mubr.f32.gmra.mrb[0].mxu0 %v4141
        %v4634 = vpop.f32.mrb[0].mxu0
        %v4635 = vadd.f32 0.0, %v4634
        %v4636 = vpop.f32.mrb[0].mxu0
        %4637 = vmatprep.mubr.f32.mxu0 0.0
        %4638 = vmatmul.mubr.f32.gmra.mrb[0].mxu0 %v4143
        %v4639 = vpop.f32.mrb[0].mxu0
        %v4640 = vadd.f32 0.0, %v4639
        %v4641 = vpop.f32.mrb[0].mxu0
        %4642 = vmatprep.mubr.f32.mxu0 0.0
        %4643 = vmatmul.mubr.f32.gmra.mrb[0].mxu0 %v4145
        %v4644 = vpop.f32.mrb[0].mxu0
        %v4645 = vadd.f32 0.0, %v4644
        %v4646 = vpop.f32.mrb[0].mxu0
        %4647 = vmatprep.mubr.f32.mxu0 0.0
        %4648 = vmatmul.mubr.f32.gmra.mrb[0].mxu0 %v4147
        %v4649 = vpop.f32.mrb[0].mxu0
        %v4650 = vadd.f32 0.0, %v4649
        %v4651 = vpop.f32.mrb[0].mxu0
        %4652 = vmatprep.mubr.f32.mxu0 0.0
        %4653 = vmatmul.mubr.f32.gmra.mrb[0].mxu0 %v4149
        %v4654 = vpop.f32.mrb[0].mxu0
        %v4655 = vadd.f32 0.0, %v4654
        %v4656 = vpop.f32.mrb[0].mxu0
        %4657 = vmatprep.mubr.f32.mxu0 0.0
        %4658 = vmatmul.mubr.f32.gmra.mrb[0].mxu0 %v4151
        %v4659 = vpop.f32.mrb[0].mxu0
        %v4660 = vadd.f32 0.0, %v4659
        %v4661 = vpop.f32.mrb[0].mxu0
        %4662 = vmatprep.mubr.f32.mxu0 0.0
        %4663 = vmatmul.mubr.f32.gmra.mrb[0].mxu0 %v4153
        %v4664 = vpop.f32.mrb[0].mxu0
        %v4665 = vadd.f32 0.0, %v4664
        %v4666 = vpop.f32.mrb[0].mxu0
        %4667 = vmatprep.mubr.f32.mxu0 0.0
        %4668 = vmatmul.mubr.f32.gmra.mrb[0].mxu0 %v4155
        %v4669 = vpop.f32.mrb[0].mxu0
        %v4670 = vadd.f32 0.0, %v4669
        %v4671 = vpop.f32.mrb[0].mxu0
        %4672 = vmatprep.mubr.f32.mxu0 0.0
        %4673 = vmatmul.mubr.f32.gmra.mrb[0].mxu0 %v4157
        %v4674 = vpop.f32.mrb[0].mxu0
        %v4675 = vadd.f32 0.0, %v4674
        %v4676 = vpop.f32.mrb[0].mxu0
        %4677 = vmatprep.mubr.f32.mxu0 0.0
        %4678 = vmatmul.mubr.f32.gmra.mrb[0].mxu0 %v4459
        %v4679 = vpop.f32.mrb[0].mxu0
        %v4680 = vadd.f32 0.0, %v4679
        %v4681 = vpop.f32.mrb[0].mxu0
        %4682 = vmatprep.mubr.f32.mxu0 0.0
        %4683 = vmatmul.mubr.f32.gmra.mrb[0].mxu0 %v4461
        %v4684 = vpop.f32.mrb[0].mxu0
        %v4685 = vadd.f32 0.0, %v4684
        %v4686 = vpop.f32.mrb[0].mxu0
        %4687 = vdwg.mxu0
        %v4688 = vadd.f32 %v4384, %v4530
        %v4689 = vadd.f32 %v4385, %v4535
        %v4690 = vadd.f32 %v4386, %v4540
        %v4691 = vadd.f32 %v4387, %v4545
        %v4692 = vadd.f32 %v4388, %v4550
        %v4693 = vadd.f32 %v4389, %v4555
        %v4694 = vadd.f32 %v4390, %v4560
        %v4695 = vadd.f32 %v4391, %v4565
        %v4696 = vadd.f32 %v4392, %v4570
        %v4697 = vadd.f32 %v4393, %v4575
        %v4698 = vadd.f32 %v4394, %v4580
        %v4699 = vadd.f32 %v4395, %v4585
        %v4700 = vadd.f32 %v4396, %v4590
        %v4701 = vadd.f32 %v4397, %v4595
        %v4702 = vadd.f32 %v4398, %v4600
        %v4703 = vadd.f32 %v4399, %v4605
        %v4704 = vadd.f32 %v4400, %v4610
        %v4705 = vadd.f32 %v4401, %v4615
        %v4706 = vadd.f32 %v4402, %v4620
        %v4707 = vadd.f32 %v4403, %v4625
        %v4708 = vadd.f32 %v4404, %v4630
        %v4709 = vadd.f32 %v4405, %v4635
        %v4710 = vadd.f32 %v4406, %v4640
        %v4711 = vadd.f32 %v4407, %v4645
        %v4712 = vadd.f32 %v4408, %v4650
        %v4713 = vadd.f32 %v4409, %v4655
        %v4714 = vadd.f32 %v4410, %v4660
        %v4715 = vadd.f32 %v4411, %v4665
        %v4716 = vadd.f32 %v4412, %v4670
        %v4717 = vadd.f32 %v4413, %v4675
        %v4718 = vadd.f32 %v4414, %v4680
        %v4719 = vadd.f32 %v4415, %v4685
        %v4721 = vrot.slane %v375, 1
        %v4722 = vrot.slane %v376, 1
        %v4723 = vsel %vm1225, %v4721, %v4722
        %v4724 = vrot.slane %v377, 1
        %v4725 = vsel %vm1225, %v4722, %v4724
        %s4726 = scalar_lea.vmem %s3, 224
        %v4727 = vld [vmem:[%s4726] sm:$0xff]
        %v4728 = vld [vmem:[%s4726 + $0x8] sm:$0xff]
        %v4729 = vld [vmem:[%s4726 + $0x10] sm:$0xff]
        %v4730 = vld [vmem:[%s4726 + $0x18] sm:$0xff]
        %v4731 = vsel %vm3173, %v4723, 0
        %v4733 = vsel %vm3173, %v4725, 0
        %4735 = vmatprep.subr.mxu0 0.0
        %4736 = vmatpush1.msra.mxu0 %v4727
        %4737 = vmatprep.subr.mxu0 0.0
        %4738 = vmatpush1.msra.mxu0 %v4728
        %4739 = vmatprep.subr.mxu0 0.0
        %4740 = vmatpush1.msra.mxu0 %v4729
        %4741 = vmatprep.subr.mxu0 0.0
        %4742 = vmatpush1.msra.mxu0 %v4730
        %4743 = vmatprep.subr.mxu0 0.0
        %4744 = vmatpush1.msra.mxu0 0.0
        %4745 = vmatprep.subr.mxu0 0.0
        %4746 = vmatpush1.msra.mxu0 0.0
        %4747 = vmatprep.subr.mxu0 0.0
        %4748 = vmatpush1.msra.mxu0 0.0
        %4749 = vmatprep.subr.mxu0 0.0
        %4750 = vmatpush1.msra.mxu0 0.0
        %4751 = vmatprep.subr.mxu0 0.0
        %4752 = vmatpush1.msra.mxu0 0.0
        %4753 = vmatprep.subr.mxu0 0.0
        %4754 = vmatpush1.msra.mxu0 0.0
        %4755 = vmatprep.subr.mxu0 0.0
        %4756 = vmatpush1.msra.mxu0 0.0
        %4757 = vmatprep.subr.mxu0 0.0
        %4758 = vmatpush1.msra.mxu0 0.0
        %4759 = vmatprep.subr.mxu0 0.0
        %4760 = vmatpush1.msra.mxu0 0.0
        %4761 = vmatprep.subr.mxu0 0.0
        %4762 = vmatpush1.msra.mxu0 0.0
        %4763 = vmatprep.subr.mxu0 0.0
        %4764 = vmatpush1.msra.mxu0 0.0
        %4765 = vmatprep.subr.mxu0 0.0
        %4766 = vmatpush1.msra.mxu0 0.0
        %4767 = vmatprep.subr.mxu0 0.0
        %4768 = vmatpush1.msra.mxu0 0.0
        %4769 = vmatprep.subr.mxu0 0.0
        %4770 = vmatpush1.msra.mxu0 0.0
        %4771 = vmatprep.subr.mxu0 0.0
        %4772 = vmatpush1.msra.mxu0 0.0
        %4773 = vmatprep.subr.mxu0 0.0
        %4774 = vmatpush1.msra.mxu0 0.0
        %4775 = vmatprep.subr.mxu0 0.0
        %4776 = vmatpush1.msra.mxu0 0.0
        %4777 = vmatprep.subr.mxu0 0.0
        %4778 = vmatpush1.msra.mxu0 0.0
        %4779 = vmatprep.subr.mxu0 0.0
        %4780 = vmatpush1.msra.mxu0 0.0
        %4781 = vmatprep.subr.mxu0 0.0
        %4782 = vmatpush1.msra.mxu0 0.0
        %4783 = vmatprep.subr.mxu0 0.0
        %4784 = vmatpush1.msra.mxu0 0.0
        %4785 = vmatprep.subr.mxu0 0.0
        %4786 = vmatpush1.msra.mxu0 0.0
        %4787 = vmatprep.subr.mxu0 0.0
        %4788 = vmatpush1.msra.mxu0 0.0
        %4789 = vmatprep.subr.mxu0 0.0
        %4790 = vmatpush1.msra.mxu0 0.0
        %4791 = vmatprep.subr.mxu0 0.0
        %4792 = vmatpush1.msra.mxu0 0.0
        %4793 = vmatprep.subr.mxu0 0.0
        %4794 = vmatpush1.msra.mxu0 0.0
        %4795 = vmatprep.subr.mxu0 0.0
        %4796 = vmatpush1.msra.mxu0 0.0
        %4797 = vmatprep.subr.mxu0 0.0
        %4798 = vmatpush1.msra.mxu0 0.0
        %4799 = vmatprep.mubr.f32.mxu0 0.0
        %4800 = vmatmul.mubr.f32.gmra.mrb[0].mxu0 %v4103
        %v4801 = vpop.f32.mrb[0].mxu0
        %v4802 = vadd.f32 0.0, %v4801
        %v4803 = vpop.f32.mrb[0].mxu0
        %4804 = vmatprep.mubr.f32.mxu0 0.0
        %4805 = vmatmul.mubr.f32.gmra.mrb[0].mxu0 %v4105
        %v4806 = vpop.f32.mrb[0].mxu0
        %v4807 = vadd.f32 0.0, %v4806
        %v4808 = vpop.f32.mrb[0].mxu0
        %4809 = vmatprep.mubr.f32.mxu0 0.0
        %4810 = vmatmul.mubr.f32.gmra.mrb[0].mxu0 %v4107
        %v4811 = vpop.f32.mrb[0].mxu0
        %v4812 = vadd.f32 0.0, %v4811
        %v4813 = vpop.f32.mrb[0].mxu0
        %4814 = vmatprep.mubr.f32.mxu0 0.0
        %4815 = vmatmul.mubr.f32.gmra.mrb[0].mxu0 %v4109
        %v4816 = vpop.f32.mrb[0].mxu0
        %v4817 = vadd.f32 0.0, %v4816
        %v4818 = vpop.f32.mrb[0].mxu0
        %4819 = vmatprep.mubr.f32.mxu0 0.0
        %4820 = vmatmul.mubr.f32.gmra.mrb[0].mxu0 %v4111
        %v4821 = vpop.f32.mrb[0].mxu0
        %v4822 = vadd.f32 0.0, %v4821
        %v4823 = vpop.f32.mrb[0].mxu0
        %4824 = vmatprep.mubr.f32.mxu0 0.0
        %4825 = vmatmul.mubr.f32.gmra.mrb[0].mxu0 %v4113
        %v4826 = vpop.f32.mrb[0].mxu0
        %v4827 = vadd.f32 0.0, %v4826
        %v4828 = vpop.f32.mrb[0].mxu0
        %4829 = vmatprep.mubr.f32.mxu0 0.0
        %4830 = vmatmul.mubr.f32.gmra.mrb[0].mxu0 %v4115
        %v4831 = vpop.f32.mrb[0].mxu0
        %v4832 = vadd.f32 0.0, %v4831
        %v4833 = vpop.f32.mrb[0].mxu0
        %4834 = vmatprep.mubr.f32.mxu0 0.0
        %4835 = vmatmul.mubr.f32.gmra.mrb[0].mxu0 %v4117
        %v4836 = vpop.f32.mrb[0].mxu0
        %v4837 = vadd.f32 0.0, %v4836
        %v4838 = vpop.f32.mrb[0].mxu0
        %4839 = vmatprep.mubr.f32.mxu0 0.0
        %4840 = vmatmul.mubr.f32.gmra.mrb[0].mxu0 %v4119
        %v4841 = vpop.f32.mrb[0].mxu0
        %v4842 = vadd.f32 0.0, %v4841
        %v4843 = vpop.f32.mrb[0].mxu0
        %4844 = vmatprep.mubr.f32.mxu0 0.0
        %4845 = vmatmul.mubr.f32.gmra.mrb[0].mxu0 %v4121
        %v4846 = vpop.f32.mrb[0].mxu0
        %v4847 = vadd.f32 0.0, %v4846
        %v4848 = vpop.f32.mrb[0].mxu0
        %4849 = vmatprep.mubr.f32.mxu0 0.0
        %4850 = vmatmul.mubr.f32.gmra.mrb[0].mxu0 %v4123
        %v4851 = vpop.f32.mrb[0].mxu0
        %v4852 = vadd.f32 0.0, %v4851
        %v4853 = vpop.f32.mrb[0].mxu0
        %4854 = vmatprep.mubr.f32.mxu0 0.0
        %4855 = vmatmul.mubr.f32.gmra.mrb[0].mxu0 %v4125
        %v4856 = vpop.f32.mrb[0].mxu0
        %v4857 = vadd.f32 0.0, %v4856
        %v4858 = vpop.f32.mrb[0].mxu0
        %4859 = vmatprep.mubr.f32.mxu0 0.0
        %4860 = vmatmul.mubr.f32.gmra.mrb[0].mxu0 %v4127
        %v4861 = vpop.f32.mrb[0].mxu0
        %v4862 = vadd.f32 0.0, %v4861
        %v4863 = vpop.f32.mrb[0].mxu0
        %4864 = vmatprep.mubr.f32.mxu0 0.0
        %4865 = vmatmul.mubr.f32.gmra.mrb[0].mxu0 %v4129
        %v4866 = vpop.f32.mrb[0].mxu0
        %v4867 = vadd.f32 0.0, %v4866
        %v4868 = vpop.f32.mrb[0].mxu0
        %4869 = vmatprep.mubr.f32.mxu0 0.0
        %4870 = vmatmul.mubr.f32.gmra.mrb[0].mxu0 %v4131
        %v4871 = vpop.f32.mrb[0].mxu0
        %v4872 = vadd.f32 0.0, %v4871
        %v4873 = vpop.f32.mrb[0].mxu0
        %4874 = vmatprep.mubr.f32.mxu0 0.0
        %4875 = vmatmul.mubr.f32.gmra.mrb[0].mxu0 %v4133
        %v4876 = vpop.f32.mrb[0].mxu0
        %v4877 = vadd.f32 0.0, %v4876
        %v4878 = vpop.f32.mrb[0].mxu0
        %4879 = vmatprep.mubr.f32.mxu0 0.0
        %4880 = vmatmul.mubr.f32.gmra.mrb[0].mxu0 %v4135
        %v4881 = vpop.f32.mrb[0].mxu0
        %v4882 = vadd.f32 0.0, %v4881
        %v4883 = vpop.f32.mrb[0].mxu0
        %4884 = vmatprep.mubr.f32.mxu0 0.0
        %4885 = vmatmul.mubr.f32.gmra.mrb[0].mxu0 %v4137
        %v4886 = vpop.f32.mrb[0].mxu0
        %v4887 = vadd.f32 0.0, %v4886
        %v4888 = vpop.f32.mrb[0].mxu0
        %4889 = vmatprep.mubr.f32.mxu0 0.0
        %4890 = vmatmul.mubr.f32.gmra.mrb[0].mxu0 %v4139
        %v4891 = vpop.f32.mrb[0].mxu0
        %v4892 = vadd.f32 0.0, %v4891
        %v4893 = vpop.f32.mrb[0].mxu0
        %4894 = vmatprep.mubr.f32.mxu0 0.0
        %4895 = vmatmul.mubr.f32.gmra.mrb[0].mxu0 %v4141
        %v4896 = vpop.f32.mrb[0].mxu0
        %v4897 = vadd.f32 0.0, %v4896
        %v4898 = vpop.f32.mrb[0].mxu0
        %4899 = vmatprep.mubr.f32.mxu0 0.0
        %4900 = vmatmul.mubr.f32.gmra.mrb[0].mxu0 %v4143
        %v4901 = vpop.f32.mrb[0].mxu0
        %v4902 = vadd.f32 0.0, %v4901
        %v4903 = vpop.f32.mrb[0].mxu0
        %4904 = vmatprep.mubr.f32.mxu0 0.0
        %4905 = vmatmul.mubr.f32.gmra.mrb[0].mxu0 %v4145
        %v4906 = vpop.f32.mrb[0].mxu0
        %v4907 = vadd.f32 0.0, %v4906
        %v4908 = vpop.f32.mrb[0].mxu0
        %4909 = vmatprep.mubr.f32.mxu0 0.0
        %4910 = vmatmul.mubr.f32.gmra.mrb[0].mxu0 %v4147
        %v4911 = vpop.f32.mrb[0].mxu0
        %v4912 = vadd.f32 0.0, %v4911
        %v4913 = vpop.f32.mrb[0].mxu0
        %4914 = vmatprep.mubr.f32.mxu0 0.0
        %4915 = vmatmul.mubr.f32.gmra.mrb[0].mxu0 %v4149
        %v4916 = vpop.f32.mrb[0].mxu0
        %v4917 = vadd.f32 0.0, %v4916
        %v4918 = vpop.f32.mrb[0].mxu0
        %4919 = vmatprep.mubr.f32.mxu0 0.0
        %4920 = vmatmul.mubr.f32.gmra.mrb[0].mxu0 %v4151
        %v4921 = vpop.f32.mrb[0].mxu0
        %v4922 = vadd.f32 0.0, %v4921
        %v4923 = vpop.f32.mrb[0].mxu0
        %4924 = vmatprep.mubr.f32.mxu0 0.0
        %4925 = vmatmul.mubr.f32.gmra.mrb[0].mxu0 %v4153
        %v4926 = vpop.f32.mrb[0].mxu0
        %v4927 = vadd.f32 0.0, %v4926
        %v4928 = vpop.f32.mrb[0].mxu0
        %4929 = vmatprep.mubr.f32.mxu0 0.0
        %4930 = vmatmul.mubr.f32.gmra.mrb[0].mxu0 %v4155
        %v4931 = vpop.f32.mrb[0].mxu0
        %v4932 = vadd.f32 0.0, %v4931
        %v4933 = vpop.f32.mrb[0].mxu0
        %4934 = vmatprep.mubr.f32.mxu0 0.0
        %4935 = vmatmul.mubr.f32.gmra.mrb[0].mxu0 %v4157
        %v4936 = vpop.f32.mrb[0].mxu0
        %v4937 = vadd.f32 0.0, %v4936
        %v4938 = vpop.f32.mrb[0].mxu0
        %4939 = vmatprep.mubr.f32.mxu0 0.0
        %4940 = vmatmul.mubr.f32.gmra.mrb[0].mxu0 %v4459
        %v4941 = vpop.f32.mrb[0].mxu0
        %v4942 = vadd.f32 0.0, %v4941
        %v4943 = vpop.f32.mrb[0].mxu0
        %4944 = vmatprep.mubr.f32.mxu0 0.0
        %4945 = vmatmul.mubr.f32.gmra.mrb[0].mxu0 %v4461
        %v4946 = vpop.f32.mrb[0].mxu0
        %v4947 = vadd.f32 0.0, %v4946
        %v4948 = vpop.f32.mrb[0].mxu0
        %4949 = vmatprep.mubr.f32.mxu0 0.0
        %4950 = vmatmul.mubr.f32.gmra.mrb[0].mxu0 %v4731
        %v4951 = vpop.f32.mrb[0].mxu0
        %v4952 = vadd.f32 0.0, %v4951
        %v4953 = vpop.f32.mrb[0].mxu0
        %4954 = vmatprep.mubr.f32.mxu0 0.0
        %4955 = vmatmul.mubr.f32.gmra.mrb[0].mxu0 %v4733
        %v4956 = vpop.f32.mrb[0].mxu0
        %v4957 = vadd.f32 0.0, %v4956
        %v4958 = vpop.f32.mrb[0].mxu0
        %4959 = vdwg.mxu0
        %v4960 = vadd.f32 %v4688, %v4802
        %v4961 = vadd.f32 %v4689, %v4807
        %v4962 = vadd.f32 %v4690, %v4812
        %v4963 = vadd.f32 %v4691, %v4817
        %v4964 = vadd.f32 %v4692, %v4822
        %v4965 = vadd.f32 %v4693, %v4827
        %v4966 = vadd.f32 %v4694, %v4832
        %v4967 = vadd.f32 %v4695, %v4837
        %v4968 = vadd.f32 %v4696, %v4842
        %v4969 = vadd.f32 %v4697, %v4847
        %v4970 = vadd.f32 %v4698, %v4852
        %v4971 = vadd.f32 %v4699, %v4857
        %v4972 = vadd.f32 %v4700, %v4862
        %v4973 = vadd.f32 %v4701, %v4867
        %v4974 = vadd.f32 %v4702, %v4872
        %v4975 = vadd.f32 %v4703, %v4877
        %v4976 = vadd.f32 %v4704, %v4882
        %v4977 = vadd.f32 %v4705, %v4887
        %v4978 = vadd.f32 %v4706, %v4892
        %v4979 = vadd.f32 %v4707, %v4897
        %v4980 = vadd.f32 %v4708, %v4902
        %v4981 = vadd.f32 %v4709, %v4907
        %v4982 = vadd.f32 %v4710, %v4912
        %v4983 = vadd.f32 %v4711, %v4917
        %v4984 = vadd.f32 %v4712, %v4922
        %v4985 = vadd.f32 %v4713, %v4927
        %v4986 = vadd.f32 %v4714, %v4932
        %v4987 = vadd.f32 %v4715, %v4937
        %v4988 = vadd.f32 %v4716, %v4942
        %v4989 = vadd.f32 %v4717, %v4947
        %v4990 = vadd.f32 %v4718, %v4952
        %v4991 = vadd.f32 %v4719, %v4957
        %v4992 = vrot.slane %v324, 2
        %v4993 = vrot.slane %v325, 2
        %v4994 = vsel %vm2176, %v4992, %v4993
        %v4995 = vrot.slane %v326, 2
        %v4996 = vsel %vm2176, %v4993, %v4995
        %v4997 = vrot.slane %v327, 2
        %v4998 = vrot.slane %v328, 2
        %v4999 = vsel %vm2176, %v4997, %v4998
        %v5000 = vrot.slane %v329, 2
        %v5001 = vsel %vm2176, %v4998, %v5000
        %v5002 = vrot.slane %v330, 2
        %v5003 = vrot.slane %v331, 2
        %v5004 = vsel %vm2176, %v5002, %v5003
        %v5005 = vrot.slane %v332, 2
        %v5006 = vsel %vm2176, %v5003, %v5005
        %v5007 = vrot.slane %v333, 2
        %v5008 = vrot.slane %v334, 2
        %v5009 = vsel %vm2176, %v5007, %v5008
        %v5010 = vrot.slane %v335, 2
        %v5011 = vsel %vm2176, %v5008, %v5010
        %v5012 = vrot.slane %v336, 2
        %v5013 = vrot.slane %v337, 2
        %v5014 = vsel %vm2176, %v5012, %v5013
        %v5015 = vrot.slane %v338, 2
        %v5016 = vsel %vm2176, %v5013, %v5015
        %v5017 = vrot.slane %v339, 2
        %v5018 = vrot.slane %v340, 2
        %v5019 = vsel %vm2176, %v5017, %v5018
        %v5020 = vrot.slane %v341, 2
        %v5021 = vsel %vm2176, %v5018, %v5020
        %v5022 = vrot.slane %v342, 2
        %v5023 = vrot.slane %v343, 2
        %v5024 = vsel %vm2176, %v5022, %v5023
        %v5025 = vrot.slane %v344, 2
        %v5026 = vsel %vm2176, %v5023, %v5025
        %v5027 = vrot.slane %v345, 2
        %v5028 = vrot.slane %v346, 2
        %v5029 = vsel %vm2176, %v5027, %v5028
        %v5030 = vrot.slane %v347, 2
        %v5031 = vsel %vm2176, %v5028, %v5030
        %v5032 = vrot.slane %v348, 2
        %v5033 = vrot.slane %v349, 2
        %v5034 = vsel %vm2176, %v5032, %v5033
        %v5035 = vrot.slane %v350, 2
        %v5036 = vsel %vm2176, %v5033, %v5035
        %v5037 = vrot.slane %v351, 2
        %v5038 = vrot.slane %v352, 2
        %v5039 = vsel %vm2176, %v5037, %v5038
        %v5040 = vrot.slane %v353, 2
        %v5041 = vsel %vm2176, %v5038, %v5040
        %v5042 = vrot.slane %v354, 2
        %v5043 = vrot.slane %v355, 2
        %v5044 = vsel %vm2176, %v5042, %v5043
        %v5045 = vrot.slane %v356, 2
        %v5046 = vsel %vm2176, %v5043, %v5045
        %v5047 = vrot.slane %v357, 2
        %v5048 = vrot.slane %v358, 2
        %v5049 = vsel %vm2176, %v5047, %v5048
        %v5050 = vrot.slane %v359, 2
        %v5051 = vsel %vm2176, %v5048, %v5050
        %v5052 = vrot.slane %v360, 2
        %v5053 = vrot.slane %v361, 2
        %v5054 = vsel %vm2176, %v5052, %v5053
        %v5055 = vrot.slane %v362, 2
        %v5056 = vsel %vm2176, %v5053, %v5055
        %v5057 = vrot.slane %v363, 2
        %v5058 = vrot.slane %v364, 2
        %v5059 = vsel %vm2176, %v5057, %v5058
        %v5060 = vrot.slane %v365, 2
        %v5061 = vsel %vm2176, %v5058, %v5060
        %v5062 = vrot.slane %v366, 2
        %v5063 = vrot.slane %v367, 2
        %v5064 = vsel %vm2176, %v5062, %v5063
        %v5065 = vrot.slane %v368, 2
        %v5066 = vsel %vm2176, %v5063, %v5065
        %v5067 = vrot.slane %v369, 2
        %v5068 = vrot.slane %v370, 2
        %v5069 = vsel %vm2176, %v5067, %v5068
        %v5070 = vrot.slane %v371, 2
        %v5071 = vsel %vm2176, %v5068, %v5070
        %s5072 = scalar_lea.vmem %s3, 64
        %v5073 = vld [vmem:[%s5072] sm:$0xff]
        %v5074 = vld [vmem:[%s5072 + $0x8] sm:$0xff]
        %v5075 = vld [vmem:[%s5072 + $0x10] sm:$0xff]
        %v5076 = vld [vmem:[%s5072 + $0x18] sm:$0xff]
        %v5077 = vsel %vm3173, %v4994, 0
        %v5079 = vsel %vm3173, %v4996, 0
        %v5081 = vsel %vm3173, %v4999, 0
        %v5083 = vsel %vm3173, %v5001, 0
        %v5085 = vsel %vm3173, %v5004, 0
        %v5087 = vsel %vm3173, %v5006, 0
        %v5089 = vsel %vm3173, %v5009, 0
        %v5091 = vsel %vm3173, %v5011, 0
        %v5093 = vsel %vm3173, %v5014, 0
        %v5095 = vsel %vm3173, %v5016, 0
        %v5097 = vsel %vm3173, %v5019, 0
        %v5099 = vsel %vm3173, %v5021, 0
        %v5101 = vsel %vm3173, %v5024, 0
        %v5103 = vsel %vm3173, %v5026, 0
        %v5105 = vsel %vm3173, %v5029, 0
        %v5107 = vsel %vm3173, %v5031, 0
        %v5109 = vsel %vm3173, %v5034, 0
        %v5111 = vsel %vm3173, %v5036, 0
        %v5113 = vsel %vm3173, %v5039, 0
        %v5115 = vsel %vm3173, %v5041, 0
        %v5117 = vsel %vm3173, %v5044, 0
        %v5119 = vsel %vm3173, %v5046, 0
        %v5121 = vsel %vm3173, %v5049, 0
        %v5123 = vsel %vm3173, %v5051, 0
        %v5125 = vsel %vm3173, %v5054, 0
        %v5127 = vsel %vm3173, %v5056, 0
        %v5129 = vsel %vm3173, %v5059, 0
        %v5131 = vsel %vm3173, %v5061, 0
        %v5133 = vsel %vm3173, %v5064, 0
        %v5135 = vsel %vm3173, %v5066, 0
        %v5137 = vsel %vm3173, %v5069, 0
        %v5139 = vsel %vm3173, %v5071, 0
        %5141 = vmatprep.subr.mxu0 0.0
        %5142 = vmatpush1.msra.mxu0 %v5073
        %5143 = vmatprep.subr.mxu0 0.0
        %5144 = vmatpush1.msra.mxu0 %v5074
        %5145 = vmatprep.subr.mxu0 0.0
        %5146 = vmatpush1.msra.mxu0 %v5075
        %5147 = vmatprep.subr.mxu0 0.0
        %5148 = vmatpush1.msra.mxu0 %v5076
        %5149 = vmatprep.subr.mxu0 0.0
        %5150 = vmatpush1.msra.mxu0 0.0
        %5151 = vmatprep.subr.mxu0 0.0
        %5152 = vmatpush1.msra.mxu0 0.0
        %5153 = vmatprep.subr.mxu0 0.0
        %5154 = vmatpush1.msra.mxu0 0.0
        %5155 = vmatprep.subr.mxu0 0.0
        %5156 = vmatpush1.msra.mxu0 0.0
        %5157 = vmatprep.subr.mxu0 0.0
        %5158 = vmatpush1.msra.mxu0 0.0
        %5159 = vmatprep.subr.mxu0 0.0
        %5160 = vmatpush1.msra.mxu0 0.0
        %5161 = vmatprep.subr.mxu0 0.0
        %5162 = vmatpush1.msra.mxu0 0.0
        %5163 = vmatprep.subr.mxu0 0.0
        %5164 = vmatpush1.msra.mxu0 0.0
        %5165 = vmatprep.subr.mxu0 0.0
        %5166 = vmatpush1.msra.mxu0 0.0
        %5167 = vmatprep.subr.mxu0 0.0
        %5168 = vmatpush1.msra.mxu0 0.0
        %5169 = vmatprep.subr.mxu0 0.0
        %5170 = vmatpush1.msra.mxu0 0.0
        %5171 = vmatprep.subr.mxu0 0.0
        %5172 = vmatpush1.msra.mxu0 0.0
        %5173 = vmatprep.subr.mxu0 0.0
        %5174 = vmatpush1.msra.mxu0 0.0
        %5175 = vmatprep.subr.mxu0 0.0
        %5176 = vmatpush1.msra.mxu0 0.0
        %5177 = vmatprep.subr.mxu0 0.0
        %5178 = vmatpush1.msra.mxu0 0.0
        %5179 = vmatprep.subr.mxu0 0.0
        %5180 = vmatpush1.msra.mxu0 0.0
        %5181 = vmatprep.subr.mxu0 0.0
        %5182 = vmatpush1.msra.mxu0 0.0
        %5183 = vmatprep.subr.mxu0 0.0
        %5184 = vmatpush1.msra.mxu0 0.0
        %5185 = vmatprep.subr.mxu0 0.0
        %5186 = vmatpush1.msra.mxu0 0.0
        %5187 = vmatprep.subr.mxu0 0.0
        %5188 = vmatpush1.msra.mxu0 0.0
        %5189 = vmatprep.subr.mxu0 0.0
        %5190 = vmatpush1.msra.mxu0 0.0
        %5191 = vmatprep.subr.mxu0 0.0
        %5192 = vmatpush1.msra.mxu0 0.0
        %5193 = vmatprep.subr.mxu0 0.0
        %5194 = vmatpush1.msra.mxu0 0.0
        %5195 = vmatprep.subr.mxu0 0.0
        %5196 = vmatpush1.msra.mxu0 0.0
        %5197 = vmatprep.subr.mxu0 0.0
        %5198 = vmatpush1.msra.mxu0 0.0
        %5199 = vmatprep.subr.mxu0 0.0
        %5200 = vmatpush1.msra.mxu0 0.0
        %5201 = vmatprep.subr.mxu0 0.0
        %5202 = vmatpush1.msra.mxu0 0.0
        %5203 = vmatprep.subr.mxu0 0.0
        %5204 = vmatpush1.msra.mxu0 0.0
        %5205 = vmatprep.mubr.f32.mxu0 0.0
        %5206 = vmatmul.mubr.f32.gmra.mrb[0].mxu0 %v5077
        %v5207 = vpop.f32.mrb[0].mxu0
        %v5208 = vadd.f32 0.0, %v5207
        %v5209 = vpop.f32.mrb[0].mxu0
        %5210 = vmatprep.mubr.f32.mxu0 0.0
        %5211 = vmatmul.mubr.f32.gmra.mrb[0].mxu0 %v5079
        %v5212 = vpop.f32.mrb[0].mxu0
        %v5213 = vadd.f32 0.0, %v5212
        %v5214 = vpop.f32.mrb[0].mxu0
        %5215 = vmatprep.mubr.f32.mxu0 0.0
        %5216 = vmatmul.mubr.f32.gmra.mrb[0].mxu0 %v5081
        %v5217 = vpop.f32.mrb[0].mxu0
        %v5218 = vadd.f32 0.0, %v5217
        %v5219 = vpop.f32.mrb[0].mxu0
        %5220 = vmatprep.mubr.f32.mxu0 0.0
        %5221 = vmatmul.mubr.f32.gmra.mrb[0].mxu0 %v5083
        %v5222 = vpop.f32.mrb[0].mxu0
        %v5223 = vadd.f32 0.0, %v5222
        %v5224 = vpop.f32.mrb[0].mxu0
        %5225 = vmatprep.mubr.f32.mxu0 0.0
        %5226 = vmatmul.mubr.f32.gmra.mrb[0].mxu0 %v5085
        %v5227 = vpop.f32.mrb[0].mxu0
        %v5228 = vadd.f32 0.0, %v5227
        %v5229 = vpop.f32.mrb[0].mxu0
        %5230 = vmatprep.mubr.f32.mxu0 0.0
        %5231 = vmatmul.mubr.f32.gmra.mrb[0].mxu0 %v5087
        %v5232 = vpop.f32.mrb[0].mxu0
        %v5233 = vadd.f32 0.0, %v5232
        %v5234 = vpop.f32.mrb[0].mxu0
        %5235 = vmatprep.mubr.f32.mxu0 0.0
        %5236 = vmatmul.mubr.f32.gmra.mrb[0].mxu0 %v5089
        %v5237 = vpop.f32.mrb[0].mxu0
        %v5238 = vadd.f32 0.0, %v5237
        %v5239 = vpop.f32.mrb[0].mxu0
        %5240 = vmatprep.mubr.f32.mxu0 0.0
        %5241 = vmatmul.mubr.f32.gmra.mrb[0].mxu0 %v5091
        %v5242 = vpop.f32.mrb[0].mxu0
        %v5243 = vadd.f32 0.0, %v5242
        %v5244 = vpop.f32.mrb[0].mxu0
        %5245 = vmatprep.mubr.f32.mxu0 0.0
        %5246 = vmatmul.mubr.f32.gmra.mrb[0].mxu0 %v5093
        %v5247 = vpop.f32.mrb[0].mxu0
        %v5248 = vadd.f32 0.0, %v5247
        %v5249 = vpop.f32.mrb[0].mxu0
        %5250 = vmatprep.mubr.f32.mxu0 0.0
        %5251 = vmatmul.mubr.f32.gmra.mrb[0].mxu0 %v5095
        %v5252 = vpop.f32.mrb[0].mxu0
        %v5253 = vadd.f32 0.0, %v5252
        %v5254 = vpop.f32.mrb[0].mxu0
        %5255 = vmatprep.mubr.f32.mxu0 0.0
        %5256 = vmatmul.mubr.f32.gmra.mrb[0].mxu0 %v5097
        %v5257 = vpop.f32.mrb[0].mxu0
        %v5258 = vadd.f32 0.0, %v5257
        %v5259 = vpop.f32.mrb[0].mxu0
        %5260 = vmatprep.mubr.f32.mxu0 0.0
        %5261 = vmatmul.mubr.f32.gmra.mrb[0].mxu0 %v5099
        %v5262 = vpop.f32.mrb[0].mxu0
        %v5263 = vadd.f32 0.0, %v5262
        %v5264 = vpop.f32.mrb[0].mxu0
        %5265 = vmatprep.mubr.f32.mxu0 0.0
        %5266 = vmatmul.mubr.f32.gmra.mrb[0].mxu0 %v5101
        %v5267 = vpop.f32.mrb[0].mxu0
        %v5268 = vadd.f32 0.0, %v5267
        %v5269 = vpop.f32.mrb[0].mxu0
        %5270 = vmatprep.mubr.f32.mxu0 0.0
        %5271 = vmatmul.mubr.f32.gmra.mrb[0].mxu0 %v5103
        %v5272 = vpop.f32.mrb[0].mxu0
        %v5273 = vadd.f32 0.0, %v5272
        %v5274 = vpop.f32.mrb[0].mxu0
        %5275 = vmatprep.mubr.f32.mxu0 0.0
        %5276 = vmatmul.mubr.f32.gmra.mrb[0].mxu0 %v5105
        %v5277 = vpop.f32.mrb[0].mxu0
        %v5278 = vadd.f32 0.0, %v5277
        %v5279 = vpop.f32.mrb[0].mxu0
        %5280 = vmatprep.mubr.f32.mxu0 0.0
        %5281 = vmatmul.mubr.f32.gmra.mrb[0].mxu0 %v5107
        %v5282 = vpop.f32.mrb[0].mxu0
        %v5283 = vadd.f32 0.0, %v5282
        %v5284 = vpop.f32.mrb[0].mxu0
        %5285 = vmatprep.mubr.f32.mxu0 0.0
        %5286 = vmatmul.mubr.f32.gmra.mrb[0].mxu0 %v5109
        %v5287 = vpop.f32.mrb[0].mxu0
        %v5288 = vadd.f32 0.0, %v5287
        %v5289 = vpop.f32.mrb[0].mxu0
        %5290 = vmatprep.mubr.f32.mxu0 0.0
        %5291 = vmatmul.mubr.f32.gmra.mrb[0].mxu0 %v5111
        %v5292 = vpop.f32.mrb[0].mxu0
        %v5293 = vadd.f32 0.0, %v5292
        %v5294 = vpop.f32.mrb[0].mxu0
        %5295 = vmatprep.mubr.f32.mxu0 0.0
        %5296 = vmatmul.mubr.f32.gmra.mrb[0].mxu0 %v5113
        %v5297 = vpop.f32.mrb[0].mxu0
        %v5298 = vadd.f32 0.0, %v5297
        %v5299 = vpop.f32.mrb[0].mxu0
        %5300 = vmatprep.mubr.f32.mxu0 0.0
        %5301 = vmatmul.mubr.f32.gmra.mrb[0].mxu0 %v5115
        %v5302 = vpop.f32.mrb[0].mxu0
        %v5303 = vadd.f32 0.0, %v5302
        %v5304 = vpop.f32.mrb[0].mxu0
        %5305 = vmatprep.mubr.f32.mxu0 0.0
        %5306 = vmatmul.mubr.f32.gmra.mrb[0].mxu0 %v5117
        %v5307 = vpop.f32.mrb[0].mxu0
        %v5308 = vadd.f32 0.0, %v5307
        %v5309 = vpop.f32.mrb[0].mxu0
        %5310 = vmatprep.mubr.f32.mxu0 0.0
        %5311 = vmatmul.mubr.f32.gmra.mrb[0].mxu0 %v5119
        %v5312 = vpop.f32.mrb[0].mxu0
        %v5313 = vadd.f32 0.0, %v5312
        %v5314 = vpop.f32.mrb[0].mxu0
        %5315 = vmatprep.mubr.f32.mxu0 0.0
        %5316 = vmatmul.mubr.f32.gmra.mrb[0].mxu0 %v5121
        %v5317 = vpop.f32.mrb[0].mxu0
        %v5318 = vadd.f32 0.0, %v5317
        %v5319 = vpop.f32.mrb[0].mxu0
        %5320 = vmatprep.mubr.f32.mxu0 0.0
        %5321 = vmatmul.mubr.f32.gmra.mrb[0].mxu0 %v5123
        %v5322 = vpop.f32.mrb[0].mxu0
        %v5323 = vadd.f32 0.0, %v5322
        %v5324 = vpop.f32.mrb[0].mxu0
        %5325 = vmatprep.mubr.f32.mxu0 0.0
        %5326 = vmatmul.mubr.f32.gmra.mrb[0].mxu0 %v5125
        %v5327 = vpop.f32.mrb[0].mxu0
        %v5328 = vadd.f32 0.0, %v5327
        %v5329 = vpop.f32.mrb[0].mxu0
        %5330 = vmatprep.mubr.f32.mxu0 0.0
        %5331 = vmatmul.mubr.f32.gmra.mrb[0].mxu0 %v5127
        %v5332 = vpop.f32.mrb[0].mxu0
        %v5333 = vadd.f32 0.0, %v5332
        %v5334 = vpop.f32.mrb[0].mxu0
        %5335 = vmatprep.mubr.f32.mxu0 0.0
        %5336 = vmatmul.mubr.f32.gmra.mrb[0].mxu0 %v5129
        %v5337 = vpop.f32.mrb[0].mxu0
        %v5338 = vadd.f32 0.0, %v5337
        %v5339 = vpop.f32.mrb[0].mxu0
        %5340 = vmatprep.mubr.f32.mxu0 0.0
        %5341 = vmatmul.mubr.f32.gmra.mrb[0].mxu0 %v5131
        %v5342 = vpop.f32.mrb[0].mxu0
        %v5343 = vadd.f32 0.0, %v5342
        %v5344 = vpop.f32.mrb[0].mxu0
        %5345 = vmatprep.mubr.f32.mxu0 0.0
        %5346 = vmatmul.mubr.f32.gmra.mrb[0].mxu0 %v5133
        %v5347 = vpop.f32.mrb[0].mxu0
        %v5348 = vadd.f32 0.0, %v5347
        %v5349 = vpop.f32.mrb[0].mxu0
        %5350 = vmatprep.mubr.f32.mxu0 0.0
        %5351 = vmatmul.mubr.f32.gmra.mrb[0].mxu0 %v5135
        %v5352 = vpop.f32.mrb[0].mxu0
        %v5353 = vadd.f32 0.0, %v5352
        %v5354 = vpop.f32.mrb[0].mxu0
        %5355 = vmatprep.mubr.f32.mxu0 0.0
        %5356 = vmatmul.mubr.f32.gmra.mrb[0].mxu0 %v5137
        %v5357 = vpop.f32.mrb[0].mxu0
        %v5358 = vadd.f32 0.0, %v5357
        %v5359 = vpop.f32.mrb[0].mxu0
        %5360 = vmatprep.mubr.f32.mxu0 0.0
        %5361 = vmatmul.mubr.f32.gmra.mrb[0].mxu0 %v5139
        %v5362 = vpop.f32.mrb[0].mxu0
        %v5363 = vadd.f32 0.0, %v5362
        %v5364 = vpop.f32.mrb[0].mxu0
        %5365 = vdwg.mxu0
        %v5366 = vadd.f32 %v4960, %v5208
        %v5367 = vadd.f32 %v4961, %v5213
        %v5368 = vadd.f32 %v4962, %v5218
        %v5369 = vadd.f32 %v4963, %v5223
        %v5370 = vadd.f32 %v4964, %v5228
        %v5371 = vadd.f32 %v4965, %v5233
        %v5372 = vadd.f32 %v4966, %v5238
        %v5373 = vadd.f32 %v4967, %v5243
        %v5374 = vadd.f32 %v4968, %v5248
        %v5375 = vadd.f32 %v4969, %v5253
        %v5376 = vadd.f32 %v4970, %v5258
        %v5377 = vadd.f32 %v4971, %v5263
        %v5378 = vadd.f32 %v4972, %v5268
        %v5379 = vadd.f32 %v4973, %v5273
        %v5380 = vadd.f32 %v4974, %v5278
        %v5381 = vadd.f32 %v4975, %v5283
        %v5382 = vadd.f32 %v4976, %v5288
        %v5383 = vadd.f32 %v4977, %v5293
        %v5384 = vadd.f32 %v4978, %v5298
        %v5385 = vadd.f32 %v4979, %v5303
        %v5386 = vadd.f32 %v4980, %v5308
        %v5387 = vadd.f32 %v4981, %v5313
        %v5388 = vadd.f32 %v4982, %v5318
        %v5389 = vadd.f32 %v4983, %v5323
        %v5390 = vadd.f32 %v4984, %v5328
        %v5391 = vadd.f32 %v4985, %v5333
        %v5392 = vadd.f32 %v4986, %v5338
        %v5393 = vadd.f32 %v4987, %v5343
        %v5394 = vadd.f32 %v4988, %v5348
        %v5395 = vadd.f32 %v4989, %v5353
        %v5396 = vadd.f32 %v4990, %v5358
        %v5397 = vadd.f32 %v4991, %v5363
        %v5398 = vrot.slane %v372, 2
        %v5399 = vrot.slane %v373, 2
        %v5400 = vsel %vm2176, %v5398, %v5399
        %v5401 = vrot.slane %v374, 2
        %v5402 = vsel %vm2176, %v5399, %v5401
        %s5403 = scalar_lea.vmem %s3, 160
        %v5404 = vld [vmem:[%s5403] sm:$0xff]
        %v5405 = vld [vmem:[%s5403 + $0x8] sm:$0xff]
        %v5406 = vld [vmem:[%s5403 + $0x10] sm:$0xff]
        %v5407 = vld [vmem:[%s5403 + $0x18] sm:$0xff]
        %v5408 = vsel %vm3173, %v5400, 0
        %v5410 = vsel %vm3173, %v5402, 0
        %5412 = vmatprep.subr.mxu0 0.0
        %5413 = vmatpush1.msra.mxu0 %v5404
        %5414 = vmatprep.subr.mxu0 0.0
        %5415 = vmatpush1.msra.mxu0 %v5405
        %5416 = vmatprep.subr.mxu0 0.0
        %5417 = vmatpush1.msra.mxu0 %v5406
        %5418 = vmatprep.subr.mxu0 0.0
        %5419 = vmatpush1.msra.mxu0 %v5407
        %5420 = vmatprep.subr.mxu0 0.0
        %5421 = vmatpush1.msra.mxu0 0.0
        %5422 = vmatprep.subr.mxu0 0.0
        %5423 = vmatpush1.msra.mxu0 0.0
        %5424 = vmatprep.subr.mxu0 0.0
        %5425 = vmatpush1.msra.mxu0 0.0
        %5426 = vmatprep.subr.mxu0 0.0
        %5427 = vmatpush1.msra.mxu0 0.0
        %5428 = vmatprep.subr.mxu0 0.0
        %5429 = vmatpush1.msra.mxu0 0.0
        %5430 = vmatprep.subr.mxu0 0.0
        %5431 = vmatpush1.msra.mxu0 0.0
        %5432 = vmatprep.subr.mxu0 0.0
        %5433 = vmatpush1.msra.mxu0 0.0
        %5434 = vmatprep.subr.mxu0 0.0
        %5435 = vmatpush1.msra.mxu0 0.0
        %5436 = vmatprep.subr.mxu0 0.0
        %5437 = vmatpush1.msra.mxu0 0.0
        %5438 = vmatprep.subr.mxu0 0.0
        %5439 = vmatpush1.msra.mxu0 0.0
        %5440 = vmatprep.subr.mxu0 0.0
        %5441 = vmatpush1.msra.mxu0 0.0
        %5442 = vmatprep.subr.mxu0 0.0
        %5443 = vmatpush1.msra.mxu0 0.0
        %5444 = vmatprep.subr.mxu0 0.0
        %5445 = vmatpush1.msra.mxu0 0.0
        %5446 = vmatprep.subr.mxu0 0.0
        %5447 = vmatpush1.msra.mxu0 0.0
        %5448 = vmatprep.subr.mxu0 0.0
        %5449 = vmatpush1.msra.mxu0 0.0
        %5450 = vmatprep.subr.mxu0 0.0
        %5451 = vmatpush1.msra.mxu0 0.0
        %5452 = vmatprep.subr.mxu0 0.0
        %5453 = vmatpush1.msra.mxu0 0.0
        %5454 = vmatprep.subr.mxu0 0.0
        %5455 = vmatpush1.msra.mxu0 0.0
        %5456 = vmatprep.subr.mxu0 0.0
        %5457 = vmatpush1.msra.mxu0 0.0
        %5458 = vmatprep.subr.mxu0 0.0
        %5459 = vmatpush1.msra.mxu0 0.0
        %5460 = vmatprep.subr.mxu0 0.0
        %5461 = vmatpush1.msra.mxu0 0.0
        %5462 = vmatprep.subr.mxu0 0.0
        %5463 = vmatpush1.msra.mxu0 0.0
        %5464 = vmatprep.subr.mxu0 0.0
        %5465 = vmatpush1.msra.mxu0 0.0
        %5466 = vmatprep.subr.mxu0 0.0
        %5467 = vmatpush1.msra.mxu0 0.0
        %5468 = vmatprep.subr.mxu0 0.0
        %5469 = vmatpush1.msra.mxu0 0.0
        %5470 = vmatprep.subr.mxu0 0.0
        %5471 = vmatpush1.msra.mxu0 0.0
        %5472 = vmatprep.subr.mxu0 0.0
        %5473 = vmatpush1.msra.mxu0 0.0
        %5474 = vmatprep.subr.mxu0 0.0
        %5475 = vmatpush1.msra.mxu0 0.0
        %5476 = vmatprep.mubr.f32.mxu0 0.0
        %5477 = vmatmul.mubr.f32.gmra.mrb[0].mxu0 %v5081
        %v5478 = vpop.f32.mrb[0].mxu0
        %v5479 = vadd.f32 0.0, %v5478
        %v5480 = vpop.f32.mrb[0].mxu0
        %5481 = vmatprep.mubr.f32.mxu0 0.0
        %5482 = vmatmul.mubr.f32.gmra.mrb[0].mxu0 %v5083
        %v5483 = vpop.f32.mrb[0].mxu0
        %v5484 = vadd.f32 0.0, %v5483
        %v5485 = vpop.f32.mrb[0].mxu0
        %5486 = vmatprep.mubr.f32.mxu0 0.0
        %5487 = vmatmul.mubr.f32.gmra.mrb[0].mxu0 %v5085
        %v5488 = vpop.f32.mrb[0].mxu0
        %v5489 = vadd.f32 0.0, %v5488
        %v5490 = vpop.f32.mrb[0].mxu0
        %5491 = vmatprep.mubr.f32.mxu0 0.0
        %5492 = vmatmul.mubr.f32.gmra.mrb[0].mxu0 %v5087
        %v5493 = vpop.f32.mrb[0].mxu0
        %v5494 = vadd.f32 0.0, %v5493
        %v5495 = vpop.f32.mrb[0].mxu0
        %5496 = vmatprep.mubr.f32.mxu0 0.0
        %5497 = vmatmul.mubr.f32.gmra.mrb[0].mxu0 %v5089
        %v5498 = vpop.f32.mrb[0].mxu0
        %v5499 = vadd.f32 0.0, %v5498
        %v5500 = vpop.f32.mrb[0].mxu0
        %5501 = vmatprep.mubr.f32.mxu0 0.0
        %5502 = vmatmul.mubr.f32.gmra.mrb[0].mxu0 %v5091
        %v5503 = vpop.f32.mrb[0].mxu0
        %v5504 = vadd.f32 0.0, %v5503
        %v5505 = vpop.f32.mrb[0].mxu0
        %5506 = vmatprep.mubr.f32.mxu0 0.0
        %5507 = vmatmul.mubr.f32.gmra.mrb[0].mxu0 %v5093
        %v5508 = vpop.f32.mrb[0].mxu0
        %v5509 = vadd.f32 0.0, %v5508
        %v5510 = vpop.f32.mrb[0].mxu0
        %5511 = vmatprep.mubr.f32.mxu0 0.0
        %5512 = vmatmul.mubr.f32.gmra.mrb[0].mxu0 %v5095
        %v5513 = vpop.f32.mrb[0].mxu0
        %v5514 = vadd.f32 0.0, %v5513
        %v5515 = vpop.f32.mrb[0].mxu0
        %5516 = vmatprep.mubr.f32.mxu0 0.0
        %5517 = vmatmul.mubr.f32.gmra.mrb[0].mxu0 %v5097
        %v5518 = vpop.f32.mrb[0].mxu0
        %v5519 = vadd.f32 0.0, %v5518
        %v5520 = vpop.f32.mrb[0].mxu0
        %5521 = vmatprep.mubr.f32.mxu0 0.0
        %5522 = vmatmul.mubr.f32.gmra.mrb[0].mxu0 %v5099
        %v5523 = vpop.f32.mrb[0].mxu0
        %v5524 = vadd.f32 0.0, %v5523
        %v5525 = vpop.f32.mrb[0].mxu0
        %5526 = vmatprep.mubr.f32.mxu0 0.0
        %5527 = vmatmul.mubr.f32.gmra.mrb[0].mxu0 %v5101
        %v5528 = vpop.f32.mrb[0].mxu0
        %v5529 = vadd.f32 0.0, %v5528
        %v5530 = vpop.f32.mrb[0].mxu0
        %5531 = vmatprep.mubr.f32.mxu0 0.0
        %5532 = vmatmul.mubr.f32.gmra.mrb[0].mxu0 %v5103
        %v5533 = vpop.f32.mrb[0].mxu0
        %v5534 = vadd.f32 0.0, %v5533
        %v5535 = vpop.f32.mrb[0].mxu0
        %5536 = vmatprep.mubr.f32.mxu0 0.0
        %5537 = vmatmul.mubr.f32.gmra.mrb[0].mxu0 %v5105
        %v5538 = vpop.f32.mrb[0].mxu0
        %v5539 = vadd.f32 0.0, %v5538
        %v5540 = vpop.f32.mrb[0].mxu0
        %5541 = vmatprep.mubr.f32.mxu0 0.0
        %5542 = vmatmul.mubr.f32.gmra.mrb[0].mxu0 %v5107
        %v5543 = vpop.f32.mrb[0].mxu0
        %v5544 = vadd.f32 0.0, %v5543
        %v5545 = vpop.f32.mrb[0].mxu0
        %5546 = vmatprep.mubr.f32.mxu0 0.0
        %5547 = vmatmul.mubr.f32.gmra.mrb[0].mxu0 %v5109
        %v5548 = vpop.f32.mrb[0].mxu0
        %v5549 = vadd.f32 0.0, %v5548
        %v5550 = vpop.f32.mrb[0].mxu0
        %5551 = vmatprep.mubr.f32.mxu0 0.0
        %5552 = vmatmul.mubr.f32.gmra.mrb[0].mxu0 %v5111
        %v5553 = vpop.f32.mrb[0].mxu0
        %v5554 = vadd.f32 0.0, %v5553
        %v5555 = vpop.f32.mrb[0].mxu0
        %5556 = vmatprep.mubr.f32.mxu0 0.0
        %5557 = vmatmul.mubr.f32.gmra.mrb[0].mxu0 %v5113
        %v5558 = vpop.f32.mrb[0].mxu0
        %v5559 = vadd.f32 0.0, %v5558
        %v5560 = vpop.f32.mrb[0].mxu0
        %5561 = vmatprep.mubr.f32.mxu0 0.0
        %5562 = vmatmul.mubr.f32.gmra.mrb[0].mxu0 %v5115
        %v5563 = vpop.f32.mrb[0].mxu0
        %v5564 = vadd.f32 0.0, %v5563
        %v5565 = vpop.f32.mrb[0].mxu0
        %5566 = vmatprep.mubr.f32.mxu0 0.0
        %5567 = vmatmul.mubr.f32.gmra.mrb[0].mxu0 %v5117
        %v5568 = vpop.f32.mrb[0].mxu0
        %v5569 = vadd.f32 0.0, %v5568
        %v5570 = vpop.f32.mrb[0].mxu0
        %5571 = vmatprep.mubr.f32.mxu0 0.0
        %5572 = vmatmul.mubr.f32.gmra.mrb[0].mxu0 %v5119
        %v5573 = vpop.f32.mrb[0].mxu0
        %v5574 = vadd.f32 0.0, %v5573
        %v5575 = vpop.f32.mrb[0].mxu0
        %5576 = vmatprep.mubr.f32.mxu0 0.0
        %5577 = vmatmul.mubr.f32.gmra.mrb[0].mxu0 %v5121
        %v5578 = vpop.f32.mrb[0].mxu0
        %v5579 = vadd.f32 0.0, %v5578
        %v5580 = vpop.f32.mrb[0].mxu0
        %5581 = vmatprep.mubr.f32.mxu0 0.0
        %5582 = vmatmul.mubr.f32.gmra.mrb[0].mxu0 %v5123
        %v5583 = vpop.f32.mrb[0].mxu0
        %v5584 = vadd.f32 0.0, %v5583
        %v5585 = vpop.f32.mrb[0].mxu0
        %5586 = vmatprep.mubr.f32.mxu0 0.0
        %5587 = vmatmul.mubr.f32.gmra.mrb[0].mxu0 %v5125
        %v5588 = vpop.f32.mrb[0].mxu0
        %v5589 = vadd.f32 0.0, %v5588
        %v5590 = vpop.f32.mrb[0].mxu0
        %5591 = vmatprep.mubr.f32.mxu0 0.0
        %5592 = vmatmul.mubr.f32.gmra.mrb[0].mxu0 %v5127
        %v5593 = vpop.f32.mrb[0].mxu0
        %v5594 = vadd.f32 0.0, %v5593
        %v5595 = vpop.f32.mrb[0].mxu0
        %5596 = vmatprep.mubr.f32.mxu0 0.0
        %5597 = vmatmul.mubr.f32.gmra.mrb[0].mxu0 %v5129
        %v5598 = vpop.f32.mrb[0].mxu0
        %v5599 = vadd.f32 0.0, %v5598
        %v5600 = vpop.f32.mrb[0].mxu0
        %5601 = vmatprep.mubr.f32.mxu0 0.0
        %5602 = vmatmul.mubr.f32.gmra.mrb[0].mxu0 %v5131
        %v5603 = vpop.f32.mrb[0].mxu0
        %v5604 = vadd.f32 0.0, %v5603
        %v5605 = vpop.f32.mrb[0].mxu0
        %5606 = vmatprep.mubr.f32.mxu0 0.0
        %5607 = vmatmul.mubr.f32.gmra.mrb[0].mxu0 %v5133
        %v5608 = vpop.f32.mrb[0].mxu0
        %v5609 = vadd.f32 0.0, %v5608
        %v5610 = vpop.f32.mrb[0].mxu0
        %5611 = vmatprep.mubr.f32.mxu0 0.0
        %5612 = vmatmul.mubr.f32.gmra.mrb[0].mxu0 %v5135
        %v5613 = vpop.f32.mrb[0].mxu0
        %v5614 = vadd.f32 0.0, %v5613
        %v5615 = vpop.f32.mrb[0].mxu0
        %5616 = vmatprep.mubr.f32.mxu0 0.0
        %5617 = vmatmul.mubr.f32.gmra.mrb[0].mxu0 %v5137
        %v5618 = vpop.f32.mrb[0].mxu0
        %v5619 = vadd.f32 0.0, %v5618
        %v5620 = vpop.f32.mrb[0].mxu0
        %5621 = vmatprep.mubr.f32.mxu0 0.0
        %5622 = vmatmul.mubr.f32.gmra.mrb[0].mxu0 %v5139
        %v5623 = vpop.f32.mrb[0].mxu0
        %v5624 = vadd.f32 0.0, %v5623
        %v5625 = vpop.f32.mrb[0].mxu0
        %5626 = vmatprep.mubr.f32.mxu0 0.0
        %5627 = vmatmul.mubr.f32.gmra.mrb[0].mxu0 %v5408
        %v5628 = vpop.f32.mrb[0].mxu0
        %v5629 = vadd.f32 0.0, %v5628
        %v5630 = vpop.f32.mrb[0].mxu0
        %5631 = vmatprep.mubr.f32.mxu0 0.0
        %5632 = vmatmul.mubr.f32.gmra.mrb[0].mxu0 %v5410
        %v5633 = vpop.f32.mrb[0].mxu0
        %v5634 = vadd.f32 0.0, %v5633
        %v5635 = vpop.f32.mrb[0].mxu0
        %5636 = vdwg.mxu0
        %v5637 = vadd.f32 %v5366, %v5479
        %v5638 = vadd.f32 %v5367, %v5484
        %v5639 = vadd.f32 %v5368, %v5489
        %v5640 = vadd.f32 %v5369, %v5494
        %v5641 = vadd.f32 %v5370, %v5499
        %v5642 = vadd.f32 %v5371, %v5504
        %v5643 = vadd.f32 %v5372, %v5509
        %v5644 = vadd.f32 %v5373, %v5514
        %v5645 = vadd.f32 %v5374, %v5519
        %v5646 = vadd.f32 %v5375, %v5524
        %v5647 = vadd.f32 %v5376, %v5529
        %v5648 = vadd.f32 %v5377, %v5534
        %v5649 = vadd.f32 %v5378, %v5539
        %v5650 = vadd.f32 %v5379, %v5544
        %v5651 = vadd.f32 %v5380, %v5549
        %v5652 = vadd.f32 %v5381, %v5554
        %v5653 = vadd.f32 %v5382, %v5559
        %v5654 = vadd.f32 %v5383, %v5564
        %v5655 = vadd.f32 %v5384, %v5569
        %v5656 = vadd.f32 %v5385, %v5574
        %v5657 = vadd.f32 %v5386, %v5579
        %v5658 = vadd.f32 %v5387, %v5584
        %v5659 = vadd.f32 %v5388, %v5589
        %v5660 = vadd.f32 %v5389, %v5594
        %v5661 = vadd.f32 %v5390, %v5599
        %v5662 = vadd.f32 %v5391, %v5604
        %v5663 = vadd.f32 %v5392, %v5609
        %v5664 = vadd.f32 %v5393, %v5614
        %v5665 = vadd.f32 %v5394, %v5619
        %v5666 = vadd.f32 %v5395, %v5624
        %v5667 = vadd.f32 %v5396, %v5629
        %v5668 = vadd.f32 %v5397, %v5634
        %v5669 = vrot.slane %v375, 2
        %v5670 = vrot.slane %v376, 2
        %v5671 = vsel %vm2176, %v5669, %v5670
        %v5672 = vrot.slane %v377, 2
        %v5673 = vsel %vm2176, %v5670, %v5672
        %s5674 = scalar_lea.vmem %s3, 256
        %v5675 = vld [vmem:[%s5674] sm:$0xff]
        %v5676 = vld [vmem:[%s5674 + $0x8] sm:$0xff]
        %v5677 = vld [vmem:[%s5674 + $0x10] sm:$0xff]
        %v5678 = vld [vmem:[%s5674 + $0x18] sm:$0xff]
        %v5679 = vsel %vm3173, %v5671, 0
        %v5681 = vsel %vm3173, %v5673, 0
        %5683 = vmatprep.subr.mxu0 0.0
        %5684 = vmatpush1.msra.mxu0 %v5675
        %5685 = vmatprep.subr.mxu0 0.0
        %5686 = vmatpush1.msra.mxu0 %v5676
        %5687 = vmatprep.subr.mxu0 0.0
        %5688 = vmatpush1.msra.mxu0 %v5677
        %5689 = vmatprep.subr.mxu0 0.0
        %5690 = vmatpush1.msra.mxu0 %v5678
        %5691 = vmatprep.subr.mxu0 0.0
        %5692 = vmatpush1.msra.mxu0 0.0
        %5693 = vmatprep.subr.mxu0 0.0
        %5694 = vmatpush1.msra.mxu0 0.0
        %5695 = vmatprep.subr.mxu0 0.0
        %5696 = vmatpush1.msra.mxu0 0.0
        %5697 = vmatprep.subr.mxu0 0.0
        %5698 = vmatpush1.msra.mxu0 0.0
        %5699 = vmatprep.subr.mxu0 0.0
        %5700 = vmatpush1.msra.mxu0 0.0
        %5701 = vmatprep.subr.mxu0 0.0
        %5702 = vmatpush1.msra.mxu0 0.0
        %5703 = vmatprep.subr.mxu0 0.0
        %5704 = vmatpush1.msra.mxu0 0.0
        %5705 = vmatprep.subr.mxu0 0.0
        %5706 = vmatpush1.msra.mxu0 0.0
        %5707 = vmatprep.subr.mxu0 0.0
        %5708 = vmatpush1.msra.mxu0 0.0
        %5709 = vmatprep.subr.mxu0 0.0
        %5710 = vmatpush1.msra.mxu0 0.0
        %5711 = vmatprep.subr.mxu0 0.0
        %5712 = vmatpush1.msra.mxu0 0.0
        %5713 = vmatprep.subr.mxu0 0.0
        %5714 = vmatpush1.msra.mxu0 0.0
        %5715 = vmatprep.subr.mxu0 0.0
        %5716 = vmatpush1.msra.mxu0 0.0
        %5717 = vmatprep.subr.mxu0 0.0
        %5718 = vmatpush1.msra.mxu0 0.0
        %5719 = vmatprep.subr.mxu0 0.0
        %5720 = vmatpush1.msra.mxu0 0.0
        %5721 = vmatprep.subr.mxu0 0.0
        %5722 = vmatpush1.msra.mxu0 0.0
        %5723 = vmatprep.subr.mxu0 0.0
        %5724 = vmatpush1.msra.mxu0 0.0
        %5725 = vmatprep.subr.mxu0 0.0
        %5726 = vmatpush1.msra.mxu0 0.0
        %5727 = vmatprep.subr.mxu0 0.0
        %5728 = vmatpush1.msra.mxu0 0.0
        %5729 = vmatprep.subr.mxu0 0.0
        %5730 = vmatpush1.msra.mxu0 0.0
        %5731 = vmatprep.subr.mxu0 0.0
        %5732 = vmatpush1.msra.mxu0 0.0
        %5733 = vmatprep.subr.mxu0 0.0
        %5734 = vmatpush1.msra.mxu0 0.0
        %5735 = vmatprep.subr.mxu0 0.0
        %5736 = vmatpush1.msra.mxu0 0.0
        %5737 = vmatprep.subr.mxu0 0.0
        %5738 = vmatpush1.msra.mxu0 0.0
        %5739 = vmatprep.subr.mxu0 0.0
        %5740 = vmatpush1.msra.mxu0 0.0
        %5741 = vmatprep.subr.mxu0 0.0
        %5742 = vmatpush1.msra.mxu0 0.0
        %5743 = vmatprep.subr.mxu0 0.0
        %5744 = vmatpush1.msra.mxu0 0.0
        %5745 = vmatprep.subr.mxu0 0.0
        %5746 = vmatpush1.msra.mxu0 0.0
        %5747 = vmatprep.mubr.f32.mxu0 0.0
        %5748 = vmatmul.mubr.f32.gmra.mrb[0].mxu0 %v5085
        %v5749 = vpop.f32.mrb[0].mxu0
        %v5750 = vadd.f32 0.0, %v5749
        %v5751 = vpop.f32.mrb[0].mxu0
        %5752 = vmatprep.mubr.f32.mxu0 0.0
        %5753 = vmatmul.mubr.f32.gmra.mrb[0].mxu0 %v5087
        %v5754 = vpop.f32.mrb[0].mxu0
        %v5755 = vadd.f32 0.0, %v5754
        %v5756 = vpop.f32.mrb[0].mxu0
        %5757 = vmatprep.mubr.f32.mxu0 0.0
        %5758 = vmatmul.mubr.f32.gmra.mrb[0].mxu0 %v5089
        %v5759 = vpop.f32.mrb[0].mxu0
        %v5760 = vadd.f32 0.0, %v5759
        %v5761 = vpop.f32.mrb[0].mxu0
        %5762 = vmatprep.mubr.f32.mxu0 0.0
        %5763 = vmatmul.mubr.f32.gmra.mrb[0].mxu0 %v5091
        %v5764 = vpop.f32.mrb[0].mxu0
        %v5765 = vadd.f32 0.0, %v5764
        %v5766 = vpop.f32.mrb[0].mxu0
        %5767 = vmatprep.mubr.f32.mxu0 0.0
        %5768 = vmatmul.mubr.f32.gmra.mrb[0].mxu0 %v5093
        %v5769 = vpop.f32.mrb[0].mxu0
        %v5770 = vadd.f32 0.0, %v5769
        %v5771 = vpop.f32.mrb[0].mxu0
        %5772 = vmatprep.mubr.f32.mxu0 0.0
        %5773 = vmatmul.mubr.f32.gmra.mrb[0].mxu0 %v5095
        %v5774 = vpop.f32.mrb[0].mxu0
        %v5775 = vadd.f32 0.0, %v5774
        %v5776 = vpop.f32.mrb[0].mxu0
        %5777 = vmatprep.mubr.f32.mxu0 0.0
        %5778 = vmatmul.mubr.f32.gmra.mrb[0].mxu0 %v5097
        %v5779 = vpop.f32.mrb[0].mxu0
        %v5780 = vadd.f32 0.0, %v5779
        %v5781 = vpop.f32.mrb[0].mxu0
        %5782 = vmatprep.mubr.f32.mxu0 0.0
        %5783 = vmatmul.mubr.f32.gmra.mrb[0].mxu0 %v5099
        %v5784 = vpop.f32.mrb[0].mxu0
        %v5785 = vadd.f32 0.0, %v5784
        %v5786 = vpop.f32.mrb[0].mxu0
        %5787 = vmatprep.mubr.f32.mxu0 0.0
        %5788 = vmatmul.mubr.f32.gmra.mrb[0].mxu0 %v5101
        %v5789 = vpop.f32.mrb[0].mxu0
        %v5790 = vadd.f32 0.0, %v5789
        %v5791 = vpop.f32.mrb[0].mxu0
        %5792 = vmatprep.mubr.f32.mxu0 0.0
        %5793 = vmatmul.mubr.f32.gmra.mrb[0].mxu0 %v5103
        %v5794 = vpop.f32.mrb[0].mxu0
        %v5795 = vadd.f32 0.0, %v5794
        %v5796 = vpop.f32.mrb[0].mxu0
        %5797 = vmatprep.mubr.f32.mxu0 0.0
        %5798 = vmatmul.mubr.f32.gmra.mrb[0].mxu0 %v5105
        %v5799 = vpop.f32.mrb[0].mxu0
        %v5800 = vadd.f32 0.0, %v5799
        %v5801 = vpop.f32.mrb[0].mxu0
        %5802 = vmatprep.mubr.f32.mxu0 0.0
        %5803 = vmatmul.mubr.f32.gmra.mrb[0].mxu0 %v5107
        %v5804 = vpop.f32.mrb[0].mxu0
        %v5805 = vadd.f32 0.0, %v5804
        %v5806 = vpop.f32.mrb[0].mxu0
        %5807 = vmatprep.mubr.f32.mxu0 0.0
        %5808 = vmatmul.mubr.f32.gmra.mrb[0].mxu0 %v5109
        %v5809 = vpop.f32.mrb[0].mxu0
        %v5810 = vadd.f32 0.0, %v5809
        %v5811 = vpop.f32.mrb[0].mxu0
        %5812 = vmatprep.mubr.f32.mxu0 0.0
        %5813 = vmatmul.mubr.f32.gmra.mrb[0].mxu0 %v5111
        %v5814 = vpop.f32.mrb[0].mxu0
        %v5815 = vadd.f32 0.0, %v5814
        %v5816 = vpop.f32.mrb[0].mxu0
        %5817 = vmatprep.mubr.f32.mxu0 0.0
        %5818 = vmatmul.mubr.f32.gmra.mrb[0].mxu0 %v5113
        %v5819 = vpop.f32.mrb[0].mxu0
        %v5820 = vadd.f32 0.0, %v5819
        %v5821 = vpop.f32.mrb[0].mxu0
        %5822 = vmatprep.mubr.f32.mxu0 0.0
        %5823 = vmatmul.mubr.f32.gmra.mrb[0].mxu0 %v5115
        %v5824 = vpop.f32.mrb[0].mxu0
        %v5825 = vadd.f32 0.0, %v5824
        %v5826 = vpop.f32.mrb[0].mxu0
        %5827 = vmatprep.mubr.f32.mxu0 0.0
        %5828 = vmatmul.mubr.f32.gmra.mrb[0].mxu0 %v5117
        %v5829 = vpop.f32.mrb[0].mxu0
        %v5830 = vadd.f32 0.0, %v5829
        %v5831 = vpop.f32.mrb[0].mxu0
        %5832 = vmatprep.mubr.f32.mxu0 0.0
        %5833 = vmatmul.mubr.f32.gmra.mrb[0].mxu0 %v5119
        %v5834 = vpop.f32.mrb[0].mxu0
        %v5835 = vadd.f32 0.0, %v5834
        %v5836 = vpop.f32.mrb[0].mxu0
        %5837 = vmatprep.mubr.f32.mxu0 0.0
        %5838 = vmatmul.mubr.f32.gmra.mrb[0].mxu0 %v5121
        %v5839 = vpop.f32.mrb[0].mxu0
        %v5840 = vadd.f32 0.0, %v5839
        %v5841 = vpop.f32.mrb[0].mxu0
        %5842 = vmatprep.mubr.f32.mxu0 0.0
        %5843 = vmatmul.mubr.f32.gmra.mrb[0].mxu0 %v5123
        %v5844 = vpop.f32.mrb[0].mxu0
        %v5845 = vadd.f32 0.0, %v5844
        %v5846 = vpop.f32.mrb[0].mxu0
        %5847 = vmatprep.mubr.f32.mxu0 0.0
        %5848 = vmatmul.mubr.f32.gmra.mrb[0].mxu0 %v5125
        %v5849 = vpop.f32.mrb[0].mxu0
        %v5850 = vadd.f32 0.0, %v5849
        %v5851 = vpop.f32.mrb[0].mxu0
        %5852 = vmatprep.mubr.f32.mxu0 0.0
        %5853 = vmatmul.mubr.f32.gmra.mrb[0].mxu0 %v5127
        %v5854 = vpop.f32.mrb[0].mxu0
        %v5855 = vadd.f32 0.0, %v5854
        %v5856 = vpop.f32.mrb[0].mxu0
        %5857 = vmatprep.mubr.f32.mxu0 0.0
        %5858 = vmatmul.mubr.f32.gmra.mrb[0].mxu0 %v5129
        %v5859 = vpop.f32.mrb[0].mxu0
        %v5860 = vadd.f32 0.0, %v5859
        %v5861 = vpop.f32.mrb[0].mxu0
        %5862 = vmatprep.mubr.f32.mxu0 0.0
        %5863 = vmatmul.mubr.f32.gmra.mrb[0].mxu0 %v5131
        %v5864 = vpop.f32.mrb[0].mxu0
        %v5865 = vadd.f32 0.0, %v5864
        %v5866 = vpop.f32.mrb[0].mxu0
        %5867 = vmatprep.mubr.f32.mxu0 0.0
        %5868 = vmatmul.mubr.f32.gmra.mrb[0].mxu0 %v5133
        %v5869 = vpop.f32.mrb[0].mxu0
        %v5870 = vadd.f32 0.0, %v5869
        %v5871 = vpop.f32.mrb[0].mxu0
        %5872 = vmatprep.mubr.f32.mxu0 0.0
        %5873 = vmatmul.mubr.f32.gmra.mrb[0].mxu0 %v5135
        %v5874 = vpop.f32.mrb[0].mxu0
        %v5875 = vadd.f32 0.0, %v5874
        %v5876 = vpop.f32.mrb[0].mxu0
        %5877 = vmatprep.mubr.f32.mxu0 0.0
        %5878 = vmatmul.mubr.f32.gmra.mrb[0].mxu0 %v5137
        %v5879 = vpop.f32.mrb[0].mxu0
        %v5880 = vadd.f32 0.0, %v5879
        %v5881 = vpop.f32.mrb[0].mxu0
        %5882 = vmatprep.mubr.f32.mxu0 0.0
        %5883 = vmatmul.mubr.f32.gmra.mrb[0].mxu0 %v5139
        %v5884 = vpop.f32.mrb[0].mxu0
        %v5885 = vadd.f32 0.0, %v5884
        %v5886 = vpop.f32.mrb[0].mxu0
        %5887 = vmatprep.mubr.f32.mxu0 0.0
        %5888 = vmatmul.mubr.f32.gmra.mrb[0].mxu0 %v5408
        %v5889 = vpop.f32.mrb[0].mxu0
        %v5890 = vadd.f32 0.0, %v5889
        %v5891 = vpop.f32.mrb[0].mxu0
        %5892 = vmatprep.mubr.f32.mxu0 0.0
        %5893 = vmatmul.mubr.f32.gmra.mrb[0].mxu0 %v5410
        %v5894 = vpop.f32.mrb[0].mxu0
        %v5895 = vadd.f32 0.0, %v5894
        %v5896 = vpop.f32.mrb[0].mxu0
        %5897 = vmatprep.mubr.f32.mxu0 0.0
        %5898 = vmatmul.mubr.f32.gmra.mrb[0].mxu0 %v5679
        %v5899 = vpop.f32.mrb[0].mxu0
        %v5900 = vadd.f32 0.0, %v5899
        %v5901 = vpop.f32.mrb[0].mxu0
        %5902 = vmatprep.mubr.f32.mxu0 0.0
        %5903 = vmatmul.mubr.f32.gmra.mrb[0].mxu0 %v5681
        %v5904 = vpop.f32.mrb[0].mxu0
        %v5905 = vadd.f32 0.0, %v5904
        %v5906 = vpop.f32.mrb[0].mxu0
        %5907 = vdwg.mxu0
        %v5908 = vadd.f32 %v5637, %v5750
        %v5909 = vadd.f32 %v5638, %v5755
        %v5910 = vadd.f32 %v5639, %v5760
        %v5911 = vadd.f32 %v5640, %v5765
        %v5912 = vadd.f32 %v5641, %v5770
        %v5913 = vadd.f32 %v5642, %v5775
        %v5914 = vadd.f32 %v5643, %v5780
        %v5915 = vadd.f32 %v5644, %v5785
        %v5916 = vadd.f32 %v5645, %v5790
        %v5917 = vadd.f32 %v5646, %v5795
        %v5918 = vadd.f32 %v5647, %v5800
        %v5919 = vadd.f32 %v5648, %v5805
        %v5920 = vadd.f32 %v5649, %v5810
        %v5921 = vadd.f32 %v5650, %v5815
        %v5922 = vadd.f32 %v5651, %v5820
        %v5923 = vadd.f32 %v5652, %v5825
        %v5924 = vadd.f32 %v5653, %v5830
        %v5925 = vadd.f32 %v5654, %v5835
        %v5926 = vadd.f32 %v5655, %v5840
        %v5927 = vadd.f32 %v5656, %v5845
        %v5928 = vadd.f32 %v5657, %v5850
        %v5929 = vadd.f32 %v5658, %v5855
        %v5930 = vadd.f32 %v5659, %v5860
        %v5931 = vadd.f32 %v5660, %v5865
        %v5932 = vadd.f32 %v5661, %v5870
        %v5933 = vadd.f32 %v5662, %v5875
        %v5934 = vadd.f32 %v5663, %v5880
        %v5935 = vadd.f32 %v5664, %v5885
        %v5936 = vadd.f32 %v5665, %v5890
        %v5937 = vadd.f32 %v5666, %v5895
        %v5938 = vadd.f32 %v5667, %v5900
        %v5939 = vadd.f32 %v5668, %v5905
        %v5940 = vadd.f32 %v3132, %v5908
        %v5941 = vadd.f32 %v3133, %v5909
        %v5942 = vadd.f32 %v3134, %v5910
        %v5943 = vadd.f32 %v3135, %v5911
        %v5944 = vadd.f32 %v3136, %v5912
        %v5945 = vadd.f32 %v3137, %v5913
        %v5946 = vadd.f32 %v3138, %v5914
        %v5947 = vadd.f32 %v3139, %v5915
        %v5948 = vadd.f32 %v3140, %v5916
        %v5949 = vadd.f32 %v3141, %v5917
        %v5950 = vadd.f32 %v3142, %v5918
        %v5951 = vadd.f32 %v3143, %v5919
        %v5952 = vadd.f32 %v3144, %v5920
        %v5953 = vadd.f32 %v3145, %v5921
        %v5954 = vadd.f32 %v3146, %v5922
        %v5955 = vadd.f32 %v3147, %v5923
        %v5956 = vadd.f32 %v3148, %v5924
        %v5957 = vadd.f32 %v3149, %v5925
        %v5958 = vadd.f32 %v3150, %v5926
        %v5959 = vadd.f32 %v3151, %v5927
        %v5960 = vadd.f32 %v3152, %v5928
        %v5961 = vadd.f32 %v3153, %v5929
        %v5962 = vadd.f32 %v3154, %v5930
        %v5963 = vadd.f32 %v3155, %v5931
        %v5964 = vadd.f32 %v3156, %v5932
        %v5965 = vadd.f32 %v3157, %v5933
        %v5966 = vadd.f32 %v3158, %v5934
        %v5967 = vadd.f32 %v3159, %v5935
        %v5968 = vadd.f32 %v3160, %v5936
        %v5969 = vadd.f32 %v3161, %v5937
        %v5970 = vadd.f32 %v3162, %v5938
        %v5971 = vadd.f32 %v3163, %v5939
        %v5972 = vxor.u32 %v5940, 2147483648
        %v5973 = vxor.u32 %v5941, 2147483648
        %v5974 = vxor.u32 %v5942, 2147483648
        %v5975 = vxor.u32 %v5943, 2147483648
        %v5976 = vxor.u32 %v5944, 2147483648
        %v5977 = vxor.u32 %v5945, 2147483648
        %v5978 = vxor.u32 %v5946, 2147483648
        %v5979 = vxor.u32 %v5947, 2147483648
        %v5980 = vxor.u32 %v5948, 2147483648
        %v5981 = vxor.u32 %v5949, 2147483648
        %v5982 = vxor.u32 %v5950, 2147483648
        %v5983 = vxor.u32 %v5951, 2147483648
        %v5984 = vxor.u32 %v5952, 2147483648
        %v5985 = vxor.u32 %v5953, 2147483648
        %v5986 = vxor.u32 %v5954, 2147483648
        %v5987 = vxor.u32 %v5955, 2147483648
        %v5988 = vxor.u32 %v5956, 2147483648
        %v5989 = vxor.u32 %v5957, 2147483648
        %v5990 = vxor.u32 %v5958, 2147483648
        %v5991 = vxor.u32 %v5959, 2147483648
        %v5992 = vxor.u32 %v5960, 2147483648
        %v5993 = vxor.u32 %v5961, 2147483648
        %v5994 = vxor.u32 %v5962, 2147483648
        %v5995 = vxor.u32 %v5963, 2147483648
        %v5996 = vxor.u32 %v5964, 2147483648
        %v5997 = vxor.u32 %v5965, 2147483648
        %v5998 = vxor.u32 %v5966, 2147483648
        %v5999 = vxor.u32 %v5967, 2147483648
        %v6000 = vxor.u32 %v5968, 2147483648
        %v6001 = vxor.u32 %v5969, 2147483648
        %v6002 = vxor.u32 %v5970, 2147483648
        %v6003 = vxor.u32 %v5971, 2147483648
        %v6004 = vmul.f32 %v5972, 1.442695
        %v6005 = vpow.pop %v6004
        %v6006 = vmul.f32 %v5973, 1.442695
        %v6007 = vpow.pop %v6006
        %v6008 = vmul.f32 %v5974, 1.442695
        %v6009 = vpow.pop %v6008
        %v6010 = vmul.f32 %v5975, 1.442695
        %v6011 = vpow.pop %v6010
        %v6012 = vmul.f32 %v5976, 1.442695
        %v6013 = vpow.pop %v6012
        %v6014 = vmul.f32 %v5977, 1.442695
        %v6015 = vpow.pop %v6014
        %v6016 = vmul.f32 %v5978, 1.442695
        %v6017 = vpow.pop %v6016
        %v6018 = vmul.f32 %v5979, 1.442695
        %v6019 = vpow.pop %v6018
        %v6020 = vmul.f32 %v5980, 1.442695
        %v6021 = vpow.pop %v6020
        %v6022 = vmul.f32 %v5981, 1.442695
        %v6023 = vpow.pop %v6022
        %v6024 = vmul.f32 %v5982, 1.442695
        %v6025 = vpow.pop %v6024
        %v6026 = vmul.f32 %v5983, 1.442695
        %v6027 = vpow.pop %v6026
        %v6028 = vmul.f32 %v5984, 1.442695
        %v6029 = vpow.pop %v6028
        %v6030 = vmul.f32 %v5985, 1.442695
        %v6031 = vpow.pop %v6030
        %v6032 = vmul.f32 %v5986, 1.442695
        %v6033 = vpow.pop %v6032
        %v6034 = vmul.f32 %v5987, 1.442695
        %v6035 = vpow.pop %v6034
        %v6036 = vmul.f32 %v5988, 1.442695
        %v6037 = vpow.pop %v6036
        %v6038 = vmul.f32 %v5989, 1.442695
        %v6039 = vpow.pop %v6038
        %v6040 = vmul.f32 %v5990, 1.442695
        %v6041 = vpow.pop %v6040
        %v6042 = vmul.f32 %v5991, 1.442695
        %v6043 = vpow.pop %v6042
        %v6044 = vmul.f32 %v5992, 1.442695
        %v6045 = vpow.pop %v6044
        %v6046 = vmul.f32 %v5993, 1.442695
        %v6047 = vpow.pop %v6046
        %v6048 = vmul.f32 %v5994, 1.442695
        %v6049 = vpow.pop %v6048
        %v6050 = vmul.f32 %v5995, 1.442695
        %v6051 = vpow.pop %v6050
        %v6052 = vmul.f32 %v5996, 1.442695
        %v6053 = vpow.pop %v6052
        %v6054 = vmul.f32 %v5997, 1.442695
        %v6055 = vpow.pop %v6054
        %v6056 = vmul.f32 %v5998, 1.442695
        %v6057 = vpow.pop %v6056
        %v6058 = vmul.f32 %v5999, 1.442695
        %v6059 = vpow.pop %v6058
        %v6060 = vmul.f32 %v6000, 1.442695
        %v6061 = vpow.pop %v6060
        %v6062 = vmul.f32 %v6001, 1.442695
        %v6063 = vpow.pop %v6062
        %v6064 = vmul.f32 %v6002, 1.442695
        %v6065 = vpow.pop %v6064
        %v6066 = vmul.f32 %v6003, 1.442695
        %v6067 = vpow.pop %v6066
        %v6068 = vadd.f32 %v6005, 1.0
        %v6069 = vadd.f32 %v6007, 1.0
        %v6070 = vadd.f32 %v6009, 1.0
        %v6071 = vadd.f32 %v6011, 1.0
        %v6072 = vadd.f32 %v6013, 1.0
        %v6073 = vadd.f32 %v6015, 1.0
        %v6074 = vadd.f32 %v6017, 1.0
        %v6075 = vadd.f32 %v6019, 1.0
        %v6076 = vadd.f32 %v6021, 1.0
        %v6077 = vadd.f32 %v6023, 1.0
        %v6078 = vadd.f32 %v6025, 1.0
        %v6079 = vadd.f32 %v6027, 1.0
        %v6080 = vadd.f32 %v6029, 1.0
        %v6081 = vadd.f32 %v6031, 1.0
        %v6082 = vadd.f32 %v6033, 1.0
        %v6083 = vadd.f32 %v6035, 1.0
        %v6084 = vadd.f32 %v6037, 1.0
        %v6085 = vadd.f32 %v6039, 1.0
        %v6086 = vadd.f32 %v6041, 1.0
        %v6087 = vadd.f32 %v6043, 1.0
        %v6088 = vadd.f32 %v6045, 1.0
        %v6089 = vadd.f32 %v6047, 1.0
        %v6090 = vadd.f32 %v6049, 1.0
        %v6091 = vadd.f32 %v6051, 1.0
        %v6092 = vadd.f32 %v6053, 1.0
        %v6093 = vadd.f32 %v6055, 1.0
        %v6094 = vadd.f32 %v6057, 1.0
        %v6095 = vadd.f32 %v6059, 1.0
        %v6096 = vadd.f32 %v6061, 1.0
        %v6097 = vadd.f32 %v6063, 1.0
        %v6098 = vadd.f32 %v6065, 1.0
        %v6099 = vadd.f32 %v6067, 1.0
        %v6100 = vrcp.pop %v6068
        %v6101 = vmul.f32 1.0, %v6100
        %v6102 = vrcp.pop %v6069
        %v6103 = vmul.f32 1.0, %v6102
        %v6104 = vrcp.pop %v6070
        %v6105 = vmul.f32 1.0, %v6104
        %v6106 = vrcp.pop %v6071
        %v6107 = vmul.f32 1.0, %v6106
        %v6108 = vrcp.pop %v6072
        %v6109 = vmul.f32 1.0, %v6108
        %v6110 = vrcp.pop %v6073
        %v6111 = vmul.f32 1.0, %v6110
        %v6112 = vrcp.pop %v6074
        %v6113 = vmul.f32 1.0, %v6112
        %v6114 = vrcp.pop %v6075
        %v6115 = vmul.f32 1.0, %v6114
        %v6116 = vrcp.pop %v6076
        %v6117 = vmul.f32 1.0, %v6116
        %v6118 = vrcp.pop %v6077
        %v6119 = vmul.f32 1.0, %v6118
        %v6120 = vrcp.pop %v6078
        %v6121 = vmul.f32 1.0, %v6120
        %v6122 = vrcp.pop %v6079
        %v6123 = vmul.f32 1.0, %v6122
        %v6124 = vrcp.pop %v6080
        %v6125 = vmul.f32 1.0, %v6124
        %v6126 = vrcp.pop %v6081
        %v6127 = vmul.f32 1.0, %v6126
        %v6128 = vrcp.pop %v6082
        %v6129 = vmul.f32 1.0, %v6128
        %v6130 = vrcp.pop %v6083
        %v6131 = vmul.f32 1.0, %v6130
        %v6132 = vrcp.pop %v6084
        %v6133 = vmul.f32 1.0, %v6132
        %v6134 = vrcp.pop %v6085
        %v6135 = vmul.f32 1.0, %v6134
        %v6136 = vrcp.pop %v6086
        %v6137 = vmul.f32 1.0, %v6136
        %v6138 = vrcp.pop %v6087
        %v6139 = vmul.f32 1.0, %v6138
        %v6140 = vrcp.pop %v6088
        %v6141 = vmul.f32 1.0, %v6140
        %v6142 = vrcp.pop %v6089
        %v6143 = vmul.f32 1.0, %v6142
        %v6144 = vrcp.pop %v6090
        %v6145 = vmul.f32 1.0, %v6144
        %v6146 = vrcp.pop %v6091
        %v6147 = vmul.f32 1.0, %v6146
        %v6148 = vrcp.pop %v6092
        %v6149 = vmul.f32 1.0, %v6148
        %v6150 = vrcp.pop %v6093
        %v6151 = vmul.f32 1.0, %v6150
        %v6152 = vrcp.pop %v6094
        %v6153 = vmul.f32 1.0, %v6152
        %v6154 = vrcp.pop %v6095
        %v6155 = vmul.f32 1.0, %v6154
        %v6156 = vrcp.pop %v6096
        %v6157 = vmul.f32 1.0, %v6156
        %v6158 = vrcp.pop %v6097
        %v6159 = vmul.f32 1.0, %v6158
        %v6160 = vrcp.pop %v6098
        %v6161 = vmul.f32 1.0, %v6160
        %v6162 = vrcp.pop %v6099
        %v6163 = vmul.f32 1.0, %v6162
        %6164 = vst.msk [vmem:[#allocation2] sm:$0xff] %vm3173, 0.0
        %6165 = vst.msk [vmem:[#allocation2 + $0x8] sm:$0xff] %vm3173, 0.0
        %vm6166 = vcmask 254976
        %6167 = vst.msk [vmem:[#allocation2 + $0x10] sm:$0x3] %vm6166, 0.0
        %s6168 = scalar_lea.vmem [#allocation2], 408
        %6169 = vst.msk [vmem:[%s6168] sm:$0xff] %vm3173, 0.0
        %6170 = vst.msk [vmem:[%s6168 + $0x8] sm:$0xff] %vm3173, 0.0
        %6171 = vst.msk [vmem:[%s6168 + $0x10] sm:$0x3] %vm6166, 0.0
        %s6172 = scalar_lea.vmem [#allocation2], 24
        %vm6173 = vcmask 253952
        %6174 = vst.msk [vmem:[%s6172] sm:$0x1] %vm6173, 0.0
        %6175 = vst.msk [vmem:[%s6172 + $0x18] sm:$0x1] %vm6173, 0.0
        %6176 = vst.msk [vmem:[%s6172 + $0x30] sm:$0x1] %vm6173, 0.0
        %6177 = vst.msk [vmem:[%s6172 + $0x48] sm:$0x1] %vm6173, 0.0
        %6178 = vst.msk [vmem:[%s6172 + $0x60] sm:$0x1] %vm6173, 0.0
        %6179 = vst.msk [vmem:[%s6172 + $0x78] sm:$0x1] %vm6173, 0.0
        %6180 = vst.msk [vmem:[%s6172 + $0x90] sm:$0x1] %vm6173, 0.0
        %6181 = vst.msk [vmem:[%s6172 + $0xa8] sm:$0x1] %vm6173, 0.0
        %6182 = vst.msk [vmem:[%s6172 + $0xc0] sm:$0x1] %vm6173, 0.0
        %6183 = vst.msk [vmem:[%s6172 + $0xd8] sm:$0x1] %vm6173, 0.0
        %6184 = vst.msk [vmem:[%s6172 + $0xf0] sm:$0x1] %vm6173, 0.0
        %6185 = vst.msk [vmem:[%s6172 + $0x108] sm:$0x1] %vm6173, 0.0
        %6186 = vst.msk [vmem:[%s6172 + $0x120] sm:$0x1] %vm6173, 0.0
        %6187 = vst.msk [vmem:[%s6172 + $0x138] sm:$0x1] %vm6173, 0.0
        %6188 = vst.msk [vmem:[%s6172 + $0x150] sm:$0x1] %vm6173, 0.0
        %6189 = vst.msk [vmem:[%s6172 + $0x168] sm:$0x1] %vm6173, 0.0
        %6190 = vst.msk [vmem:[%s6172 + $0x11] sm:$0x1] %vm6173, 0.0
        %6191 = vst.msk [vmem:[%s6172 + $0x29] sm:$0x1] %vm6173, 0.0
        %6192 = vst.msk [vmem:[%s6172 + $0x41] sm:$0x1] %vm6173, 0.0
        %6193 = vst.msk [vmem:[%s6172 + $0x59] sm:$0x1] %vm6173, 0.0
        %6194 = vst.msk [vmem:[%s6172 + $0x71] sm:$0x1] %vm6173, 0.0
        %6195 = vst.msk [vmem:[%s6172 + $0x89] sm:$0x1] %vm6173, 0.0
        %6196 = vst.msk [vmem:[%s6172 + $0xa1] sm:$0x1] %vm6173, 0.0
        %6197 = vst.msk [vmem:[%s6172 + $0xb9] sm:$0x1] %vm6173, 0.0
        %6198 = vst.msk [vmem:[%s6172 + $0xd1] sm:$0x1] %vm6173, 0.0
        %6199 = vst.msk [vmem:[%s6172 + $0xe9] sm:$0x1] %vm6173, 0.0
        %6200 = vst.msk [vmem:[%s6172 + $0x101] sm:$0x1] %vm6173, 0.0
        %6201 = vst.msk [vmem:[%s6172 + $0x119] sm:$0x1] %vm6173, 0.0
        %6202 = vst.msk [vmem:[%s6172 + $0x131] sm:$0x1] %vm6173, 0.0
        %6203 = vst.msk [vmem:[%s6172 + $0x149] sm:$0x1] %vm6173, 0.0
        %6204 = vst.msk [vmem:[%s6172 + $0x161] sm:$0x1] %vm6173, 0.0
        %6205 = vst.msk [vmem:[%s6172 + $0x179] sm:$0x1] %vm6173, 0.0
        %v6206 = vmul.f32 %v4017, %v6101
        %v6207 = vmul.f32 %v4019, %v6103
        %v6208 = vmul.f32 %v4022, %v6105
        %v6209 = vmul.f32 %v4024, %v6107
        %v6210 = vmul.f32 %v4027, %v6109
        %v6211 = vmul.f32 %v4029, %v6111
        %v6212 = vmul.f32 %v4032, %v6113
        %v6213 = vmul.f32 %v4034, %v6115
        %v6214 = vmul.f32 %v4037, %v6117
        %v6215 = vmul.f32 %v4039, %v6119
        %v6216 = vmul.f32 %v4042, %v6121
        %v6217 = vmul.f32 %v4044, %v6123
        %v6218 = vmul.f32 %v4047, %v6125
        %v6219 = vmul.f32 %v4049, %v6127
        %v6220 = vmul.f32 %v4052, %v6129
        %v6221 = vmul.f32 %v4054, %v6131
        %v6222 = vmul.f32 %v4057, %v6133
        %v6223 = vmul.f32 %v4059, %v6135
        %v6224 = vmul.f32 %v4062, %v6137
        %v6225 = vmul.f32 %v4064, %v6139
        %v6226 = vmul.f32 %v4067, %v6141
        %v6227 = vmul.f32 %v4069, %v6143
        %v6228 = vmul.f32 %v4072, %v6145
        %v6229 = vmul.f32 %v4074, %v6147
        %v6230 = vmul.f32 %v4077, %v6149
        %v6231 = vmul.f32 %v4079, %v6151
        %v6232 = vmul.f32 %v4082, %v6153
        %v6233 = vmul.f32 %v4084, %v6155
        %v6234 = vmul.f32 %v4087, %v6157
        %v6235 = vmul.f32 %v4089, %v6159
        %v6236 = vmul.f32 %v4419, %v6161
        %v6237 = vmul.f32 %v4421, %v6163
        %6238 = vst.msk [vmem:[%s6172 + $0x1] sm:$0xff] %vm3173, %v6206
        %6239 = vst.msk [vmem:[%s6172 + $0x9] sm:$0xff] %vm3173, %v6207
        %6240 = vst.msk [vmem:[%s6172 + $0x19] sm:$0xff] %vm3173, %v6208
        %6241 = vst.msk [vmem:[%s6172 + $0x21] sm:$0xff] %vm3173, %v6209
        %6242 = vst.msk [vmem:[%s6172 + $0x31] sm:$0xff] %vm3173, %v6210
        %6243 = vst.msk [vmem:[%s6172 + $0x39] sm:$0xff] %vm3173, %v6211
        %6244 = vst.msk [vmem:[%s6172 + $0x49] sm:$0xff] %vm3173, %v6212
        %6245 = vst.msk [vmem:[%s6172 + $0x51] sm:$0xff] %vm3173, %v6213
        %6246 = vst.msk [vmem:[%s6172 + $0x61] sm:$0xff] %vm3173, %v6214
        %6247 = vst.msk [vmem:[%s6172 + $0x69] sm:$0xff] %vm3173, %v6215
        %6248 = vst.msk [vmem:[%s6172 + $0x79] sm:$0xff] %vm3173, %v6216
        %6249 = vst.msk [vmem:[%s6172 + $0x81] sm:$0xff] %vm3173, %v6217
        %6250 = vst.msk [vmem:[%s6172 + $0x91] sm:$0xff] %vm3173, %v6218
        %6251 = vst.msk [vmem:[%s6172 + $0x99] sm:$0xff] %vm3173, %v6219
        %6252 = vst.msk [vmem:[%s6172 + $0xa9] sm:$0xff] %vm3173, %v6220
        %6253 = vst.msk [vmem:[%s6172 + $0xb1] sm:$0xff] %vm3173, %v6221
        %6254 = vst.msk [vmem:[%s6172 + $0xc1] sm:$0xff] %vm3173, %v6222
        %6255 = vst.msk [vmem:[%s6172 + $0xc9] sm:$0xff] %vm3173, %v6223
        %6256 = vst.msk [vmem:[%s6172 + $0xd9] sm:$0xff] %vm3173, %v6224
        %6257 = vst.msk [vmem:[%s6172 + $0xe1] sm:$0xff] %vm3173, %v6225
        %6258 = vst.msk [vmem:[%s6172 + $0xf1] sm:$0xff] %vm3173, %v6226
        %6259 = vst.msk [vmem:[%s6172 + $0xf9] sm:$0xff] %vm3173, %v6227
        %6260 = vst.msk [vmem:[%s6172 + $0x109] sm:$0xff] %vm3173, %v6228
        %6261 = vst.msk [vmem:[%s6172 + $0x111] sm:$0xff] %vm3173, %v6229
        %6262 = vst.msk [vmem:[%s6172 + $0x121] sm:$0xff] %vm3173, %v6230
        %6263 = vst.msk [vmem:[%s6172 + $0x129] sm:$0xff] %vm3173, %v6231
        %6264 = vst.msk [vmem:[%s6172 + $0x139] sm:$0xff] %vm3173, %v6232
        %6265 = vst.msk [vmem:[%s6172 + $0x141] sm:$0xff] %vm3173, %v6233
        %6266 = vst.msk [vmem:[%s6172 + $0x151] sm:$0xff] %vm3173, %v6234
        %6267 = vst.msk [vmem:[%s6172 + $0x159] sm:$0xff] %vm3173, %v6235
        %6268 = vst.msk [vmem:[%s6172 + $0x169] sm:$0xff] %vm3173, %v6236
        %6269 = vst.msk [vmem:[%s6172 + $0x171] sm:$0xff] %vm3173, %v6237
        %v6270 = vld [vmem:[#allocation2] sm:$0xff]
        %v6271 = vld [vmem:[#allocation2 + $0x8] sm:$0xff]
        %v6272 = vld [vmem:[#allocation2 + $0x10] sm:$0x3]
        %v6273 = vld [vmem:[#allocation2 + $0x18] sm:$0xff]
        %v6274 = vld [vmem:[#allocation2 + $0x20] sm:$0xff]
        %v6275 = vld [vmem:[#allocation2 + $0x28] sm:$0x3]
        %v6276 = vld [vmem:[#allocation2 + $0x30] sm:$0xff]
        %v6277 = vld [vmem:[#allocation2 + $0x38] sm:$0xff]
        %v6278 = vld [vmem:[#allocation2 + $0x40] sm:$0x3]
        %v6279 = vld [vmem:[#allocation2 + $0x48] sm:$0xff]
        %v6280 = vld [vmem:[#allocation2 + $0x50] sm:$0xff]
        %v6281 = vld [vmem:[#allocation2 + $0x58] sm:$0x3]
        %v6282 = vld [vmem:[#allocation2 + $0x60] sm:$0xff]
        %v6283 = vld [vmem:[#allocation2 + $0x68] sm:$0xff]
        %v6284 = vld [vmem:[#allocation2 + $0x70] sm:$0x3]
        %v6285 = vld [vmem:[#allocation2 + $0x78] sm:$0xff]
        %v6286 = vld [vmem:[#allocation2 + $0x80] sm:$0xff]
        %v6287 = vld [vmem:[#allocation2 + $0x88] sm:$0x3]
        %v6288 = vld [vmem:[#allocation2 + $0x90] sm:$0xff]
        %v6289 = vld [vmem:[#allocation2 + $0x98] sm:$0xff]
        %v6290 = vld [vmem:[#allocation2 + $0xa0] sm:$0x3]
        %v6291 = vld [vmem:[#allocation2 + $0xa8] sm:$0xff]
        %v6292 = vld [vmem:[#allocation2 + $0xb0] sm:$0xff]
        %v6293 = vld [vmem:[#allocation2 + $0xb8] sm:$0x3]
        %v6294 = vld [vmem:[#allocation2 + $0xc0] sm:$0xff]
        %v6295 = vld [vmem:[#allocation2 + $0xc8] sm:$0xff]
        %v6296 = vld [vmem:[#allocation2 + $0xd0] sm:$0x3]
        %v6297 = vld [vmem:[#allocation2 + $0xd8] sm:$0xff]
        %v6298 = vld [vmem:[#allocation2 + $0xe0] sm:$0xff]
        %v6299 = vld [vmem:[#allocation2 + $0xe8] sm:$0x3]
        %v6300 = vld [vmem:[#allocation2 + $0xf0] sm:$0xff]
        %v6301 = vld [vmem:[#allocation2 + $0xf8] sm:$0xff]
        %v6302 = vld [vmem:[#allocation2 + $0x100] sm:$0x3]
        %v6303 = vld [vmem:[#allocation2 + $0x108] sm:$0xff]
        %v6304 = vld [vmem:[#allocation2 + $0x110] sm:$0xff]
        %v6305 = vld [vmem:[#allocation2 + $0x118] sm:$0x3]
        %v6306 = vld [vmem:[#allocation2 + $0x120] sm:$0xff]
        %v6307 = vld [vmem:[#allocation2 + $0x128] sm:$0xff]
        %v6308 = vld [vmem:[#allocation2 + $0x130] sm:$0x3]
        %v6309 = vld [vmem:[#allocation2 + $0x138] sm:$0xff]
        %v6310 = vld [vmem:[#allocation2 + $0x140] sm:$0xff]
        %v6311 = vld [vmem:[#allocation2 + $0x148] sm:$0x3]
        %v6312 = vld [vmem:[#allocation2 + $0x150] sm:$0xff]
        %v6313 = vld [vmem:[#allocation2 + $0x158] sm:$0xff]
        %v6314 = vld [vmem:[#allocation2 + $0x160] sm:$0x3]
        %v6315 = vld [vmem:[#allocation2 + $0x168] sm:$0xff]
        %v6316 = vld [vmem:[#allocation2 + $0x170] sm:$0xff]
        %v6317 = vld [vmem:[#allocation2 + $0x178] sm:$0x3]
        %v6318 = vld [vmem:[#allocation2 + $0x180] sm:$0xff]
        %v6319 = vld [vmem:[#allocation2 + $0x188] sm:$0xff]
        %v6320 = vld [vmem:[#allocation2 + $0x190] sm:$0x3]
        %v6321 = vld [vmem:[#allocation2 + $0x198] sm:$0xff]
        %v6322 = vld [vmem:[#allocation2 + $0x1a0] sm:$0xff]
        %v6323 = vld [vmem:[#allocation2 + $0x1a8] sm:$0x3]
        %v6324 = vld [vmem:[%s4] sm:$0xff]
        %v6325 = vld [vmem:[%s4 + $0x8] sm:$0xff]
        %v6326 = vld [vmem:[%s4 + $0x10] sm:$0xff]
        %v6327 = vld [vmem:[%s4 + $0x18] sm:$0xff]
        %s6328 = scalar_lea.vmem %s4, 96
        %v6329 = vld [vmem:[%s6328] sm:$0xff]
        %v6330 = vld [vmem:[%s6328 + $0x8] sm:$0xff]
        %v6331 = vld [vmem:[%s6328 + $0x10] sm:$0xff]
        %v6332 = vld [vmem:[%s6328 + $0x18] sm:$0xff]
        %v6334 = vsel %vm3173, %v6273, 0
        %v6337 = vsel %vm3173, %v6274, 0
        %v6340 = vsel %vm3173, %v6276, 0
        %v6343 = vsel %vm3173, %v6277, 0
        %v6346 = vsel %vm3173, %v6279, 0
        %v6349 = vsel %vm3173, %v6280, 0
        %v6352 = vsel %vm3173, %v6282, 0
        %v6355 = vsel %vm3173, %v6283, 0
        %v6358 = vsel %vm3173, %v6285, 0
        %v6361 = vsel %vm3173, %v6286, 0
        %v6364 = vsel %vm3173, %v6288, 0
        %v6367 = vsel %vm3173, %v6289, 0
        %v6370 = vsel %vm3173, %v6291, 0
        %v6373 = vsel %vm3173, %v6292, 0
        %v6376 = vsel %vm3173, %v6294, 0
        %v6379 = vsel %vm3173, %v6295, 0
        %v6382 = vsel %vm3173, %v6297, 0
        %v6385 = vsel %vm3173, %v6298, 0
        %v6388 = vsel %vm3173, %v6300, 0
        %v6391 = vsel %vm3173, %v6301, 0
        %v6394 = vsel %vm3173, %v6303, 0
        %v6397 = vsel %vm3173, %v6304, 0
        %v6400 = vsel %vm3173, %v6306, 0
        %v6403 = vsel %vm3173, %v6307, 0
        %v6406 = vsel %vm3173, %v6309, 0
        %v6409 = vsel %vm3173, %v6310, 0
        %v6412 = vsel %vm3173, %v6312, 0
        %v6415 = vsel %vm3173, %v6313, 0
        %v6418 = vsel %vm3173, %v6315, 0
        %v6421 = vsel %vm3173, %v6316, 0
        %v6424 = vsel %vm3173, %v6318, 0
        %v6427 = vsel %vm3173, %v6319, 0
        %6429 = vmatprep.subr.mxu0 0.0
        %6430 = vmatpush1.msra.mxu0 %v6329
        %6431 = vmatprep.subr.mxu0 0.0
        %6432 = vmatpush1.msra.mxu0 %v6330
        %6433 = vmatprep.subr.mxu0 0.0
        %6434 = vmatpush1.msra.mxu0 %v6331
        %6435 = vmatprep.subr.mxu0 0.0
        %6436 = vmatpush1.msra.mxu0 %v6332
        %6437 = vmatprep.subr.mxu0 0.0
        %6438 = vmatpush1.msra.mxu0 0.0
        %6439 = vmatprep.subr.mxu0 0.0
        %6440 = vmatpush1.msra.mxu0 0.0
        %6441 = vmatprep.subr.mxu0 0.0
        %6442 = vmatpush1.msra.mxu0 0.0
        %6443 = vmatprep.subr.mxu0 0.0
        %6444 = vmatpush1.msra.mxu0 0.0
        %6445 = vmatprep.subr.mxu0 0.0
        %6446 = vmatpush1.msra.mxu0 0.0
        %6447 = vmatprep.subr.mxu0 0.0
        %6448 = vmatpush1.msra.mxu0 0.0
        %6449 = vmatprep.subr.mxu0 0.0
        %6450 = vmatpush1.msra.mxu0 0.0
        %6451 = vmatprep.subr.mxu0 0.0
        %6452 = vmatpush1.msra.mxu0 0.0
        %6453 = vmatprep.subr.mxu0 0.0
        %6454 = vmatpush1.msra.mxu0 0.0
        %6455 = vmatprep.subr.mxu0 0.0
        %6456 = vmatpush1.msra.mxu0 0.0
        %6457 = vmatprep.subr.mxu0 0.0
        %6458 = vmatpush1.msra.mxu0 0.0
        %6459 = vmatprep.subr.mxu0 0.0
        %6460 = vmatpush1.msra.mxu0 0.0
        %6461 = vmatprep.subr.mxu0 0.0
        %6462 = vmatpush1.msra.mxu0 0.0
        %6463 = vmatprep.subr.mxu0 0.0
        %6464 = vmatpush1.msra.mxu0 0.0
        %6465 = vmatprep.subr.mxu0 0.0
        %6466 = vmatpush1.msra.mxu0 0.0
        %6467 = vmatprep.subr.mxu0 0.0
        %6468 = vmatpush1.msra.mxu0 0.0
        %6469 = vmatprep.subr.mxu0 0.0
        %6470 = vmatpush1.msra.mxu0 0.0
        %6471 = vmatprep.subr.mxu0 0.0
        %6472 = vmatpush1.msra.mxu0 0.0
        %6473 = vmatprep.subr.mxu0 0.0
        %6474 = vmatpush1.msra.mxu0 0.0
        %6475 = vmatprep.subr.mxu0 0.0
        %6476 = vmatpush1.msra.mxu0 0.0
        %6477 = vmatprep.subr.mxu0 0.0
        %6478 = vmatpush1.msra.mxu0 0.0
        %6479 = vmatprep.subr.mxu0 0.0
        %6480 = vmatpush1.msra.mxu0 0.0
        %6481 = vmatprep.subr.mxu0 0.0
        %6482 = vmatpush1.msra.mxu0 0.0
        %6483 = vmatprep.subr.mxu0 0.0
        %6484 = vmatpush1.msra.mxu0 0.0
        %6485 = vmatprep.subr.mxu0 0.0
        %6486 = vmatpush1.msra.mxu0 0.0
        %6487 = vmatprep.subr.mxu0 0.0
        %6488 = vmatpush1.msra.mxu0 0.0
        %6489 = vmatprep.subr.mxu0 0.0
        %6490 = vmatpush1.msra.mxu0 0.0
        %6491 = vmatprep.subr.mxu0 0.0
        %6492 = vmatpush1.msra.mxu0 0.0
        %6493 = vmatprep.mubr.f32.mxu0 0.0
        %6494 = vmatmul.mubr.f32.gmra.mrb[0].mxu0 %v6334
        %v6495 = vpop.f32.mrb[0].mxu0
        %v6496 = vadd.f32 0.0, %v6495
        %v6497 = vpop.f32.mrb[0].mxu0
        %6498 = vmatprep.mubr.f32.mxu0 0.0
        %6499 = vmatmul.mubr.f32.gmra.mrb[0].mxu0 %v6337
        %v6500 = vpop.f32.mrb[0].mxu0
        %v6501 = vadd.f32 0.0, %v6500
        %v6502 = vpop.f32.mrb[0].mxu0
        %6503 = vmatprep.mubr.f32.mxu0 0.0
        %6504 = vmatmul.mubr.f32.gmra.mrb[0].mxu0 %v6340
        %v6505 = vpop.f32.mrb[0].mxu0
        %v6506 = vadd.f32 0.0, %v6505
        %v6507 = vpop.f32.mrb[0].mxu0
        %6508 = vmatprep.mubr.f32.mxu0 0.0
        %6509 = vmatmul.mubr.f32.gmra.mrb[0].mxu0 %v6343
        %v6510 = vpop.f32.mrb[0].mxu0
        %v6511 = vadd.f32 0.0, %v6510
        %v6512 = vpop.f32.mrb[0].mxu0
        %6513 = vmatprep.mubr.f32.mxu0 0.0
        %6514 = vmatmul.mubr.f32.gmra.mrb[0].mxu0 %v6346
        %v6515 = vpop.f32.mrb[0].mxu0
        %v6516 = vadd.f32 0.0, %v6515
        %v6517 = vpop.f32.mrb[0].mxu0
        %6518 = vmatprep.mubr.f32.mxu0 0.0
        %6519 = vmatmul.mubr.f32.gmra.mrb[0].mxu0 %v6349
        %v6520 = vpop.f32.mrb[0].mxu0
        %v6521 = vadd.f32 0.0, %v6520
        %v6522 = vpop.f32.mrb[0].mxu0
        %6523 = vmatprep.mubr.f32.mxu0 0.0
        %6524 = vmatmul.mubr.f32.gmra.mrb[0].mxu0 %v6352
        %v6525 = vpop.f32.mrb[0].mxu0
        %v6526 = vadd.f32 0.0, %v6525
        %v6527 = vpop.f32.mrb[0].mxu0
        %6528 = vmatprep.mubr.f32.mxu0 0.0
        %6529 = vmatmul.mubr.f32.gmra.mrb[0].mxu0 %v6355
        %v6530 = vpop.f32.mrb[0].mxu0
        %v6531 = vadd.f32 0.0, %v6530
        %v6532 = vpop.f32.mrb[0].mxu0
        %6533 = vmatprep.mubr.f32.mxu0 0.0
        %6534 = vmatmul.mubr.f32.gmra.mrb[0].mxu0 %v6358
        %v6535 = vpop.f32.mrb[0].mxu0
        %v6536 = vadd.f32 0.0, %v6535
        %v6537 = vpop.f32.mrb[0].mxu0
        %6538 = vmatprep.mubr.f32.mxu0 0.0
        %6539 = vmatmul.mubr.f32.gmra.mrb[0].mxu0 %v6361
        %v6540 = vpop.f32.mrb[0].mxu0
        %v6541 = vadd.f32 0.0, %v6540
        %v6542 = vpop.f32.mrb[0].mxu0
        %6543 = vmatprep.mubr.f32.mxu0 0.0
        %6544 = vmatmul.mubr.f32.gmra.mrb[0].mxu0 %v6364
        %v6545 = vpop.f32.mrb[0].mxu0
        %v6546 = vadd.f32 0.0, %v6545
        %v6547 = vpop.f32.mrb[0].mxu0
        %6548 = vmatprep.mubr.f32.mxu0 0.0
        %6549 = vmatmul.mubr.f32.gmra.mrb[0].mxu0 %v6367
        %v6550 = vpop.f32.mrb[0].mxu0
        %v6551 = vadd.f32 0.0, %v6550
        %v6552 = vpop.f32.mrb[0].mxu0
        %6553 = vmatprep.mubr.f32.mxu0 0.0
        %6554 = vmatmul.mubr.f32.gmra.mrb[0].mxu0 %v6370
        %v6555 = vpop.f32.mrb[0].mxu0
        %v6556 = vadd.f32 0.0, %v6555
        %v6557 = vpop.f32.mrb[0].mxu0
        %6558 = vmatprep.mubr.f32.mxu0 0.0
        %6559 = vmatmul.mubr.f32.gmra.mrb[0].mxu0 %v6373
        %v6560 = vpop.f32.mrb[0].mxu0
        %v6561 = vadd.f32 0.0, %v6560
        %v6562 = vpop.f32.mrb[0].mxu0
        %6563 = vmatprep.mubr.f32.mxu0 0.0
        %6564 = vmatmul.mubr.f32.gmra.mrb[0].mxu0 %v6376
        %v6565 = vpop.f32.mrb[0].mxu0
        %v6566 = vadd.f32 0.0, %v6565
        %v6567 = vpop.f32.mrb[0].mxu0
        %6568 = vmatprep.mubr.f32.mxu0 0.0
        %6569 = vmatmul.mubr.f32.gmra.mrb[0].mxu0 %v6379
        %v6570 = vpop.f32.mrb[0].mxu0
        %v6571 = vadd.f32 0.0, %v6570
        %v6572 = vpop.f32.mrb[0].mxu0
        %6573 = vmatprep.mubr.f32.mxu0 0.0
        %6574 = vmatmul.mubr.f32.gmra.mrb[0].mxu0 %v6382
        %v6575 = vpop.f32.mrb[0].mxu0
        %v6576 = vadd.f32 0.0, %v6575
        %v6577 = vpop.f32.mrb[0].mxu0
        %6578 = vmatprep.mubr.f32.mxu0 0.0
        %6579 = vmatmul.mubr.f32.gmra.mrb[0].mxu0 %v6385
        %v6580 = vpop.f32.mrb[0].mxu0
        %v6581 = vadd.f32 0.0, %v6580
        %v6582 = vpop.f32.mrb[0].mxu0
        %6583 = vmatprep.mubr.f32.mxu0 0.0
        %6584 = vmatmul.mubr.f32.gmra.mrb[0].mxu0 %v6388
        %v6585 = vpop.f32.mrb[0].mxu0
        %v6586 = vadd.f32 0.0, %v6585
        %v6587 = vpop.f32.mrb[0].mxu0
        %6588 = vmatprep.mubr.f32.mxu0 0.0
        %6589 = vmatmul.mubr.f32.gmra.mrb[0].mxu0 %v6391
        %v6590 = vpop.f32.mrb[0].mxu0
        %v6591 = vadd.f32 0.0, %v6590
        %v6592 = vpop.f32.mrb[0].mxu0
        %6593 = vmatprep.mubr.f32.mxu0 0.0
        %6594 = vmatmul.mubr.f32.gmra.mrb[0].mxu0 %v6394
        %v6595 = vpop.f32.mrb[0].mxu0
        %v6596 = vadd.f32 0.0, %v6595
        %v6597 = vpop.f32.mrb[0].mxu0
        %6598 = vmatprep.mubr.f32.mxu0 0.0
        %6599 = vmatmul.mubr.f32.gmra.mrb[0].mxu0 %v6397
        %v6600 = vpop.f32.mrb[0].mxu0
        %v6601 = vadd.f32 0.0, %v6600
        %v6602 = vpop.f32.mrb[0].mxu0
        %6603 = vmatprep.mubr.f32.mxu0 0.0
        %6604 = vmatmul.mubr.f32.gmra.mrb[0].mxu0 %v6400
        %v6605 = vpop.f32.mrb[0].mxu0
        %v6606 = vadd.f32 0.0, %v6605
        %v6607 = vpop.f32.mrb[0].mxu0
        %6608 = vmatprep.mubr.f32.mxu0 0.0
        %6609 = vmatmul.mubr.f32.gmra.mrb[0].mxu0 %v6403
        %v6610 = vpop.f32.mrb[0].mxu0
        %v6611 = vadd.f32 0.0, %v6610
        %v6612 = vpop.f32.mrb[0].mxu0
        %6613 = vmatprep.mubr.f32.mxu0 0.0
        %6614 = vmatmul.mubr.f32.gmra.mrb[0].mxu0 %v6406
        %v6615 = vpop.f32.mrb[0].mxu0
        %v6616 = vadd.f32 0.0, %v6615
        %v6617 = vpop.f32.mrb[0].mxu0
        %6618 = vmatprep.mubr.f32.mxu0 0.0
        %6619 = vmatmul.mubr.f32.gmra.mrb[0].mxu0 %v6409
        %v6620 = vpop.f32.mrb[0].mxu0
        %v6621 = vadd.f32 0.0, %v6620
        %v6622 = vpop.f32.mrb[0].mxu0
        %6623 = vmatprep.mubr.f32.mxu0 0.0
        %6624 = vmatmul.mubr.f32.gmra.mrb[0].mxu0 %v6412
        %v6625 = vpop.f32.mrb[0].mxu0
        %v6626 = vadd.f32 0.0, %v6625
        %v6627 = vpop.f32.mrb[0].mxu0
        %6628 = vmatprep.mubr.f32.mxu0 0.0
        %6629 = vmatmul.mubr.f32.gmra.mrb[0].mxu0 %v6415
        %v6630 = vpop.f32.mrb[0].mxu0
        %v6631 = vadd.f32 0.0, %v6630
        %v6632 = vpop.f32.mrb[0].mxu0
        %6633 = vmatprep.mubr.f32.mxu0 0.0
        %6634 = vmatmul.mubr.f32.gmra.mrb[0].mxu0 %v6418
        %v6635 = vpop.f32.mrb[0].mxu0
        %v6636 = vadd.f32 0.0, %v6635
        %v6637 = vpop.f32.mrb[0].mxu0
        %6638 = vmatprep.mubr.f32.mxu0 0.0
        %6639 = vmatmul.mubr.f32.gmra.mrb[0].mxu0 %v6421
        %v6640 = vpop.f32.mrb[0].mxu0
        %v6641 = vadd.f32 0.0, %v6640
        %v6642 = vpop.f32.mrb[0].mxu0
        %6643 = vmatprep.mubr.f32.mxu0 0.0
        %6644 = vmatmul.mubr.f32.gmra.mrb[0].mxu0 %v6424
        %v6645 = vpop.f32.mrb[0].mxu0
        %v6646 = vadd.f32 0.0, %v6645
        %v6647 = vpop.f32.mrb[0].mxu0
        %6648 = vmatprep.mubr.f32.mxu0 0.0
        %6649 = vmatmul.mubr.f32.gmra.mrb[0].mxu0 %v6427
        %v6650 = vpop.f32.mrb[0].mxu0
        %v6651 = vadd.f32 0.0, %v6650
        %v6652 = vpop.f32.mrb[0].mxu0
        %6653 = vdwg.mxu0
        %v6655 = vsel %vm3173, %v6270, 0
        %v6658 = vsel %vm3173, %v6271, 0
        %6660 = vmatprep.subr.mxu0 0.0
        %6661 = vmatpush1.msra.mxu0 %v6324
        %6662 = vmatprep.subr.mxu0 0.0
        %6663 = vmatpush1.msra.mxu0 %v6325
        %6664 = vmatprep.subr.mxu0 0.0
        %6665 = vmatpush1.msra.mxu0 %v6326
        %6666 = vmatprep.subr.mxu0 0.0
        %6667 = vmatpush1.msra.mxu0 %v6327
        %6668 = vmatprep.subr.mxu0 0.0
        %6669 = vmatpush1.msra.mxu0 0.0
        %6670 = vmatprep.subr.mxu0 0.0
        %6671 = vmatpush1.msra.mxu0 0.0
        %6672 = vmatprep.subr.mxu0 0.0
        %6673 = vmatpush1.msra.mxu0 0.0
        %6674 = vmatprep.subr.mxu0 0.0
        %6675 = vmatpush1.msra.mxu0 0.0
        %6676 = vmatprep.subr.mxu0 0.0
        %6677 = vmatpush1.msra.mxu0 0.0
        %6678 = vmatprep.subr.mxu0 0.0
        %6679 = vmatpush1.msra.mxu0 0.0
        %6680 = vmatprep.subr.mxu0 0.0
        %6681 = vmatpush1.msra.mxu0 0.0
        %6682 = vmatprep.subr.mxu0 0.0
        %6683 = vmatpush1.msra.mxu0 0.0
        %6684 = vmatprep.subr.mxu0 0.0
        %6685 = vmatpush1.msra.mxu0 0.0
        %6686 = vmatprep.subr.mxu0 0.0
        %6687 = vmatpush1.msra.mxu0 0.0
        %6688 = vmatprep.subr.mxu0 0.0
        %6689 = vmatpush1.msra.mxu0 0.0
        %6690 = vmatprep.subr.mxu0 0.0
        %6691 = vmatpush1.msra.mxu0 0.0
        %6692 = vmatprep.subr.mxu0 0.0
        %6693 = vmatpush1.msra.mxu0 0.0
        %6694 = vmatprep.subr.mxu0 0.0
        %6695 = vmatpush1.msra.mxu0 0.0
        %6696 = vmatprep.subr.mxu0 0.0
        %6697 = vmatpush1.msra.mxu0 0.0
        %6698 = vmatprep.subr.mxu0 0.0
        %6699 = vmatpush1.msra.mxu0 0.0
        %6700 = vmatprep.subr.mxu0 0.0
        %6701 = vmatpush1.msra.mxu0 0.0
        %6702 = vmatprep.subr.mxu0 0.0
        %6703 = vmatpush1.msra.mxu0 0.0
        %6704 = vmatprep.subr.mxu0 0.0
        %6705 = vmatpush1.msra.mxu0 0.0
        %6706 = vmatprep.subr.mxu0 0.0
        %6707 = vmatpush1.msra.mxu0 0.0
        %6708 = vmatprep.subr.mxu0 0.0
        %6709 = vmatpush1.msra.mxu0 0.0
        %6710 = vmatprep.subr.mxu0 0.0
        %6711 = vmatpush1.msra.mxu0 0.0
        %6712 = vmatprep.subr.mxu0 0.0
        %6713 = vmatpush1.msra.mxu0 0.0
        %6714 = vmatprep.subr.mxu0 0.0
        %6715 = vmatpush1.msra.mxu0 0.0
        %6716 = vmatprep.subr.mxu0 0.0
        %6717 = vmatpush1.msra.mxu0 0.0
        %6718 = vmatprep.subr.mxu0 0.0
        %6719 = vmatpush1.msra.mxu0 0.0
        %6720 = vmatprep.subr.mxu0 0.0
        %6721 = vmatpush1.msra.mxu0 0.0
        %6722 = vmatprep.subr.mxu0 0.0
        %6723 = vmatpush1.msra.mxu0 0.0
        %6724 = vmatprep.mubr.f32.mxu0 0.0
        %6725 = vmatmul.mubr.f32.gmra.mrb[0].mxu0 %v6655
        %v6726 = vpop.f32.mrb[0].mxu0
        %v6727 = vadd.f32 %v6496, %v6726
        %v6728 = vpop.f32.mrb[0].mxu0
        %6729 = vmatprep.mubr.f32.mxu0 0.0
        %6730 = vmatmul.mubr.f32.gmra.mrb[0].mxu0 %v6658
        %v6731 = vpop.f32.mrb[0].mxu0
        %v6732 = vadd.f32 %v6501, %v6731
        %v6733 = vpop.f32.mrb[0].mxu0
        %6734 = vmatprep.mubr.f32.mxu0 0.0
        %6735 = vmatmul.mubr.f32.gmra.mrb[0].mxu0 %v6334
        %v6736 = vpop.f32.mrb[0].mxu0
        %v6737 = vadd.f32 %v6506, %v6736
        %v6738 = vpop.f32.mrb[0].mxu0
        %6739 = vmatprep.mubr.f32.mxu0 0.0
        %6740 = vmatmul.mubr.f32.gmra.mrb[0].mxu0 %v6337
        %v6741 = vpop.f32.mrb[0].mxu0
        %v6742 = vadd.f32 %v6511, %v6741
        %v6743 = vpop.f32.mrb[0].mxu0
        %6744 = vmatprep.mubr.f32.mxu0 0.0
        %6745 = vmatmul.mubr.f32.gmra.mrb[0].mxu0 %v6340
        %v6746 = vpop.f32.mrb[0].mxu0
        %v6747 = vadd.f32 %v6516, %v6746
        %v6748 = vpop.f32.mrb[0].mxu0
        %6749 = vmatprep.mubr.f32.mxu0 0.0
        %6750 = vmatmul.mubr.f32.gmra.mrb[0].mxu0 %v6343
        %v6751 = vpop.f32.mrb[0].mxu0
        %v6752 = vadd.f32 %v6521, %v6751
        %v6753 = vpop.f32.mrb[0].mxu0
        %6754 = vmatprep.mubr.f32.mxu0 0.0
        %6755 = vmatmul.mubr.f32.gmra.mrb[0].mxu0 %v6346
        %v6756 = vpop.f32.mrb[0].mxu0
        %v6757 = vadd.f32 %v6526, %v6756
        %v6758 = vpop.f32.mrb[0].mxu0
        %6759 = vmatprep.mubr.f32.mxu0 0.0
        %6760 = vmatmul.mubr.f32.gmra.mrb[0].mxu0 %v6349
        %v6761 = vpop.f32.mrb[0].mxu0
        %v6762 = vadd.f32 %v6531, %v6761
        %v6763 = vpop.f32.mrb[0].mxu0
        %6764 = vmatprep.mubr.f32.mxu0 0.0
        %6765 = vmatmul.mubr.f32.gmra.mrb[0].mxu0 %v6352
        %v6766 = vpop.f32.mrb[0].mxu0
        %v6767 = vadd.f32 %v6536, %v6766
        %v6768 = vpop.f32.mrb[0].mxu0
        %6769 = vmatprep.mubr.f32.mxu0 0.0
        %6770 = vmatmul.mubr.f32.gmra.mrb[0].mxu0 %v6355
        %v6771 = vpop.f32.mrb[0].mxu0
        %v6772 = vadd.f32 %v6541, %v6771
        %v6773 = vpop.f32.mrb[0].mxu0
        %6774 = vmatprep.mubr.f32.mxu0 0.0
        %6775 = vmatmul.mubr.f32.gmra.mrb[0].mxu0 %v6358
        %v6776 = vpop.f32.mrb[0].mxu0
        %v6777 = vadd.f32 %v6546, %v6776
        %v6778 = vpop.f32.mrb[0].mxu0
        %6779 = vmatprep.mubr.f32.mxu0 0.0
        %6780 = vmatmul.mubr.f32.gmra.mrb[0].mxu0 %v6361
        %v6781 = vpop.f32.mrb[0].mxu0
        %v6782 = vadd.f32 %v6551, %v6781
        %v6783 = vpop.f32.mrb[0].mxu0
        %6784 = vmatprep.mubr.f32.mxu0 0.0
        %6785 = vmatmul.mubr.f32.gmra.mrb[0].mxu0 %v6364
        %v6786 = vpop.f32.mrb[0].mxu0
        %v6787 = vadd.f32 %v6556, %v6786
        %v6788 = vpop.f32.mrb[0].mxu0
        %6789 = vmatprep.mubr.f32.mxu0 0.0
        %6790 = vmatmul.mubr.f32.gmra.mrb[0].mxu0 %v6367
        %v6791 = vpop.f32.mrb[0].mxu0
        %v6792 = vadd.f32 %v6561, %v6791
        %v6793 = vpop.f32.mrb[0].mxu0
        %6794 = vmatprep.mubr.f32.mxu0 0.0
        %6795 = vmatmul.mubr.f32.gmra.mrb[0].mxu0 %v6370
        %v6796 = vpop.f32.mrb[0].mxu0
        %v6797 = vadd.f32 %v6566, %v6796
        %v6798 = vpop.f32.mrb[0].mxu0
        %6799 = vmatprep.mubr.f32.mxu0 0.0
        %6800 = vmatmul.mubr.f32.gmra.mrb[0].mxu0 %v6373
        %v6801 = vpop.f32.mrb[0].mxu0
        %v6802 = vadd.f32 %v6571, %v6801
        %v6803 = vpop.f32.mrb[0].mxu0
        %6804 = vmatprep.mubr.f32.mxu0 0.0
        %6805 = vmatmul.mubr.f32.gmra.mrb[0].mxu0 %v6376
        %v6806 = vpop.f32.mrb[0].mxu0
        %v6807 = vadd.f32 %v6576, %v6806
        %v6808 = vpop.f32.mrb[0].mxu0
        %6809 = vmatprep.mubr.f32.mxu0 0.0
        %6810 = vmatmul.mubr.f32.gmra.mrb[0].mxu0 %v6379
        %v6811 = vpop.f32.mrb[0].mxu0
        %v6812 = vadd.f32 %v6581, %v6811
        %v6813 = vpop.f32.mrb[0].mxu0
        %6814 = vmatprep.mubr.f32.mxu0 0.0
        %6815 = vmatmul.mubr.f32.gmra.mrb[0].mxu0 %v6382
        %v6816 = vpop.f32.mrb[0].mxu0
        %v6817 = vadd.f32 %v6586, %v6816
        %v6818 = vpop.f32.mrb[0].mxu0
        %6819 = vmatprep.mubr.f32.mxu0 0.0
        %6820 = vmatmul.mubr.f32.gmra.mrb[0].mxu0 %v6385
        %v6821 = vpop.f32.mrb[0].mxu0
        %v6822 = vadd.f32 %v6591, %v6821
        %v6823 = vpop.f32.mrb[0].mxu0
        %6824 = vmatprep.mubr.f32.mxu0 0.0
        %6825 = vmatmul.mubr.f32.gmra.mrb[0].mxu0 %v6388
        %v6826 = vpop.f32.mrb[0].mxu0
        %v6827 = vadd.f32 %v6596, %v6826
        %v6828 = vpop.f32.mrb[0].mxu0
        %6829 = vmatprep.mubr.f32.mxu0 0.0
        %6830 = vmatmul.mubr.f32.gmra.mrb[0].mxu0 %v6391
        %v6831 = vpop.f32.mrb[0].mxu0
        %v6832 = vadd.f32 %v6601, %v6831
        %v6833 = vpop.f32.mrb[0].mxu0
        %6834 = vmatprep.mubr.f32.mxu0 0.0
        %6835 = vmatmul.mubr.f32.gmra.mrb[0].mxu0 %v6394
        %v6836 = vpop.f32.mrb[0].mxu0
        %v6837 = vadd.f32 %v6606, %v6836
        %v6838 = vpop.f32.mrb[0].mxu0
        %6839 = vmatprep.mubr.f32.mxu0 0.0
        %6840 = vmatmul.mubr.f32.gmra.mrb[0].mxu0 %v6397
        %v6841 = vpop.f32.mrb[0].mxu0
        %v6842 = vadd.f32 %v6611, %v6841
        %v6843 = vpop.f32.mrb[0].mxu0
        %6844 = vmatprep.mubr.f32.mxu0 0.0
        %6845 = vmatmul.mubr.f32.gmra.mrb[0].mxu0 %v6400
        %v6846 = vpop.f32.mrb[0].mxu0
        %v6847 = vadd.f32 %v6616, %v6846
        %v6848 = vpop.f32.mrb[0].mxu0
        %6849 = vmatprep.mubr.f32.mxu0 0.0
        %6850 = vmatmul.mubr.f32.gmra.mrb[0].mxu0 %v6403
        %v6851 = vpop.f32.mrb[0].mxu0
        %v6852 = vadd.f32 %v6621, %v6851
        %v6853 = vpop.f32.mrb[0].mxu0
        %6854 = vmatprep.mubr.f32.mxu0 0.0
        %6855 = vmatmul.mubr.f32.gmra.mrb[0].mxu0 %v6406
        %v6856 = vpop.f32.mrb[0].mxu0
        %v6857 = vadd.f32 %v6626, %v6856
        %v6858 = vpop.f32.mrb[0].mxu0
        %6859 = vmatprep.mubr.f32.mxu0 0.0
        %6860 = vmatmul.mubr.f32.gmra.mrb[0].mxu0 %v6409
        %v6861 = vpop.f32.mrb[0].mxu0
        %v6862 = vadd.f32 %v6631, %v6861
        %v6863 = vpop.f32.mrb[0].mxu0
        %6864 = vmatprep.mubr.f32.mxu0 0.0
        %6865 = vmatmul.mubr.f32.gmra.mrb[0].mxu0 %v6412
        %v6866 = vpop.f32.mrb[0].mxu0
        %v6867 = vadd.f32 %v6636, %v6866
        %v6868 = vpop.f32.mrb[0].mxu0
        %6869 = vmatprep.mubr.f32.mxu0 0.0
        %6870 = vmatmul.mubr.f32.gmra.mrb[0].mxu0 %v6415
        %v6871 = vpop.f32.mrb[0].mxu0
        %v6872 = vadd.f32 %v6641, %v6871
        %v6873 = vpop.f32.mrb[0].mxu0
        %6874 = vmatprep.mubr.f32.mxu0 0.0
        %6875 = vmatmul.mubr.f32.gmra.mrb[0].mxu0 %v6418
        %v6876 = vpop.f32.mrb[0].mxu0
        %v6877 = vadd.f32 %v6646, %v6876
        %v6878 = vpop.f32.mrb[0].mxu0
        %6879 = vmatprep.mubr.f32.mxu0 0.0
        %6880 = vmatmul.mubr.f32.gmra.mrb[0].mxu0 %v6421
        %v6881 = vpop.f32.mrb[0].mxu0
        %v6882 = vadd.f32 %v6651, %v6881
        %v6883 = vpop.f32.mrb[0].mxu0
        %6884 = vdwg.mxu0
        %s6885 = scalar_lea.vmem %s4, 192
        %v6886 = vld [vmem:[%s6885] sm:$0xff]
        %v6887 = vld [vmem:[%s6885 + $0x8] sm:$0xff]
        %v6888 = vld [vmem:[%s6885 + $0x10] sm:$0xff]
        %v6889 = vld [vmem:[%s6885 + $0x18] sm:$0xff]
        %v6891 = vsel %vm3173, %v6321, 0
        %v6894 = vsel %vm3173, %v6322, 0
        %6896 = vmatprep.subr.mxu0 0.0
        %6897 = vmatpush1.msra.mxu0 %v6886
        %6898 = vmatprep.subr.mxu0 0.0
        %6899 = vmatpush1.msra.mxu0 %v6887
        %6900 = vmatprep.subr.mxu0 0.0
        %6901 = vmatpush1.msra.mxu0 %v6888
        %6902 = vmatprep.subr.mxu0 0.0
        %6903 = vmatpush1.msra.mxu0 %v6889
        %6904 = vmatprep.subr.mxu0 0.0
        %6905 = vmatpush1.msra.mxu0 0.0
        %6906 = vmatprep.subr.mxu0 0.0
        %6907 = vmatpush1.msra.mxu0 0.0
        %6908 = vmatprep.subr.mxu0 0.0
        %6909 = vmatpush1.msra.mxu0 0.0
        %6910 = vmatprep.subr.mxu0 0.0
        %6911 = vmatpush1.msra.mxu0 0.0
        %6912 = vmatprep.subr.mxu0 0.0
        %6913 = vmatpush1.msra.mxu0 0.0
        %6914 = vmatprep.subr.mxu0 0.0
        %6915 = vmatpush1.msra.mxu0 0.0
        %6916 = vmatprep.subr.mxu0 0.0
        %6917 = vmatpush1.msra.mxu0 0.0
        %6918 = vmatprep.subr.mxu0 0.0
        %6919 = vmatpush1.msra.mxu0 0.0
        %6920 = vmatprep.subr.mxu0 0.0
        %6921 = vmatpush1.msra.mxu0 0.0
        %6922 = vmatprep.subr.mxu0 0.0
        %6923 = vmatpush1.msra.mxu0 0.0
        %6924 = vmatprep.subr.mxu0 0.0
        %6925 = vmatpush1.msra.mxu0 0.0
        %6926 = vmatprep.subr.mxu0 0.0
        %6927 = vmatpush1.msra.mxu0 0.0
        %6928 = vmatprep.subr.mxu0 0.0
        %6929 = vmatpush1.msra.mxu0 0.0
        %6930 = vmatprep.subr.mxu0 0.0
        %6931 = vmatpush1.msra.mxu0 0.0
        %6932 = vmatprep.subr.mxu0 0.0
        %6933 = vmatpush1.msra.mxu0 0.0
        %6934 = vmatprep.subr.mxu0 0.0
        %6935 = vmatpush1.msra.mxu0 0.0
        %6936 = vmatprep.subr.mxu0 0.0
        %6937 = vmatpush1.msra.mxu0 0.0
        %6938 = vmatprep.subr.mxu0 0.0
        %6939 = vmatpush1.msra.mxu0 0.0
        %6940 = vmatprep.subr.mxu0 0.0
        %6941 = vmatpush1.msra.mxu0 0.0
        %6942 = vmatprep.subr.mxu0 0.0
        %6943 = vmatpush1.msra.mxu0 0.0
        %6944 = vmatprep.subr.mxu0 0.0
        %6945 = vmatpush1.msra.mxu0 0.0
        %6946 = vmatprep.subr.mxu0 0.0
        %6947 = vmatpush1.msra.mxu0 0.0
        %6948 = vmatprep.subr.mxu0 0.0
        %6949 = vmatpush1.msra.mxu0 0.0
        %6950 = vmatprep.subr.mxu0 0.0
        %6951 = vmatpush1.msra.mxu0 0.0
        %6952 = vmatprep.subr.mxu0 0.0
        %6953 = vmatpush1.msra.mxu0 0.0
        %6954 = vmatprep.subr.mxu0 0.0
        %6955 = vmatpush1.msra.mxu0 0.0
        %6956 = vmatprep.subr.mxu0 0.0
        %6957 = vmatpush1.msra.mxu0 0.0
        %6958 = vmatprep.subr.mxu0 0.0
        %6959 = vmatpush1.msra.mxu0 0.0
        %6960 = vmatprep.mubr.f32.mxu0 0.0
        %6961 = vmatmul.mubr.f32.gmra.mrb[0].mxu0 %v6340
        %v6962 = vpop.f32.mrb[0].mxu0
        %v6963 = vadd.f32 0.0, %v6962
        %v6964 = vpop.f32.mrb[0].mxu0
        %6965 = vmatprep.mubr.f32.mxu0 0.0
        %6966 = vmatmul.mubr.f32.gmra.mrb[0].mxu0 %v6343
        %v6967 = vpop.f32.mrb[0].mxu0
        %v6968 = vadd.f32 0.0, %v6967
        %v6969 = vpop.f32.mrb[0].mxu0
        %6970 = vmatprep.mubr.f32.mxu0 0.0
        %6971 = vmatmul.mubr.f32.gmra.mrb[0].mxu0 %v6346
        %v6972 = vpop.f32.mrb[0].mxu0
        %v6973 = vadd.f32 0.0, %v6972
        %v6974 = vpop.f32.mrb[0].mxu0
        %6975 = vmatprep.mubr.f32.mxu0 0.0
        %6976 = vmatmul.mubr.f32.gmra.mrb[0].mxu0 %v6349
        %v6977 = vpop.f32.mrb[0].mxu0
        %v6978 = vadd.f32 0.0, %v6977
        %v6979 = vpop.f32.mrb[0].mxu0
        %6980 = vmatprep.mubr.f32.mxu0 0.0
        %6981 = vmatmul.mubr.f32.gmra.mrb[0].mxu0 %v6352
        %v6982 = vpop.f32.mrb[0].mxu0
        %v6983 = vadd.f32 0.0, %v6982
        %v6984 = vpop.f32.mrb[0].mxu0
        %6985 = vmatprep.mubr.f32.mxu0 0.0
        %6986 = vmatmul.mubr.f32.gmra.mrb[0].mxu0 %v6355
        %v6987 = vpop.f32.mrb[0].mxu0
        %v6988 = vadd.f32 0.0, %v6987
        %v6989 = vpop.f32.mrb[0].mxu0
        %6990 = vmatprep.mubr.f32.mxu0 0.0
        %6991 = vmatmul.mubr.f32.gmra.mrb[0].mxu0 %v6358
        %v6992 = vpop.f32.mrb[0].mxu0
        %v6993 = vadd.f32 0.0, %v6992
        %v6994 = vpop.f32.mrb[0].mxu0
        %6995 = vmatprep.mubr.f32.mxu0 0.0
        %6996 = vmatmul.mubr.f32.gmra.mrb[0].mxu0 %v6361
        %v6997 = vpop.f32.mrb[0].mxu0
        %v6998 = vadd.f32 0.0, %v6997
        %v6999 = vpop.f32.mrb[0].mxu0
        %7000 = vmatprep.mubr.f32.mxu0 0.0
        %7001 = vmatmul.mubr.f32.gmra.mrb[0].mxu0 %v6364
        %v7002 = vpop.f32.mrb[0].mxu0
        %v7003 = vadd.f32 0.0, %v7002
        %v7004 = vpop.f32.mrb[0].mxu0
        %7005 = vmatprep.mubr.f32.mxu0 0.0
        %7006 = vmatmul.mubr.f32.gmra.mrb[0].mxu0 %v6367
        %v7007 = vpop.f32.mrb[0].mxu0
        %v7008 = vadd.f32 0.0, %v7007
        %v7009 = vpop.f32.mrb[0].mxu0
        %7010 = vmatprep.mubr.f32.mxu0 0.0
        %7011 = vmatmul.mubr.f32.gmra.mrb[0].mxu0 %v6370
        %v7012 = vpop.f32.mrb[0].mxu0
        %v7013 = vadd.f32 0.0, %v7012
        %v7014 = vpop.f32.mrb[0].mxu0
        %7015 = vmatprep.mubr.f32.mxu0 0.0
        %7016 = vmatmul.mubr.f32.gmra.mrb[0].mxu0 %v6373
        %v7017 = vpop.f32.mrb[0].mxu0
        %v7018 = vadd.f32 0.0, %v7017
        %v7019 = vpop.f32.mrb[0].mxu0
        %7020 = vmatprep.mubr.f32.mxu0 0.0
        %7021 = vmatmul.mubr.f32.gmra.mrb[0].mxu0 %v6376
        %v7022 = vpop.f32.mrb[0].mxu0
        %v7023 = vadd.f32 0.0, %v7022
        %v7024 = vpop.f32.mrb[0].mxu0
        %7025 = vmatprep.mubr.f32.mxu0 0.0
        %7026 = vmatmul.mubr.f32.gmra.mrb[0].mxu0 %v6379
        %v7027 = vpop.f32.mrb[0].mxu0
        %v7028 = vadd.f32 0.0, %v7027
        %v7029 = vpop.f32.mrb[0].mxu0
        %7030 = vmatprep.mubr.f32.mxu0 0.0
        %7031 = vmatmul.mubr.f32.gmra.mrb[0].mxu0 %v6382
        %v7032 = vpop.f32.mrb[0].mxu0
        %v7033 = vadd.f32 0.0, %v7032
        %v7034 = vpop.f32.mrb[0].mxu0
        %7035 = vmatprep.mubr.f32.mxu0 0.0
        %7036 = vmatmul.mubr.f32.gmra.mrb[0].mxu0 %v6385
        %v7037 = vpop.f32.mrb[0].mxu0
        %v7038 = vadd.f32 0.0, %v7037
        %v7039 = vpop.f32.mrb[0].mxu0
        %7040 = vmatprep.mubr.f32.mxu0 0.0
        %7041 = vmatmul.mubr.f32.gmra.mrb[0].mxu0 %v6388
        %v7042 = vpop.f32.mrb[0].mxu0
        %v7043 = vadd.f32 0.0, %v7042
        %v7044 = vpop.f32.mrb[0].mxu0
        %7045 = vmatprep.mubr.f32.mxu0 0.0
        %7046 = vmatmul.mubr.f32.gmra.mrb[0].mxu0 %v6391
        %v7047 = vpop.f32.mrb[0].mxu0
        %v7048 = vadd.f32 0.0, %v7047
        %v7049 = vpop.f32.mrb[0].mxu0
        %7050 = vmatprep.mubr.f32.mxu0 0.0
        %7051 = vmatmul.mubr.f32.gmra.mrb[0].mxu0 %v6394
        %v7052 = vpop.f32.mrb[0].mxu0
        %v7053 = vadd.f32 0.0, %v7052
        %v7054 = vpop.f32.mrb[0].mxu0
        %7055 = vmatprep.mubr.f32.mxu0 0.0
        %7056 = vmatmul.mubr.f32.gmra.mrb[0].mxu0 %v6397
        %v7057 = vpop.f32.mrb[0].mxu0
        %v7058 = vadd.f32 0.0, %v7057
        %v7059 = vpop.f32.mrb[0].mxu0
        %7060 = vmatprep.mubr.f32.mxu0 0.0
        %7061 = vmatmul.mubr.f32.gmra.mrb[0].mxu0 %v6400
        %v7062 = vpop.f32.mrb[0].mxu0
        %v7063 = vadd.f32 0.0, %v7062
        %v7064 = vpop.f32.mrb[0].mxu0
        %7065 = vmatprep.mubr.f32.mxu0 0.0
        %7066 = vmatmul.mubr.f32.gmra.mrb[0].mxu0 %v6403
        %v7067 = vpop.f32.mrb[0].mxu0
        %v7068 = vadd.f32 0.0, %v7067
        %v7069 = vpop.f32.mrb[0].mxu0
        %7070 = vmatprep.mubr.f32.mxu0 0.0
        %7071 = vmatmul.mubr.f32.gmra.mrb[0].mxu0 %v6406
        %v7072 = vpop.f32.mrb[0].mxu0
        %v7073 = vadd.f32 0.0, %v7072
        %v7074 = vpop.f32.mrb[0].mxu0
        %7075 = vmatprep.mubr.f32.mxu0 0.0
        %7076 = vmatmul.mubr.f32.gmra.mrb[0].mxu0 %v6409
        %v7077 = vpop.f32.mrb[0].mxu0
        %v7078 = vadd.f32 0.0, %v7077
        %v7079 = vpop.f32.mrb[0].mxu0
        %7080 = vmatprep.mubr.f32.mxu0 0.0
        %7081 = vmatmul.mubr.f32.gmra.mrb[0].mxu0 %v6412
        %v7082 = vpop.f32.mrb[0].mxu0
        %v7083 = vadd.f32 0.0, %v7082
        %v7084 = vpop.f32.mrb[0].mxu0
        %7085 = vmatprep.mubr.f32.mxu0 0.0
        %7086 = vmatmul.mubr.f32.gmra.mrb[0].mxu0 %v6415
        %v7087 = vpop.f32.mrb[0].mxu0
        %v7088 = vadd.f32 0.0, %v7087
        %v7089 = vpop.f32.mrb[0].mxu0
        %7090 = vmatprep.mubr.f32.mxu0 0.0
        %7091 = vmatmul.mubr.f32.gmra.mrb[0].mxu0 %v6418
        %v7092 = vpop.f32.mrb[0].mxu0
        %v7093 = vadd.f32 0.0, %v7092
        %v7094 = vpop.f32.mrb[0].mxu0
        %7095 = vmatprep.mubr.f32.mxu0 0.0
        %7096 = vmatmul.mubr.f32.gmra.mrb[0].mxu0 %v6421
        %v7097 = vpop.f32.mrb[0].mxu0
        %v7098 = vadd.f32 0.0, %v7097
        %v7099 = vpop.f32.mrb[0].mxu0
        %7100 = vmatprep.mubr.f32.mxu0 0.0
        %7101 = vmatmul.mubr.f32.gmra.mrb[0].mxu0 %v6424
        %v7102 = vpop.f32.mrb[0].mxu0
        %v7103 = vadd.f32 0.0, %v7102
        %v7104 = vpop.f32.mrb[0].mxu0
        %7105 = vmatprep.mubr.f32.mxu0 0.0
        %7106 = vmatmul.mubr.f32.gmra.mrb[0].mxu0 %v6427
        %v7107 = vpop.f32.mrb[0].mxu0
        %v7108 = vadd.f32 0.0, %v7107
        %v7109 = vpop.f32.mrb[0].mxu0
        %7110 = vmatprep.mubr.f32.mxu0 0.0
        %7111 = vmatmul.mubr.f32.gmra.mrb[0].mxu0 %v6891
        %v7112 = vpop.f32.mrb[0].mxu0
        %v7113 = vadd.f32 0.0, %v7112
        %v7114 = vpop.f32.mrb[0].mxu0
        %7115 = vmatprep.mubr.f32.mxu0 0.0
        %7116 = vmatmul.mubr.f32.gmra.mrb[0].mxu0 %v6894
        %v7117 = vpop.f32.mrb[0].mxu0
        %v7118 = vadd.f32 0.0, %v7117
        %v7119 = vpop.f32.mrb[0].mxu0
        %7120 = vdwg.mxu0
        %v7121 = vadd.f32 %v6727, %v6963
        %v7122 = vadd.f32 %v6732, %v6968
        %v7123 = vadd.f32 %v6737, %v6973
        %v7124 = vadd.f32 %v6742, %v6978
        %v7125 = vadd.f32 %v6747, %v6983
        %v7126 = vadd.f32 %v6752, %v6988
        %v7127 = vadd.f32 %v6757, %v6993
        %v7128 = vadd.f32 %v6762, %v6998
        %v7129 = vadd.f32 %v6767, %v7003
        %v7130 = vadd.f32 %v6772, %v7008
        %v7131 = vadd.f32 %v6777, %v7013
        %v7132 = vadd.f32 %v6782, %v7018
        %v7133 = vadd.f32 %v6787, %v7023
        %v7134 = vadd.f32 %v6792, %v7028
        %v7135 = vadd.f32 %v6797, %v7033
        %v7136 = vadd.f32 %v6802, %v7038
        %v7137 = vadd.f32 %v6807, %v7043
        %v7138 = vadd.f32 %v6812, %v7048
        %v7139 = vadd.f32 %v6817, %v7053
        %v7140 = vadd.f32 %v6822, %v7058
        %v7141 = vadd.f32 %v6827, %v7063
        %v7142 = vadd.f32 %v6832, %v7068
        %v7143 = vadd.f32 %v6837, %v7073
        %v7144 = vadd.f32 %v6842, %v7078
        %v7145 = vadd.f32 %v6847, %v7083
        %v7146 = vadd.f32 %v6852, %v7088
        %v7147 = vadd.f32 %v6857, %v7093
        %v7148 = vadd.f32 %v6862, %v7098
        %v7149 = vadd.f32 %v6867, %v7103
        %v7150 = vadd.f32 %v6872, %v7108
        %v7151 = vadd.f32 %v6877, %v7113
        %v7152 = vadd.f32 %v6882, %v7118
        %v7169 = vrot.slane %v6270, 1
        %v7170 = vrot.slane %v6271, 1
        %v7171 = vsel %vm1225, %v7169, %v7170
        %v7172 = vrot.slane %v6272, 1
        %v7173 = vsel %vm1225, %v7170, %v7172
        %v7174 = vrot.slane %v6273, 1
        %v7175 = vrot.slane %v6274, 1
        %v7176 = vsel %vm1225, %v7174, %v7175
        %v7177 = vrot.slane %v6275, 1
        %v7178 = vsel %vm1225, %v7175, %v7177
        %v7179 = vrot.slane %v6276, 1
        %v7180 = vrot.slane %v6277, 1
        %v7181 = vsel %vm1225, %v7179, %v7180
        %v7182 = vrot.slane %v6278, 1
        %v7183 = vsel %vm1225, %v7180, %v7182
        %v7184 = vrot.slane %v6279, 1
        %v7185 = vrot.slane %v6280, 1
        %v7186 = vsel %vm1225, %v7184, %v7185
        %v7187 = vrot.slane %v6281, 1
        %v7188 = vsel %vm1225, %v7185, %v7187
        %v7189 = vrot.slane %v6282, 1
        %v7190 = vrot.slane %v6283, 1
        %v7191 = vsel %vm1225, %v7189, %v7190
        %v7192 = vrot.slane %v6284, 1
        %v7193 = vsel %vm1225, %v7190, %v7192
        %v7194 = vrot.slane %v6285, 1
        %v7195 = vrot.slane %v6286, 1
        %v7196 = vsel %vm1225, %v7194, %v7195
        %v7197 = vrot.slane %v6287, 1
        %v7198 = vsel %vm1225, %v7195, %v7197
        %v7199 = vrot.slane %v6288, 1
        %v7200 = vrot.slane %v6289, 1
        %v7201 = vsel %vm1225, %v7199, %v7200
        %v7202 = vrot.slane %v6290, 1
        %v7203 = vsel %vm1225, %v7200, %v7202
        %v7204 = vrot.slane %v6291, 1
        %v7205 = vrot.slane %v6292, 1
        %v7206 = vsel %vm1225, %v7204, %v7205
        %v7207 = vrot.slane %v6293, 1
        %v7208 = vsel %vm1225, %v7205, %v7207
        %v7209 = vrot.slane %v6294, 1
        %v7210 = vrot.slane %v6295, 1
        %v7211 = vsel %vm1225, %v7209, %v7210
        %v7212 = vrot.slane %v6296, 1
        %v7213 = vsel %vm1225, %v7210, %v7212
        %v7214 = vrot.slane %v6297, 1
        %v7215 = vrot.slane %v6298, 1
        %v7216 = vsel %vm1225, %v7214, %v7215
        %v7217 = vrot.slane %v6299, 1
        %v7218 = vsel %vm1225, %v7215, %v7217
        %v7219 = vrot.slane %v6300, 1
        %v7220 = vrot.slane %v6301, 1
        %v7221 = vsel %vm1225, %v7219, %v7220
        %v7222 = vrot.slane %v6302, 1
        %v7223 = vsel %vm1225, %v7220, %v7222
        %v7224 = vrot.slane %v6303, 1
        %v7225 = vrot.slane %v6304, 1
        %v7226 = vsel %vm1225, %v7224, %v7225
        %v7227 = vrot.slane %v6305, 1
        %v7228 = vsel %vm1225, %v7225, %v7227
        %v7229 = vrot.slane %v6306, 1
        %v7230 = vrot.slane %v6307, 1
        %v7231 = vsel %vm1225, %v7229, %v7230
        %v7232 = vrot.slane %v6308, 1
        %v7233 = vsel %vm1225, %v7230, %v7232
        %v7234 = vrot.slane %v6309, 1
        %v7235 = vrot.slane %v6310, 1
        %v7236 = vsel %vm1225, %v7234, %v7235
        %v7237 = vrot.slane %v6311, 1
        %v7238 = vsel %vm1225, %v7235, %v7237
        %v7239 = vrot.slane %v6312, 1
        %v7240 = vrot.slane %v6313, 1
        %v7241 = vsel %vm1225, %v7239, %v7240
        %v7242 = vrot.slane %v6314, 1
        %v7243 = vsel %vm1225, %v7240, %v7242
        %v7244 = vrot.slane %v6315, 1
        %v7245 = vrot.slane %v6316, 1
        %v7246 = vsel %vm1225, %v7244, %v7245
        %v7247 = vrot.slane %v6317, 1
        %v7248 = vsel %vm1225, %v7245, %v7247
        %s7249 = scalar_lea.vmem %s4, 32
        %v7250 = vld [vmem:[%s7249] sm:$0xff]
        %v7251 = vld [vmem:[%s7249 + $0x8] sm:$0xff]
        %v7252 = vld [vmem:[%s7249 + $0x10] sm:$0xff]
        %v7253 = vld [vmem:[%s7249 + $0x18] sm:$0xff]
        %v7254 = vsel %vm3173, %v7171, 0
        %v7256 = vsel %vm3173, %v7173, 0
        %v7258 = vsel %vm3173, %v7176, 0
        %v7260 = vsel %vm3173, %v7178, 0
        %v7262 = vsel %vm3173, %v7181, 0
        %v7264 = vsel %vm3173, %v7183, 0
        %v7266 = vsel %vm3173, %v7186, 0
        %v7268 = vsel %vm3173, %v7188, 0
        %v7270 = vsel %vm3173, %v7191, 0
        %v7272 = vsel %vm3173, %v7193, 0
        %v7274 = vsel %vm3173, %v7196, 0
        %v7276 = vsel %vm3173, %v7198, 0
        %v7278 = vsel %vm3173, %v7201, 0
        %v7280 = vsel %vm3173, %v7203, 0
        %v7282 = vsel %vm3173, %v7206, 0
        %v7284 = vsel %vm3173, %v7208, 0
        %v7286 = vsel %vm3173, %v7211, 0
        %v7288 = vsel %vm3173, %v7213, 0
        %v7290 = vsel %vm3173, %v7216, 0
        %v7292 = vsel %vm3173, %v7218, 0
        %v7294 = vsel %vm3173, %v7221, 0
        %v7296 = vsel %vm3173, %v7223, 0
        %v7298 = vsel %vm3173, %v7226, 0
        %v7300 = vsel %vm3173, %v7228, 0
        %v7302 = vsel %vm3173, %v7231, 0
        %v7304 = vsel %vm3173, %v7233, 0
        %v7306 = vsel %vm3173, %v7236, 0
        %v7308 = vsel %vm3173, %v7238, 0
        %v7310 = vsel %vm3173, %v7241, 0
        %v7312 = vsel %vm3173, %v7243, 0
        %v7314 = vsel %vm3173, %v7246, 0
        %v7316 = vsel %vm3173, %v7248, 0
        %7318 = vmatprep.subr.mxu0 0.0
        %7319 = vmatpush1.msra.mxu0 %v7250
        %7320 = vmatprep.subr.mxu0 0.0
        %7321 = vmatpush1.msra.mxu0 %v7251
        %7322 = vmatprep.subr.mxu0 0.0
        %7323 = vmatpush1.msra.mxu0 %v7252
        %7324 = vmatprep.subr.mxu0 0.0
        %7325 = vmatpush1.msra.mxu0 %v7253
        %7326 = vmatprep.subr.mxu0 0.0
        %7327 = vmatpush1.msra.mxu0 0.0
        %7328 = vmatprep.subr.mxu0 0.0
        %7329 = vmatpush1.msra.mxu0 0.0
        %7330 = vmatprep.subr.mxu0 0.0
        %7331 = vmatpush1.msra.mxu0 0.0
        %7332 = vmatprep.subr.mxu0 0.0
        %7333 = vmatpush1.msra.mxu0 0.0
        %7334 = vmatprep.subr.mxu0 0.0
        %7335 = vmatpush1.msra.mxu0 0.0
        %7336 = vmatprep.subr.mxu0 0.0
        %7337 = vmatpush1.msra.mxu0 0.0
        %7338 = vmatprep.subr.mxu0 0.0
        %7339 = vmatpush1.msra.mxu0 0.0
        %7340 = vmatprep.subr.mxu0 0.0
        %7341 = vmatpush1.msra.mxu0 0.0
        %7342 = vmatprep.subr.mxu0 0.0
        %7343 = vmatpush1.msra.mxu0 0.0
        %7344 = vmatprep.subr.mxu0 0.0
        %7345 = vmatpush1.msra.mxu0 0.0
        %7346 = vmatprep.subr.mxu0 0.0
        %7347 = vmatpush1.msra.mxu0 0.0
        %7348 = vmatprep.subr.mxu0 0.0
        %7349 = vmatpush1.msra.mxu0 0.0
        %7350 = vmatprep.subr.mxu0 0.0
        %7351 = vmatpush1.msra.mxu0 0.0
        %7352 = vmatprep.subr.mxu0 0.0
        %7353 = vmatpush1.msra.mxu0 0.0
        %7354 = vmatprep.subr.mxu0 0.0
        %7355 = vmatpush1.msra.mxu0 0.0
        %7356 = vmatprep.subr.mxu0 0.0
        %7357 = vmatpush1.msra.mxu0 0.0
        %7358 = vmatprep.subr.mxu0 0.0
        %7359 = vmatpush1.msra.mxu0 0.0
        %7360 = vmatprep.subr.mxu0 0.0
        %7361 = vmatpush1.msra.mxu0 0.0
        %7362 = vmatprep.subr.mxu0 0.0
        %7363 = vmatpush1.msra.mxu0 0.0
        %7364 = vmatprep.subr.mxu0 0.0
        %7365 = vmatpush1.msra.mxu0 0.0
        %7366 = vmatprep.subr.mxu0 0.0
        %7367 = vmatpush1.msra.mxu0 0.0
        %7368 = vmatprep.subr.mxu0 0.0
        %7369 = vmatpush1.msra.mxu0 0.0
        %7370 = vmatprep.subr.mxu0 0.0
        %7371 = vmatpush1.msra.mxu0 0.0
        %7372 = vmatprep.subr.mxu0 0.0
        %7373 = vmatpush1.msra.mxu0 0.0
        %7374 = vmatprep.subr.mxu0 0.0
        %7375 = vmatpush1.msra.mxu0 0.0
        %7376 = vmatprep.subr.mxu0 0.0
        %7377 = vmatpush1.msra.mxu0 0.0
        %7378 = vmatprep.subr.mxu0 0.0
        %7379 = vmatpush1.msra.mxu0 0.0
        %7380 = vmatprep.subr.mxu0 0.0
        %7381 = vmatpush1.msra.mxu0 0.0
        %7382 = vmatprep.mubr.f32.mxu0 0.0
        %7383 = vmatmul.mubr.f32.gmra.mrb[0].mxu0 %v7254
        %v7384 = vpop.f32.mrb[0].mxu0
        %v7385 = vadd.f32 0.0, %v7384
        %v7386 = vpop.f32.mrb[0].mxu0
        %7387 = vmatprep.mubr.f32.mxu0 0.0
        %7388 = vmatmul.mubr.f32.gmra.mrb[0].mxu0 %v7256
        %v7389 = vpop.f32.mrb[0].mxu0
        %v7390 = vadd.f32 0.0, %v7389
        %v7391 = vpop.f32.mrb[0].mxu0
        %7392 = vmatprep.mubr.f32.mxu0 0.0
        %7393 = vmatmul.mubr.f32.gmra.mrb[0].mxu0 %v7258
        %v7394 = vpop.f32.mrb[0].mxu0
        %v7395 = vadd.f32 0.0, %v7394
        %v7396 = vpop.f32.mrb[0].mxu0
        %7397 = vmatprep.mubr.f32.mxu0 0.0
        %7398 = vmatmul.mubr.f32.gmra.mrb[0].mxu0 %v7260
        %v7399 = vpop.f32.mrb[0].mxu0
        %v7400 = vadd.f32 0.0, %v7399
        %v7401 = vpop.f32.mrb[0].mxu0
        %7402 = vmatprep.mubr.f32.mxu0 0.0
        %7403 = vmatmul.mubr.f32.gmra.mrb[0].mxu0 %v7262
        %v7404 = vpop.f32.mrb[0].mxu0
        %v7405 = vadd.f32 0.0, %v7404
        %v7406 = vpop.f32.mrb[0].mxu0
        %7407 = vmatprep.mubr.f32.mxu0 0.0
        %7408 = vmatmul.mubr.f32.gmra.mrb[0].mxu0 %v7264
        %v7409 = vpop.f32.mrb[0].mxu0
        %v7410 = vadd.f32 0.0, %v7409
        %v7411 = vpop.f32.mrb[0].mxu0
        %7412 = vmatprep.mubr.f32.mxu0 0.0
        %7413 = vmatmul.mubr.f32.gmra.mrb[0].mxu0 %v7266
        %v7414 = vpop.f32.mrb[0].mxu0
        %v7415 = vadd.f32 0.0, %v7414
        %v7416 = vpop.f32.mrb[0].mxu0
        %7417 = vmatprep.mubr.f32.mxu0 0.0
        %7418 = vmatmul.mubr.f32.gmra.mrb[0].mxu0 %v7268
        %v7419 = vpop.f32.mrb[0].mxu0
        %v7420 = vadd.f32 0.0, %v7419
        %v7421 = vpop.f32.mrb[0].mxu0
        %7422 = vmatprep.mubr.f32.mxu0 0.0
        %7423 = vmatmul.mubr.f32.gmra.mrb[0].mxu0 %v7270
        %v7424 = vpop.f32.mrb[0].mxu0
        %v7425 = vadd.f32 0.0, %v7424
        %v7426 = vpop.f32.mrb[0].mxu0
        %7427 = vmatprep.mubr.f32.mxu0 0.0
        %7428 = vmatmul.mubr.f32.gmra.mrb[0].mxu0 %v7272
        %v7429 = vpop.f32.mrb[0].mxu0
        %v7430 = vadd.f32 0.0, %v7429
        %v7431 = vpop.f32.mrb[0].mxu0
        %7432 = vmatprep.mubr.f32.mxu0 0.0
        %7433 = vmatmul.mubr.f32.gmra.mrb[0].mxu0 %v7274
        %v7434 = vpop.f32.mrb[0].mxu0
        %v7435 = vadd.f32 0.0, %v7434
        %v7436 = vpop.f32.mrb[0].mxu0
        %7437 = vmatprep.mubr.f32.mxu0 0.0
        %7438 = vmatmul.mubr.f32.gmra.mrb[0].mxu0 %v7276
        %v7439 = vpop.f32.mrb[0].mxu0
        %v7440 = vadd.f32 0.0, %v7439
        %v7441 = vpop.f32.mrb[0].mxu0
        %7442 = vmatprep.mubr.f32.mxu0 0.0
        %7443 = vmatmul.mubr.f32.gmra.mrb[0].mxu0 %v7278
        %v7444 = vpop.f32.mrb[0].mxu0
        %v7445 = vadd.f32 0.0, %v7444
        %v7446 = vpop.f32.mrb[0].mxu0
        %7447 = vmatprep.mubr.f32.mxu0 0.0
        %7448 = vmatmul.mubr.f32.gmra.mrb[0].mxu0 %v7280
        %v7449 = vpop.f32.mrb[0].mxu0
        %v7450 = vadd.f32 0.0, %v7449
        %v7451 = vpop.f32.mrb[0].mxu0
        %7452 = vmatprep.mubr.f32.mxu0 0.0
        %7453 = vmatmul.mubr.f32.gmra.mrb[0].mxu0 %v7282
        %v7454 = vpop.f32.mrb[0].mxu0
        %v7455 = vadd.f32 0.0, %v7454
        %v7456 = vpop.f32.mrb[0].mxu0
        %7457 = vmatprep.mubr.f32.mxu0 0.0
        %7458 = vmatmul.mubr.f32.gmra.mrb[0].mxu0 %v7284
        %v7459 = vpop.f32.mrb[0].mxu0
        %v7460 = vadd.f32 0.0, %v7459
        %v7461 = vpop.f32.mrb[0].mxu0
        %7462 = vmatprep.mubr.f32.mxu0 0.0
        %7463 = vmatmul.mubr.f32.gmra.mrb[0].mxu0 %v7286
        %v7464 = vpop.f32.mrb[0].mxu0
        %v7465 = vadd.f32 0.0, %v7464
        %v7466 = vpop.f32.mrb[0].mxu0
        %7467 = vmatprep.mubr.f32.mxu0 0.0
        %7468 = vmatmul.mubr.f32.gmra.mrb[0].mxu0 %v7288
        %v7469 = vpop.f32.mrb[0].mxu0
        %v7470 = vadd.f32 0.0, %v7469
        %v7471 = vpop.f32.mrb[0].mxu0
        %7472 = vmatprep.mubr.f32.mxu0 0.0
        %7473 = vmatmul.mubr.f32.gmra.mrb[0].mxu0 %v7290
        %v7474 = vpop.f32.mrb[0].mxu0
        %v7475 = vadd.f32 0.0, %v7474
        %v7476 = vpop.f32.mrb[0].mxu0
        %7477 = vmatprep.mubr.f32.mxu0 0.0
        %7478 = vmatmul.mubr.f32.gmra.mrb[0].mxu0 %v7292
        %v7479 = vpop.f32.mrb[0].mxu0
        %v7480 = vadd.f32 0.0, %v7479
        %v7481 = vpop.f32.mrb[0].mxu0
        %7482 = vmatprep.mubr.f32.mxu0 0.0
        %7483 = vmatmul.mubr.f32.gmra.mrb[0].mxu0 %v7294
        %v7484 = vpop.f32.mrb[0].mxu0
        %v7485 = vadd.f32 0.0, %v7484
        %v7486 = vpop.f32.mrb[0].mxu0
        %7487 = vmatprep.mubr.f32.mxu0 0.0
        %7488 = vmatmul.mubr.f32.gmra.mrb[0].mxu0 %v7296
        %v7489 = vpop.f32.mrb[0].mxu0
        %v7490 = vadd.f32 0.0, %v7489
        %v7491 = vpop.f32.mrb[0].mxu0
        %7492 = vmatprep.mubr.f32.mxu0 0.0
        %7493 = vmatmul.mubr.f32.gmra.mrb[0].mxu0 %v7298
        %v7494 = vpop.f32.mrb[0].mxu0
        %v7495 = vadd.f32 0.0, %v7494
        %v7496 = vpop.f32.mrb[0].mxu0
        %7497 = vmatprep.mubr.f32.mxu0 0.0
        %7498 = vmatmul.mubr.f32.gmra.mrb[0].mxu0 %v7300
        %v7499 = vpop.f32.mrb[0].mxu0
        %v7500 = vadd.f32 0.0, %v7499
        %v7501 = vpop.f32.mrb[0].mxu0
        %7502 = vmatprep.mubr.f32.mxu0 0.0
        %7503 = vmatmul.mubr.f32.gmra.mrb[0].mxu0 %v7302
        %v7504 = vpop.f32.mrb[0].mxu0
        %v7505 = vadd.f32 0.0, %v7504
        %v7506 = vpop.f32.mrb[0].mxu0
        %7507 = vmatprep.mubr.f32.mxu0 0.0
        %7508 = vmatmul.mubr.f32.gmra.mrb[0].mxu0 %v7304
        %v7509 = vpop.f32.mrb[0].mxu0
        %v7510 = vadd.f32 0.0, %v7509
        %v7511 = vpop.f32.mrb[0].mxu0
        %7512 = vmatprep.mubr.f32.mxu0 0.0
        %7513 = vmatmul.mubr.f32.gmra.mrb[0].mxu0 %v7306
        %v7514 = vpop.f32.mrb[0].mxu0
        %v7515 = vadd.f32 0.0, %v7514
        %v7516 = vpop.f32.mrb[0].mxu0
        %7517 = vmatprep.mubr.f32.mxu0 0.0
        %7518 = vmatmul.mubr.f32.gmra.mrb[0].mxu0 %v7308
        %v7519 = vpop.f32.mrb[0].mxu0
        %v7520 = vadd.f32 0.0, %v7519
        %v7521 = vpop.f32.mrb[0].mxu0
        %7522 = vmatprep.mubr.f32.mxu0 0.0
        %7523 = vmatmul.mubr.f32.gmra.mrb[0].mxu0 %v7310
        %v7524 = vpop.f32.mrb[0].mxu0
        %v7525 = vadd.f32 0.0, %v7524
        %v7526 = vpop.f32.mrb[0].mxu0
        %7527 = vmatprep.mubr.f32.mxu0 0.0
        %7528 = vmatmul.mubr.f32.gmra.mrb[0].mxu0 %v7312
        %v7529 = vpop.f32.mrb[0].mxu0
        %v7530 = vadd.f32 0.0, %v7529
        %v7531 = vpop.f32.mrb[0].mxu0
        %7532 = vmatprep.mubr.f32.mxu0 0.0
        %7533 = vmatmul.mubr.f32.gmra.mrb[0].mxu0 %v7314
        %v7534 = vpop.f32.mrb[0].mxu0
        %v7535 = vadd.f32 0.0, %v7534
        %v7536 = vpop.f32.mrb[0].mxu0
        %7537 = vmatprep.mubr.f32.mxu0 0.0
        %7538 = vmatmul.mubr.f32.gmra.mrb[0].mxu0 %v7316
        %v7539 = vpop.f32.mrb[0].mxu0
        %v7540 = vadd.f32 0.0, %v7539
        %v7541 = vpop.f32.mrb[0].mxu0
        %7542 = vdwg.mxu0
        %v7543 = vadd.f32 %v7121, %v7385
        %v7544 = vadd.f32 %v7122, %v7390
        %v7545 = vadd.f32 %v7123, %v7395
        %v7546 = vadd.f32 %v7124, %v7400
        %v7547 = vadd.f32 %v7125, %v7405
        %v7548 = vadd.f32 %v7126, %v7410
        %v7549 = vadd.f32 %v7127, %v7415
        %v7550 = vadd.f32 %v7128, %v7420
        %v7551 = vadd.f32 %v7129, %v7425
        %v7552 = vadd.f32 %v7130, %v7430
        %v7553 = vadd.f32 %v7131, %v7435
        %v7554 = vadd.f32 %v7132, %v7440
        %v7555 = vadd.f32 %v7133, %v7445
        %v7556 = vadd.f32 %v7134, %v7450
        %v7557 = vadd.f32 %v7135, %v7455
        %v7558 = vadd.f32 %v7136, %v7460
        %v7559 = vadd.f32 %v7137, %v7465
        %v7560 = vadd.f32 %v7138, %v7470
        %v7561 = vadd.f32 %v7139, %v7475
        %v7562 = vadd.f32 %v7140, %v7480
        %v7563 = vadd.f32 %v7141, %v7485
        %v7564 = vadd.f32 %v7142, %v7490
        %v7565 = vadd.f32 %v7143, %v7495
        %v7566 = vadd.f32 %v7144, %v7500
        %v7567 = vadd.f32 %v7145, %v7505
        %v7568 = vadd.f32 %v7146, %v7510
        %v7569 = vadd.f32 %v7147, %v7515
        %v7570 = vadd.f32 %v7148, %v7520
        %v7571 = vadd.f32 %v7149, %v7525
        %v7572 = vadd.f32 %v7150, %v7530
        %v7573 = vadd.f32 %v7151, %v7535
        %v7574 = vadd.f32 %v7152, %v7540
        %v7576 = vrot.slane %v6318, 1
        %v7577 = vrot.slane %v6319, 1
        %v7578 = vsel %vm1225, %v7576, %v7577
        %v7579 = vrot.slane %v6320, 1
        %v7580 = vsel %vm1225, %v7577, %v7579
        %s7581 = scalar_lea.vmem %s4, 128
        %v7582 = vld [vmem:[%s7581] sm:$0xff]
        %v7583 = vld [vmem:[%s7581 + $0x8] sm:$0xff]
        %v7584 = vld [vmem:[%s7581 + $0x10] sm:$0xff]
        %v7585 = vld [vmem:[%s7581 + $0x18] sm:$0xff]
        %v7586 = vsel %vm3173, %v7578, 0
        %v7588 = vsel %vm3173, %v7580, 0
        %7590 = vmatprep.subr.mxu0 0.0
        %7591 = vmatpush1.msra.mxu0 %v7582
        %7592 = vmatprep.subr.mxu0 0.0
        %7593 = vmatpush1.msra.mxu0 %v7583
        %7594 = vmatprep.subr.mxu0 0.0
        %7595 = vmatpush1.msra.mxu0 %v7584
        %7596 = vmatprep.subr.mxu0 0.0
        %7597 = vmatpush1.msra.mxu0 %v7585
        %7598 = vmatprep.subr.mxu0 0.0
        %7599 = vmatpush1.msra.mxu0 0.0
        %7600 = vmatprep.subr.mxu0 0.0
        %7601 = vmatpush1.msra.mxu0 0.0
        %7602 = vmatprep.subr.mxu0 0.0
        %7603 = vmatpush1.msra.mxu0 0.0
        %7604 = vmatprep.subr.mxu0 0.0
        %7605 = vmatpush1.msra.mxu0 0.0
        %7606 = vmatprep.subr.mxu0 0.0
        %7607 = vmatpush1.msra.mxu0 0.0
        %7608 = vmatprep.subr.mxu0 0.0
        %7609 = vmatpush1.msra.mxu0 0.0
        %7610 = vmatprep.subr.mxu0 0.0
        %7611 = vmatpush1.msra.mxu0 0.0
        %7612 = vmatprep.subr.mxu0 0.0
        %7613 = vmatpush1.msra.mxu0 0.0
        %7614 = vmatprep.subr.mxu0 0.0
        %7615 = vmatpush1.msra.mxu0 0.0
        %7616 = vmatprep.subr.mxu0 0.0
        %7617 = vmatpush1.msra.mxu0 0.0
        %7618 = vmatprep.subr.mxu0 0.0
        %7619 = vmatpush1.msra.mxu0 0.0
        %7620 = vmatprep.subr.mxu0 0.0
        %7621 = vmatpush1.msra.mxu0 0.0
        %7622 = vmatprep.subr.mxu0 0.0
        %7623 = vmatpush1.msra.mxu0 0.0
        %7624 = vmatprep.subr.mxu0 0.0
        %7625 = vmatpush1.msra.mxu0 0.0
        %7626 = vmatprep.subr.mxu0 0.0
        %7627 = vmatpush1.msra.mxu0 0.0
        %7628 = vmatprep.subr.mxu0 0.0
        %7629 = vmatpush1.msra.mxu0 0.0
        %7630 = vmatprep.subr.mxu0 0.0
        %7631 = vmatpush1.msra.mxu0 0.0
        %7632 = vmatprep.subr.mxu0 0.0
        %7633 = vmatpush1.msra.mxu0 0.0
        %7634 = vmatprep.subr.mxu0 0.0
        %7635 = vmatpush1.msra.mxu0 0.0
        %7636 = vmatprep.subr.mxu0 0.0
        %7637 = vmatpush1.msra.mxu0 0.0
        %7638 = vmatprep.subr.mxu0 0.0
        %7639 = vmatpush1.msra.mxu0 0.0
        %7640 = vmatprep.subr.mxu0 0.0
        %7641 = vmatpush1.msra.mxu0 0.0
        %7642 = vmatprep.subr.mxu0 0.0
        %7643 = vmatpush1.msra.mxu0 0.0
        %7644 = vmatprep.subr.mxu0 0.0
        %7645 = vmatpush1.msra.mxu0 0.0
        %7646 = vmatprep.subr.mxu0 0.0
        %7647 = vmatpush1.msra.mxu0 0.0
        %7648 = vmatprep.subr.mxu0 0.0
        %7649 = vmatpush1.msra.mxu0 0.0
        %7650 = vmatprep.subr.mxu0 0.0
        %7651 = vmatpush1.msra.mxu0 0.0
        %7652 = vmatprep.subr.mxu0 0.0
        %7653 = vmatpush1.msra.mxu0 0.0
        %7654 = vmatprep.mubr.f32.mxu0 0.0
        %7655 = vmatmul.mubr.f32.gmra.mrb[0].mxu0 %v7258
        %v7656 = vpop.f32.mrb[0].mxu0
        %v7657 = vadd.f32 0.0, %v7656
        %v7658 = vpop.f32.mrb[0].mxu0
        %7659 = vmatprep.mubr.f32.mxu0 0.0
        %7660 = vmatmul.mubr.f32.gmra.mrb[0].mxu0 %v7260
        %v7661 = vpop.f32.mrb[0].mxu0
        %v7662 = vadd.f32 0.0, %v7661
        %v7663 = vpop.f32.mrb[0].mxu0
        %7664 = vmatprep.mubr.f32.mxu0 0.0
        %7665 = vmatmul.mubr.f32.gmra.mrb[0].mxu0 %v7262
        %v7666 = vpop.f32.mrb[0].mxu0
        %v7667 = vadd.f32 0.0, %v7666
        %v7668 = vpop.f32.mrb[0].mxu0
        %7669 = vmatprep.mubr.f32.mxu0 0.0
        %7670 = vmatmul.mubr.f32.gmra.mrb[0].mxu0 %v7264
        %v7671 = vpop.f32.mrb[0].mxu0
        %v7672 = vadd.f32 0.0, %v7671
        %v7673 = vpop.f32.mrb[0].mxu0
        %7674 = vmatprep.mubr.f32.mxu0 0.0
        %7675 = vmatmul.mubr.f32.gmra.mrb[0].mxu0 %v7266
        %v7676 = vpop.f32.mrb[0].mxu0
        %v7677 = vadd.f32 0.0, %v7676
        %v7678 = vpop.f32.mrb[0].mxu0
        %7679 = vmatprep.mubr.f32.mxu0 0.0
        %7680 = vmatmul.mubr.f32.gmra.mrb[0].mxu0 %v7268
        %v7681 = vpop.f32.mrb[0].mxu0
        %v7682 = vadd.f32 0.0, %v7681
        %v7683 = vpop.f32.mrb[0].mxu0
        %7684 = vmatprep.mubr.f32.mxu0 0.0
        %7685 = vmatmul.mubr.f32.gmra.mrb[0].mxu0 %v7270
        %v7686 = vpop.f32.mrb[0].mxu0
        %v7687 = vadd.f32 0.0, %v7686
        %v7688 = vpop.f32.mrb[0].mxu0
        %7689 = vmatprep.mubr.f32.mxu0 0.0
        %7690 = vmatmul.mubr.f32.gmra.mrb[0].mxu0 %v7272
        %v7691 = vpop.f32.mrb[0].mxu0
        %v7692 = vadd.f32 0.0, %v7691
        %v7693 = vpop.f32.mrb[0].mxu0
        %7694 = vmatprep.mubr.f32.mxu0 0.0
        %7695 = vmatmul.mubr.f32.gmra.mrb[0].mxu0 %v7274
        %v7696 = vpop.f32.mrb[0].mxu0
        %v7697 = vadd.f32 0.0, %v7696
        %v7698 = vpop.f32.mrb[0].mxu0
        %7699 = vmatprep.mubr.f32.mxu0 0.0
        %7700 = vmatmul.mubr.f32.gmra.mrb[0].mxu0 %v7276
        %v7701 = vpop.f32.mrb[0].mxu0
        %v7702 = vadd.f32 0.0, %v7701
        %v7703 = vpop.f32.mrb[0].mxu0
        %7704 = vmatprep.mubr.f32.mxu0 0.0
        %7705 = vmatmul.mubr.f32.gmra.mrb[0].mxu0 %v7278
        %v7706 = vpop.f32.mrb[0].mxu0
        %v7707 = vadd.f32 0.0, %v7706
        %v7708 = vpop.f32.mrb[0].mxu0
        %7709 = vmatprep.mubr.f32.mxu0 0.0
        %7710 = vmatmul.mubr.f32.gmra.mrb[0].mxu0 %v7280
        %v7711 = vpop.f32.mrb[0].mxu0
        %v7712 = vadd.f32 0.0, %v7711
        %v7713 = vpop.f32.mrb[0].mxu0
        %7714 = vmatprep.mubr.f32.mxu0 0.0
        %7715 = vmatmul.mubr.f32.gmra.mrb[0].mxu0 %v7282
        %v7716 = vpop.f32.mrb[0].mxu0
        %v7717 = vadd.f32 0.0, %v7716
        %v7718 = vpop.f32.mrb[0].mxu0
        %7719 = vmatprep.mubr.f32.mxu0 0.0
        %7720 = vmatmul.mubr.f32.gmra.mrb[0].mxu0 %v7284
        %v7721 = vpop.f32.mrb[0].mxu0
        %v7722 = vadd.f32 0.0, %v7721
        %v7723 = vpop.f32.mrb[0].mxu0
        %7724 = vmatprep.mubr.f32.mxu0 0.0
        %7725 = vmatmul.mubr.f32.gmra.mrb[0].mxu0 %v7286
        %v7726 = vpop.f32.mrb[0].mxu0
        %v7727 = vadd.f32 0.0, %v7726
        %v7728 = vpop.f32.mrb[0].mxu0
        %7729 = vmatprep.mubr.f32.mxu0 0.0
        %7730 = vmatmul.mubr.f32.gmra.mrb[0].mxu0 %v7288
        %v7731 = vpop.f32.mrb[0].mxu0
        %v7732 = vadd.f32 0.0, %v7731
        %v7733 = vpop.f32.mrb[0].mxu0
        %7734 = vmatprep.mubr.f32.mxu0 0.0
        %7735 = vmatmul.mubr.f32.gmra.mrb[0].mxu0 %v7290
        %v7736 = vpop.f32.mrb[0].mxu0
        %v7737 = vadd.f32 0.0, %v7736
        %v7738 = vpop.f32.mrb[0].mxu0
        %7739 = vmatprep.mubr.f32.mxu0 0.0
        %7740 = vmatmul.mubr.f32.gmra.mrb[0].mxu0 %v7292
        %v7741 = vpop.f32.mrb[0].mxu0
        %v7742 = vadd.f32 0.0, %v7741
        %v7743 = vpop.f32.mrb[0].mxu0
        %7744 = vmatprep.mubr.f32.mxu0 0.0
        %7745 = vmatmul.mubr.f32.gmra.mrb[0].mxu0 %v7294
        %v7746 = vpop.f32.mrb[0].mxu0
        %v7747 = vadd.f32 0.0, %v7746
        %v7748 = vpop.f32.mrb[0].mxu0
        %7749 = vmatprep.mubr.f32.mxu0 0.0
        %7750 = vmatmul.mubr.f32.gmra.mrb[0].mxu0 %v7296
        %v7751 = vpop.f32.mrb[0].mxu0
        %v7752 = vadd.f32 0.0, %v7751
        %v7753 = vpop.f32.mrb[0].mxu0
        %7754 = vmatprep.mubr.f32.mxu0 0.0
        %7755 = vmatmul.mubr.f32.gmra.mrb[0].mxu0 %v7298
        %v7756 = vpop.f32.mrb[0].mxu0
        %v7757 = vadd.f32 0.0, %v7756
        %v7758 = vpop.f32.mrb[0].mxu0
        %7759 = vmatprep.mubr.f32.mxu0 0.0
        %7760 = vmatmul.mubr.f32.gmra.mrb[0].mxu0 %v7300
        %v7761 = vpop.f32.mrb[0].mxu0
        %v7762 = vadd.f32 0.0, %v7761
        %v7763 = vpop.f32.mrb[0].mxu0
        %7764 = vmatprep.mubr.f32.mxu0 0.0
        %7765 = vmatmul.mubr.f32.gmra.mrb[0].mxu0 %v7302
        %v7766 = vpop.f32.mrb[0].mxu0
        %v7767 = vadd.f32 0.0, %v7766
        %v7768 = vpop.f32.mrb[0].mxu0
        %7769 = vmatprep.mubr.f32.mxu0 0.0
        %7770 = vmatmul.mubr.f32.gmra.mrb[0].mxu0 %v7304
        %v7771 = vpop.f32.mrb[0].mxu0
        %v7772 = vadd.f32 0.0, %v7771
        %v7773 = vpop.f32.mrb[0].mxu0
        %7774 = vmatprep.mubr.f32.mxu0 0.0
        %7775 = vmatmul.mubr.f32.gmra.mrb[0].mxu0 %v7306
        %v7776 = vpop.f32.mrb[0].mxu0
        %v7777 = vadd.f32 0.0, %v7776
        %v7778 = vpop.f32.mrb[0].mxu0
        %7779 = vmatprep.mubr.f32.mxu0 0.0
        %7780 = vmatmul.mubr.f32.gmra.mrb[0].mxu0 %v7308
        %v7781 = vpop.f32.mrb[0].mxu0
        %v7782 = vadd.f32 0.0, %v7781
        %v7783 = vpop.f32.mrb[0].mxu0
        %7784 = vmatprep.mubr.f32.mxu0 0.0
        %7785 = vmatmul.mubr.f32.gmra.mrb[0].mxu0 %v7310
        %v7786 = vpop.f32.mrb[0].mxu0
        %v7787 = vadd.f32 0.0, %v7786
        %v7788 = vpop.f32.mrb[0].mxu0
        %7789 = vmatprep.mubr.f32.mxu0 0.0
        %7790 = vmatmul.mubr.f32.gmra.mrb[0].mxu0 %v7312
        %v7791 = vpop.f32.mrb[0].mxu0
        %v7792 = vadd.f32 0.0, %v7791
        %v7793 = vpop.f32.mrb[0].mxu0
        %7794 = vmatprep.mubr.f32.mxu0 0.0
        %7795 = vmatmul.mubr.f32.gmra.mrb[0].mxu0 %v7314
        %v7796 = vpop.f32.mrb[0].mxu0
        %v7797 = vadd.f32 0.0, %v7796
        %v7798 = vpop.f32.mrb[0].mxu0
        %7799 = vmatprep.mubr.f32.mxu0 0.0
        %7800 = vmatmul.mubr.f32.gmra.mrb[0].mxu0 %v7316
        %v7801 = vpop.f32.mrb[0].mxu0
        %v7802 = vadd.f32 0.0, %v7801
        %v7803 = vpop.f32.mrb[0].mxu0
        %7804 = vmatprep.mubr.f32.mxu0 0.0
        %7805 = vmatmul.mubr.f32.gmra.mrb[0].mxu0 %v7586
        %v7806 = vpop.f32.mrb[0].mxu0
        %v7807 = vadd.f32 0.0, %v7806
        %v7808 = vpop.f32.mrb[0].mxu0
        %7809 = vmatprep.mubr.f32.mxu0 0.0
        %7810 = vmatmul.mubr.f32.gmra.mrb[0].mxu0 %v7588
        %v7811 = vpop.f32.mrb[0].mxu0
        %v7812 = vadd.f32 0.0, %v7811
        %v7813 = vpop.f32.mrb[0].mxu0
        %7814 = vdwg.mxu0
        %v7815 = vadd.f32 %v7543, %v7657
        %v7816 = vadd.f32 %v7544, %v7662
        %v7817 = vadd.f32 %v7545, %v7667
        %v7818 = vadd.f32 %v7546, %v7672
        %v7819 = vadd.f32 %v7547, %v7677
        %v7820 = vadd.f32 %v7548, %v7682
        %v7821 = vadd.f32 %v7549, %v7687
        %v7822 = vadd.f32 %v7550, %v7692
        %v7823 = vadd.f32 %v7551, %v7697
        %v7824 = vadd.f32 %v7552, %v7702
        %v7825 = vadd.f32 %v7553, %v7707
        %v7826 = vadd.f32 %v7554, %v7712
        %v7827 = vadd.f32 %v7555, %v7717
        %v7828 = vadd.f32 %v7556, %v7722
        %v7829 = vadd.f32 %v7557, %v7727
        %v7830 = vadd.f32 %v7558, %v7732
        %v7831 = vadd.f32 %v7559, %v7737
        %v7832 = vadd.f32 %v7560, %v7742
        %v7833 = vadd.f32 %v7561, %v7747
        %v7834 = vadd.f32 %v7562, %v7752
        %v7835 = vadd.f32 %v7563, %v7757
        %v7836 = vadd.f32 %v7564, %v7762
        %v7837 = vadd.f32 %v7565, %v7767
        %v7838 = vadd.f32 %v7566, %v7772
        %v7839 = vadd.f32 %v7567, %v7777
        %v7840 = vadd.f32 %v7568, %v7782
        %v7841 = vadd.f32 %v7569, %v7787
        %v7842 = vadd.f32 %v7570, %v7792
        %v7843 = vadd.f32 %v7571, %v7797
        %v7844 = vadd.f32 %v7572, %v7802
        %v7845 = vadd.f32 %v7573, %v7807
        %v7846 = vadd.f32 %v7574, %v7812
        %v7848 = vrot.slane %v6321, 1
        %v7849 = vrot.slane %v6322, 1
        %v7850 = vsel %vm1225, %v7848, %v7849
        %v7851 = vrot.slane %v6323, 1
        %v7852 = vsel %vm1225, %v7849, %v7851
        %s7853 = scalar_lea.vmem %s4, 224
        %v7854 = vld [vmem:[%s7853] sm:$0xff]
        %v7855 = vld [vmem:[%s7853 + $0x8] sm:$0xff]
        %v7856 = vld [vmem:[%s7853 + $0x10] sm:$0xff]
        %v7857 = vld [vmem:[%s7853 + $0x18] sm:$0xff]
        %v7858 = vsel %vm3173, %v7850, 0
        %v7860 = vsel %vm3173, %v7852, 0
        %7862 = vmatprep.subr.mxu0 0.0
        %7863 = vmatpush1.msra.mxu0 %v7854
        %7864 = vmatprep.subr.mxu0 0.0
        %7865 = vmatpush1.msra.mxu0 %v7855
        %7866 = vmatprep.subr.mxu0 0.0
        %7867 = vmatpush1.msra.mxu0 %v7856
        %7868 = vmatprep.subr.mxu0 0.0
        %7869 = vmatpush1.msra.mxu0 %v7857
        %7870 = vmatprep.subr.mxu0 0.0
        %7871 = vmatpush1.msra.mxu0 0.0
        %7872 = vmatprep.subr.mxu0 0.0
        %7873 = vmatpush1.msra.mxu0 0.0
        %7874 = vmatprep.subr.mxu0 0.0
        %7875 = vmatpush1.msra.mxu0 0.0
        %7876 = vmatprep.subr.mxu0 0.0
        %7877 = vmatpush1.msra.mxu0 0.0
        %7878 = vmatprep.subr.mxu0 0.0
        %7879 = vmatpush1.msra.mxu0 0.0
        %7880 = vmatprep.subr.mxu0 0.0
        %7881 = vmatpush1.msra.mxu0 0.0
        %7882 = vmatprep.subr.mxu0 0.0
        %7883 = vmatpush1.msra.mxu0 0.0
        %7884 = vmatprep.subr.mxu0 0.0
        %7885 = vmatpush1.msra.mxu0 0.0
        %7886 = vmatprep.subr.mxu0 0.0
        %7887 = vmatpush1.msra.mxu0 0.0
        %7888 = vmatprep.subr.mxu0 0.0
        %7889 = vmatpush1.msra.mxu0 0.0
        %7890 = vmatprep.subr.mxu0 0.0
        %7891 = vmatpush1.msra.mxu0 0.0
        %7892 = vmatprep.subr.mxu0 0.0
        %7893 = vmatpush1.msra.mxu0 0.0
        %7894 = vmatprep.subr.mxu0 0.0
        %7895 = vmatpush1.msra.mxu0 0.0
        %7896 = vmatprep.subr.mxu0 0.0
        %7897 = vmatpush1.msra.mxu0 0.0
        %7898 = vmatprep.subr.mxu0 0.0
        %7899 = vmatpush1.msra.mxu0 0.0
        %7900 = vmatprep.subr.mxu0 0.0
        %7901 = vmatpush1.msra.mxu0 0.0
        %7902 = vmatprep.subr.mxu0 0.0
        %7903 = vmatpush1.msra.mxu0 0.0
        %7904 = vmatprep.subr.mxu0 0.0
        %7905 = vmatpush1.msra.mxu0 0.0
        %7906 = vmatprep.subr.mxu0 0.0
        %7907 = vmatpush1.msra.mxu0 0.0
        %7908 = vmatprep.subr.mxu0 0.0
        %7909 = vmatpush1.msra.mxu0 0.0
        %7910 = vmatprep.subr.mxu0 0.0
        %7911 = vmatpush1.msra.mxu0 0.0
        %7912 = vmatprep.subr.mxu0 0.0
        %7913 = vmatpush1.msra.mxu0 0.0
        %7914 = vmatprep.subr.mxu0 0.0
        %7915 = vmatpush1.msra.mxu0 0.0
        %7916 = vmatprep.subr.mxu0 0.0
        %7917 = vmatpush1.msra.mxu0 0.0
        %7918 = vmatprep.subr.mxu0 0.0
        %7919 = vmatpush1.msra.mxu0 0.0
        %7920 = vmatprep.subr.mxu0 0.0
        %7921 = vmatpush1.msra.mxu0 0.0
        %7922 = vmatprep.subr.mxu0 0.0
        %7923 = vmatpush1.msra.mxu0 0.0
        %7924 = vmatprep.subr.mxu0 0.0
        %7925 = vmatpush1.msra.mxu0 0.0
        %7926 = vmatprep.mubr.f32.mxu0 0.0
        %7927 = vmatmul.mubr.f32.gmra.mrb[0].mxu0 %v7262
        %v7928 = vpop.f32.mrb[0].mxu0
        %v7929 = vadd.f32 0.0, %v7928
        %v7930 = vpop.f32.mrb[0].mxu0
        %7931 = vmatprep.mubr.f32.mxu0 0.0
        %7932 = vmatmul.mubr.f32.gmra.mrb[0].mxu0 %v7264
        %v7933 = vpop.f32.mrb[0].mxu0
        %v7934 = vadd.f32 0.0, %v7933
        %v7935 = vpop.f32.mrb[0].mxu0
        %7936 = vmatprep.mubr.f32.mxu0 0.0
        %7937 = vmatmul.mubr.f32.gmra.mrb[0].mxu0 %v7266
        %v7938 = vpop.f32.mrb[0].mxu0
        %v7939 = vadd.f32 0.0, %v7938
        %v7940 = vpop.f32.mrb[0].mxu0
        %7941 = vmatprep.mubr.f32.mxu0 0.0
        %7942 = vmatmul.mubr.f32.gmra.mrb[0].mxu0 %v7268
        %v7943 = vpop.f32.mrb[0].mxu0
        %v7944 = vadd.f32 0.0, %v7943
        %v7945 = vpop.f32.mrb[0].mxu0
        %7946 = vmatprep.mubr.f32.mxu0 0.0
        %7947 = vmatmul.mubr.f32.gmra.mrb[0].mxu0 %v7270
        %v7948 = vpop.f32.mrb[0].mxu0
        %v7949 = vadd.f32 0.0, %v7948
        %v7950 = vpop.f32.mrb[0].mxu0
        %7951 = vmatprep.mubr.f32.mxu0 0.0
        %7952 = vmatmul.mubr.f32.gmra.mrb[0].mxu0 %v7272
        %v7953 = vpop.f32.mrb[0].mxu0
        %v7954 = vadd.f32 0.0, %v7953
        %v7955 = vpop.f32.mrb[0].mxu0
        %7956 = vmatprep.mubr.f32.mxu0 0.0
        %7957 = vmatmul.mubr.f32.gmra.mrb[0].mxu0 %v7274
        %v7958 = vpop.f32.mrb[0].mxu0
        %v7959 = vadd.f32 0.0, %v7958
        %v7960 = vpop.f32.mrb[0].mxu0
        %7961 = vmatprep.mubr.f32.mxu0 0.0
        %7962 = vmatmul.mubr.f32.gmra.mrb[0].mxu0 %v7276
        %v7963 = vpop.f32.mrb[0].mxu0
        %v7964 = vadd.f32 0.0, %v7963
        %v7965 = vpop.f32.mrb[0].mxu0
        %7966 = vmatprep.mubr.f32.mxu0 0.0
        %7967 = vmatmul.mubr.f32.gmra.mrb[0].mxu0 %v7278
        %v7968 = vpop.f32.mrb[0].mxu0
        %v7969 = vadd.f32 0.0, %v7968
        %v7970 = vpop.f32.mrb[0].mxu0
        %7971 = vmatprep.mubr.f32.mxu0 0.0
        %7972 = vmatmul.mubr.f32.gmra.mrb[0].mxu0 %v7280
        %v7973 = vpop.f32.mrb[0].mxu0
        %v7974 = vadd.f32 0.0, %v7973
        %v7975 = vpop.f32.mrb[0].mxu0
        %7976 = vmatprep.mubr.f32.mxu0 0.0
        %7977 = vmatmul.mubr.f32.gmra.mrb[0].mxu0 %v7282
        %v7978 = vpop.f32.mrb[0].mxu0
        %v7979 = vadd.f32 0.0, %v7978
        %v7980 = vpop.f32.mrb[0].mxu0
        %7981 = vmatprep.mubr.f32.mxu0 0.0
        %7982 = vmatmul.mubr.f32.gmra.mrb[0].mxu0 %v7284
        %v7983 = vpop.f32.mrb[0].mxu0
        %v7984 = vadd.f32 0.0, %v7983
        %v7985 = vpop.f32.mrb[0].mxu0
        %7986 = vmatprep.mubr.f32.mxu0 0.0
        %7987 = vmatmul.mubr.f32.gmra.mrb[0].mxu0 %v7286
        %v7988 = vpop.f32.mrb[0].mxu0
        %v7989 = vadd.f32 0.0, %v7988
        %v7990 = vpop.f32.mrb[0].mxu0
        %7991 = vmatprep.mubr.f32.mxu0 0.0
        %7992 = vmatmul.mubr.f32.gmra.mrb[0].mxu0 %v7288
        %v7993 = vpop.f32.mrb[0].mxu0
        %v7994 = vadd.f32 0.0, %v7993
        %v7995 = vpop.f32.mrb[0].mxu0
        %7996 = vmatprep.mubr.f32.mxu0 0.0
        %7997 = vmatmul.mubr.f32.gmra.mrb[0].mxu0 %v7290
        %v7998 = vpop.f32.mrb[0].mxu0
        %v7999 = vadd.f32 0.0, %v7998
        %v8000 = vpop.f32.mrb[0].mxu0
        %8001 = vmatprep.mubr.f32.mxu0 0.0
        %8002 = vmatmul.mubr.f32.gmra.mrb[0].mxu0 %v7292
        %v8003 = vpop.f32.mrb[0].mxu0
        %v8004 = vadd.f32 0.0, %v8003
        %v8005 = vpop.f32.mrb[0].mxu0
        %8006 = vmatprep.mubr.f32.mxu0 0.0
        %8007 = vmatmul.mubr.f32.gmra.mrb[0].mxu0 %v7294
        %v8008 = vpop.f32.mrb[0].mxu0
        %v8009 = vadd.f32 0.0, %v8008
        %v8010 = vpop.f32.mrb[0].mxu0
        %8011 = vmatprep.mubr.f32.mxu0 0.0
        %8012 = vmatmul.mubr.f32.gmra.mrb[0].mxu0 %v7296
        %v8013 = vpop.f32.mrb[0].mxu0
        %v8014 = vadd.f32 0.0, %v8013
        %v8015 = vpop.f32.mrb[0].mxu0
        %8016 = vmatprep.mubr.f32.mxu0 0.0
        %8017 = vmatmul.mubr.f32.gmra.mrb[0].mxu0 %v7298
        %v8018 = vpop.f32.mrb[0].mxu0
        %v8019 = vadd.f32 0.0, %v8018
        %v8020 = vpop.f32.mrb[0].mxu0
        %8021 = vmatprep.mubr.f32.mxu0 0.0
        %8022 = vmatmul.mubr.f32.gmra.mrb[0].mxu0 %v7300
        %v8023 = vpop.f32.mrb[0].mxu0
        %v8024 = vadd.f32 0.0, %v8023
        %v8025 = vpop.f32.mrb[0].mxu0
        %8026 = vmatprep.mubr.f32.mxu0 0.0
        %8027 = vmatmul.mubr.f32.gmra.mrb[0].mxu0 %v7302
        %v8028 = vpop.f32.mrb[0].mxu0
        %v8029 = vadd.f32 0.0, %v8028
        %v8030 = vpop.f32.mrb[0].mxu0
        %8031 = vmatprep.mubr.f32.mxu0 0.0
        %8032 = vmatmul.mubr.f32.gmra.mrb[0].mxu0 %v7304
        %v8033 = vpop.f32.mrb[0].mxu0
        %v8034 = vadd.f32 0.0, %v8033
        %v8035 = vpop.f32.mrb[0].mxu0
        %8036 = vmatprep.mubr.f32.mxu0 0.0
        %8037 = vmatmul.mubr.f32.gmra.mrb[0].mxu0 %v7306
        %v8038 = vpop.f32.mrb[0].mxu0
        %v8039 = vadd.f32 0.0, %v8038
        %v8040 = vpop.f32.mrb[0].mxu0
        %8041 = vmatprep.mubr.f32.mxu0 0.0
        %8042 = vmatmul.mubr.f32.gmra.mrb[0].mxu0 %v7308
        %v8043 = vpop.f32.mrb[0].mxu0
        %v8044 = vadd.f32 0.0, %v8043
        %v8045 = vpop.f32.mrb[0].mxu0
        %8046 = vmatprep.mubr.f32.mxu0 0.0
        %8047 = vmatmul.mubr.f32.gmra.mrb[0].mxu0 %v7310
        %v8048 = vpop.f32.mrb[0].mxu0
        %v8049 = vadd.f32 0.0, %v8048
        %v8050 = vpop.f32.mrb[0].mxu0
        %8051 = vmatprep.mubr.f32.mxu0 0.0
        %8052 = vmatmul.mubr.f32.gmra.mrb[0].mxu0 %v7312
        %v8053 = vpop.f32.mrb[0].mxu0
        %v8054 = vadd.f32 0.0, %v8053
        %v8055 = vpop.f32.mrb[0].mxu0
        %8056 = vmatprep.mubr.f32.mxu0 0.0
        %8057 = vmatmul.mubr.f32.gmra.mrb[0].mxu0 %v7314
        %v8058 = vpop.f32.mrb[0].mxu0
        %v8059 = vadd.f32 0.0, %v8058
        %v8060 = vpop.f32.mrb[0].mxu0
        %8061 = vmatprep.mubr.f32.mxu0 0.0
        %8062 = vmatmul.mubr.f32.gmra.mrb[0].mxu0 %v7316
        %v8063 = vpop.f32.mrb[0].mxu0
        %v8064 = vadd.f32 0.0, %v8063
        %v8065 = vpop.f32.mrb[0].mxu0
        %8066 = vmatprep.mubr.f32.mxu0 0.0
        %8067 = vmatmul.mubr.f32.gmra.mrb[0].mxu0 %v7586
        %v8068 = vpop.f32.mrb[0].mxu0
        %v8069 = vadd.f32 0.0, %v8068
        %v8070 = vpop.f32.mrb[0].mxu0
        %8071 = vmatprep.mubr.f32.mxu0 0.0
        %8072 = vmatmul.mubr.f32.gmra.mrb[0].mxu0 %v7588
        %v8073 = vpop.f32.mrb[0].mxu0
        %v8074 = vadd.f32 0.0, %v8073
        %v8075 = vpop.f32.mrb[0].mxu0
        %8076 = vmatprep.mubr.f32.mxu0 0.0
        %8077 = vmatmul.mubr.f32.gmra.mrb[0].mxu0 %v7858
        %v8078 = vpop.f32.mrb[0].mxu0
        %v8079 = vadd.f32 0.0, %v8078
        %v8080 = vpop.f32.mrb[0].mxu0
        %8081 = vmatprep.mubr.f32.mxu0 0.0
        %8082 = vmatmul.mubr.f32.gmra.mrb[0].mxu0 %v7860
        %v8083 = vpop.f32.mrb[0].mxu0
        %v8084 = vadd.f32 0.0, %v8083
        %v8085 = vpop.f32.mrb[0].mxu0
        %8086 = vdwg.mxu0
        %v8087 = vadd.f32 %v7815, %v7929
        %v8088 = vadd.f32 %v7816, %v7934
        %v8089 = vadd.f32 %v7817, %v7939
        %v8090 = vadd.f32 %v7818, %v7944
        %v8091 = vadd.f32 %v7819, %v7949
        %v8092 = vadd.f32 %v7820, %v7954
        %v8093 = vadd.f32 %v7821, %v7959
        %v8094 = vadd.f32 %v7822, %v7964
        %v8095 = vadd.f32 %v7823, %v7969
        %v8096 = vadd.f32 %v7824, %v7974
        %v8097 = vadd.f32 %v7825, %v7979
        %v8098 = vadd.f32 %v7826, %v7984
        %v8099 = vadd.f32 %v7827, %v7989
        %v8100 = vadd.f32 %v7828, %v7994
        %v8101 = vadd.f32 %v7829, %v7999
        %v8102 = vadd.f32 %v7830, %v8004
        %v8103 = vadd.f32 %v7831, %v8009
        %v8104 = vadd.f32 %v7832, %v8014
        %v8105 = vadd.f32 %v7833, %v8019
        %v8106 = vadd.f32 %v7834, %v8024
        %v8107 = vadd.f32 %v7835, %v8029
        %v8108 = vadd.f32 %v7836, %v8034
        %v8109 = vadd.f32 %v7837, %v8039
        %v8110 = vadd.f32 %v7838, %v8044
        %v8111 = vadd.f32 %v7839, %v8049
        %v8112 = vadd.f32 %v7840, %v8054
        %v8113 = vadd.f32 %v7841, %v8059
        %v8114 = vadd.f32 %v7842, %v8064
        %v8115 = vadd.f32 %v7843, %v8069
        %v8116 = vadd.f32 %v7844, %v8074
        %v8117 = vadd.f32 %v7845, %v8079
        %v8118 = vadd.f32 %v7846, %v8084
        %v8119 = vrot.slane %v6270, 2
        %v8120 = vrot.slane %v6271, 2
        %v8121 = vsel %vm2176, %v8119, %v8120
        %v8122 = vrot.slane %v6272, 2
        %v8123 = vsel %vm2176, %v8120, %v8122
        %v8124 = vrot.slane %v6273, 2
        %v8125 = vrot.slane %v6274, 2
        %v8126 = vsel %vm2176, %v8124, %v8125
        %v8127 = vrot.slane %v6275, 2
        %v8128 = vsel %vm2176, %v8125, %v8127
        %v8129 = vrot.slane %v6276, 2
        %v8130 = vrot.slane %v6277, 2
        %v8131 = vsel %vm2176, %v8129, %v8130
        %v8132 = vrot.slane %v6278, 2
        %v8133 = vsel %vm2176, %v8130, %v8132
        %v8134 = vrot.slane %v6279, 2
        %v8135 = vrot.slane %v6280, 2
        %v8136 = vsel %vm2176, %v8134, %v8135
        %v8137 = vrot.slane %v6281, 2
        %v8138 = vsel %vm2176, %v8135, %v8137
        %v8139 = vrot.slane %v6282, 2
        %v8140 = vrot.slane %v6283, 2
        %v8141 = vsel %vm2176, %v8139, %v8140
        %v8142 = vrot.slane %v6284, 2
        %v8143 = vsel %vm2176, %v8140, %v8142
        %v8144 = vrot.slane %v6285, 2
        %v8145 = vrot.slane %v6286, 2
        %v8146 = vsel %vm2176, %v8144, %v8145
        %v8147 = vrot.slane %v6287, 2
        %v8148 = vsel %vm2176, %v8145, %v8147
        %v8149 = vrot.slane %v6288, 2
        %v8150 = vrot.slane %v6289, 2
        %v8151 = vsel %vm2176, %v8149, %v8150
        %v8152 = vrot.slane %v6290, 2
        %v8153 = vsel %vm2176, %v8150, %v8152
        %v8154 = vrot.slane %v6291, 2
        %v8155 = vrot.slane %v6292, 2
        %v8156 = vsel %vm2176, %v8154, %v8155
        %v8157 = vrot.slane %v6293, 2
        %v8158 = vsel %vm2176, %v8155, %v8157
        %v8159 = vrot.slane %v6294, 2
        %v8160 = vrot.slane %v6295, 2
        %v8161 = vsel %vm2176, %v8159, %v8160
        %v8162 = vrot.slane %v6296, 2
        %v8163 = vsel %vm2176, %v8160, %v8162
        %v8164 = vrot.slane %v6297, 2
        %v8165 = vrot.slane %v6298, 2
        %v8166 = vsel %vm2176, %v8164, %v8165
        %v8167 = vrot.slane %v6299, 2
        %v8168 = vsel %vm2176, %v8165, %v8167
        %v8169 = vrot.slane %v6300, 2
        %v8170 = vrot.slane %v6301, 2
        %v8171 = vsel %vm2176, %v8169, %v8170
        %v8172 = vrot.slane %v6302, 2
        %v8173 = vsel %vm2176, %v8170, %v8172
        %v8174 = vrot.slane %v6303, 2
        %v8175 = vrot.slane %v6304, 2
        %v8176 = vsel %vm2176, %v8174, %v8175
        %v8177 = vrot.slane %v6305, 2
        %v8178 = vsel %vm2176, %v8175, %v8177
        %v8179 = vrot.slane %v6306, 2
        %v8180 = vrot.slane %v6307, 2
        %v8181 = vsel %vm2176, %v8179, %v8180
        %v8182 = vrot.slane %v6308, 2
        %v8183 = vsel %vm2176, %v8180, %v8182
        %v8184 = vrot.slane %v6309, 2
        %v8185 = vrot.slane %v6310, 2
        %v8186 = vsel %vm2176, %v8184, %v8185
        %v8187 = vrot.slane %v6311, 2
        %v8188 = vsel %vm2176, %v8185, %v8187
        %v8189 = vrot.slane %v6312, 2
        %v8190 = vrot.slane %v6313, 2
        %v8191 = vsel %vm2176, %v8189, %v8190
        %v8192 = vrot.slane %v6314, 2
        %v8193 = vsel %vm2176, %v8190, %v8192
        %v8194 = vrot.slane %v6315, 2
        %v8195 = vrot.slane %v6316, 2
        %v8196 = vsel %vm2176, %v8194, %v8195
        %v8197 = vrot.slane %v6317, 2
        %v8198 = vsel %vm2176, %v8195, %v8197
        %s8199 = scalar_lea.vmem %s4, 64
        %v8200 = vld [vmem:[%s8199] sm:$0xff]
        %v8201 = vld [vmem:[%s8199 + $0x8] sm:$0xff]
        %v8202 = vld [vmem:[%s8199 + $0x10] sm:$0xff]
        %v8203 = vld [vmem:[%s8199 + $0x18] sm:$0xff]
        %v8204 = vsel %vm3173, %v8121, 0
        %v8206 = vsel %vm3173, %v8123, 0
        %v8208 = vsel %vm3173, %v8126, 0
        %v8210 = vsel %vm3173, %v8128, 0
        %v8212 = vsel %vm3173, %v8131, 0
        %v8214 = vsel %vm3173, %v8133, 0
        %v8216 = vsel %vm3173, %v8136, 0
        %v8218 = vsel %vm3173, %v8138, 0
        %v8220 = vsel %vm3173, %v8141, 0
        %v8222 = vsel %vm3173, %v8143, 0
        %v8224 = vsel %vm3173, %v8146, 0
        %v8226 = vsel %vm3173, %v8148, 0
        %v8228 = vsel %vm3173, %v8151, 0
        %v8230 = vsel %vm3173, %v8153, 0
        %v8232 = vsel %vm3173, %v8156, 0
        %v8234 = vsel %vm3173, %v8158, 0
        %v8236 = vsel %vm3173, %v8161, 0
        %v8238 = vsel %vm3173, %v8163, 0
        %v8240 = vsel %vm3173, %v8166, 0
        %v8242 = vsel %vm3173, %v8168, 0
        %v8244 = vsel %vm3173, %v8171, 0
        %v8246 = vsel %vm3173, %v8173, 0
        %v8248 = vsel %vm3173, %v8176, 0
        %v8250 = vsel %vm3173, %v8178, 0
        %v8252 = vsel %vm3173, %v8181, 0
        %v8254 = vsel %vm3173, %v8183, 0
        %v8256 = vsel %vm3173, %v8186, 0
        %v8258 = vsel %vm3173, %v8188, 0
        %v8260 = vsel %vm3173, %v8191, 0
        %v8262 = vsel %vm3173, %v8193, 0
        %v8264 = vsel %vm3173, %v8196, 0
        %v8266 = vsel %vm3173, %v8198, 0
        %8268 = vmatprep.subr.mxu0 0.0
        %8269 = vmatpush1.msra.mxu0 %v8200
        %8270 = vmatprep.subr.mxu0 0.0
        %8271 = vmatpush1.msra.mxu0 %v8201
        %8272 = vmatprep.subr.mxu0 0.0
        %8273 = vmatpush1.msra.mxu0 %v8202
        %8274 = vmatprep.subr.mxu0 0.0
        %8275 = vmatpush1.msra.mxu0 %v8203
        %8276 = vmatprep.subr.mxu0 0.0
        %8277 = vmatpush1.msra.mxu0 0.0
        %8278 = vmatprep.subr.mxu0 0.0
        %8279 = vmatpush1.msra.mxu0 0.0
        %8280 = vmatprep.subr.mxu0 0.0
        %8281 = vmatpush1.msra.mxu0 0.0
        %8282 = vmatprep.subr.mxu0 0.0
        %8283 = vmatpush1.msra.mxu0 0.0
        %8284 = vmatprep.subr.mxu0 0.0
        %8285 = vmatpush1.msra.mxu0 0.0
        %8286 = vmatprep.subr.mxu0 0.0
        %8287 = vmatpush1.msra.mxu0 0.0
        %8288 = vmatprep.subr.mxu0 0.0
        %8289 = vmatpush1.msra.mxu0 0.0
        %8290 = vmatprep.subr.mxu0 0.0
        %8291 = vmatpush1.msra.mxu0 0.0
        %8292 = vmatprep.subr.mxu0 0.0
        %8293 = vmatpush1.msra.mxu0 0.0
        %8294 = vmatprep.subr.mxu0 0.0
        %8295 = vmatpush1.msra.mxu0 0.0
        %8296 = vmatprep.subr.mxu0 0.0
        %8297 = vmatpush1.msra.mxu0 0.0
        %8298 = vmatprep.subr.mxu0 0.0
        %8299 = vmatpush1.msra.mxu0 0.0
        %8300 = vmatprep.subr.mxu0 0.0
        %8301 = vmatpush1.msra.mxu0 0.0
        %8302 = vmatprep.subr.mxu0 0.0
        %8303 = vmatpush1.msra.mxu0 0.0
        %8304 = vmatprep.subr.mxu0 0.0
        %8305 = vmatpush1.msra.mxu0 0.0
        %8306 = vmatprep.subr.mxu0 0.0
        %8307 = vmatpush1.msra.mxu0 0.0
        %8308 = vmatprep.subr.mxu0 0.0
        %8309 = vmatpush1.msra.mxu0 0.0
        %8310 = vmatprep.subr.mxu0 0.0
        %8311 = vmatpush1.msra.mxu0 0.0
        %8312 = vmatprep.subr.mxu0 0.0
        %8313 = vmatpush1.msra.mxu0 0.0
        %8314 = vmatprep.subr.mxu0 0.0
        %8315 = vmatpush1.msra.mxu0 0.0
        %8316 = vmatprep.subr.mxu0 0.0
        %8317 = vmatpush1.msra.mxu0 0.0
        %8318 = vmatprep.subr.mxu0 0.0
        %8319 = vmatpush1.msra.mxu0 0.0
        %8320 = vmatprep.subr.mxu0 0.0
        %8321 = vmatpush1.msra.mxu0 0.0
        %8322 = vmatprep.subr.mxu0 0.0
        %8323 = vmatpush1.msra.mxu0 0.0
        %8324 = vmatprep.subr.mxu0 0.0
        %8325 = vmatpush1.msra.mxu0 0.0
        %8326 = vmatprep.subr.mxu0 0.0
        %8327 = vmatpush1.msra.mxu0 0.0
        %8328 = vmatprep.subr.mxu0 0.0
        %8329 = vmatpush1.msra.mxu0 0.0
        %8330 = vmatprep.subr.mxu0 0.0
        %8331 = vmatpush1.msra.mxu0 0.0
        %8332 = vmatprep.mubr.f32.mxu0 0.0
        %8333 = vmatmul.mubr.f32.gmra.mrb[0].mxu0 %v8204
        %v8334 = vpop.f32.mrb[0].mxu0
        %v8335 = vadd.f32 0.0, %v8334
        %v8336 = vpop.f32.mrb[0].mxu0
        %8337 = vmatprep.mubr.f32.mxu0 0.0
        %8338 = vmatmul.mubr.f32.gmra.mrb[0].mxu0 %v8206
        %v8339 = vpop.f32.mrb[0].mxu0
        %v8340 = vadd.f32 0.0, %v8339
        %v8341 = vpop.f32.mrb[0].mxu0
        %8342 = vmatprep.mubr.f32.mxu0 0.0
        %8343 = vmatmul.mubr.f32.gmra.mrb[0].mxu0 %v8208
        %v8344 = vpop.f32.mrb[0].mxu0
        %v8345 = vadd.f32 0.0, %v8344
        %v8346 = vpop.f32.mrb[0].mxu0
        %8347 = vmatprep.mubr.f32.mxu0 0.0
        %8348 = vmatmul.mubr.f32.gmra.mrb[0].mxu0 %v8210
        %v8349 = vpop.f32.mrb[0].mxu0
        %v8350 = vadd.f32 0.0, %v8349
        %v8351 = vpop.f32.mrb[0].mxu0
        %8352 = vmatprep.mubr.f32.mxu0 0.0
        %8353 = vmatmul.mubr.f32.gmra.mrb[0].mxu0 %v8212
        %v8354 = vpop.f32.mrb[0].mxu0
        %v8355 = vadd.f32 0.0, %v8354
        %v8356 = vpop.f32.mrb[0].mxu0
        %8357 = vmatprep.mubr.f32.mxu0 0.0
        %8358 = vmatmul.mubr.f32.gmra.mrb[0].mxu0 %v8214
        %v8359 = vpop.f32.mrb[0].mxu0
        %v8360 = vadd.f32 0.0, %v8359
        %v8361 = vpop.f32.mrb[0].mxu0
        %8362 = vmatprep.mubr.f32.mxu0 0.0
        %8363 = vmatmul.mubr.f32.gmra.mrb[0].mxu0 %v8216
        %v8364 = vpop.f32.mrb[0].mxu0
        %v8365 = vadd.f32 0.0, %v8364
        %v8366 = vpop.f32.mrb[0].mxu0
        %8367 = vmatprep.mubr.f32.mxu0 0.0
        %8368 = vmatmul.mubr.f32.gmra.mrb[0].mxu0 %v8218
        %v8369 = vpop.f32.mrb[0].mxu0
        %v8370 = vadd.f32 0.0, %v8369
        %v8371 = vpop.f32.mrb[0].mxu0
        %8372 = vmatprep.mubr.f32.mxu0 0.0
        %8373 = vmatmul.mubr.f32.gmra.mrb[0].mxu0 %v8220
        %v8374 = vpop.f32.mrb[0].mxu0
        %v8375 = vadd.f32 0.0, %v8374
        %v8376 = vpop.f32.mrb[0].mxu0
        %8377 = vmatprep.mubr.f32.mxu0 0.0
        %8378 = vmatmul.mubr.f32.gmra.mrb[0].mxu0 %v8222
        %v8379 = vpop.f32.mrb[0].mxu0
        %v8380 = vadd.f32 0.0, %v8379
        %v8381 = vpop.f32.mrb[0].mxu0
        %8382 = vmatprep.mubr.f32.mxu0 0.0
        %8383 = vmatmul.mubr.f32.gmra.mrb[0].mxu0 %v8224
        %v8384 = vpop.f32.mrb[0].mxu0
        %v8385 = vadd.f32 0.0, %v8384
        %v8386 = vpop.f32.mrb[0].mxu0
        %8387 = vmatprep.mubr.f32.mxu0 0.0
        %8388 = vmatmul.mubr.f32.gmra.mrb[0].mxu0 %v8226
        %v8389 = vpop.f32.mrb[0].mxu0
        %v8390 = vadd.f32 0.0, %v8389
        %v8391 = vpop.f32.mrb[0].mxu0
        %8392 = vmatprep.mubr.f32.mxu0 0.0
        %8393 = vmatmul.mubr.f32.gmra.mrb[0].mxu0 %v8228
        %v8394 = vpop.f32.mrb[0].mxu0
        %v8395 = vadd.f32 0.0, %v8394
        %v8396 = vpop.f32.mrb[0].mxu0
        %8397 = vmatprep.mubr.f32.mxu0 0.0
        %8398 = vmatmul.mubr.f32.gmra.mrb[0].mxu0 %v8230
        %v8399 = vpop.f32.mrb[0].mxu0
        %v8400 = vadd.f32 0.0, %v8399
        %v8401 = vpop.f32.mrb[0].mxu0
        %8402 = vmatprep.mubr.f32.mxu0 0.0
        %8403 = vmatmul.mubr.f32.gmra.mrb[0].mxu0 %v8232
        %v8404 = vpop.f32.mrb[0].mxu0
        %v8405 = vadd.f32 0.0, %v8404
        %v8406 = vpop.f32.mrb[0].mxu0
        %8407 = vmatprep.mubr.f32.mxu0 0.0
        %8408 = vmatmul.mubr.f32.gmra.mrb[0].mxu0 %v8234
        %v8409 = vpop.f32.mrb[0].mxu0
        %v8410 = vadd.f32 0.0, %v8409
        %v8411 = vpop.f32.mrb[0].mxu0
        %8412 = vmatprep.mubr.f32.mxu0 0.0
        %8413 = vmatmul.mubr.f32.gmra.mrb[0].mxu0 %v8236
        %v8414 = vpop.f32.mrb[0].mxu0
        %v8415 = vadd.f32 0.0, %v8414
        %v8416 = vpop.f32.mrb[0].mxu0
        %8417 = vmatprep.mubr.f32.mxu0 0.0
        %8418 = vmatmul.mubr.f32.gmra.mrb[0].mxu0 %v8238
        %v8419 = vpop.f32.mrb[0].mxu0
        %v8420 = vadd.f32 0.0, %v8419
        %v8421 = vpop.f32.mrb[0].mxu0
        %8422 = vmatprep.mubr.f32.mxu0 0.0
        %8423 = vmatmul.mubr.f32.gmra.mrb[0].mxu0 %v8240
        %v8424 = vpop.f32.mrb[0].mxu0
        %v8425 = vadd.f32 0.0, %v8424
        %v8426 = vpop.f32.mrb[0].mxu0
        %8427 = vmatprep.mubr.f32.mxu0 0.0
        %8428 = vmatmul.mubr.f32.gmra.mrb[0].mxu0 %v8242
        %v8429 = vpop.f32.mrb[0].mxu0
        %v8430 = vadd.f32 0.0, %v8429
        %v8431 = vpop.f32.mrb[0].mxu0
        %8432 = vmatprep.mubr.f32.mxu0 0.0
        %8433 = vmatmul.mubr.f32.gmra.mrb[0].mxu0 %v8244
        %v8434 = vpop.f32.mrb[0].mxu0
        %v8435 = vadd.f32 0.0, %v8434
        %v8436 = vpop.f32.mrb[0].mxu0
        %8437 = vmatprep.mubr.f32.mxu0 0.0
        %8438 = vmatmul.mubr.f32.gmra.mrb[0].mxu0 %v8246
        %v8439 = vpop.f32.mrb[0].mxu0
        %v8440 = vadd.f32 0.0, %v8439
        %v8441 = vpop.f32.mrb[0].mxu0
        %8442 = vmatprep.mubr.f32.mxu0 0.0
        %8443 = vmatmul.mubr.f32.gmra.mrb[0].mxu0 %v8248
        %v8444 = vpop.f32.mrb[0].mxu0
        %v8445 = vadd.f32 0.0, %v8444
        %v8446 = vpop.f32.mrb[0].mxu0
        %8447 = vmatprep.mubr.f32.mxu0 0.0
        %8448 = vmatmul.mubr.f32.gmra.mrb[0].mxu0 %v8250
        %v8449 = vpop.f32.mrb[0].mxu0
        %v8450 = vadd.f32 0.0, %v8449
        %v8451 = vpop.f32.mrb[0].mxu0
        %8452 = vmatprep.mubr.f32.mxu0 0.0
        %8453 = vmatmul.mubr.f32.gmra.mrb[0].mxu0 %v8252
        %v8454 = vpop.f32.mrb[0].mxu0
        %v8455 = vadd.f32 0.0, %v8454
        %v8456 = vpop.f32.mrb[0].mxu0
        %8457 = vmatprep.mubr.f32.mxu0 0.0
        %8458 = vmatmul.mubr.f32.gmra.mrb[0].mxu0 %v8254
        %v8459 = vpop.f32.mrb[0].mxu0
        %v8460 = vadd.f32 0.0, %v8459
        %v8461 = vpop.f32.mrb[0].mxu0
        %8462 = vmatprep.mubr.f32.mxu0 0.0
        %8463 = vmatmul.mubr.f32.gmra.mrb[0].mxu0 %v8256
        %v8464 = vpop.f32.mrb[0].mxu0
        %v8465 = vadd.f32 0.0, %v8464
        %v8466 = vpop.f32.mrb[0].mxu0
        %8467 = vmatprep.mubr.f32.mxu0 0.0
        %8468 = vmatmul.mubr.f32.gmra.mrb[0].mxu0 %v8258
        %v8469 = vpop.f32.mrb[0].mxu0
        %v8470 = vadd.f32 0.0, %v8469
        %v8471 = vpop.f32.mrb[0].mxu0
        %8472 = vmatprep.mubr.f32.mxu0 0.0
        %8473 = vmatmul.mubr.f32.gmra.mrb[0].mxu0 %v8260
        %v8474 = vpop.f32.mrb[0].mxu0
        %v8475 = vadd.f32 0.0, %v8474
        %v8476 = vpop.f32.mrb[0].mxu0
        %8477 = vmatprep.mubr.f32.mxu0 0.0
        %8478 = vmatmul.mubr.f32.gmra.mrb[0].mxu0 %v8262
        %v8479 = vpop.f32.mrb[0].mxu0
        %v8480 = vadd.f32 0.0, %v8479
        %v8481 = vpop.f32.mrb[0].mxu0
        %8482 = vmatprep.mubr.f32.mxu0 0.0
        %8483 = vmatmul.mubr.f32.gmra.mrb[0].mxu0 %v8264
        %v8484 = vpop.f32.mrb[0].mxu0
        %v8485 = vadd.f32 0.0, %v8484
        %v8486 = vpop.f32.mrb[0].mxu0
        %8487 = vmatprep.mubr.f32.mxu0 0.0
        %8488 = vmatmul.mubr.f32.gmra.mrb[0].mxu0 %v8266
        %v8489 = vpop.f32.mrb[0].mxu0
        %v8490 = vadd.f32 0.0, %v8489
        %v8491 = vpop.f32.mrb[0].mxu0
        %8492 = vdwg.mxu0
        %v8493 = vadd.f32 %v8087, %v8335
        %v8494 = vadd.f32 %v8088, %v8340
        %v8495 = vadd.f32 %v8089, %v8345
        %v8496 = vadd.f32 %v8090, %v8350
        %v8497 = vadd.f32 %v8091, %v8355
        %v8498 = vadd.f32 %v8092, %v8360
        %v8499 = vadd.f32 %v8093, %v8365
        %v8500 = vadd.f32 %v8094, %v8370
        %v8501 = vadd.f32 %v8095, %v8375
        %v8502 = vadd.f32 %v8096, %v8380
        %v8503 = vadd.f32 %v8097, %v8385
        %v8504 = vadd.f32 %v8098, %v8390
        %v8505 = vadd.f32 %v8099, %v8395
        %v8506 = vadd.f32 %v8100, %v8400
        %v8507 = vadd.f32 %v8101, %v8405
        %v8508 = vadd.f32 %v8102, %v8410
        %v8509 = vadd.f32 %v8103, %v8415
        %v8510 = vadd.f32 %v8104, %v8420
        %v8511 = vadd.f32 %v8105, %v8425
        %v8512 = vadd.f32 %v8106, %v8430
        %v8513 = vadd.f32 %v8107, %v8435
        %v8514 = vadd.f32 %v8108, %v8440
        %v8515 = vadd.f32 %v8109, %v8445
        %v8516 = vadd.f32 %v8110, %v8450
        %v8517 = vadd.f32 %v8111, %v8455
        %v8518 = vadd.f32 %v8112, %v8460
        %v8519 = vadd.f32 %v8113, %v8465
        %v8520 = vadd.f32 %v8114, %v8470
        %v8521 = vadd.f32 %v8115, %v8475
        %v8522 = vadd.f32 %v8116, %v8480
        %v8523 = vadd.f32 %v8117, %v8485
        %v8524 = vadd.f32 %v8118, %v8490
        %v8525 = vrot.slane %v6318, 2
        %v8526 = vrot.slane %v6319, 2
        %v8527 = vsel %vm2176, %v8525, %v8526
        %v8528 = vrot.slane %v6320, 2
        %v8529 = vsel %vm2176, %v8526, %v8528
        %s8530 = scalar_lea.vmem %s4, 160
        %v8531 = vld [vmem:[%s8530] sm:$0xff]
        %v8532 = vld [vmem:[%s8530 + $0x8] sm:$0xff]
        %v8533 = vld [vmem:[%s8530 + $0x10] sm:$0xff]
        %v8534 = vld [vmem:[%s8530 + $0x18] sm:$0xff]
        %v8535 = vsel %vm3173, %v8527, 0
        %v8537 = vsel %vm3173, %v8529, 0
        %8539 = vmatprep.subr.mxu0 0.0
        %8540 = vmatpush1.msra.mxu0 %v8531
        %8541 = vmatprep.subr.mxu0 0.0
        %8542 = vmatpush1.msra.mxu0 %v8532
        %8543 = vmatprep.subr.mxu0 0.0
        %8544 = vmatpush1.msra.mxu0 %v8533
        %8545 = vmatprep.subr.mxu0 0.0
        %8546 = vmatpush1.msra.mxu0 %v8534
        %8547 = vmatprep.subr.mxu0 0.0
        %8548 = vmatpush1.msra.mxu0 0.0
        %8549 = vmatprep.subr.mxu0 0.0
        %8550 = vmatpush1.msra.mxu0 0.0
        %8551 = vmatprep.subr.mxu0 0.0
        %8552 = vmatpush1.msra.mxu0 0.0
        %8553 = vmatprep.subr.mxu0 0.0
        %8554 = vmatpush1.msra.mxu0 0.0
        %8555 = vmatprep.subr.mxu0 0.0
        %8556 = vmatpush1.msra.mxu0 0.0
        %8557 = vmatprep.subr.mxu0 0.0
        %8558 = vmatpush1.msra.mxu0 0.0
        %8559 = vmatprep.subr.mxu0 0.0
        %8560 = vmatpush1.msra.mxu0 0.0
        %8561 = vmatprep.subr.mxu0 0.0
        %8562 = vmatpush1.msra.mxu0 0.0
        %8563 = vmatprep.subr.mxu0 0.0
        %8564 = vmatpush1.msra.mxu0 0.0
        %8565 = vmatprep.subr.mxu0 0.0
        %8566 = vmatpush1.msra.mxu0 0.0
        %8567 = vmatprep.subr.mxu0 0.0
        %8568 = vmatpush1.msra.mxu0 0.0
        %8569 = vmatprep.subr.mxu0 0.0
        %8570 = vmatpush1.msra.mxu0 0.0
        %8571 = vmatprep.subr.mxu0 0.0
        %8572 = vmatpush1.msra.mxu0 0.0
        %8573 = vmatprep.subr.mxu0 0.0
        %8574 = vmatpush1.msra.mxu0 0.0
        %8575 = vmatprep.subr.mxu0 0.0
        %8576 = vmatpush1.msra.mxu0 0.0
        %8577 = vmatprep.subr.mxu0 0.0
        %8578 = vmatpush1.msra.mxu0 0.0
        %8579 = vmatprep.subr.mxu0 0.0
        %8580 = vmatpush1.msra.mxu0 0.0
        %8581 = vmatprep.subr.mxu0 0.0
        %8582 = vmatpush1.msra.mxu0 0.0
        %8583 = vmatprep.subr.mxu0 0.0
        %8584 = vmatpush1.msra.mxu0 0.0
        %8585 = vmatprep.subr.mxu0 0.0
        %8586 = vmatpush1.msra.mxu0 0.0
        %8587 = vmatprep.subr.mxu0 0.0
        %8588 = vmatpush1.msra.mxu0 0.0
        %8589 = vmatprep.subr.mxu0 0.0
        %8590 = vmatpush1.msra.mxu0 0.0
        %8591 = vmatprep.subr.mxu0 0.0
        %8592 = vmatpush1.msra.mxu0 0.0
        %8593 = vmatprep.subr.mxu0 0.0
        %8594 = vmatpush1.msra.mxu0 0.0
        %8595 = vmatprep.subr.mxu0 0.0
        %8596 = vmatpush1.msra.mxu0 0.0
        %8597 = vmatprep.subr.mxu0 0.0
        %8598 = vmatpush1.msra.mxu0 0.0
        %8599 = vmatprep.subr.mxu0 0.0
        %8600 = vmatpush1.msra.mxu0 0.0
        %8601 = vmatprep.subr.mxu0 0.0
        %8602 = vmatpush1.msra.mxu0 0.0
        %8603 = vmatprep.mubr.f32.mxu0 0.0
        %8604 = vmatmul.mubr.f32.gmra.mrb[0].mxu0 %v8208
        %v8605 = vpop.f32.mrb[0].mxu0
        %v8606 = vadd.f32 0.0, %v8605
        %v8607 = vpop.f32.mrb[0].mxu0
        %8608 = vmatprep.mubr.f32.mxu0 0.0
        %8609 = vmatmul.mubr.f32.gmra.mrb[0].mxu0 %v8210
        %v8610 = vpop.f32.mrb[0].mxu0
        %v8611 = vadd.f32 0.0, %v8610
        %v8612 = vpop.f32.mrb[0].mxu0
        %8613 = vmatprep.mubr.f32.mxu0 0.0
        %8614 = vmatmul.mubr.f32.gmra.mrb[0].mxu0 %v8212
        %v8615 = vpop.f32.mrb[0].mxu0
        %v8616 = vadd.f32 0.0, %v8615
        %v8617 = vpop.f32.mrb[0].mxu0
        %8618 = vmatprep.mubr.f32.mxu0 0.0
        %8619 = vmatmul.mubr.f32.gmra.mrb[0].mxu0 %v8214
        %v8620 = vpop.f32.mrb[0].mxu0
        %v8621 = vadd.f32 0.0, %v8620
        %v8622 = vpop.f32.mrb[0].mxu0
        %8623 = vmatprep.mubr.f32.mxu0 0.0
        %8624 = vmatmul.mubr.f32.gmra.mrb[0].mxu0 %v8216
        %v8625 = vpop.f32.mrb[0].mxu0
        %v8626 = vadd.f32 0.0, %v8625
        %v8627 = vpop.f32.mrb[0].mxu0
        %8628 = vmatprep.mubr.f32.mxu0 0.0
        %8629 = vmatmul.mubr.f32.gmra.mrb[0].mxu0 %v8218
        %v8630 = vpop.f32.mrb[0].mxu0
        %v8631 = vadd.f32 0.0, %v8630
        %v8632 = vpop.f32.mrb[0].mxu0
        %8633 = vmatprep.mubr.f32.mxu0 0.0
        %8634 = vmatmul.mubr.f32.gmra.mrb[0].mxu0 %v8220
        %v8635 = vpop.f32.mrb[0].mxu0
        %v8636 = vadd.f32 0.0, %v8635
        %v8637 = vpop.f32.mrb[0].mxu0
        %8638 = vmatprep.mubr.f32.mxu0 0.0
        %8639 = vmatmul.mubr.f32.gmra.mrb[0].mxu0 %v8222
        %v8640 = vpop.f32.mrb[0].mxu0
        %v8641 = vadd.f32 0.0, %v8640
        %v8642 = vpop.f32.mrb[0].mxu0
        %8643 = vmatprep.mubr.f32.mxu0 0.0
        %8644 = vmatmul.mubr.f32.gmra.mrb[0].mxu0 %v8224
        %v8645 = vpop.f32.mrb[0].mxu0
        %v8646 = vadd.f32 0.0, %v8645
        %v8647 = vpop.f32.mrb[0].mxu0
        %8648 = vmatprep.mubr.f32.mxu0 0.0
        %8649 = vmatmul.mubr.f32.gmra.mrb[0].mxu0 %v8226
        %v8650 = vpop.f32.mrb[0].mxu0
        %v8651 = vadd.f32 0.0, %v8650
        %v8652 = vpop.f32.mrb[0].mxu0
        %8653 = vmatprep.mubr.f32.mxu0 0.0
        %8654 = vmatmul.mubr.f32.gmra.mrb[0].mxu0 %v8228
        %v8655 = vpop.f32.mrb[0].mxu0
        %v8656 = vadd.f32 0.0, %v8655
        %v8657 = vpop.f32.mrb[0].mxu0
        %8658 = vmatprep.mubr.f32.mxu0 0.0
        %8659 = vmatmul.mubr.f32.gmra.mrb[0].mxu0 %v8230
        %v8660 = vpop.f32.mrb[0].mxu0
        %v8661 = vadd.f32 0.0, %v8660
        %v8662 = vpop.f32.mrb[0].mxu0
        %8663 = vmatprep.mubr.f32.mxu0 0.0
        %8664 = vmatmul.mubr.f32.gmra.mrb[0].mxu0 %v8232
        %v8665 = vpop.f32.mrb[0].mxu0
        %v8666 = vadd.f32 0.0, %v8665
        %v8667 = vpop.f32.mrb[0].mxu0
        %8668 = vmatprep.mubr.f32.mxu0 0.0
        %8669 = vmatmul.mubr.f32.gmra.mrb[0].mxu0 %v8234
        %v8670 = vpop.f32.mrb[0].mxu0
        %v8671 = vadd.f32 0.0, %v8670
        %v8672 = vpop.f32.mrb[0].mxu0
        %8673 = vmatprep.mubr.f32.mxu0 0.0
        %8674 = vmatmul.mubr.f32.gmra.mrb[0].mxu0 %v8236
        %v8675 = vpop.f32.mrb[0].mxu0
        %v8676 = vadd.f32 0.0, %v8675
        %v8677 = vpop.f32.mrb[0].mxu0
        %8678 = vmatprep.mubr.f32.mxu0 0.0
        %8679 = vmatmul.mubr.f32.gmra.mrb[0].mxu0 %v8238
        %v8680 = vpop.f32.mrb[0].mxu0
        %v8681 = vadd.f32 0.0, %v8680
        %v8682 = vpop.f32.mrb[0].mxu0
        %8683 = vmatprep.mubr.f32.mxu0 0.0
        %8684 = vmatmul.mubr.f32.gmra.mrb[0].mxu0 %v8240
        %v8685 = vpop.f32.mrb[0].mxu0
        %v8686 = vadd.f32 0.0, %v8685
        %v8687 = vpop.f32.mrb[0].mxu0
        %8688 = vmatprep.mubr.f32.mxu0 0.0
        %8689 = vmatmul.mubr.f32.gmra.mrb[0].mxu0 %v8242
        %v8690 = vpop.f32.mrb[0].mxu0
        %v8691 = vadd.f32 0.0, %v8690
        %v8692 = vpop.f32.mrb[0].mxu0
        %8693 = vmatprep.mubr.f32.mxu0 0.0
        %8694 = vmatmul.mubr.f32.gmra.mrb[0].mxu0 %v8244
        %v8695 = vpop.f32.mrb[0].mxu0
        %v8696 = vadd.f32 0.0, %v8695
        %v8697 = vpop.f32.mrb[0].mxu0
        %8698 = vmatprep.mubr.f32.mxu0 0.0
        %8699 = vmatmul.mubr.f32.gmra.mrb[0].mxu0 %v8246
        %v8700 = vpop.f32.mrb[0].mxu0
        %v8701 = vadd.f32 0.0, %v8700
        %v8702 = vpop.f32.mrb[0].mxu0
        %8703 = vmatprep.mubr.f32.mxu0 0.0
        %8704 = vmatmul.mubr.f32.gmra.mrb[0].mxu0 %v8248
        %v8705 = vpop.f32.mrb[0].mxu0
        %v8706 = vadd.f32 0.0, %v8705
        %v8707 = vpop.f32.mrb[0].mxu0
        %8708 = vmatprep.mubr.f32.mxu0 0.0
        %8709 = vmatmul.mubr.f32.gmra.mrb[0].mxu0 %v8250
        %v8710 = vpop.f32.mrb[0].mxu0
        %v8711 = vadd.f32 0.0, %v8710
        %v8712 = vpop.f32.mrb[0].mxu0
        %8713 = vmatprep.mubr.f32.mxu0 0.0
        %8714 = vmatmul.mubr.f32.gmra.mrb[0].mxu0 %v8252
        %v8715 = vpop.f32.mrb[0].mxu0
        %v8716 = vadd.f32 0.0, %v8715
        %v8717 = vpop.f32.mrb[0].mxu0
        %8718 = vmatprep.mubr.f32.mxu0 0.0
        %8719 = vmatmul.mubr.f32.gmra.mrb[0].mxu0 %v8254
        %v8720 = vpop.f32.mrb[0].mxu0
        %v8721 = vadd.f32 0.0, %v8720
        %v8722 = vpop.f32.mrb[0].mxu0
        %8723 = vmatprep.mubr.f32.mxu0 0.0
        %8724 = vmatmul.mubr.f32.gmra.mrb[0].mxu0 %v8256
        %v8725 = vpop.f32.mrb[0].mxu0
        %v8726 = vadd.f32 0.0, %v8725
        %v8727 = vpop.f32.mrb[0].mxu0
        %8728 = vmatprep.mubr.f32.mxu0 0.0
        %8729 = vmatmul.mubr.f32.gmra.mrb[0].mxu0 %v8258
        %v8730 = vpop.f32.mrb[0].mxu0
        %v8731 = vadd.f32 0.0, %v8730
        %v8732 = vpop.f32.mrb[0].mxu0
        %8733 = vmatprep.mubr.f32.mxu0 0.0
        %8734 = vmatmul.mubr.f32.gmra.mrb[0].mxu0 %v8260
        %v8735 = vpop.f32.mrb[0].mxu0
        %v8736 = vadd.f32 0.0, %v8735
        %v8737 = vpop.f32.mrb[0].mxu0
        %8738 = vmatprep.mubr.f32.mxu0 0.0
        %8739 = vmatmul.mubr.f32.gmra.mrb[0].mxu0 %v8262
        %v8740 = vpop.f32.mrb[0].mxu0
        %v8741 = vadd.f32 0.0, %v8740
        %v8742 = vpop.f32.mrb[0].mxu0
        %8743 = vmatprep.mubr.f32.mxu0 0.0
        %8744 = vmatmul.mubr.f32.gmra.mrb[0].mxu0 %v8264
        %v8745 = vpop.f32.mrb[0].mxu0
        %v8746 = vadd.f32 0.0, %v8745
        %v8747 = vpop.f32.mrb[0].mxu0
        %8748 = vmatprep.mubr.f32.mxu0 0.0
        %8749 = vmatmul.mubr.f32.gmra.mrb[0].mxu0 %v8266
        %v8750 = vpop.f32.mrb[0].mxu0
        %v8751 = vadd.f32 0.0, %v8750
        %v8752 = vpop.f32.mrb[0].mxu0
        %8753 = vmatprep.mubr.f32.mxu0 0.0
        %8754 = vmatmul.mubr.f32.gmra.mrb[0].mxu0 %v8535
        %v8755 = vpop.f32.mrb[0].mxu0
        %v8756 = vadd.f32 0.0, %v8755
        %v8757 = vpop.f32.mrb[0].mxu0
        %8758 = vmatprep.mubr.f32.mxu0 0.0
        %8759 = vmatmul.mubr.f32.gmra.mrb[0].mxu0 %v8537
        %v8760 = vpop.f32.mrb[0].mxu0
        %v8761 = vadd.f32 0.0, %v8760
        %v8762 = vpop.f32.mrb[0].mxu0
        %8763 = vdwg.mxu0
        %v8764 = vadd.f32 %v8493, %v8606
        %v8765 = vadd.f32 %v8494, %v8611
        %v8766 = vadd.f32 %v8495, %v8616
        %v8767 = vadd.f32 %v8496, %v8621
        %v8768 = vadd.f32 %v8497, %v8626
        %v8769 = vadd.f32 %v8498, %v8631
        %v8770 = vadd.f32 %v8499, %v8636
        %v8771 = vadd.f32 %v8500, %v8641
        %v8772 = vadd.f32 %v8501, %v8646
        %v8773 = vadd.f32 %v8502, %v8651
        %v8774 = vadd.f32 %v8503, %v8656
        %v8775 = vadd.f32 %v8504, %v8661
        %v8776 = vadd.f32 %v8505, %v8666
        %v8777 = vadd.f32 %v8506, %v8671
        %v8778 = vadd.f32 %v8507, %v8676
        %v8779 = vadd.f32 %v8508, %v8681
        %v8780 = vadd.f32 %v8509, %v8686
        %v8781 = vadd.f32 %v8510, %v8691
        %v8782 = vadd.f32 %v8511, %v8696
        %v8783 = vadd.f32 %v8512, %v8701
        %v8784 = vadd.f32 %v8513, %v8706
        %v8785 = vadd.f32 %v8514, %v8711
        %v8786 = vadd.f32 %v8515, %v8716
        %v8787 = vadd.f32 %v8516, %v8721
        %v8788 = vadd.f32 %v8517, %v8726
        %v8789 = vadd.f32 %v8518, %v8731
        %v8790 = vadd.f32 %v8519, %v8736
        %v8791 = vadd.f32 %v8520, %v8741
        %v8792 = vadd.f32 %v8521, %v8746
        %v8793 = vadd.f32 %v8522, %v8751
        %v8794 = vadd.f32 %v8523, %v8756
        %v8795 = vadd.f32 %v8524, %v8761
        %v8796 = vrot.slane %v6321, 2
        %v8797 = vrot.slane %v6322, 2
        %v8798 = vsel %vm2176, %v8796, %v8797
        %v8799 = vrot.slane %v6323, 2
        %v8800 = vsel %vm2176, %v8797, %v8799
        %s8801 = scalar_lea.vmem %s4, 256
        %v8802 = vld [vmem:[%s8801] sm:$0xff]
        %v8803 = vld [vmem:[%s8801 + $0x8] sm:$0xff]
        %v8804 = vld [vmem:[%s8801 + $0x10] sm:$0xff]
        %v8805 = vld [vmem:[%s8801 + $0x18] sm:$0xff]
        %v8806 = vsel %vm3173, %v8798, 0
        %v8808 = vsel %vm3173, %v8800, 0
        %8810 = vmatprep.subr.mxu0 0.0
        %8811 = vmatpush1.msra.mxu0 %v8802
        %8812 = vmatprep.subr.mxu0 0.0
        %8813 = vmatpush1.msra.mxu0 %v8803
        %8814 = vmatprep.subr.mxu0 0.0
        %8815 = vmatpush1.msra.mxu0 %v8804
        %8816 = vmatprep.subr.mxu0 0.0
        %8817 = vmatpush1.msra.mxu0 %v8805
        %8818 = vmatprep.subr.mxu0 0.0
        %8819 = vmatpush1.msra.mxu0 0.0
        %8820 = vmatprep.subr.mxu0 0.0
        %8821 = vmatpush1.msra.mxu0 0.0
        %8822 = vmatprep.subr.mxu0 0.0
        %8823 = vmatpush1.msra.mxu0 0.0
        %8824 = vmatprep.subr.mxu0 0.0
        %8825 = vmatpush1.msra.mxu0 0.0
        %8826 = vmatprep.subr.mxu0 0.0
        %8827 = vmatpush1.msra.mxu0 0.0
        %8828 = vmatprep.subr.mxu0 0.0
        %8829 = vmatpush1.msra.mxu0 0.0
        %8830 = vmatprep.subr.mxu0 0.0
        %8831 = vmatpush1.msra.mxu0 0.0
        %8832 = vmatprep.subr.mxu0 0.0
        %8833 = vmatpush1.msra.mxu0 0.0
        %8834 = vmatprep.subr.mxu0 0.0
        %8835 = vmatpush1.msra.mxu0 0.0
        %8836 = vmatprep.subr.mxu0 0.0
        %8837 = vmatpush1.msra.mxu0 0.0
        %8838 = vmatprep.subr.mxu0 0.0
        %8839 = vmatpush1.msra.mxu0 0.0
        %8840 = vmatprep.subr.mxu0 0.0
        %8841 = vmatpush1.msra.mxu0 0.0
        %8842 = vmatprep.subr.mxu0 0.0
        %8843 = vmatpush1.msra.mxu0 0.0
        %8844 = vmatprep.subr.mxu0 0.0
        %8845 = vmatpush1.msra.mxu0 0.0
        %8846 = vmatprep.subr.mxu0 0.0
        %8847 = vmatpush1.msra.mxu0 0.0
        %8848 = vmatprep.subr.mxu0 0.0
        %8849 = vmatpush1.msra.mxu0 0.0
        %8850 = vmatprep.subr.mxu0 0.0
        %8851 = vmatpush1.msra.mxu0 0.0
        %8852 = vmatprep.subr.mxu0 0.0
        %8853 = vmatpush1.msra.mxu0 0.0
        %8854 = vmatprep.subr.mxu0 0.0
        %8855 = vmatpush1.msra.mxu0 0.0
        %8856 = vmatprep.subr.mxu0 0.0
        %8857 = vmatpush1.msra.mxu0 0.0
        %8858 = vmatprep.subr.mxu0 0.0
        %8859 = vmatpush1.msra.mxu0 0.0
        %8860 = vmatprep.subr.mxu0 0.0
        %8861 = vmatpush1.msra.mxu0 0.0
        %8862 = vmatprep.subr.mxu0 0.0
        %8863 = vmatpush1.msra.mxu0 0.0
        %8864 = vmatprep.subr.mxu0 0.0
        %8865 = vmatpush1.msra.mxu0 0.0
        %8866 = vmatprep.subr.mxu0 0.0
        %8867 = vmatpush1.msra.mxu0 0.0
        %8868 = vmatprep.subr.mxu0 0.0
        %8869 = vmatpush1.msra.mxu0 0.0
        %8870 = vmatprep.subr.mxu0 0.0
        %8871 = vmatpush1.msra.mxu0 0.0
        %8872 = vmatprep.subr.mxu0 0.0
        %8873 = vmatpush1.msra.mxu0 0.0
        %8874 = vmatprep.mubr.f32.mxu0 0.0
        %8875 = vmatmul.mubr.f32.gmra.mrb[0].mxu0 %v8212
        %v8876 = vpop.f32.mrb[0].mxu0
        %v8877 = vadd.f32 0.0, %v8876
        %v8878 = vpop.f32.mrb[0].mxu0
        %8879 = vmatprep.mubr.f32.mxu0 0.0
        %8880 = vmatmul.mubr.f32.gmra.mrb[0].mxu0 %v8214
        %v8881 = vpop.f32.mrb[0].mxu0
        %v8882 = vadd.f32 0.0, %v8881
        %v8883 = vpop.f32.mrb[0].mxu0
        %8884 = vmatprep.mubr.f32.mxu0 0.0
        %8885 = vmatmul.mubr.f32.gmra.mrb[0].mxu0 %v8216
        %v8886 = vpop.f32.mrb[0].mxu0
        %v8887 = vadd.f32 0.0, %v8886
        %v8888 = vpop.f32.mrb[0].mxu0
        %8889 = vmatprep.mubr.f32.mxu0 0.0
        %8890 = vmatmul.mubr.f32.gmra.mrb[0].mxu0 %v8218
        %v8891 = vpop.f32.mrb[0].mxu0
        %v8892 = vadd.f32 0.0, %v8891
        %v8893 = vpop.f32.mrb[0].mxu0
        %8894 = vmatprep.mubr.f32.mxu0 0.0
        %8895 = vmatmul.mubr.f32.gmra.mrb[0].mxu0 %v8220
        %v8896 = vpop.f32.mrb[0].mxu0
        %v8897 = vadd.f32 0.0, %v8896
        %v8898 = vpop.f32.mrb[0].mxu0
        %8899 = vmatprep.mubr.f32.mxu0 0.0
        %8900 = vmatmul.mubr.f32.gmra.mrb[0].mxu0 %v8222
        %v8901 = vpop.f32.mrb[0].mxu0
        %v8902 = vadd.f32 0.0, %v8901
        %v8903 = vpop.f32.mrb[0].mxu0
        %8904 = vmatprep.mubr.f32.mxu0 0.0
        %8905 = vmatmul.mubr.f32.gmra.mrb[0].mxu0 %v8224
        %v8906 = vpop.f32.mrb[0].mxu0
        %v8907 = vadd.f32 0.0, %v8906
        %v8908 = vpop.f32.mrb[0].mxu0
        %8909 = vmatprep.mubr.f32.mxu0 0.0
        %8910 = vmatmul.mubr.f32.gmra.mrb[0].mxu0 %v8226
        %v8911 = vpop.f32.mrb[0].mxu0
        %v8912 = vadd.f32 0.0, %v8911
        %v8913 = vpop.f32.mrb[0].mxu0
        %8914 = vmatprep.mubr.f32.mxu0 0.0
        %8915 = vmatmul.mubr.f32.gmra.mrb[0].mxu0 %v8228
        %v8916 = vpop.f32.mrb[0].mxu0
        %v8917 = vadd.f32 0.0, %v8916
        %v8918 = vpop.f32.mrb[0].mxu0
        %8919 = vmatprep.mubr.f32.mxu0 0.0
        %8920 = vmatmul.mubr.f32.gmra.mrb[0].mxu0 %v8230
        %v8921 = vpop.f32.mrb[0].mxu0
        %v8922 = vadd.f32 0.0, %v8921
        %v8923 = vpop.f32.mrb[0].mxu0
        %8924 = vmatprep.mubr.f32.mxu0 0.0
        %8925 = vmatmul.mubr.f32.gmra.mrb[0].mxu0 %v8232
        %v8926 = vpop.f32.mrb[0].mxu0
        %v8927 = vadd.f32 0.0, %v8926
        %v8928 = vpop.f32.mrb[0].mxu0
        %8929 = vmatprep.mubr.f32.mxu0 0.0
        %8930 = vmatmul.mubr.f32.gmra.mrb[0].mxu0 %v8234
        %v8931 = vpop.f32.mrb[0].mxu0
        %v8932 = vadd.f32 0.0, %v8931
        %v8933 = vpop.f32.mrb[0].mxu0
        %8934 = vmatprep.mubr.f32.mxu0 0.0
        %8935 = vmatmul.mubr.f32.gmra.mrb[0].mxu0 %v8236
        %v8936 = vpop.f32.mrb[0].mxu0
        %v8937 = vadd.f32 0.0, %v8936
        %v8938 = vpop.f32.mrb[0].mxu0
        %8939 = vmatprep.mubr.f32.mxu0 0.0
        %8940 = vmatmul.mubr.f32.gmra.mrb[0].mxu0 %v8238
        %v8941 = vpop.f32.mrb[0].mxu0
        %v8942 = vadd.f32 0.0, %v8941
        %v8943 = vpop.f32.mrb[0].mxu0
        %8944 = vmatprep.mubr.f32.mxu0 0.0
        %8945 = vmatmul.mubr.f32.gmra.mrb[0].mxu0 %v8240
        %v8946 = vpop.f32.mrb[0].mxu0
        %v8947 = vadd.f32 0.0, %v8946
        %v8948 = vpop.f32.mrb[0].mxu0
        %8949 = vmatprep.mubr.f32.mxu0 0.0
        %8950 = vmatmul.mubr.f32.gmra.mrb[0].mxu0 %v8242
        %v8951 = vpop.f32.mrb[0].mxu0
        %v8952 = vadd.f32 0.0, %v8951
        %v8953 = vpop.f32.mrb[0].mxu0
        %8954 = vmatprep.mubr.f32.mxu0 0.0
        %8955 = vmatmul.mubr.f32.gmra.mrb[0].mxu0 %v8244
        %v8956 = vpop.f32.mrb[0].mxu0
        %v8957 = vadd.f32 0.0, %v8956
        %v8958 = vpop.f32.mrb[0].mxu0
        %8959 = vmatprep.mubr.f32.mxu0 0.0
        %8960 = vmatmul.mubr.f32.gmra.mrb[0].mxu0 %v8246
        %v8961 = vpop.f32.mrb[0].mxu0
        %v8962 = vadd.f32 0.0, %v8961
        %v8963 = vpop.f32.mrb[0].mxu0
        %8964 = vmatprep.mubr.f32.mxu0 0.0
        %8965 = vmatmul.mubr.f32.gmra.mrb[0].mxu0 %v8248
        %v8966 = vpop.f32.mrb[0].mxu0
        %v8967 = vadd.f32 0.0, %v8966
        %v8968 = vpop.f32.mrb[0].mxu0
        %8969 = vmatprep.mubr.f32.mxu0 0.0
        %8970 = vmatmul.mubr.f32.gmra.mrb[0].mxu0 %v8250
        %v8971 = vpop.f32.mrb[0].mxu0
        %v8972 = vadd.f32 0.0, %v8971
        %v8973 = vpop.f32.mrb[0].mxu0
        %8974 = vmatprep.mubr.f32.mxu0 0.0
        %8975 = vmatmul.mubr.f32.gmra.mrb[0].mxu0 %v8252
        %v8976 = vpop.f32.mrb[0].mxu0
        %v8977 = vadd.f32 0.0, %v8976
        %v8978 = vpop.f32.mrb[0].mxu0
        %8979 = vmatprep.mubr.f32.mxu0 0.0
        %8980 = vmatmul.mubr.f32.gmra.mrb[0].mxu0 %v8254
        %v8981 = vpop.f32.mrb[0].mxu0
        %v8982 = vadd.f32 0.0, %v8981
        %v8983 = vpop.f32.mrb[0].mxu0
        %8984 = vmatprep.mubr.f32.mxu0 0.0
        %8985 = vmatmul.mubr.f32.gmra.mrb[0].mxu0 %v8256
        %v8986 = vpop.f32.mrb[0].mxu0
        %v8987 = vadd.f32 0.0, %v8986
        %v8988 = vpop.f32.mrb[0].mxu0
        %8989 = vmatprep.mubr.f32.mxu0 0.0
        %8990 = vmatmul.mubr.f32.gmra.mrb[0].mxu0 %v8258
        %v8991 = vpop.f32.mrb[0].mxu0
        %v8992 = vadd.f32 0.0, %v8991
        %v8993 = vpop.f32.mrb[0].mxu0
        %8994 = vmatprep.mubr.f32.mxu0 0.0
        %8995 = vmatmul.mubr.f32.gmra.mrb[0].mxu0 %v8260
        %v8996 = vpop.f32.mrb[0].mxu0
        %v8997 = vadd.f32 0.0, %v8996
        %v8998 = vpop.f32.mrb[0].mxu0
        %8999 = vmatprep.mubr.f32.mxu0 0.0
        %9000 = vmatmul.mubr.f32.gmra.mrb[0].mxu0 %v8262
        %v9001 = vpop.f32.mrb[0].mxu0
        %v9002 = vadd.f32 0.0, %v9001
        %v9003 = vpop.f32.mrb[0].mxu0
        %9004 = vmatprep.mubr.f32.mxu0 0.0
        %9005 = vmatmul.mubr.f32.gmra.mrb[0].mxu0 %v8264
        %v9006 = vpop.f32.mrb[0].mxu0
        %v9007 = vadd.f32 0.0, %v9006
        %v9008 = vpop.f32.mrb[0].mxu0
        %9009 = vmatprep.mubr.f32.mxu0 0.0
        %9010 = vmatmul.mubr.f32.gmra.mrb[0].mxu0 %v8266
        %v9011 = vpop.f32.mrb[0].mxu0
        %v9012 = vadd.f32 0.0, %v9011
        %v9013 = vpop.f32.mrb[0].mxu0
        %9014 = vmatprep.mubr.f32.mxu0 0.0
        %9015 = vmatmul.mubr.f32.gmra.mrb[0].mxu0 %v8535
        %v9016 = vpop.f32.mrb[0].mxu0
        %v9017 = vadd.f32 0.0, %v9016
        %v9018 = vpop.f32.mrb[0].mxu0
        %9019 = vmatprep.mubr.f32.mxu0 0.0
        %9020 = vmatmul.mubr.f32.gmra.mrb[0].mxu0 %v8537
        %v9021 = vpop.f32.mrb[0].mxu0
        %v9022 = vadd.f32 0.0, %v9021
        %v9023 = vpop.f32.mrb[0].mxu0
        %9024 = vmatprep.mubr.f32.mxu0 0.0
        %9025 = vmatmul.mubr.f32.gmra.mrb[0].mxu0 %v8806
        %v9026 = vpop.f32.mrb[0].mxu0
        %v9027 = vadd.f32 0.0, %v9026
        %v9028 = vpop.f32.mrb[0].mxu0
        %9029 = vmatprep.mubr.f32.mxu0 0.0
        %9030 = vmatmul.mubr.f32.gmra.mrb[0].mxu0 %v8808
        %v9031 = vpop.f32.mrb[0].mxu0
        %v9032 = vadd.f32 0.0, %v9031
        %v9033 = vpop.f32.mrb[0].mxu0
        %9034 = vdwg.mxu0
        %v9035 = vadd.f32 %v8764, %v8877
        %v9036 = vadd.f32 %v8765, %v8882
        %v9037 = vadd.f32 %v8766, %v8887
        %v9038 = vadd.f32 %v8767, %v8892
        %v9039 = vadd.f32 %v8768, %v8897
        %v9040 = vadd.f32 %v8769, %v8902
        %v9041 = vadd.f32 %v8770, %v8907
        %v9042 = vadd.f32 %v8771, %v8912
        %v9043 = vadd.f32 %v8772, %v8917
        %v9044 = vadd.f32 %v8773, %v8922
        %v9045 = vadd.f32 %v8774, %v8927
        %v9046 = vadd.f32 %v8775, %v8932
        %v9047 = vadd.f32 %v8776, %v8937
        %v9048 = vadd.f32 %v8777, %v8942
        %v9049 = vadd.f32 %v8778, %v8947
        %v9050 = vadd.f32 %v8779, %v8952
        %v9051 = vadd.f32 %v8780, %v8957
        %v9052 = vadd.f32 %v8781, %v8962
        %v9053 = vadd.f32 %v8782, %v8967
        %v9054 = vadd.f32 %v8783, %v8972
        %v9055 = vadd.f32 %v8784, %v8977
        %v9056 = vadd.f32 %v8785, %v8982
        %v9057 = vadd.f32 %v8786, %v8987
        %v9058 = vadd.f32 %v8787, %v8992
        %v9059 = vadd.f32 %v8788, %v8997
        %v9060 = vadd.f32 %v8789, %v9002
        %v9061 = vadd.f32 %v8790, %v9007
        %v9062 = vadd.f32 %v8791, %v9012
        %v9063 = vadd.f32 %v8792, %v9017
        %v9064 = vadd.f32 %v8793, %v9022
        %v9065 = vadd.f32 %v8794, %v9027
        %v9066 = vadd.f32 %v8795, %v9032
        %9099 = vrot.lane.b32.xlu0 %v9035, 64
        %v9100 = vpop.permute.xlu0 %9099
        %9101 = vrot.lane.b32.xlu0 %v9036, 64
        %v9102 = vpop.permute.xlu0 %9101
        %9103 = vrot.lane.b32.xlu0 %v9037, 64
        %v9104 = vpop.permute.xlu0 %9103
        %9105 = vrot.lane.b32.xlu0 %v9038, 64
        %v9106 = vpop.permute.xlu0 %9105
        %9107 = vrot.lane.b32.xlu0 %v9039, 64
        %v9108 = vpop.permute.xlu0 %9107
        %9109 = vrot.lane.b32.xlu0 %v9040, 64
        %v9110 = vpop.permute.xlu0 %9109
        %9111 = vrot.lane.b32.xlu0 %v9041, 64
        %v9112 = vpop.permute.xlu0 %9111
        %9113 = vrot.lane.b32.xlu0 %v9042, 64
        %v9114 = vpop.permute.xlu0 %9113
        %9115 = vrot.lane.b32.xlu0 %v9043, 64
        %v9116 = vpop.permute.xlu0 %9115
        %9117 = vrot.lane.b32.xlu0 %v9044, 64
        %v9118 = vpop.permute.xlu0 %9117
        %9119 = vrot.lane.b32.xlu0 %v9045, 64
        %v9120 = vpop.permute.xlu0 %9119
        %9121 = vrot.lane.b32.xlu0 %v9046, 64
        %v9122 = vpop.permute.xlu0 %9121
        %9123 = vrot.lane.b32.xlu0 %v9047, 64
        %v9124 = vpop.permute.xlu0 %9123
        %9125 = vrot.lane.b32.xlu0 %v9048, 64
        %v9126 = vpop.permute.xlu0 %9125
        %9127 = vrot.lane.b32.xlu0 %v9049, 64
        %v9128 = vpop.permute.xlu0 %9127
        %9129 = vrot.lane.b32.xlu0 %v9050, 64
        %v9130 = vpop.permute.xlu0 %9129
        %9131 = vrot.lane.b32.xlu0 %v9051, 64
        %v9132 = vpop.permute.xlu0 %9131
        %9133 = vrot.lane.b32.xlu0 %v9052, 64
        %v9134 = vpop.permute.xlu0 %9133
        %9135 = vrot.lane.b32.xlu0 %v9053, 64
        %v9136 = vpop.permute.xlu0 %9135
        %9137 = vrot.lane.b32.xlu0 %v9054, 64
        %v9138 = vpop.permute.xlu0 %9137
        %9139 = vrot.lane.b32.xlu0 %v9055, 64
        %v9140 = vpop.permute.xlu0 %9139
        %9141 = vrot.lane.b32.xlu0 %v9056, 64
        %v9142 = vpop.permute.xlu0 %9141
        %9143 = vrot.lane.b32.xlu0 %v9057, 64
        %v9144 = vpop.permute.xlu0 %9143
        %9145 = vrot.lane.b32.xlu0 %v9058, 64
        %v9146 = vpop.permute.xlu0 %9145
        %9147 = vrot.lane.b32.xlu0 %v9059, 64
        %v9148 = vpop.permute.xlu0 %9147
        %9149 = vrot.lane.b32.xlu0 %v9060, 64
        %v9150 = vpop.permute.xlu0 %9149
        %9151 = vrot.lane.b32.xlu0 %v9061, 64
        %v9152 = vpop.permute.xlu0 %9151
        %9153 = vrot.lane.b32.xlu0 %v9062, 64
        %v9154 = vpop.permute.xlu0 %9153
        %9155 = vrot.lane.b32.xlu0 %v9063, 64
        %v9156 = vpop.permute.xlu0 %9155
        %9157 = vrot.lane.b32.xlu0 %v9064, 64
        %v9158 = vpop.permute.xlu0 %9157
        %9159 = vrot.lane.b32.xlu0 %v9065, 64
        %v9160 = vpop.permute.xlu0 %9159
        %9161 = vrot.lane.b32.xlu0 %v9066, 64
        %v9162 = vpop.permute.xlu0 %9161
        %v9195 = vadd.f32 %v3132, %v9100
        %v9196 = vadd.f32 %v3133, %v9102
        %v9197 = vadd.f32 %v3134, %v9104
        %v9198 = vadd.f32 %v3135, %v9106
        %v9199 = vadd.f32 %v3136, %v9108
        %v9200 = vadd.f32 %v3137, %v9110
        %v9201 = vadd.f32 %v3138, %v9112
        %v9202 = vadd.f32 %v3139, %v9114
        %v9203 = vadd.f32 %v3140, %v9116
        %v9204 = vadd.f32 %v3141, %v9118
        %v9205 = vadd.f32 %v3142, %v9120
        %v9206 = vadd.f32 %v3143, %v9122
        %v9207 = vadd.f32 %v3144, %v9124
        %v9208 = vadd.f32 %v3145, %v9126
        %v9209 = vadd.f32 %v3146, %v9128
        %v9210 = vadd.f32 %v3147, %v9130
        %v9211 = vadd.f32 %v3148, %v9132
        %v9212 = vadd.f32 %v3149, %v9134
        %v9213 = vadd.f32 %v3150, %v9136
        %v9214 = vadd.f32 %v3151, %v9138
        %v9215 = vadd.f32 %v3152, %v9140
        %v9216 = vadd.f32 %v3153, %v9142
        %v9217 = vadd.f32 %v3154, %v9144
        %v9218 = vadd.f32 %v3155, %v9146
        %v9219 = vadd.f32 %v3156, %v9148
        %v9220 = vadd.f32 %v3157, %v9150
        %v9221 = vadd.f32 %v3158, %v9152
        %v9222 = vadd.f32 %v3159, %v9154
        %v9223 = vadd.f32 %v3160, %v9156
        %v9224 = vadd.f32 %v3161, %v9158
        %v9225 = vadd.f32 %v3162, %v9160
        %v9226 = vadd.f32 %v3163, %v9162
        %v9227 = vtanh.pop %v9195
        %v9228 = vtanh.pop %v9196
        %v9229 = vtanh.pop %v9197
        %v9230 = vtanh.pop %v9198
        %v9231 = vtanh.pop %v9199
        %v9232 = vtanh.pop %v9200
        %v9233 = vtanh.pop %v9201
        %v9234 = vtanh.pop %v9202
        %v9235 = vtanh.pop %v9203
        %v9236 = vtanh.pop %v9204
        %v9237 = vtanh.pop %v9205
        %v9238 = vtanh.pop %v9206
        %v9239 = vtanh.pop %v9207
        %v9240 = vtanh.pop %v9208
        %v9241 = vtanh.pop %v9209
        %v9242 = vtanh.pop %v9210
        %v9243 = vtanh.pop %v9211
        %v9244 = vtanh.pop %v9212
        %v9245 = vtanh.pop %v9213
        %v9246 = vtanh.pop %v9214
        %v9247 = vtanh.pop %v9215
        %v9248 = vtanh.pop %v9216
        %v9249 = vtanh.pop %v9217
        %v9250 = vtanh.pop %v9218
        %v9251 = vtanh.pop %v9219
        %v9252 = vtanh.pop %v9220
        %v9253 = vtanh.pop %v9221
        %v9254 = vtanh.pop %v9222
        %v9255 = vtanh.pop %v9223
        %v9256 = vtanh.pop %v9224
        %v9257 = vtanh.pop %v9225
        %v9258 = vtanh.pop %v9226
        %9259 = vrot.lane.b32.xlu0 %v4017, 64
        %v9260 = vpop.permute.xlu0 %9259
        %9261 = vrot.lane.b32.xlu0 %v4019, 64
        %v9262 = vpop.permute.xlu0 %9261
        %9263 = vrot.lane.b32.xlu0 %v4022, 64
        %v9264 = vpop.permute.xlu0 %9263
        %9265 = vrot.lane.b32.xlu0 %v4024, 64
        %v9266 = vpop.permute.xlu0 %9265
        %9267 = vrot.lane.b32.xlu0 %v4027, 64
        %v9268 = vpop.permute.xlu0 %9267
        %9269 = vrot.lane.b32.xlu0 %v4029, 64
        %v9270 = vpop.permute.xlu0 %9269
        %9271 = vrot.lane.b32.xlu0 %v4032, 64
        %v9272 = vpop.permute.xlu0 %9271
        %9273 = vrot.lane.b32.xlu0 %v4034, 64
        %v9274 = vpop.permute.xlu0 %9273
        %9275 = vrot.lane.b32.xlu0 %v4037, 64
        %v9276 = vpop.permute.xlu0 %9275
        %9277 = vrot.lane.b32.xlu0 %v4039, 64
        %v9278 = vpop.permute.xlu0 %9277
        %9279 = vrot.lane.b32.xlu0 %v4042, 64
        %v9280 = vpop.permute.xlu0 %9279
        %9281 = vrot.lane.b32.xlu0 %v4044, 64
        %v9282 = vpop.permute.xlu0 %9281
        %9283 = vrot.lane.b32.xlu0 %v4047, 64
        %v9284 = vpop.permute.xlu0 %9283
        %9285 = vrot.lane.b32.xlu0 %v4049, 64
        %v9286 = vpop.permute.xlu0 %9285
        %9287 = vrot.lane.b32.xlu0 %v4052, 64
        %v9288 = vpop.permute.xlu0 %9287
        %9289 = vrot.lane.b32.xlu0 %v4054, 64
        %v9290 = vpop.permute.xlu0 %9289
        %9291 = vrot.lane.b32.xlu0 %v4057, 64
        %v9292 = vpop.permute.xlu0 %9291
        %9293 = vrot.lane.b32.xlu0 %v4059, 64
        %v9294 = vpop.permute.xlu0 %9293
        %9295 = vrot.lane.b32.xlu0 %v4062, 64
        %v9296 = vpop.permute.xlu0 %9295
        %9297 = vrot.lane.b32.xlu0 %v4064, 64
        %v9298 = vpop.permute.xlu0 %9297
        %9299 = vrot.lane.b32.xlu0 %v4067, 64
        %v9300 = vpop.permute.xlu0 %9299
        %9301 = vrot.lane.b32.xlu0 %v4069, 64
        %v9302 = vpop.permute.xlu0 %9301
        %9303 = vrot.lane.b32.xlu0 %v4072, 64
        %v9304 = vpop.permute.xlu0 %9303
        %9305 = vrot.lane.b32.xlu0 %v4074, 64
        %v9306 = vpop.permute.xlu0 %9305
        %9307 = vrot.lane.b32.xlu0 %v4077, 64
        %v9308 = vpop.permute.xlu0 %9307
        %9309 = vrot.lane.b32.xlu0 %v4079, 64
        %v9310 = vpop.permute.xlu0 %9309
        %9311 = vrot.lane.b32.xlu0 %v4082, 64
        %v9312 = vpop.permute.xlu0 %9311
        %9313 = vrot.lane.b32.xlu0 %v4084, 64
        %v9314 = vpop.permute.xlu0 %9313
        %9315 = vrot.lane.b32.xlu0 %v4087, 64
        %v9316 = vpop.permute.xlu0 %9315
        %9317 = vrot.lane.b32.xlu0 %v4089, 64
        %v9318 = vpop.permute.xlu0 %9317
        %9319 = vrot.lane.b32.xlu0 %v4419, 64
        %v9320 = vpop.permute.xlu0 %9319
        %9321 = vrot.lane.b32.xlu0 %v4421, 64
        %v9322 = vpop.permute.xlu0 %9321
        %v9355 = vsub.f32 %v9227, %v9260
        %v9356 = vsub.f32 %v9228, %v9262
        %v9357 = vsub.f32 %v9229, %v9264
        %v9358 = vsub.f32 %v9230, %v9266
        %v9359 = vsub.f32 %v9231, %v9268
        %v9360 = vsub.f32 %v9232, %v9270
        %v9361 = vsub.f32 %v9233, %v9272
        %v9362 = vsub.f32 %v9234, %v9274
        %v9363 = vsub.f32 %v9235, %v9276
        %v9364 = vsub.f32 %v9236, %v9278
        %v9365 = vsub.f32 %v9237, %v9280
        %v9366 = vsub.f32 %v9238, %v9282
        %v9367 = vsub.f32 %v9239, %v9284
        %v9368 = vsub.f32 %v9240, %v9286
        %v9369 = vsub.f32 %v9241, %v9288
        %v9370 = vsub.f32 %v9242, %v9290
        %v9371 = vsub.f32 %v9243, %v9292
        %v9372 = vsub.f32 %v9244, %v9294
        %v9373 = vsub.f32 %v9245, %v9296
        %v9374 = vsub.f32 %v9246, %v9298
        %v9375 = vsub.f32 %v9247, %v9300
        %v9376 = vsub.f32 %v9248, %v9302
        %v9377 = vsub.f32 %v9249, %v9304
        %v9378 = vsub.f32 %v9250, %v9306
        %v9379 = vsub.f32 %v9251, %v9308
        %v9380 = vsub.f32 %v9252, %v9310
        %v9381 = vsub.f32 %v9253, %v9312
        %v9382 = vsub.f32 %v9254, %v9314
        %v9383 = vsub.f32 %v9255, %v9316
        %v9384 = vsub.f32 %v9256, %v9318
        %v9385 = vsub.f32 %v9257, %v9320
        %v9386 = vsub.f32 %v9258, %v9322
        %9419 = vrot.lane.b32.xlu0 %v9355, 96
        %v9420 = vpop.permute.xlu0 %9419
        %9421 = vrot.lane.b32.xlu0 %v9356, 96
        %v9422 = vpop.permute.xlu0 %9421
        %9423 = vrot.lane.b32.xlu0 %v9357, 96
        %v9424 = vpop.permute.xlu0 %9423
        %9425 = vrot.lane.b32.xlu0 %v9358, 96
        %v9426 = vpop.permute.xlu0 %9425
        %9427 = vrot.lane.b32.xlu0 %v9359, 96
        %v9428 = vpop.permute.xlu0 %9427
        %9429 = vrot.lane.b32.xlu0 %v9360, 96
        %v9430 = vpop.permute.xlu0 %9429
        %9431 = vrot.lane.b32.xlu0 %v9361, 96
        %v9432 = vpop.permute.xlu0 %9431
        %9433 = vrot.lane.b32.xlu0 %v9362, 96
        %v9434 = vpop.permute.xlu0 %9433
        %9435 = vrot.lane.b32.xlu0 %v9363, 96
        %v9436 = vpop.permute.xlu0 %9435
        %9437 = vrot.lane.b32.xlu0 %v9364, 96
        %v9438 = vpop.permute.xlu0 %9437
        %9439 = vrot.lane.b32.xlu0 %v9365, 96
        %v9440 = vpop.permute.xlu0 %9439
        %9441 = vrot.lane.b32.xlu0 %v9366, 96
        %v9442 = vpop.permute.xlu0 %9441
        %9443 = vrot.lane.b32.xlu0 %v9367, 96
        %v9444 = vpop.permute.xlu0 %9443
        %9445 = vrot.lane.b32.xlu0 %v9368, 96
        %v9446 = vpop.permute.xlu0 %9445
        %9447 = vrot.lane.b32.xlu0 %v9369, 96
        %v9448 = vpop.permute.xlu0 %9447
        %9449 = vrot.lane.b32.xlu0 %v9370, 96
        %v9450 = vpop.permute.xlu0 %9449
        %9451 = vrot.lane.b32.xlu0 %v9371, 96
        %v9452 = vpop.permute.xlu0 %9451
        %9453 = vrot.lane.b32.xlu0 %v9372, 96
        %v9454 = vpop.permute.xlu0 %9453
        %9455 = vrot.lane.b32.xlu0 %v9373, 96
        %v9456 = vpop.permute.xlu0 %9455
        %9457 = vrot.lane.b32.xlu0 %v9374, 96
        %v9458 = vpop.permute.xlu0 %9457
        %9459 = vrot.lane.b32.xlu0 %v9375, 96
        %v9460 = vpop.permute.xlu0 %9459
        %9461 = vrot.lane.b32.xlu0 %v9376, 96
        %v9462 = vpop.permute.xlu0 %9461
        %9463 = vrot.lane.b32.xlu0 %v9377, 96
        %v9464 = vpop.permute.xlu0 %9463
        %9465 = vrot.lane.b32.xlu0 %v9378, 96
        %v9466 = vpop.permute.xlu0 %9465
        %9467 = vrot.lane.b32.xlu0 %v9379, 96
        %v9468 = vpop.permute.xlu0 %9467
        %9469 = vrot.lane.b32.xlu0 %v9380, 96
        %v9470 = vpop.permute.xlu0 %9469
        %9471 = vrot.lane.b32.xlu0 %v9381, 96
        %v9472 = vpop.permute.xlu0 %9471
        %9473 = vrot.lane.b32.xlu0 %v9382, 96
        %v9474 = vpop.permute.xlu0 %9473
        %9475 = vrot.lane.b32.xlu0 %v9383, 96
        %v9476 = vpop.permute.xlu0 %9475
        %9477 = vrot.lane.b32.xlu0 %v9384, 96
        %v9478 = vpop.permute.xlu0 %9477
        %9479 = vrot.lane.b32.xlu0 %v9385, 96
        %v9480 = vpop.permute.xlu0 %9479
        %9481 = vrot.lane.b32.xlu0 %v9386, 96
        %v9482 = vpop.permute.xlu0 %9481
        %v9515 = vmul.f32 %v6101, %v9420
        %v9516 = vmul.f32 %v6103, %v9422
        %v9517 = vmul.f32 %v6105, %v9424
        %v9518 = vmul.f32 %v6107, %v9426
        %v9519 = vmul.f32 %v6109, %v9428
        %v9520 = vmul.f32 %v6111, %v9430
        %v9521 = vmul.f32 %v6113, %v9432
        %v9522 = vmul.f32 %v6115, %v9434
        %v9523 = vmul.f32 %v6117, %v9436
        %v9524 = vmul.f32 %v6119, %v9438
        %v9525 = vmul.f32 %v6121, %v9440
        %v9526 = vmul.f32 %v6123, %v9442
        %v9527 = vmul.f32 %v6125, %v9444
        %v9528 = vmul.f32 %v6127, %v9446
        %v9529 = vmul.f32 %v6129, %v9448
        %v9530 = vmul.f32 %v6131, %v9450
        %v9531 = vmul.f32 %v6133, %v9452
        %v9532 = vmul.f32 %v6135, %v9454
        %v9533 = vmul.f32 %v6137, %v9456
        %v9534 = vmul.f32 %v6139, %v9458
        %v9535 = vmul.f32 %v6141, %v9460
        %v9536 = vmul.f32 %v6143, %v9462
        %v9537 = vmul.f32 %v6145, %v9464
        %v9538 = vmul.f32 %v6147, %v9466
        %v9539 = vmul.f32 %v6149, %v9468
        %v9540 = vmul.f32 %v6151, %v9470
        %v9541 = vmul.f32 %v6153, %v9472
        %v9542 = vmul.f32 %v6155, %v9474
        %v9543 = vmul.f32 %v6157, %v9476
        %v9544 = vmul.f32 %v6159, %v9478
        %v9545 = vmul.f32 %v6161, %v9480
        %v9546 = vmul.f32 %v6163, %v9482
        %9579 = vrot.lane.b32.xlu0 %v9515, 96
        %v9580 = vpop.permute.xlu0 %9579
        %9581 = vrot.lane.b32.xlu0 %v9516, 96
        %v9582 = vpop.permute.xlu0 %9581
        %9583 = vrot.lane.b32.xlu0 %v9517, 96
        %v9584 = vpop.permute.xlu0 %9583
        %9585 = vrot.lane.b32.xlu0 %v9518, 96
        %v9586 = vpop.permute.xlu0 %9585
        %9587 = vrot.lane.b32.xlu0 %v9519, 96
        %v9588 = vpop.permute.xlu0 %9587
        %9589 = vrot.lane.b32.xlu0 %v9520, 96
        %v9590 = vpop.permute.xlu0 %9589
        %9591 = vrot.lane.b32.xlu0 %v9521, 96
        %v9592 = vpop.permute.xlu0 %9591
        %9593 = vrot.lane.b32.xlu0 %v9522, 96
        %v9594 = vpop.permute.xlu0 %9593
        %9595 = vrot.lane.b32.xlu0 %v9523, 96
        %v9596 = vpop.permute.xlu0 %9595
        %9597 = vrot.lane.b32.xlu0 %v9524, 96
        %v9598 = vpop.permute.xlu0 %9597
        %9599 = vrot.lane.b32.xlu0 %v9525, 96
        %v9600 = vpop.permute.xlu0 %9599
        %9601 = vrot.lane.b32.xlu0 %v9526, 96
        %v9602 = vpop.permute.xlu0 %9601
        %9603 = vrot.lane.b32.xlu0 %v9527, 96
        %v9604 = vpop.permute.xlu0 %9603
        %9605 = vrot.lane.b32.xlu0 %v9528, 96
        %v9606 = vpop.permute.xlu0 %9605
        %9607 = vrot.lane.b32.xlu0 %v9529, 96
        %v9608 = vpop.permute.xlu0 %9607
        %9609 = vrot.lane.b32.xlu0 %v9530, 96
        %v9610 = vpop.permute.xlu0 %9609
        %9611 = vrot.lane.b32.xlu0 %v9531, 96
        %v9612 = vpop.permute.xlu0 %9611
        %9613 = vrot.lane.b32.xlu0 %v9532, 96
        %v9614 = vpop.permute.xlu0 %9613
        %9615 = vrot.lane.b32.xlu0 %v9533, 96
        %v9616 = vpop.permute.xlu0 %9615
        %9617 = vrot.lane.b32.xlu0 %v9534, 96
        %v9618 = vpop.permute.xlu0 %9617
        %9619 = vrot.lane.b32.xlu0 %v9535, 96
        %v9620 = vpop.permute.xlu0 %9619
        %9621 = vrot.lane.b32.xlu0 %v9536, 96
        %v9622 = vpop.permute.xlu0 %9621
        %9623 = vrot.lane.b32.xlu0 %v9537, 96
        %v9624 = vpop.permute.xlu0 %9623
        %9625 = vrot.lane.b32.xlu0 %v9538, 96
        %v9626 = vpop.permute.xlu0 %9625
        %9627 = vrot.lane.b32.xlu0 %v9539, 96
        %v9628 = vpop.permute.xlu0 %9627
        %9629 = vrot.lane.b32.xlu0 %v9540, 96
        %v9630 = vpop.permute.xlu0 %9629
        %9631 = vrot.lane.b32.xlu0 %v9541, 96
        %v9632 = vpop.permute.xlu0 %9631
        %9633 = vrot.lane.b32.xlu0 %v9542, 96
        %v9634 = vpop.permute.xlu0 %9633
        %9635 = vrot.lane.b32.xlu0 %v9543, 96
        %v9636 = vpop.permute.xlu0 %9635
        %9637 = vrot.lane.b32.xlu0 %v9544, 96
        %v9638 = vpop.permute.xlu0 %9637
        %9639 = vrot.lane.b32.xlu0 %v9545, 96
        %v9640 = vpop.permute.xlu0 %9639
        %9641 = vrot.lane.b32.xlu0 %v9546, 96
        %v9642 = vpop.permute.xlu0 %9641
        %v9675 = vadd.f32 %v4017, %v9580
        %v9676 = vadd.f32 %v4019, %v9582
        %v9677 = vadd.f32 %v4022, %v9584
        %v9678 = vadd.f32 %v4024, %v9586
        %v9679 = vadd.f32 %v4027, %v9588
        %v9680 = vadd.f32 %v4029, %v9590
        %v9681 = vadd.f32 %v4032, %v9592
        %v9682 = vadd.f32 %v4034, %v9594
        %v9683 = vadd.f32 %v4037, %v9596
        %v9684 = vadd.f32 %v4039, %v9598
        %v9685 = vadd.f32 %v4042, %v9600
        %v9686 = vadd.f32 %v4044, %v9602
        %v9687 = vadd.f32 %v4047, %v9604
        %v9688 = vadd.f32 %v4049, %v9606
        %v9689 = vadd.f32 %v4052, %v9608
        %v9690 = vadd.f32 %v4054, %v9610
        %v9691 = vadd.f32 %v4057, %v9612
        %v9692 = vadd.f32 %v4059, %v9614
        %v9693 = vadd.f32 %v4062, %v9616
        %v9694 = vadd.f32 %v4064, %v9618
        %v9695 = vadd.f32 %v4067, %v9620
        %v9696 = vadd.f32 %v4069, %v9622
        %v9697 = vadd.f32 %v4072, %v9624
        %v9698 = vadd.f32 %v4074, %v9626
        %v9699 = vadd.f32 %v4077, %v9628
        %v9700 = vadd.f32 %v4079, %v9630
        %v9701 = vadd.f32 %v4082, %v9632
        %v9702 = vadd.f32 %v4084, %v9634
        %v9703 = vadd.f32 %v4087, %v9636
        %v9704 = vadd.f32 %v4089, %v9638
        %v9705 = vadd.f32 %v4419, %v9640
        %v9706 = vadd.f32 %v4421, %v9642
        %9707 = vst.msk [vmem:[%s259] sm:$0xff] %vm3173, %v9675
        %9708 = vst.msk [vmem:[%s259 + $0x8] sm:$0xff] %vm3173, %v9676
        %9709 = vst.msk [vmem:[%s259 + $0x10] sm:$0xff] %vm3173, %v9677
        %9710 = vst.msk [vmem:[%s259 + $0x18] sm:$0xff] %vm3173, %v9678
        %9711 = vst.msk [vmem:[%s259 + $0x20] sm:$0xff] %vm3173, %v9679
        %9712 = vst.msk [vmem:[%s259 + $0x28] sm:$0xff] %vm3173, %v9680
        %9713 = vst.msk [vmem:[%s259 + $0x30] sm:$0xff] %vm3173, %v9681
        %9714 = vst.msk [vmem:[%s259 + $0x38] sm:$0xff] %vm3173, %v9682
        %9715 = vst.msk [vmem:[%s259 + $0x40] sm:$0xff] %vm3173, %v9683
        %9716 = vst.msk [vmem:[%s259 + $0x48] sm:$0xff] %vm3173, %v9684
        %9717 = vst.msk [vmem:[%s259 + $0x50] sm:$0xff] %vm3173, %v9685
        %9718 = vst.msk [vmem:[%s259 + $0x58] sm:$0xff] %vm3173, %v9686
        %9719 = vst.msk [vmem:[%s259 + $0x60] sm:$0xff] %vm3173, %v9687
        %9720 = vst.msk [vmem:[%s259 + $0x68] sm:$0xff] %vm3173, %v9688
        %9721 = vst.msk [vmem:[%s259 + $0x70] sm:$0xff] %vm3173, %v9689
        %9722 = vst.msk [vmem:[%s259 + $0x78] sm:$0xff] %vm3173, %v9690
        %9723 = vst.msk [vmem:[%s259 + $0x80] sm:$0xff] %vm3173, %v9691
        %9724 = vst.msk [vmem:[%s259 + $0x88] sm:$0xff] %vm3173, %v9692
        %9725 = vst.msk [vmem:[%s259 + $0x90] sm:$0xff] %vm3173, %v9693
        %9726 = vst.msk [vmem:[%s259 + $0x98] sm:$0xff] %vm3173, %v9694
        %9727 = vst.msk [vmem:[%s259 + $0xa0] sm:$0xff] %vm3173, %v9695
        %9728 = vst.msk [vmem:[%s259 + $0xa8] sm:$0xff] %vm3173, %v9696
        %9729 = vst.msk [vmem:[%s259 + $0xb0] sm:$0xff] %vm3173, %v9697
        %9730 = vst.msk [vmem:[%s259 + $0xb8] sm:$0xff] %vm3173, %v9698
        %9731 = vst.msk [vmem:[%s259 + $0xc0] sm:$0xff] %vm3173, %v9699
        %9732 = vst.msk [vmem:[%s259 + $0xc8] sm:$0xff] %vm3173, %v9700
        %9733 = vst.msk [vmem:[%s259 + $0xd0] sm:$0xff] %vm3173, %v9701
        %9734 = vst.msk [vmem:[%s259 + $0xd8] sm:$0xff] %vm3173, %v9702
        %9735 = vst.msk [vmem:[%s259 + $0xe0] sm:$0xff] %vm3173, %v9703
        %9736 = vst.msk [vmem:[%s259 + $0xe8] sm:$0xff] %vm3173, %v9704
        %9737 = vst.msk [vmem:[%s259 + $0xf0] sm:$0xff] %vm3173, %v9705
        %9738 = vst.msk [vmem:[%s259 + $0xf8] sm:$0xff] %vm3173, %v9706
        %s9739 = sand.u32 %s164, 1
        %s9740 = scalar_lea.sflag [#allocation4], %s9739
        %s9741 = sand.u32 %s164, 1
        %s9742 = smul.addr %s9741, 256
        %s9743 = scalar_lea.vmem [#allocation3], %s9742
        // Predicated region
        $region45: #{tpu_custom_call.1} parent=43 // pred_check
          %p9744 = pneg %p174
        $region46: #{tpu_custom_call.1} parent=43 // pred_check_branch
          %9746 = sbr.rel (%p9744) target = $region48
        $region47: #{tpu_custom_call.1} parent=43 // pred_region
          %s9748 = ssub.s32 4096, 4096
          %9749 = vsyncadd %s9740, %s9748
          %s9750 = smul.addr %s20, 32
          %s9751 = smul.addr %s9750, 128
          %s9752 = scalar_lea.hbm %s6, %s9751
          %s9753 = sshll.u32 %s9743, 4
          %s9754 = int_to_ptr.vmem [resolvable:$true] %s9753
          %9759 = dma.vmem_to_hbm [thread:$0]  %s9754, 4096, %s9752, %s9740, 128, 128, 8
        $region48: #{tpu_custom_call.1} parent=43 // pred_fallthru
          _
      $region44: #{tpu_custom_call.1} parent=5 // pred_fallthru
        _
      %p9760 = scmp.le.s32.totalorder 2, %s15
      // Predicated region
      $region49: #{tpu_custom_call.1} parent=5 // pred_check
        %p9761 = pneg %p9760
      $region50: #{tpu_custom_call.1} parent=5 // pred_check_branch
        %9763 = sbr.rel (%p9761) target = $region52
      $region51: #{tpu_custom_call.1} parent=5 // pred_region
        %s9764 = ssub.s32 %s15, 2
        // Predicated region
        $region53: #{tpu_custom_call.1} parent=51 // pred_check
          %p9765 = pneg %p180
        $region54: #{tpu_custom_call.1} parent=51 // pred_check_branch
          %9767 = sbr.rel (%p9765) target = $region56
        $region55: #{tpu_custom_call.1} parent=51 // pred_region
          %s9768 = sand.u32 %s165, 1
          %s9769 = scalar_lea.sflag [#allocation4], %s9768
          %s9770 = sand.u32 %s165, 1
          %s9771 = smul.addr %s9770, 256
          %s9772 = scalar_lea.vmem [#allocation3], %s9771
          %9773 = dma.done %s9769, 4096
        $region56: #{tpu_custom_call.1} parent=51 // pred_fallthru
          _
      $region52: #{tpu_custom_call.1} parent=5 // pred_fallthru
        _
    $region6: #{tpu_custom_call.1} parent=1 // loop_footer
      %s19 = sadd.s32 1, %s15
    $region7: #{tpu_custom_call.1} parent=1 // loop_footer_branch
      %14 = sbr.rel target = $region3
    $region8: #{tpu_custom_call.1} parent=1 // loop_exit
      _
    %9774 = vsyncpa [#allocation4], 1
    %s9775 = scalar_lea.sflag [#allocation4], 1
    %9776 = vsyncpa %s9775, 1

</llo_original>
